<compile_context>
chip_gen: v6e
topology: v6e:2x2x1
jax: 0.10.0
libtpu: 0.0.40
codegen_flags: <defaults>
</compile_context>

<pallas_src>
import functools

import jax
import jax.numpy as jnp
from jax.experimental import pallas as pl
from jax.experimental.pallas import tpu as pltpu

# Destination-row tile. 128 keeps the demo tiny; 256-512 is better for large
# graphs (VMEM use is O(TILE * N) per buffered adj block).
TILE_DST = 128
LANE = 128
# N^2 intermediates (logits / mask / softmax weights) in bf16: ~2x VPU and
# half the VMEM on v6e/v7x.  On v5e (no bf16 VALU/EUP) prefer jnp.float32.
COMPUTE_DTYPE = jnp.bfloat16
VMEM_LIMIT_BYTES = 48 * 1024 * 1024  # explicit budget; fits v7x's 64 MiB VMEM


def _round_up(x, m):
    return (x + m - 1) // m * m


# ---------------------------------------------------------------------------
# Kernel 1: row-tiled projection  x @ [W | W·a_src | W·a_dst]  (lane-padded)
# ---------------------------------------------------------------------------
def _proj_kernel(x_ref, w_ref, out_ref):
    out_ref[...] = jnp.dot(
        x_ref[...], w_ref[...], preferred_element_type=jnp.float32
    ).astype(out_ref.dtype)


def _project(x, w_comb):
    n_pad, k = x.shape
    p = w_comb.shape[1]
    return pl.pallas_call(
        _proj_kernel,
        out_shape=jax.ShapeDtypeStruct((n_pad, p), COMPUTE_DTYPE),
        grid=(n_pad // TILE_DST,),
        in_specs=[
            pl.BlockSpec((TILE_DST, k), lambda i: (i, 0)),
            pl.BlockSpec((k, p), lambda i: (0, 0)),          # W resident
        ],
        out_specs=pl.BlockSpec((TILE_DST, p), lambda i: (i, 0)),
        compiler_params=pltpu.CompilerParams(
            dimension_semantics=("parallel",),
            vmem_limit_bytes=VMEM_LIMIT_BYTES),
        cost_estimate=pl.CostEstimate(
            flops=2 * n_pad * k * p, transcendentals=0,
            bytes_accessed=2 * n_pad * k + 2 * k * p + 2 * n_pad * p),
    )(x, w_comb)


# ---------------------------------------------------------------------------
# Kernel 2: dst-tiled attention (masked softmax + aggregation + epilogue)
# ---------------------------------------------------------------------------
def _gat_attention_kernel(adj_ref, feat_ref, src_ref, dst_ref, bias_ref,
                          out_ref, *, heads, out_per_head, concat, out_dim,
                          apply_elu, apply_log_softmax, negative_slope=0.2):
    adj = adj_ref[...]       # (TILE, N_pad) 0/1 mask
    feat = feat_ref[...]     # (N_pad, H*(C+1))  per head: [feat_h | 1]
    src = src_ref[...]       # (H, N_pad)  per-source attention scores
    dst = dst_ref[...]       # (TILE, H)   per-destination attention scores
    bias = bias_ref[...]     # (1, OUT_PAD) f32

    tile = adj.shape[0]
    c = out_per_head
    cw = c + 1
    edge = adj > 0                                   # one N^2 compare, shared
    neg_big = jnp.asarray(-1e30, dtype=COMPUTE_DTYPE)
    slope = jnp.asarray(negative_slope, dtype=COMPUTE_DTYPE)

    head_outs = []
    # Static unroll over heads: per-head temporaries are only (TILE, N) bf16
    # and each head's big temporaries die before the next head's matmul.
    for h in range(heads):
        a_d = dst[:, h:h + 1]                        # (TILE, 1)
        a_s = src[h:h + 1, :]                        # (1, N_pad)
        logits = a_d + a_s                           # e[i,j] = a_dst[i]+a_src[j]
        logits = jnp.where(logits > 0, logits, slope * logits)   # LeakyReLU
        masked = jnp.where(edge, logits, neg_big)
        m = jnp.max(masked, axis=-1, keepdims=True)
        # exp(-1e30 - m) underflows to exactly 0 -> no second mask select.
        p = jnp.exp(masked - m)                      # (TILE, N_pad) bf16
        # Aggregation + denominator in one MXU pass ([feat_h | ones] block),
        # accumulated in f32.
        res = jnp.dot(p, feat[:, h * cw:(h + 1) * cw],
                      preferred_element_type=jnp.float32)        # (TILE, C+1)
        # Deferred softmax normalization on the (TILE, C) result; reciprocal
        # goes to the EUP slot.
        head_outs.append(res[:, :c] * pl.reciprocal(res[:, c:c + 1], approx=True))

    if concat:
        out = jnp.concatenate(head_outs, axis=-1)    # (TILE, H*C)
    else:
        acc = head_outs[0]
        for ho in head_outs[1:]:
            acc = acc + ho
        out = acc / jnp.float32(heads)               # (TILE, C)

    width = out.shape[1]
    out_pad = out_ref.shape[1]
    if width < out_pad:                              # lane-dense output slab
        out = jnp.concatenate(
            [out, jnp.zeros((tile, out_pad - width), jnp.float32)], axis=-1)

    out = out + bias

    if apply_elu:
        out = jnp.where(out > 0, out, jnp.exp(out) - 1.0)

    if apply_log_softmax:
        col = jax.lax.broadcasted_iota(jnp.int32, out.shape, 1)
        valid = col < out_dim                        # ignore padded lanes
        mx = jnp.max(jnp.where(valid, out, jnp.float32(-1e30)),
                     axis=-1, keepdims=True)
        ex = jnp.where(valid, jnp.exp(out - mx), jnp.float32(0.0))
        lse = jnp.log(jnp.sum(ex, axis=-1, keepdims=True)) + mx
        out = out - lse

    out_ref[...] = out.astype(out_ref.dtype)


# ---------------------------------------------------------------------------
# One GATConv layer (eval mode)
# ---------------------------------------------------------------------------
def gat_conv(x, adj, w, att_src, att_dst, bias, *, heads, out_per_head,
             concat, apply_elu=False, apply_log_softmax=False):
    """x: (N_pad, F>=F_in) zero-padded; adj: (N_pad, N_pad) 0/1 mask with
    adj[i, j]=1 iff edge j -> i (self-loops for every padded node)."""
    n_pad = x.shape[0]
    h_, c = heads, out_per_head
    f_in = w.shape[0]
    hc = h_ * c
    out_dim = hc if concat else c

    # Fold the attention projections into the feature matmul.
    w_heads = w.reshape(f_in, h_, c)
    a_src_proj = jnp.einsum("fhc,hc->fh", w_heads, att_src)   # (F_in, H)
    a_dst_proj = jnp.einsum("fhc,hc->fh", w_heads, att_dst)   # (F_in, H)
    w_comb = jnp.concatenate([w, a_src_proj, a_dst_proj], axis=1)
    p_pad = _round_up(w_comb.shape[1], LANE)
    w_comb = jnp.pad(w_comb, ((0, x.shape[1] - f_in),
                              (0, p_pad - w_comb.shape[1])))

    # bf16 operands -> full-rate MXU; accumulation stays f32 inside the kernel.
    proj = _project(x.astype(COMPUTE_DTYPE), w_comb.astype(COMPUTE_DTYPE))
    feat = proj[:, :hc]                        # (N_pad, H*C)
    a_src = proj[:, hc:hc + h_].T              # (H, N_pad)
    a_dst = proj[:, hc + h_:hc + 2 * h_]       # (N_pad, H)

    # Augment per-head features with a ones column so the aggregation matmul
    # also produces the softmax denominator.
    feat_aug = jnp.concatenate(
        [feat.reshape(n_pad, h_, c),
         jnp.ones((n_pad, h_, 1), COMPUTE_DTYPE)],
        axis=-1).reshape(n_pad, h_ * (c + 1))

    out_pad = _round_up(out_dim, LANE)
    bias_pad = jnp.pad(bias.astype(jnp.float32),
                       ((0, 0), (0, out_pad - bias.shape[1])))

    kern = functools.partial(
        _gat_attention_kernel, heads=h_, out_per_head=c, concat=concat,
        out_dim=out_dim, apply_elu=apply_elu,
        apply_log_softmax=apply_log_softmax)

    adj_bytes = n_pad * n_pad * adj.dtype.itemsize
    cost = pl.CostEstimate(
        flops=2 * h_ * n_pad * n_pad * (c + 1) + 6 * h_ * n_pad * n_pad,
        transcendentals=h_ * n_pad * n_pad,
        bytes_accessed=adj_bytes + 2 * n_pad * h_ * (c + 1) + 4 * n_pad * out_pad)

    return pl.pallas_call(
        kern,
        out_shape=jax.ShapeDtypeStruct((n_pad, out_pad), jnp.float32),
        grid=(n_pad // TILE_DST,),
        in_specs=[
            pl.BlockSpec((TILE_DST, n_pad), lambda i: (i, 0)),        # adj tile
            pl.BlockSpec((n_pad, h_ * (c + 1)), lambda i: (0, 0)),    # feat (resident)
            pl.BlockSpec((h_, n_pad), lambda i: (0, 0)),              # src scores (resident)
            pl.BlockSpec((TILE_DST, h_), lambda i: (i, 0)),           # dst scores tile
            pl.BlockSpec((1, out_pad), lambda i: (0, 0)),             # bias (resident)
        ],
        out_specs=pl.BlockSpec((TILE_DST, out_pad), lambda i: (i, 0)),
        compiler_params=pltpu.CompilerParams(
            dimension_semantics=("parallel",),   # dst tiles shard across v7x's 2 TCs
            vmem_limit_bytes=VMEM_LIMIT_BYTES),
        cost_estimate=cost,
    )(adj, feat_aug, a_src, a_dst, bias_pad)


# ---------------------------------------------------------------------------
# Graph / parameter helpers and full forward
# ---------------------------------------------------------------------------
def edge_index_to_adj(edge_index, n, n_pad):
    # adj[dst, src] = 1 for every edge src -> dst, plus self-loops for every
    # (padded) node so every softmax row is non-empty.  bf16 halves HBM
    # traffic of the dominant streamed array.
    # TODO(synk): for large sparse graphs switch to a block-sparse layout with
    # scalar-prefetched non-empty-block lists instead of a dense N^2 mask.
    del n
    src, dst = edge_index[0], edge_index[1]
    adj = jnp.zeros((n_pad, n_pad), COMPUTE_DTYPE).at[dst, src].set(1.0)
    idx = jnp.arange(n_pad)
    return adj.at[idx, idx].set(1.0)


def init_params(key, in_channels, out_channels, heads1=8, hid=8):
    ks = jax.random.split(key, 8)
    glorot = lambda k, shape: (jax.random.normal(k, shape, jnp.float32)
                               * jnp.sqrt(2.0 / sum(shape[-2:])))
    return {
        # conv1: GATConv(in_channels, 8, heads=8)
        "w1":    glorot(ks[0], (in_channels, heads1 * hid)),
        "asrc1": glorot(ks[1], (heads1, hid)),
        "adst1": glorot(ks[2], (heads1, hid)),
        "b1":    jnp.zeros((1, heads1 * hid), jnp.float32),
        # conv2: GATConv(64, out_channels, heads=1, concat=False)
        "w2":    glorot(ks[3], (heads1 * hid, out_channels)),
        "asrc2": glorot(ks[4], (1, out_channels)),
        "adst2": glorot(ks[5], (1, out_channels)),
        "b2":    jnp.zeros((1, out_channels), jnp.float32),
    }


@jax.jit
def gat_forward(x, adj, params):
    n = x.shape[0]
    n_pad = adj.shape[0]
    num_classes = params["w2"].shape[1]

    x_pad = jnp.pad(x, ((0, n_pad - n), (0, 0)))

    # conv1 -> ELU (fused in the attention kernel)
    # TODO(synk): F.dropout(p=0.6) on attention weights / between layers is
    # identity in eval mode and is omitted.
    h = gat_conv(x_pad, adj, params["w1"], params["asrc1"], params["adst1"],
                 params["b1"], heads=8, out_per_head=8, concat=True,
                 apply_elu=True)                     # (N_pad, 128), padded lanes are 0
    # conv2 -> log_softmax(dim=1) (fused).  h is fed un-sliced (lane-dense);
    # W2 is row-padded with zeros inside gat_conv so padded lanes contribute 0.
    out = gat_conv(h, adj, params["w2"], params["asrc2"], params["adst2"],
                   params["b2"], heads=1, out_per_head=num_classes,
                   concat=False, apply_log_softmax=True)
    return out[:n, :num_classes]


if __name__ == "__main__":
    key = jax.random.PRNGKey(0)
    k_x, k_e1, k_e2, k_p = jax.random.split(key, 4)

    num_nodes = 16
    in_channels = 16
    num_classes = 7
    num_edges = 48

    x = jax.random.normal(k_x, (num_nodes, in_channels), jnp.float32)
    edge_index = jnp.stack([
        jax.random.randint(k_e1, (num_edges,), 0, num_nodes),
        jax.random.randint(k_e2, (num_edges,), 0, num_nodes),
    ], axis=0)  # (2, E)

    n_pad = _round_up(num_nodes, TILE_DST)
    adj = edge_index_to_adj(edge_index, num_nodes, n_pad)
    params = init_params(k_p, in_channels, num_classes)

    out = gat_forward(x, adj, params)
    out = jax.block_until_ready(out)

    assert out.shape == (num_nodes, num_classes)
    assert bool(jnp.all(jnp.isfinite(out)))
    # log_softmax rows must (approximately) sum to 1 in probability space
    assert bool(jnp.all(jnp.abs(jnp.sum(jnp.exp(out), axis=1) - 1.0) < 1e-3))
    print("KERNEL_OK")
</pallas_src>

<mosaic_0001>
module attributes {stable_mosaic.version = 11 : i64} {
  func.func @_proj_kernel(%arg0: i32, %arg1: memref<128x16xbf16, #tpu.memory_space<vmem>>, %arg2: memref<16x128xbf16, #tpu.memory_space<vmem>>, %arg3: memref<128x128xbf16, #tpu.memory_space<vmem>>) attributes {dimension_semantics = [#tpu.dimension_semantics<parallel>], iteration_bounds = array<i64: 1>, scalar_prefetch = 0 : i64, scratch_operands = 0 : i64, tpu.core_type = #tpu.core_type<tc>, window_params = [{transform_indices = @transform_0, window_bounds = array<i64: 128, 16>}, {pipeline_mode = #tpu.pipeline_mode<synchronous>, transform_indices = @transform_1, window_bounds = array<i64: 16, 128>}, {transform_indices = @transform_2, window_bounds = array<i64: 128, 128>}]} {
    %c0 = arith.constant 0 : index
    %c0_0 = arith.constant 0 : index
    %0 = vector.load %arg1[%c0, %c0_0] : memref<128x16xbf16, #tpu.memory_space<vmem>>, vector<128x16xbf16>
    %c0_1 = arith.constant 0 : index
    %c0_2 = arith.constant 0 : index
    %1 = vector.load %arg2[%c0_1, %c0_2] : memref<16x128xbf16, #tpu.memory_space<vmem>>, vector<16x128xbf16>
    %cst = arith.constant dense<0.000000e+00> : vector<128x128xf32>
    %2 = tpu.matmul %0, %1, %cst {dimension_numbers = #tpu.dot_dimension_numbers<[1], [0], [0], [1], [0, 0, 1, 1], [], []>} : vector<128x16xbf16>, vector<16x128xbf16>, vector<128x128xf32> -> vector<128x128xf32>
    %3 = arith.truncf %2 : vector<128x128xf32> to vector<128x128xbf16>
    %c0_3 = arith.constant 0 : index
    %c0_4 = arith.constant 0 : index
    %4 = vector.load %arg3[%c0_3, %c0_4] : memref<128x128xbf16, #tpu.memory_space<vmem>>, vector<128x128xbf16>
    tpu.vector_store %arg3[%c0_3, %c0_4], %3 {strides = array<i32>} : memref<128x128xbf16, #tpu.memory_space<vmem>>, vector<128x128xbf16>,
    return
  }
  func.func @transform_0(%arg0: i32) -> (i32, i32) {
    %c0_i32 = arith.constant 0 : i32
    %c0_i32_0 = arith.constant 0 : i32
    return %arg0, %c0_i32 : i32, i32
  }
  func.func @transform_1(%arg0: i32) -> (i32, i32) {
    %c0_i32 = arith.constant 0 : i32
    %c0_i32_0 = arith.constant 0 : i32
    %c0_i32_1 = arith.constant 0 : i32
    return %c0_i32, %c0_i32_0 : i32, i32
  }
  func.func @transform_2(%arg0: i32) -> (i32, i32) {
    %c0_i32 = arith.constant 0 : i32
    %c0_i32_0 = arith.constant 0 : i32
    return %arg0, %c0_i32 : i32, i32
  }
}

module attributes {stable_mosaic.version = 11 : i64} {
  func.func @_gat_attention_kernel(%arg0: i32, %arg1: memref<128x128xbf16, #tpu.memory_space<vmem>>, %arg2: memref<128x72xbf16, #tpu.memory_space<vmem>>, %arg3: memref<8x128xbf16, #tpu.memory_space<vmem>>, %arg4: memref<128x8xbf16, #tpu.memory_space<vmem>>, %arg5: memref<1x128xf32, #tpu.memory_space<vmem>>, %arg6: memref<128x128xf32, #tpu.memory_space<vmem>>) attributes {dimension_semantics = [#tpu.dimension_semantics<parallel>], iteration_bounds = array<i64: 1>, scalar_prefetch = 0 : i64, scratch_operands = 0 : i64, tpu.core_type = #tpu.core_type<tc>, window_params = [{transform_indices = @transform_0, window_bounds = array<i64: 128, 128>}, {pipeline_mode = #tpu.pipeline_mode<synchronous>, transform_indices = @transform_1, window_bounds = array<i64: 128, 72>}, {pipeline_mode = #tpu.pipeline_mode<synchronous>, transform_indices = @transform_2, window_bounds = array<i64: 8, 128>}, {transform_indices = @transform_3, window_bounds = array<i64: 128, 8>}, {pipeline_mode = #tpu.pipeline_mode<synchronous>, transform_indices = @transform_4, window_bounds = array<i64: 1, 128>}, {transform_indices = @transform_5, window_bounds = array<i64: 128, 128>}]} {
    %c0 = arith.constant 0 : index
    %c0_0 = arith.constant 0 : index
    %0 = vector.load %arg1[%c0, %c0_0] : memref<128x128xbf16, #tpu.memory_space<vmem>>, vector<128x128xbf16>
    %c0_1 = arith.constant 0 : index
    %c0_2 = arith.constant 0 : index
    %1 = vector.load %arg2[%c0_1, %c0_2] : memref<128x72xbf16, #tpu.memory_space<vmem>>, vector<128x72xbf16>
    %c0_3 = arith.constant 0 : index
    %c0_4 = arith.constant 0 : index
    %2 = vector.load %arg3[%c0_3, %c0_4] : memref<8x128xbf16, #tpu.memory_space<vmem>>, vector<8x128xbf16>
    %c0_5 = arith.constant 0 : index
    %c0_6 = arith.constant 0 : index
    %3 = vector.load %arg4[%c0_5, %c0_6] : memref<128x8xbf16, #tpu.memory_space<vmem>>, vector<128x8xbf16>
    %c0_7 = arith.constant 0 : index
    %c0_8 = arith.constant 0 : index
    %4 = vector.load %arg5[%c0_7, %c0_8] : memref<1x128xf32, #tpu.memory_space<vmem>>, vector<1x128xf32>
    %cst = arith.constant 0.000000e+00 : bf16
    %5 = vector.broadcast %cst : bf16 to vector<128x128xbf16>
    %6 = arith.cmpf ogt, %0, %5 : vector<128x128xbf16>
    %7 = vector.extract_strided_slice %3 {offsets = [0, 0], sizes = [128, 1], strides = [1, 1]} : vector<128x8xbf16> to vector<128x1xbf16>
    %8 = vector.extract_strided_slice %2 {offsets = [0, 0], sizes = [1, 128], strides = [1, 1]} : vector<8x128xbf16> to vector<1x128xbf16>
    %9 = vector.broadcast %7 : vector<128x1xbf16> to vector<128x128xbf16>
    %10 = vector.broadcast %8 : vector<1x128xbf16> to vector<128x128xbf16>
    %11 = arith.addf %9, %10 : vector<128x128xbf16>
    %cst_9 = arith.constant 0.000000e+00 : bf16
    %12 = vector.broadcast %cst_9 : bf16 to vector<128x128xbf16>
    %13 = arith.cmpf ogt, %11, %12 : vector<128x128xbf16>
    %cst_10 = arith.constant 2.001950e-01 : bf16
    %14 = vector.broadcast %cst_10 : bf16 to vector<128x128xbf16>
    %15 = arith.mulf %14, %11 : vector<128x128xbf16>
    %16 = arith.select %13, %11, %15 : vector<128x128xi1>, vector<128x128xbf16>
    %cst_11 = arith.constant -1.000260e+30 : bf16
    %17 = vector.broadcast %cst_11 : bf16 to vector<128x128xbf16>
    %18 = arith.select %6, %16, %17 : vector<128x128xi1>, vector<128x128xbf16>
    %cst_12 = arith.constant dense<0xFF80> : vector<128xbf16>
    %19 = vector.multi_reduction <maximumf>, %18, %cst_12 [1] : vector<128x128xbf16> to vector<128xbf16>
    %20 = vector.shape_cast %19 : vector<128xbf16> to vector<128x1xbf16>
    %21 = vector.broadcast %20 : vector<128x1xbf16> to vector<128x128xbf16>
    %22 = arith.subf %18, %21 : vector<128x128xbf16>
    %23 = math.exp %22 : vector<128x128xbf16>
    %24 = vector.extract_strided_slice %1 {offsets = [0, 0], sizes = [128, 9], strides = [1, 1]} : vector<128x72xbf16> to vector<128x9xbf16>
    %cst_13 = arith.constant dense<0.000000e+00> : vector<128x9xf32>
    %25 = tpu.matmul %23, %24, %cst_13 {dimension_numbers = #tpu.dot_dimension_numbers<[1], [0], [0], [1], [0, 0, 1, 1], [], []>} : vector<128x128xbf16>, vector<128x9xbf16>, vector<128x9xf32> -> vector<128x9xf32>
    %26 = vector.extract_strided_slice %25 {offsets = [0, 0], sizes = [128, 8], strides = [1, 1]} : vector<128x9xf32> to vector<128x8xf32>
    %27 = vector.extract_strided_slice %25 {offsets = [0, 8], sizes = [128, 1], strides = [1, 1]} : vector<128x9xf32> to vector<128x1xf32>
    %28 = tpu.reciprocal %27 {approx = true} : vector<128x1xf32> -> vector<128x1xf32>
    %29 = vector.broadcast %28 : vector<128x1xf32> to vector<128x8xf32>
    %30 = arith.mulf %26, %29 : vector<128x8xf32>
    %31 = vector.extract_strided_slice %3 {offsets = [0, 1], sizes = [128, 1], strides = [1, 1]} : vector<128x8xbf16> to vector<128x1xbf16>
    %32 = vector.extract_strided_slice %2 {offsets = [1, 0], sizes = [1, 128], strides = [1, 1]} : vector<8x128xbf16> to vector<1x128xbf16>
    %33 = vector.broadcast %31 : vector<128x1xbf16> to vector<128x128xbf16>
    %34 = vector.broadcast %32 : vector<1x128xbf16> to vector<128x128xbf16>
    %35 = arith.addf %33, %34 : vector<128x128xbf16>
    %cst_14 = arith.constant 0.000000e+00 : bf16
    %36 = vector.broadcast %cst_14 : bf16 to vector<128x128xbf16>
    %37 = arith.cmpf ogt, %35, %36 : vector<128x128xbf16>
    %cst_15 = arith.constant 2.001950e-01 : bf16
    %38 = vector.broadcast %cst_15 : bf16 to vector<128x128xbf16>
    %39 = arith.mulf %38, %35 : vector<128x128xbf16>
    %40 = arith.select %37, %35, %39 : vector<128x128xi1>, vector<128x128xbf16>
    %cst_16 = arith.constant -1.000260e+30 : bf16
    %41 = vector.broadcast %cst_16 : bf16 to vector<128x128xbf16>
    %42 = arith.select %6, %40, %41 : vector<128x128xi1>, vector<128x128xbf16>
    %cst_17 = arith.constant dense<0xFF80> : vector<128xbf16>
    %43 = vector.multi_reduction <maximumf>, %42, %cst_17 [1] : vector<128x128xbf16> to vector<128xbf16>
    %44 = vector.shape_cast %43 : vector<128xbf16> to vector<128x1xbf16>
    %45 = vector.broadcast %44 : vector<128x1xbf16> to vector<128x128xbf16>
    %46 = arith.subf %42, %45 : vector<128x128xbf16>
    %47 = math.exp %46 : vector<128x128xbf16>
    %48 = vector.extract_strided_slice %1 {offsets = [0, 9], sizes = [128, 9], strides = [1, 1]} : vector<128x72xbf16> to vector<128x9xbf16>
    %cst_18 = arith.constant dense<0.000000e+00> : vector<128x9xf32>
    %49 = tpu.matmul %47, %48, %cst_18 {dimension_numbers = #tpu.dot_dimension_numbers<[1], [0], [0], [1], [0, 0, 1, 1], [], []>} : vector<128x128xbf16>, vector<128x9xbf16>, vector<128x9xf32> -> vector<128x9xf32>
    %50 = vector.extract_strided_slice %49 {offsets = [0, 0], sizes = [128, 8], strides = [1, 1]} : vector<128x9xf32> to vector<128x8xf32>
    %51 = vector.extract_strided_slice %49 {offsets = [0, 8], sizes = [128, 1], strides = [1, 1]} : vector<128x9xf32> to vector<128x1xf32>
    %52 = tpu.reciprocal %51 {approx = true} : vector<128x1xf32> -> vector<128x1xf32>
    %53 = vector.broadcast %52 : vector<128x1xf32> to vector<128x8xf32>
    %54 = arith.mulf %50, %53 : vector<128x8xf32>
    %55 = vector.extract_strided_slice %3 {offsets = [0, 2], sizes = [128, 1], strides = [1, 1]} : vector<128x8xbf16> to vector<128x1xbf16>
    %56 = vector.extract_strided_slice %2 {offsets = [2, 0], sizes = [1, 128], strides = [1, 1]} : vector<8x128xbf16> to vector<1x128xbf16>
    %57 = vector.broadcast %55 : vector<128x1xbf16> to vector<128x128xbf16>
    %58 = vector.broadcast %56 : vector<1x128xbf16> to vector<128x128xbf16>
    %59 = arith.addf %57, %58 : vector<128x128xbf16>
    %cst_19 = arith.constant 0.000000e+00 : bf16
    %60 = vector.broadcast %cst_19 : bf16 to vector<128x128xbf16>
    %61 = arith.cmpf ogt, %59, %60 : vector<128x128xbf16>
    %cst_20 = arith.constant 2.001950e-01 : bf16
    %62 = vector.broadcast %cst_20 : bf16 to vector<128x128xbf16>
    %63 = arith.mulf %62, %59 : vector<128x128xbf16>
    %64 = arith.select %61, %59, %63 : vector<128x128xi1>, vector<128x128xbf16>
    %cst_21 = arith.constant -1.000260e+30 : bf16
    %65 = vector.broadcast %cst_21 : bf16 to vector<128x128xbf16>
    %66 = arith.select %6, %64, %65 : vector<128x128xi1>, vector<128x128xbf16>
    %cst_22 = arith.constant dense<0xFF80> : vector<128xbf16>
    %67 = vector.multi_reduction <maximumf>, %66, %cst_22 [1] : vector<128x128xbf16> to vector<128xbf16>
    %68 = vector.shape_cast %67 : vector<128xbf16> to vector<128x1xbf16>
    %69 = vector.broadcast %68 : vector<128x1xbf16> to vector<128x128xbf16>
    %70 = arith.subf %66, %69 : vector<128x128xbf16>
    %71 = math.exp %70 : vector<128x128xbf16>
    %72 = vector.extract_strided_slice %1 {offsets = [0, 18], sizes = [128, 9], strides = [1, 1]} : vector<128x72xbf16> to vector<128x9xbf16>
    %cst_23 = arith.constant dense<0.000000e+00> : vector<128x9xf32>
    %73 = tpu.matmul %71, %72, %cst_23 {dimension_numbers = #tpu.dot_dimension_numbers<[1], [0], [0], [1], [0, 0, 1, 1], [], []>} : vector<128x128xbf16>, vector<128x9xbf16>, vector<128x9xf32> -> vector<128x9xf32>
    %74 = vector.extract_strided_slice %73 {offsets = [0, 0], sizes = [128, 8], strides = [1, 1]} : vector<128x9xf32> to vector<128x8xf32>
    %75 = vector.extract_strided_slice %73 {offsets = [0, 8], sizes = [128, 1], strides = [1, 1]} : vector<128x9xf32> to vector<128x1xf32>
    %76 = tpu.reciprocal %75 {approx = true} : vector<128x1xf32> -> vector<128x1xf32>
    %77 = vector.broadcast %76 : vector<128x1xf32> to vector<128x8xf32>
    %78 = arith.mulf %74, %77 : vector<128x8xf32>
    %79 = vector.extract_strided_slice %3 {offsets = [0, 3], sizes = [128, 1], strides = [1, 1]} : vector<128x8xbf16> to vector<128x1xbf16>
    %80 = vector.extract_strided_slice %2 {offsets = [3, 0], sizes = [1, 128], strides = [1, 1]} : vector<8x128xbf16> to vector<1x128xbf16>
    %81 = vector.broadcast %79 : vector<128x1xbf16> to vector<128x128xbf16>
    %82 = vector.broadcast %80 : vector<1x128xbf16> to vector<128x128xbf16>
    %83 = arith.addf %81, %82 : vector<128x128xbf16>
    %cst_24 = arith.constant 0.000000e+00 : bf16
    %84 = vector.broadcast %cst_24 : bf16 to vector<128x128xbf16>
    %85 = arith.cmpf ogt, %83, %84 : vector<128x128xbf16>
    %cst_25 = arith.constant 2.001950e-01 : bf16
    %86 = vector.broadcast %cst_25 : bf16 to vector<128x128xbf16>
    %87 = arith.mulf %86, %83 : vector<128x128xbf16>
    %88 = arith.select %85, %83, %87 : vector<128x128xi1>, vector<128x128xbf16>
    %cst_26 = arith.constant -1.000260e+30 : bf16
    %89 = vector.broadcast %cst_26 : bf16 to vector<128x128xbf16>
    %90 = arith.select %6, %88, %89 : vector<128x128xi1>, vector<128x128xbf16>
    %cst_27 = arith.constant dense<0xFF80> : vector<128xbf16>
    %91 = vector.multi_reduction <maximumf>, %90, %cst_27 [1] : vector<128x128xbf16> to vector<128xbf16>
    %92 = vector.shape_cast %91 : vector<128xbf16> to vector<128x1xbf16>
    %93 = vector.broadcast %92 : vector<128x1xbf16> to vector<128x128xbf16>
    %94 = arith.subf %90, %93 : vector<128x128xbf16>
    %95 = math.exp %94 : vector<128x128xbf16>
    %96 = vector.extract_strided_slice %1 {offsets = [0, 27], sizes = [128, 9], strides = [1, 1]} : vector<128x72xbf16> to vector<128x9xbf16>
    %cst_28 = arith.constant dense<0.000000e+00> : vector<128x9xf32>
    %97 = tpu.matmul %95, %96, %cst_28 {dimension_numbers = #tpu.dot_dimension_numbers<[1], [0], [0], [1], [0, 0, 1, 1], [], []>} : vector<128x128xbf16>, vector<128x9xbf16>, vector<128x9xf32> -> vector<128x9xf32>
    %98 = vector.extract_strided_slice %97 {offsets = [0, 0], sizes = [128, 8], strides = [1, 1]} : vector<128x9xf32> to vector<128x8xf32>
    %99 = vector.extract_strided_slice %97 {offsets = [0, 8], sizes = [128, 1], strides = [1, 1]} : vector<128x9xf32> to vector<128x1xf32>
    %100 = tpu.reciprocal %99 {approx = true} : vector<128x1xf32> -> vector<128x1xf32>
    %101 = vector.broadcast %100 : vector<128x1xf32> to vector<128x8xf32>
    %102 = arith.mulf %98, %101 : vector<128x8xf32>
    %103 = vector.extract_strided_slice %3 {offsets = [0, 4], sizes = [128, 1], strides = [1, 1]} : vector<128x8xbf16> to vector<128x1xbf16>
    %104 = vector.extract_strided_slice %2 {offsets = [4, 0], sizes = [1, 128], strides = [1, 1]} : vector<8x128xbf16> to vector<1x128xbf16>
    %105 = vector.broadcast %103 : vector<128x1xbf16> to vector<128x128xbf16>
    %106 = vector.broadcast %104 : vector<1x128xbf16> to vector<128x128xbf16>
    %107 = arith.addf %105, %106 : vector<128x128xbf16>
    %cst_29 = arith.constant 0.000000e+00 : bf16
    %108 = vector.broadcast %cst_29 : bf16 to vector<128x128xbf16>
    %109 = arith.cmpf ogt, %107, %108 : vector<128x128xbf16>
    %cst_30 = arith.constant 2.001950e-01 : bf16
    %110 = vector.broadcast %cst_30 : bf16 to vector<128x128xbf16>
    %111 = arith.mulf %110, %107 : vector<128x128xbf16>
    %112 = arith.select %109, %107, %111 : vector<128x128xi1>, vector<128x128xbf16>
    %cst_31 = arith.constant -1.000260e+30 : bf16
    %113 = vector.broadcast %cst_31 : bf16 to vector<128x128xbf16>
    %114 = arith.select %6, %112, %113 : vector<128x128xi1>, vector<128x128xbf16>
    %cst_32 = arith.constant dense<0xFF80> : vector<128xbf16>
    %115 = vector.multi_reduction <maximumf>, %114, %cst_32 [1] : vector<128x128xbf16> to vector<128xbf16>
    %116 = vector.shape_cast %115 : vector<128xbf16> to vector<128x1xbf16>
    %117 = vector.broadcast %116 : vector<128x1xbf16> to vector<128x128xbf16>
    %118 = arith.subf %114, %117 : vector<128x128xbf16>
    %119 = math.exp %118 : vector<128x128xbf16>
    %120 = vector.extract_strided_slice %1 {offsets = [0, 36], sizes = [128, 9], strides = [1, 1]} : vector<128x72xbf16> to vector<128x9xbf16>
    %cst_33 = arith.constant dense<0.000000e+00> : vector<128x9xf32>
    %121 = tpu.matmul %119, %120, %cst_33 {dimension_numbers = #tpu.dot_dimension_numbers<[1], [0], [0], [1], [0, 0, 1, 1], [], []>} : vector<128x128xbf16>, vector<128x9xbf16>, vector<128x9xf32> -> vector<128x9xf32>
    %122 = vector.extract_strided_slice %121 {offsets = [0, 0], sizes = [128, 8], strides = [1, 1]} : vector<128x9xf32> to vector<128x8xf32>
    %123 = vector.extract_strided_slice %121 {offsets = [0, 8], sizes = [128, 1], strides = [1, 1]} : vector<128x9xf32> to vector<128x1xf32>
    %124 = tpu.reciprocal %123 {approx = true} : vector<128x1xf32> -> vector<128x1xf32>
    %125 = vector.broadcast %124 : vector<128x1xf32> to vector<128x8xf32>
    %126 = arith.mulf %122, %125 : vector<128x8xf32>
    %127 = vector.extract_strided_slice %3 {offsets = [0, 5], sizes = [128, 1], strides = [1, 1]} : vector<128x8xbf16> to vector<128x1xbf16>
    %128 = vector.extract_strided_slice %2 {offsets = [5, 0], sizes = [1, 128], strides = [1, 1]} : vector<8x128xbf16> to vector<1x128xbf16>
    %129 = vector.broadcast %127 : vector<128x1xbf16> to vector<128x128xbf16>
    %130 = vector.broadcast %128 : vector<1x128xbf16> to vector<128x128xbf16>
    %131 = arith.addf %129, %130 : vector<128x128xbf16>
    %cst_34 = arith.constant 0.000000e+00 : bf16
    %132 = vector.broadcast %cst_34 : bf16 to vector<128x128xbf16>
    %133 = arith.cmpf ogt, %131, %132 : vector<128x128xbf16>
    %cst_35 = arith.constant 2.001950e-01 : bf16
    %134 = vector.broadcast %cst_35 : bf16 to vector<128x128xbf16>
    %135 = arith.mulf %134, %131 : vector<128x128xbf16>
    %136 = arith.select %133, %131, %135 : vector<128x128xi1>, vector<128x128xbf16>
    %cst_36 = arith.constant -1.000260e+30 : bf16
    %137 = vector.broadcast %cst_36 : bf16 to vector<128x128xbf16>
    %138 = arith.select %6, %136, %137 : vector<128x128xi1>, vector<128x128xbf16>
    %cst_37 = arith.constant dense<0xFF80> : vector<128xbf16>
    %139 = vector.multi_reduction <maximumf>, %138, %cst_37 [1] : vector<128x128xbf16> to vector<128xbf16>
    %140 = vector.shape_cast %139 : vector<128xbf16> to vector<128x1xbf16>
    %141 = vector.broadcast %140 : vector<128x1xbf16> to vector<128x128xbf16>
    %142 = arith.subf %138, %141 : vector<128x128xbf16>
    %143 = math.exp %142 : vector<128x128xbf16>
    %144 = vector.extract_strided_slice %1 {offsets = [0, 45], sizes = [128, 9], strides = [1, 1]} : vector<128x72xbf16> to vector<128x9xbf16>
    %cst_38 = arith.constant dense<0.000000e+00> : vector<128x9xf32>
    %145 = tpu.matmul %143, %144, %cst_38 {dimension_numbers = #tpu.dot_dimension_numbers<[1], [0], [0], [1], [0, 0, 1, 1], [], []>} : vector<128x128xbf16>, vector<128x9xbf16>, vector<128x9xf32> -> vector<128x9xf32>
    %146 = vector.extract_strided_slice %145 {offsets = [0, 0], sizes = [128, 8], strides = [1, 1]} : vector<128x9xf32> to vector<128x8xf32>
    %147 = vector.extract_strided_slice %145 {offsets = [0, 8], sizes = [128, 1], strides = [1, 1]} : vector<128x9xf32> to vector<128x1xf32>
    %148 = tpu.reciprocal %147 {approx = true} : vector<128x1xf32> -> vector<128x1xf32>
    %149 = vector.broadcast %148 : vector<128x1xf32> to vector<128x8xf32>
    %150 = arith.mulf %146, %149 : vector<128x8xf32>
    %151 = vector.extract_strided_slice %3 {offsets = [0, 6], sizes = [128, 1], strides = [1, 1]} : vector<128x8xbf16> to vector<128x1xbf16>
    %152 = vector.extract_strided_slice %2 {offsets = [6, 0], sizes = [1, 128], strides = [1, 1]} : vector<8x128xbf16> to vector<1x128xbf16>
    %153 = vector.broadcast %151 : vector<128x1xbf16> to vector<128x128xbf16>
    %154 = vector.broadcast %152 : vector<1x128xbf16> to vector<128x128xbf16>
    %155 = arith.addf %153, %154 : vector<128x128xbf16>
    %cst_39 = arith.constant 0.000000e+00 : bf16
    %156 = vector.broadcast %cst_39 : bf16 to vector<128x128xbf16>
    %157 = arith.cmpf ogt, %155, %156 : vector<128x128xbf16>
    %cst_40 = arith.constant 2.001950e-01 : bf16
    %158 = vector.broadcast %cst_40 : bf16 to vector<128x128xbf16>
    %159 = arith.mulf %158, %155 : vector<128x128xbf16>
    %160 = arith.select %157, %155, %159 : vector<128x128xi1>, vector<128x128xbf16>
    %cst_41 = arith.constant -1.000260e+30 : bf16
    %161 = vector.broadcast %cst_41 : bf16 to vector<128x128xbf16>
    %162 = arith.select %6, %160, %161 : vector<128x128xi1>, vector<128x128xbf16>
    %cst_42 = arith.constant dense<0xFF80> : vector<128xbf16>
    %163 = vector.multi_reduction <maximumf>, %162, %cst_42 [1] : vector<128x128xbf16> to vector<128xbf16>
    %164 = vector.shape_cast %163 : vector<128xbf16> to vector<128x1xbf16>
    %165 = vector.broadcast %164 : vector<128x1xbf16> to vector<128x128xbf16>
    %166 = arith.subf %162, %165 : vector<128x128xbf16>
    %167 = math.exp %166 : vector<128x128xbf16>
    %168 = vector.extract_strided_slice %1 {offsets = [0, 54], sizes = [128, 9], strides = [1, 1]} : vector<128x72xbf16> to vector<128x9xbf16>
    %cst_43 = arith.constant dense<0.000000e+00> : vector<128x9xf32>
    %169 = tpu.matmul %167, %168, %cst_43 {dimension_numbers = #tpu.dot_dimension_numbers<[1], [0], [0], [1], [0, 0, 1, 1], [], []>} : vector<128x128xbf16>, vector<128x9xbf16>, vector<128x9xf32> -> vector<128x9xf32>
    %170 = vector.extract_strided_slice %169 {offsets = [0, 0], sizes = [128, 8], strides = [1, 1]} : vector<128x9xf32> to vector<128x8xf32>
    %171 = vector.extract_strided_slice %169 {offsets = [0, 8], sizes = [128, 1], strides = [1, 1]} : vector<128x9xf32> to vector<128x1xf32>
    %172 = tpu.reciprocal %171 {approx = true} : vector<128x1xf32> -> vector<128x1xf32>
    %173 = vector.broadcast %172 : vector<128x1xf32> to vector<128x8xf32>
    %174 = arith.mulf %170, %173 : vector<128x8xf32>
    %175 = vector.extract_strided_slice %3 {offsets = [0, 7], sizes = [128, 1], strides = [1, 1]} : vector<128x8xbf16> to vector<128x1xbf16>
    %176 = vector.extract_strided_slice %2 {offsets = [7, 0], sizes = [1, 128], strides = [1, 1]} : vector<8x128xbf16> to vector<1x128xbf16>
    %177 = vector.broadcast %175 : vector<128x1xbf16> to vector<128x128xbf16>
    %178 = vector.broadcast %176 : vector<1x128xbf16> to vector<128x128xbf16>
    %179 = arith.addf %177, %178 : vector<128x128xbf16>
    %cst_44 = arith.constant 0.000000e+00 : bf16
    %180 = vector.broadcast %cst_44 : bf16 to vector<128x128xbf16>
    %181 = arith.cmpf ogt, %179, %180 : vector<128x128xbf16>
    %cst_45 = arith.constant 2.001950e-01 : bf16
    %182 = vector.broadcast %cst_45 : bf16 to vector<128x128xbf16>
    %183 = arith.mulf %182, %179 : vector<128x128xbf16>
    %184 = arith.select %181, %179, %183 : vector<128x128xi1>, vector<128x128xbf16>
    %cst_46 = arith.constant -1.000260e+30 : bf16
    %185 = vector.broadcast %cst_46 : bf16 to vector<128x128xbf16>
    %186 = arith.select %6, %184, %185 : vector<128x128xi1>, vector<128x128xbf16>
    %cst_47 = arith.constant dense<0xFF80> : vector<128xbf16>
    %187 = vector.multi_reduction <maximumf>, %186, %cst_47 [1] : vector<128x128xbf16> to vector<128xbf16>
    %188 = vector.shape_cast %187 : vector<128xbf16> to vector<128x1xbf16>
    %189 = vector.broadcast %188 : vector<128x1xbf16> to vector<128x128xbf16>
    %190 = arith.subf %186, %189 : vector<128x128xbf16>
    %191 = math.exp %190 : vector<128x128xbf16>
    %192 = vector.extract_strided_slice %1 {offsets = [0, 63], sizes = [128, 9], strides = [1, 1]} : vector<128x72xbf16> to vector<128x9xbf16>
    %cst_48 = arith.constant dense<0.000000e+00> : vector<128x9xf32>
    %193 = tpu.matmul %191, %192, %cst_48 {dimension_numbers = #tpu.dot_dimension_numbers<[1], [0], [0], [1], [0, 0, 1, 1], [], []>} : vector<128x128xbf16>, vector<128x9xbf16>, vector<128x9xf32> -> vector<128x9xf32>
    %194 = vector.extract_strided_slice %193 {offsets = [0, 0], sizes = [128, 8], strides = [1, 1]} : vector<128x9xf32> to vector<128x8xf32>
    %195 = vector.extract_strided_slice %193 {offsets = [0, 8], sizes = [128, 1], strides = [1, 1]} : vector<128x9xf32> to vector<128x1xf32>
    %196 = tpu.reciprocal %195 {approx = true} : vector<128x1xf32> -> vector<128x1xf32>
    %197 = vector.broadcast %196 : vector<128x1xf32> to vector<128x8xf32>
    %198 = arith.mulf %194, %197 : vector<128x8xf32>
    %199 = tpu.concatenate %30, %54, %78, %102, %126, %150, %174, %198 in 1 : vector<128x8xf32>, vector<128x8xf32>, vector<128x8xf32>, vector<128x8xf32>, vector<128x8xf32>, vector<128x8xf32>, vector<128x8xf32>, vector<128x8xf32> -> vector<128x64xf32>
    %cst_49 = arith.constant 0.000000e+00 : f32
    %200 = vector.broadcast %cst_49 : f32 to vector<128x64xf32>
    %201 = tpu.concatenate %199, %200 in 1 : vector<128x64xf32>, vector<128x64xf32> -> vector<128x128xf32>
    %202 = vector.broadcast %4 : vector<1x128xf32> to vector<128x128xf32>
    %203 = arith.addf %201, %202 : vector<128x128xf32>
    %cst_50 = arith.constant 0.000000e+00 : f32
    %204 = vector.broadcast %cst_50 : f32 to vector<128x128xf32>
    %205 = arith.cmpf ogt, %203, %204 : vector<128x128xf32>
    %206 = math.exp %203 : vector<128x128xf32>
    %cst_51 = arith.constant 1.000000e+00 : f32
    %207 = vector.broadcast %cst_51 : f32 to vector<128x128xf32>
    %208 = arith.subf %206, %207 : vector<128x128xf32>
    %209 = arith.select %205, %203, %208 : vector<128x128xi1>, vector<128x128xf32>
    %c0_52 = arith.constant 0 : index
    %c0_53 = arith.constant 0 : index
    %210 = vector.load %arg6[%c0_52, %c0_53] : memref<128x128xf32, #tpu.memory_space<vmem>>, vector<128x128xf32>
    tpu.vector_store %arg6[%c0_52, %c0_53], %209 {strides = array<i32>} : memref<128x128xf32, #tpu.memory_space<vmem>>, vector<128x128xf32>,
    return
  }
  func.func @transform_0(%arg0: i32) -> (i32, i32) {
    %c0_i32 = arith.constant 0 : i32
    %c0_i32_0 = arith.constant 0 : i32
    return %arg0, %c0_i32 : i32, i32
  }
  func.func @transform_1(%arg0: i32) -> (i32, i32) {
    %c0_i32 = arith.constant 0 : i32
    %c0_i32_0 = arith.constant 0 : i32
    %c0_i32_1 = arith.constant 0 : i32
    return %c0_i32, %c0_i32_0 : i32, i32
  }
  func.func @transform_2(%arg0: i32) -> (i32, i32) {
    %c0_i32 = arith.constant 0 : i32
    %c0_i32_0 = arith.constant 0 : i32
    %c0_i32_1 = arith.constant 0 : i32
    return %c0_i32, %c0_i32_0 : i32, i32
  }
  func.func @transform_3(%arg0: i32) -> (i32, i32) {
    %c0_i32 = arith.constant 0 : i32
    %c0_i32_0 = arith.constant 0 : i32
    return %arg0, %c0_i32 : i32, i32
  }
  func.func @transform_4(%arg0: i32) -> (i32, i32) {
    %c0_i32 = arith.constant 0 : i32
    %c0_i32_0 = arith.constant 0 : i32
    %c0_i32_1 = arith.constant 0 : i32
    return %c0_i32, %c0_i32_0 : i32, i32
  }
  func.func @transform_5(%arg0: i32) -> (i32, i32) {
    %c0_i32 = arith.constant 0 : i32
    %c0_i32_0 = arith.constant 0 : i32
    return %arg0, %c0_i32 : i32, i32
  }
}

module attributes {stable_mosaic.version = 11 : i64} {
  func.func @_proj_kernel(%arg0: i32, %arg1: memref<128x128xbf16, #tpu.memory_space<vmem>>, %arg2: memref<128x128xbf16, #tpu.memory_space<vmem>>, %arg3: memref<128x128xbf16, #tpu.memory_space<vmem>>) attributes {dimension_semantics = [#tpu.dimension_semantics<parallel>], iteration_bounds = array<i64: 1>, scalar_prefetch = 0 : i64, scratch_operands = 0 : i64, tpu.core_type = #tpu.core_type<tc>, window_params = [{transform_indices = @transform_0, window_bounds = array<i64: 128, 128>}, {pipeline_mode = #tpu.pipeline_mode<synchronous>, transform_indices = @transform_1, window_bounds = array<i64: 128, 128>}, {transform_indices = @transform_2, window_bounds = array<i64: 128, 128>}]} {
    %c0 = arith.constant 0 : index
    %c0_0 = arith.constant 0 : index
    %0 = vector.load %arg1[%c0, %c0_0] : memref<128x128xbf16, #tpu.memory_space<vmem>>, vector<128x128xbf16>
    %c0_1 = arith.constant 0 : index
    %c0_2 = arith.constant 0 : index
    %1 = vector.load %arg2[%c0_1, %c0_2] : memref<128x128xbf16, #tpu.memory_space<vmem>>, vector<128x128xbf16>
    %cst = arith.constant dense<0.000000e+00> : vector<128x128xf32>
    %2 = tpu.matmul %0, %1, %cst {dimension_numbers = #tpu.dot_dimension_numbers<[1], [0], [0], [1], [0, 0, 1, 1], [], []>} : vector<128x128xbf16>, vector<128x128xbf16>, vector<128x128xf32> -> vector<128x128xf32>
    %3 = arith.truncf %2 : vector<128x128xf32> to vector<128x128xbf16>
    %c0_3 = arith.constant 0 : index
    %c0_4 = arith.constant 0 : index
    %4 = vector.load %arg3[%c0_3, %c0_4] : memref<128x128xbf16, #tpu.memory_space<vmem>>, vector<128x128xbf16>
    tpu.vector_store %arg3[%c0_3, %c0_4], %3 {strides = array<i32>} : memref<128x128xbf16, #tpu.memory_space<vmem>>, vector<128x128xbf16>,
    return
  }
  func.func @transform_0(%arg0: i32) -> (i32, i32) {
    %c0_i32 = arith.constant 0 : i32
    %c0_i32_0 = arith.constant 0 : i32
    return %arg0, %c0_i32 : i32, i32
  }
  func.func @transform_1(%arg0: i32) -> (i32, i32) {
    %c0_i32 = arith.constant 0 : i32
    %c0_i32_0 = arith.constant 0 : i32
    %c0_i32_1 = arith.constant 0 : i32
    return %c0_i32, %c0_i32_0 : i32, i32
  }
  func.func @transform_2(%arg0: i32) -> (i32, i32) {
    %c0_i32 = arith.constant 0 : i32
    %c0_i32_0 = arith.constant 0 : i32
    return %arg0, %c0_i32 : i32, i32
  }
}

module attributes {stable_mosaic.version = 11 : i64} {
  func.func @_gat_attention_kernel(%arg0: i32, %arg1: memref<128x128xbf16, #tpu.memory_space<vmem>>, %arg2: memref<128x8xbf16, #tpu.memory_space<vmem>>, %arg3: memref<1x128xbf16, #tpu.memory_space<vmem>>, %arg4: memref<128x1xbf16, #tpu.memory_space<vmem>>, %arg5: memref<1x128xf32, #tpu.memory_space<vmem>>, %arg6: memref<128x128xf32, #tpu.memory_space<vmem>>) attributes {dimension_semantics = [#tpu.dimension_semantics<parallel>], iteration_bounds = array<i64: 1>, scalar_prefetch = 0 : i64, scratch_operands = 0 : i64, tpu.core_type = #tpu.core_type<tc>, window_params = [{transform_indices = @transform_0, window_bounds = array<i64: 128, 128>}, {pipeline_mode = #tpu.pipeline_mode<synchronous>, transform_indices = @transform_1, window_bounds = array<i64: 128, 8>}, {pipeline_mode = #tpu.pipeline_mode<synchronous>, transform_indices = @transform_2, window_bounds = array<i64: 1, 128>}, {transform_indices = @transform_3, window_bounds = array<i64: 128, 1>}, {pipeline_mode = #tpu.pipeline_mode<synchronous>, transform_indices = @transform_4, window_bounds = array<i64: 1, 128>}, {transform_indices = @transform_5, window_bounds = array<i64: 128, 128>}]} {
    %c0 = arith.constant 0 : index
    %c0_0 = arith.constant 0 : index
    %0 = vector.load %arg1[%c0, %c0_0] : memref<128x128xbf16, #tpu.memory_space<vmem>>, vector<128x128xbf16>
    %c0_1 = arith.constant 0 : index
    %c0_2 = arith.constant 0 : index
    %1 = vector.load %arg2[%c0_1, %c0_2] : memref<128x8xbf16, #tpu.memory_space<vmem>>, vector<128x8xbf16>
    %c0_3 = arith.constant 0 : index
    %c0_4 = arith.constant 0 : index
    %2 = vector.load %arg3[%c0_3, %c0_4] : memref<1x128xbf16, #tpu.memory_space<vmem>>, vector<1x128xbf16>
    %c0_5 = arith.constant 0 : index
    %c0_6 = arith.constant 0 : index
    %3 = vector.load %arg4[%c0_5, %c0_6] : memref<128x1xbf16, #tpu.memory_space<vmem>>, vector<128x1xbf16>
    %c0_7 = arith.constant 0 : index
    %c0_8 = arith.constant 0 : index
    %4 = vector.load %arg5[%c0_7, %c0_8] : memref<1x128xf32, #tpu.memory_space<vmem>>, vector<1x128xf32>
    %cst = arith.constant 0.000000e+00 : bf16
    %5 = vector.broadcast %cst : bf16 to vector<128x128xbf16>
    %6 = arith.cmpf ogt, %0, %5 : vector<128x128xbf16>
    %7 = vector.broadcast %3 : vector<128x1xbf16> to vector<128x128xbf16>
    %8 = vector.broadcast %2 : vector<1x128xbf16> to vector<128x128xbf16>
    %9 = arith.addf %7, %8 : vector<128x128xbf16>
    %cst_9 = arith.constant 0.000000e+00 : bf16
    %10 = vector.broadcast %cst_9 : bf16 to vector<128x128xbf16>
    %11 = arith.cmpf ogt, %9, %10 : vector<128x128xbf16>
    %cst_10 = arith.constant 2.001950e-01 : bf16
    %12 = vector.broadcast %cst_10 : bf16 to vector<128x128xbf16>
    %13 = arith.mulf %12, %9 : vector<128x128xbf16>
    %14 = arith.select %11, %9, %13 : vector<128x128xi1>, vector<128x128xbf16>
    %cst_11 = arith.constant -1.000260e+30 : bf16
    %15 = vector.broadcast %cst_11 : bf16 to vector<128x128xbf16>
    %16 = arith.select %6, %14, %15 : vector<128x128xi1>, vector<128x128xbf16>
    %cst_12 = arith.constant dense<0xFF80> : vector<128xbf16>
    %17 = vector.multi_reduction <maximumf>, %16, %cst_12 [1] : vector<128x128xbf16> to vector<128xbf16>
    %18 = vector.shape_cast %17 : vector<128xbf16> to vector<128x1xbf16>
    %19 = vector.broadcast %18 : vector<128x1xbf16> to vector<128x128xbf16>
    %20 = arith.subf %16, %19 : vector<128x128xbf16>
    %21 = math.exp %20 : vector<128x128xbf16>
    %cst_13 = arith.constant dense<0.000000e+00> : vector<128x8xf32>
    %22 = tpu.matmul %21, %1, %cst_13 {dimension_numbers = #tpu.dot_dimension_numbers<[1], [0], [0], [1], [0, 0, 1, 1], [], []>} : vector<128x128xbf16>, vector<128x8xbf16>, vector<128x8xf32> -> vector<128x8xf32>
    %23 = vector.extract_strided_slice %22 {offsets = [0, 0], sizes = [128, 7], strides = [1, 1]} : vector<128x8xf32> to vector<128x7xf32>
    %24 = vector.extract_strided_slice %22 {offsets = [0, 7], sizes = [128, 1], strides = [1, 1]} : vector<128x8xf32> to vector<128x1xf32>
    %25 = tpu.reciprocal %24 {approx = true} : vector<128x1xf32> -> vector<128x1xf32>
    %26 = vector.broadcast %25 : vector<128x1xf32> to vector<128x7xf32>
    %27 = arith.mulf %23, %26 : vector<128x7xf32>
    %cst_14 = arith.constant 1.000000e+00 : f32
    %28 = vector.broadcast %cst_14 : f32 to vector<128x7xf32>
    %29 = arith.divf %27, %28 : vector<128x7xf32>
    %cst_15 = arith.constant 0.000000e+00 : f32
    %30 = vector.broadcast %cst_15 : f32 to vector<128x121xf32>
    %31 = tpu.concatenate %29, %30 in 1 : vector<128x7xf32>, vector<128x121xf32> -> vector<128x128xf32>
    %32 = vector.broadcast %4 : vector<1x128xf32> to vector<128x128xf32>
    %33 = arith.addf %31, %32 : vector<128x128xf32>
    %34 = tpu.iota {dimensions = array<i32: 1>} : vector<128x128xi32>
    %c7_i32 = arith.constant 7 : i32
    %35 = vector.broadcast %c7_i32 : i32 to vector<128x128xi32>
    %36 = arith.cmpi slt, %34, %35 : vector<128x128xi32>
    %cst_16 = arith.constant -1.000000e+30 : f32
    %37 = vector.broadcast %cst_16 : f32 to vector<128x128xf32>
    %38 = arith.select %36, %33, %37 : vector<128x128xi1>, vector<128x128xf32>
    %cst_17 = arith.constant dense<0xFF800000> : vector<128xf32>
    %39 = vector.multi_reduction <maximumf>, %38, %cst_17 [1] : vector<128x128xf32> to vector<128xf32>
    %40 = vector.shape_cast %39 : vector<128xf32> to vector<128x1xf32>
    %41 = vector.broadcast %40 : vector<128x1xf32> to vector<128x128xf32>
    %42 = arith.subf %33, %41 : vector<128x128xf32>
    %43 = math.exp %42 : vector<128x128xf32>
    %cst_18 = arith.constant 0.000000e+00 : f32
    %44 = vector.broadcast %cst_18 : f32 to vector<128x128xf32>
    %45 = arith.select %36, %43, %44 : vector<128x128xi1>, vector<128x128xf32>
    %cst_19 = arith.constant dense<0.000000e+00> : vector<128xf32>
    %46 = vector.multi_reduction <add>, %45, %cst_19 [1] : vector<128x128xf32> to vector<128xf32>
    %47 = vector.shape_cast %46 : vector<128xf32> to vector<128x1xf32>
    %48 = math.log %47 : vector<128x1xf32>
    %49 = arith.addf %48, %40 : vector<128x1xf32>
    %50 = vector.broadcast %49 : vector<128x1xf32> to vector<128x128xf32>
    %51 = arith.subf %33, %50 : vector<128x128xf32>
    %c0_20 = arith.constant 0 : index
    %c0_21 = arith.constant 0 : index
    %52 = vector.load %arg6[%c0_20, %c0_21] : memref<128x128xf32, #tpu.memory_space<vmem>>, vector<128x128xf32>
    tpu.vector_store %arg6[%c0_20, %c0_21], %51 {strides = array<i32>} : memref<128x128xf32, #tpu.memory_space<vmem>>, vector<128x128xf32>,
    return
  }
  func.func @transform_0(%arg0: i32) -> (i32, i32) {
    %c0_i32 = arith.constant 0 : i32
    %c0_i32_0 = arith.constant 0 : i32
    return %arg0, %c0_i32 : i32, i32
  }
  func.func @transform_1(%arg0: i32) -> (i32, i32) {
    %c0_i32 = arith.constant 0 : i32
    %c0_i32_0 = arith.constant 0 : i32
    %c0_i32_1 = arith.constant 0 : i32
    return %c0_i32, %c0_i32_0 : i32, i32
  }
  func.func @transform_2(%arg0: i32) -> (i32, i32) {
    %c0_i32 = arith.constant 0 : i32
    %c0_i32_0 = arith.constant 0 : i32
    %c0_i32_1 = arith.constant 0 : i32
    return %c0_i32, %c0_i32_0 : i32, i32
  }
  func.func @transform_3(%arg0: i32) -> (i32, i32) {
    %c0_i32 = arith.constant 0 : i32
    %c0_i32_0 = arith.constant 0 : i32
    return %arg0, %c0_i32 : i32, i32
  }
  func.func @transform_4(%arg0: i32) -> (i32, i32) {
    %c0_i32 = arith.constant 0 : i32
    %c0_i32_0 = arith.constant 0 : i32
    %c0_i32_1 = arith.constant 0 : i32
    return %c0_i32, %c0_i32_0 : i32, i32
  }
  func.func @transform_5(%arg0: i32) -> (i32, i32) {
    %c0_i32 = arith.constant 0 : i32
    %c0_i32_0 = arith.constant 0 : i32
    return %arg0, %c0_i32 : i32, i32
  }
}

</mosaic_0001>

<llo_original>
// kernel: gat_forward.4
$region0: #{gat_forward.4}
  #allocation0 [shape = 'u32[]', space=smem, size = 0x4, offset = 0x4, fixed_abs, tag = 'smem constant byte address 0x4 - core index']
  #allocation1 [shape = 'u32[144,128]{1,0:T(1,128)}', space=vmem, size = 0x12000, scoped, tag = 'internal scratch']
  %s0 = inlined_call_operand.vmem [shape: bf16[128,16], index: 0, kind: input, shape index: {}]
  %s1 = inlined_call_operand.vmem [shape: bf16[16,128], index: 1, kind: input, shape index: {}]
  %s2 = inlined_call_operand.vmem [shape: bf16[128,128], index: 2, kind: output, shape index: {}]
  %s3 = sld [smem:[#allocation0]]
  $region18: #{gat_forward.4} parent=0
    _
  %s5 = ssub.s32 1, %s3
  %s6 = scalar_select 0, %s5, %s3
  // Predicated region
  $region2: #{gat_forward.4} parent=0 // pred_check
    _
  $region3: #{gat_forward.4} parent=0 // pred_check_branch
    %8 = sbr.rel (0) target = $region5
  $region4: #{gat_forward.4} parent=0 // pred_region
    _
  $region5: #{gat_forward.4} parent=0 // pred_fallthru
    _
  // Predicated region
  $region6: #{gat_forward.4} parent=0 // pred_check
    _
  $region7: #{gat_forward.4} parent=0 // pred_check_branch
    %10 = sbr.rel (0) target = $region9
  $region8: #{gat_forward.4} parent=0 // pred_region
    _
  $region9: #{gat_forward.4} parent=0 // pred_fallthru
    _
  %v12 = vld [vmem:[%s0] sm:$0xf]
  %v13 = vld [vmem:[%s0 + $0x4] sm:$0xf]
  %v14 = vld [vmem:[%s0 + $0x8] sm:$0xf]
  %v15 = vld [vmem:[%s0 + $0xc] sm:$0xf]
  %v16 = vld [vmem:[%s0 + $0x10] sm:$0xf]
  %v17 = vld [vmem:[%s0 + $0x14] sm:$0xf]
  %v18 = vld [vmem:[%s0 + $0x18] sm:$0xf]
  %v19 = vld [vmem:[%s0 + $0x1c] sm:$0xf]
  %v20 = vld [vmem:[%s0 + $0x20] sm:$0xf]
  %v21 = vld [vmem:[%s0 + $0x24] sm:$0xf]
  %v22 = vld [vmem:[%s0 + $0x28] sm:$0xf]
  %v23 = vld [vmem:[%s0 + $0x2c] sm:$0xf]
  %v24 = vld [vmem:[%s0 + $0x30] sm:$0xf]
  %v25 = vld [vmem:[%s0 + $0x34] sm:$0xf]
  %v26 = vld [vmem:[%s0 + $0x38] sm:$0xf]
  %v27 = vld [vmem:[%s0 + $0x3c] sm:$0xf]
  %v28 = vld [vmem:[%s1] sm:$0xf]
  %v29 = vld [vmem:[%s1 + $0x4] sm:$0xf]
  %v46 = vunpack.c.l.b16 %v12
  %v47 = vunpack.c.l.b16 %v13
  %v48 = vunpack.c.l.b16 %v14
  %v49 = vunpack.c.l.b16 %v15
  %v50 = vunpack.c.l.b16 %v16
  %v51 = vunpack.c.l.b16 %v17
  %v52 = vunpack.c.l.b16 %v18
  %v53 = vunpack.c.l.b16 %v19
  %v54 = vunpack.c.l.b16 %v20
  %v55 = vunpack.c.l.b16 %v21
  %v56 = vunpack.c.l.b16 %v22
  %v57 = vunpack.c.l.b16 %v23
  %v58 = vunpack.c.l.b16 %v24
  %v59 = vunpack.c.l.b16 %v25
  %v60 = vunpack.c.l.b16 %v26
  %v61 = vunpack.c.l.b16 %v27
  %v62 = vpack.c.b16 %v47, %v46
  %v63 = vpack.c.b16 %v49, %v48
  %v64 = vpack.c.b16 %v51, %v50
  %v65 = vpack.c.b16 %v53, %v52
  %v66 = vpack.c.b16 %v55, %v54
  %v67 = vpack.c.b16 %v57, %v56
  %v68 = vpack.c.b16 %v59, %v58
  %v69 = vpack.c.b16 %v61, %v60
  %v72 = vunpack.c.l.b16 %v28
  %v73 = vunpack.c.l.b16 %v29
  %v74 = vpack.c.b16 %v73, %v72
  %vm76 = vcmask 130048
  %v78 = vsel %vm76, %v62, 0
  %v81 = vsel %vm76, %v63, 0
  %v84 = vsel %vm76, %v64, 0
  %v87 = vsel %vm76, %v65, 0
  %v90 = vsel %vm76, %v66, 0
  %v93 = vsel %vm76, %v67, 0
  %v96 = vsel %vm76, %v68, 0
  %v99 = vsel %vm76, %v69, 0
  %101 = vmatprep.subr.bf16.mxu0 0
  %102 = vmatpush1.bf16.msra.mxu0 0
  %103 = vmatprep.subr.bf16.mxu0 0
  %104 = vmatpush1.bf16.msra.mxu0 0
  %105 = vmatprep.subr.bf16.mxu0 0
  %106 = vmatpush1.bf16.msra.mxu0 0
  %107 = vmatprep.subr.bf16.mxu0 0
  %108 = vmatpush1.bf16.msra.mxu0 0
  %109 = vmatprep.subr.bf16.mxu0 0
  %110 = vmatpush1.bf16.msra.mxu0 0
  %111 = vmatprep.subr.bf16.mxu0 0
  %112 = vmatpush1.bf16.msra.mxu0 0
  %113 = vmatprep.subr.bf16.mxu0 0
  %114 = vmatpush1.bf16.msra.mxu0 0
  %115 = vmatprep.subr.bf16.mxu0 0
  %116 = vmatpush1.bf16.msra.mxu0 %v74
  %117 = vmatprep.subr.bf16.mxu0 0
  %118 = vmatpush2.bf16.msra.mxu0 0
  %119 = vmatprep.subr.bf16.mxu0 0
  %120 = vmatpush2.bf16.msra.mxu0 0
  %121 = vmatprep.subr.bf16.mxu0 0
  %122 = vmatpush2.bf16.msra.mxu0 0
  %123 = vmatprep.subr.bf16.mxu0 0
  %124 = vmatpush2.bf16.msra.mxu0 0
  %125 = vmatprep.subr.bf16.mxu0 0
  %126 = vmatpush2.bf16.msra.mxu0 0
  %127 = vmatprep.subr.bf16.mxu0 0
  %128 = vmatpush2.bf16.msra.mxu0 0
  %129 = vmatprep.subr.bf16.mxu0 0
  %130 = vmatpush2.bf16.msra.mxu0 0
  %131 = vmatprep.subr.bf16.mxu0 0
  %132 = vmatpush2.bf16.msra.mxu0 0
  %133 = vmatprep.mubr.bf16.mxu0 0
  %134 = vmatmul.mubr.bf16.gmra.mxu0 %v78
  %v135 = vpop.f32.mrf.mxu0
  %v136 = vadd.f32 0.0, %v135
  %v137 = vpop.f32.mrf.mxu0
  %v138 = vpop.f32.mrf.mxu0
  %v139 = vadd.f32 0.0, %v138
  %v140 = vpop.f32.mrf.mxu0
  %141 = vmatprep.mubr.bf16.mxu0 0
  %142 = vmatmul.mubr.bf16.gmra.mxu0 %v81
  %v143 = vpop.f32.mrf.mxu0
  %v144 = vadd.f32 0.0, %v143
  %v145 = vpop.f32.mrf.mxu0
  %v146 = vpop.f32.mrf.mxu0
  %v147 = vadd.f32 0.0, %v146
  %v148 = vpop.f32.mrf.mxu0
  %149 = vmatprep.mubr.bf16.mxu0 0
  %150 = vmatmul.mubr.bf16.gmra.mxu0 %v84
  %v151 = vpop.f32.mrf.mxu0
  %v152 = vadd.f32 0.0, %v151
  %v153 = vpop.f32.mrf.mxu0
  %v154 = vpop.f32.mrf.mxu0
  %v155 = vadd.f32 0.0, %v154
  %v156 = vpop.f32.mrf.mxu0
  %157 = vmatprep.mubr.bf16.mxu0 0
  %158 = vmatmul.mubr.bf16.gmra.mxu0 %v87
  %v159 = vpop.f32.mrf.mxu0
  %v160 = vadd.f32 0.0, %v159
  %v161 = vpop.f32.mrf.mxu0
  %v162 = vpop.f32.mrf.mxu0
  %v163 = vadd.f32 0.0, %v162
  %v164 = vpop.f32.mrf.mxu0
  %165 = vmatprep.mubr.bf16.mxu0 0
  %166 = vmatmul.mubr.bf16.gmra.mxu0 %v90
  %v167 = vpop.f32.mrf.mxu0
  %v168 = vadd.f32 0.0, %v167
  %v169 = vpop.f32.mrf.mxu0
  %v170 = vpop.f32.mrf.mxu0
  %v171 = vadd.f32 0.0, %v170
  %v172 = vpop.f32.mrf.mxu0
  %173 = vmatprep.mubr.bf16.mxu0 0
  %174 = vmatmul.mubr.bf16.gmra.mxu0 %v93
  %v175 = vpop.f32.mrf.mxu0
  %v176 = vadd.f32 0.0, %v175
  %v177 = vpop.f32.mrf.mxu0
  %v178 = vpop.f32.mrf.mxu0
  %v179 = vadd.f32 0.0, %v178
  %v180 = vpop.f32.mrf.mxu0
  %181 = vmatprep.mubr.bf16.mxu0 0
  %182 = vmatmul.mubr.bf16.gmra.mxu0 %v96
  %v183 = vpop.f32.mrf.mxu0
  %v184 = vadd.f32 0.0, %v183
  %v185 = vpop.f32.mrf.mxu0
  %v186 = vpop.f32.mrf.mxu0
  %v187 = vadd.f32 0.0, %v186
  %v188 = vpop.f32.mrf.mxu0
  %189 = vmatprep.mubr.bf16.mxu0 0
  %190 = vmatmul.mubr.bf16.gmra.mxu0 %v99
  %v191 = vpop.f32.mrf.mxu0
  %v192 = vadd.f32 0.0, %v191
  %v193 = vpop.f32.mrf.mxu0
  %v194 = vpop.f32.mrf.mxu0
  %v195 = vadd.f32 0.0, %v194
  %v196 = vpop.f32.mrf.mxu0
  %197 = vdwg.mxu0
  %v198 = vpack.c.bf16 %v139, %v136
  %v199 = vpack.c.bf16 %v147, %v144
  %v200 = vpack.c.bf16 %v155, %v152
  %v201 = vpack.c.bf16 %v163, %v160
  %v202 = vpack.c.bf16 %v171, %v168
  %v203 = vpack.c.bf16 %v179, %v176
  %v204 = vpack.c.bf16 %v187, %v184
  %v205 = vpack.c.bf16 %v195, %v192
  %v214 = vunpack.c.l.b16 %v198
  %v215 = vunpack.c.h.b16 %v198
  %v216 = vunpack.c.l.b16 %v199
  %v217 = vunpack.c.h.b16 %v199
  %v218 = vunpack.c.l.b16 %v200
  %v219 = vunpack.c.h.b16 %v200
  %v220 = vunpack.c.l.b16 %v201
  %v221 = vunpack.c.h.b16 %v201
  %v222 = vunpack.c.l.b16 %v202
  %v223 = vunpack.c.h.b16 %v202
  %v224 = vunpack.c.l.b16 %v203
  %v225 = vunpack.c.h.b16 %v203
  %v226 = vunpack.c.l.b16 %v204
  %v227 = vunpack.c.h.b16 %v204
  %v228 = vunpack.c.l.b16 %v205
  %v229 = vunpack.c.h.b16 %v205
  %v230 = vpack.c.b16 %v214, %v214
  %v231 = vpack.c.b16 %v215, %v215
  %v232 = vpack.c.b16 %v216, %v216
  %v233 = vpack.c.b16 %v217, %v217
  %v234 = vpack.c.b16 %v218, %v218
  %v235 = vpack.c.b16 %v219, %v219
  %v236 = vpack.c.b16 %v220, %v220
  %v237 = vpack.c.b16 %v221, %v221
  %v238 = vpack.c.b16 %v222, %v222
  %v239 = vpack.c.b16 %v223, %v223
  %v240 = vpack.c.b16 %v224, %v224
  %v241 = vpack.c.b16 %v225, %v225
  %v242 = vpack.c.b16 %v226, %v226
  %v243 = vpack.c.b16 %v227, %v227
  %v244 = vpack.c.b16 %v228, %v228
  %v245 = vpack.c.b16 %v229, %v229
  %262 = vst [vmem:[%s2] sm:$0xf] %v230
  %263 = vst [vmem:[%s2 + $0x4] sm:$0xf] %v231
  %264 = vst [vmem:[%s2 + $0x8] sm:$0xf] %v232
  %265 = vst [vmem:[%s2 + $0xc] sm:$0xf] %v233
  %266 = vst [vmem:[%s2 + $0x10] sm:$0xf] %v234
  %267 = vst [vmem:[%s2 + $0x14] sm:$0xf] %v235
  %268 = vst [vmem:[%s2 + $0x18] sm:$0xf] %v236
  %269 = vst [vmem:[%s2 + $0x1c] sm:$0xf] %v237
  %270 = vst [vmem:[%s2 + $0x20] sm:$0xf] %v238
  %271 = vst [vmem:[%s2 + $0x24] sm:$0xf] %v239
  %272 = vst [vmem:[%s2 + $0x28] sm:$0xf] %v240
  %273 = vst [vmem:[%s2 + $0x2c] sm:$0xf] %v241
  %274 = vst [vmem:[%s2 + $0x30] sm:$0xf] %v242
  %275 = vst [vmem:[%s2 + $0x34] sm:$0xf] %v243
  %276 = vst [vmem:[%s2 + $0x38] sm:$0xf] %v244
  %277 = vst [vmem:[%s2 + $0x3c] sm:$0xf] %v245
  // Predicated region
  $region10: #{gat_forward.4} parent=0 // pred_check
    _
  $region11: #{gat_forward.4} parent=0 // pred_check_branch
    %279 = sbr.rel (0) target = $region13
  $region12: #{gat_forward.4} parent=0 // pred_region
    _
  $region13: #{gat_forward.4} parent=0 // pred_fallthru
    _
  // Predicated region
  $region14: #{gat_forward.4} parent=0 // pred_check
    _
  $region15: #{gat_forward.4} parent=0 // pred_check_branch
    %281 = sbr.rel (0) target = $region17
  $region16: #{gat_forward.4} parent=0 // pred_region
    _
  $region17: #{gat_forward.4} parent=0 // pred_fallthru
    _

// kernel: gat_forward.6
$region0: #{gat_forward.6}
  #allocation0 [shape = 'u32[]', space=smem, size = 0x4, offset = 0x4, fixed_abs, tag = 'smem constant byte address 0x4 - core index']
  #allocation1 [shape = 'u32[144,128]{1,0:T(1,128)}', space=vmem, size = 0x12000, scoped, tag = 'internal scratch']
  %s0 = inlined_call_operand.vmem [shape: bf16[128,128], index: 0, kind: input, shape index: {}]
  %s1 = inlined_call_operand.vmem [shape: bf16[128,128], index: 1, kind: input, shape index: {}]
  %s2 = inlined_call_operand.vmem [shape: bf16[128,128], index: 2, kind: output, shape index: {}]
  %s3 = sld [smem:[#allocation0]]
  $region18: #{gat_forward.6} parent=0
    _
  %s5 = ssub.s32 1, %s3
  %s6 = scalar_select 0, %s5, %s3
  // Predicated region
  $region2: #{gat_forward.6} parent=0 // pred_check
    _
  $region3: #{gat_forward.6} parent=0 // pred_check_branch
    %8 = sbr.rel (0) target = $region5
  $region4: #{gat_forward.6} parent=0 // pred_region
    _
  $region5: #{gat_forward.6} parent=0 // pred_fallthru
    _
  // Predicated region
  $region6: #{gat_forward.6} parent=0 // pred_check
    _
  $region7: #{gat_forward.6} parent=0 // pred_check_branch
    %10 = sbr.rel (0) target = $region9
  $region8: #{gat_forward.6} parent=0 // pred_region
    _
  $region9: #{gat_forward.6} parent=0 // pred_fallthru
    _
  %v12 = vld [vmem:[%s0] sm:$0xf]
  %v13 = vld [vmem:[%s0 + $0x4] sm:$0xf]
  %v14 = vld [vmem:[%s0 + $0x8] sm:$0xf]
  %v15 = vld [vmem:[%s0 + $0xc] sm:$0xf]
  %v16 = vld [vmem:[%s0 + $0x10] sm:$0xf]
  %v17 = vld [vmem:[%s0 + $0x14] sm:$0xf]
  %v18 = vld [vmem:[%s0 + $0x18] sm:$0xf]
  %v19 = vld [vmem:[%s0 + $0x1c] sm:$0xf]
  %v20 = vld [vmem:[%s0 + $0x20] sm:$0xf]
  %v21 = vld [vmem:[%s0 + $0x24] sm:$0xf]
  %v22 = vld [vmem:[%s0 + $0x28] sm:$0xf]
  %v23 = vld [vmem:[%s0 + $0x2c] sm:$0xf]
  %v24 = vld [vmem:[%s0 + $0x30] sm:$0xf]
  %v25 = vld [vmem:[%s0 + $0x34] sm:$0xf]
  %v26 = vld [vmem:[%s0 + $0x38] sm:$0xf]
  %v27 = vld [vmem:[%s0 + $0x3c] sm:$0xf]
  %v28 = vld [vmem:[%s1] sm:$0xf]
  %v29 = vld [vmem:[%s1 + $0x4] sm:$0xf]
  %v30 = vld [vmem:[%s1 + $0x8] sm:$0xf]
  %v31 = vld [vmem:[%s1 + $0xc] sm:$0xf]
  %v32 = vld [vmem:[%s1 + $0x10] sm:$0xf]
  %v33 = vld [vmem:[%s1 + $0x14] sm:$0xf]
  %v34 = vld [vmem:[%s1 + $0x18] sm:$0xf]
  %v35 = vld [vmem:[%s1 + $0x1c] sm:$0xf]
  %v36 = vld [vmem:[%s1 + $0x20] sm:$0xf]
  %v37 = vld [vmem:[%s1 + $0x24] sm:$0xf]
  %v38 = vld [vmem:[%s1 + $0x28] sm:$0xf]
  %v39 = vld [vmem:[%s1 + $0x2c] sm:$0xf]
  %v40 = vld [vmem:[%s1 + $0x30] sm:$0xf]
  %v41 = vld [vmem:[%s1 + $0x34] sm:$0xf]
  %v42 = vld [vmem:[%s1 + $0x38] sm:$0xf]
  %v43 = vld [vmem:[%s1 + $0x3c] sm:$0xf]
  %v60 = vunpack.c.l.b16 %v12
  %v61 = vunpack.c.l.b16 %v13
  %v62 = vunpack.c.l.b16 %v14
  %v63 = vunpack.c.l.b16 %v15
  %v64 = vunpack.c.l.b16 %v16
  %v65 = vunpack.c.l.b16 %v17
  %v66 = vunpack.c.l.b16 %v18
  %v67 = vunpack.c.l.b16 %v19
  %v68 = vunpack.c.l.b16 %v20
  %v69 = vunpack.c.l.b16 %v21
  %v70 = vunpack.c.l.b16 %v22
  %v71 = vunpack.c.l.b16 %v23
  %v72 = vunpack.c.l.b16 %v24
  %v73 = vunpack.c.l.b16 %v25
  %v74 = vunpack.c.l.b16 %v26
  %v75 = vunpack.c.l.b16 %v27
  %v76 = vpack.c.b16 %v61, %v60
  %v77 = vpack.c.b16 %v63, %v62
  %v78 = vpack.c.b16 %v65, %v64
  %v79 = vpack.c.b16 %v67, %v66
  %v80 = vpack.c.b16 %v69, %v68
  %v81 = vpack.c.b16 %v71, %v70
  %v82 = vpack.c.b16 %v73, %v72
  %v83 = vpack.c.b16 %v75, %v74
  %v108 = vunpack.c.l.b16 %v28
  %v109 = vunpack.c.l.b16 %v29
  %v110 = vunpack.c.l.b16 %v30
  %v111 = vunpack.c.l.b16 %v31
  %v112 = vunpack.c.l.b16 %v32
  %v113 = vunpack.c.l.b16 %v33
  %v114 = vunpack.c.l.b16 %v34
  %v115 = vunpack.c.l.b16 %v35
  %v116 = vunpack.c.l.b16 %v36
  %v117 = vunpack.c.l.b16 %v37
  %v118 = vunpack.c.l.b16 %v38
  %v119 = vunpack.c.l.b16 %v39
  %v120 = vunpack.c.l.b16 %v40
  %v121 = vunpack.c.l.b16 %v41
  %v122 = vunpack.c.l.b16 %v42
  %v123 = vunpack.c.l.b16 %v43
  %v124 = vpack.c.b16 %v109, %v108
  %v125 = vpack.c.b16 %v111, %v110
  %v126 = vpack.c.b16 %v113, %v112
  %v127 = vpack.c.b16 %v115, %v114
  %v128 = vpack.c.b16 %v117, %v116
  %v129 = vpack.c.b16 %v119, %v118
  %v130 = vpack.c.b16 %v121, %v120
  %v131 = vpack.c.b16 %v123, %v122
  %140 = vmatprep.subr.bf16.mxu0 0
  %141 = vmatpush1.bf16.msra.mxu0 %v131
  %142 = vmatprep.subr.bf16.mxu0 0
  %143 = vmatpush1.bf16.msra.mxu0 %v130
  %144 = vmatprep.subr.bf16.mxu0 0
  %145 = vmatpush1.bf16.msra.mxu0 %v129
  %146 = vmatprep.subr.bf16.mxu0 0
  %147 = vmatpush1.bf16.msra.mxu0 %v128
  %148 = vmatprep.subr.bf16.mxu0 0
  %149 = vmatpush1.bf16.msra.mxu0 %v127
  %150 = vmatprep.subr.bf16.mxu0 0
  %151 = vmatpush1.bf16.msra.mxu0 %v126
  %152 = vmatprep.subr.bf16.mxu0 0
  %153 = vmatpush1.bf16.msra.mxu0 %v125
  %154 = vmatprep.subr.bf16.mxu0 0
  %155 = vmatpush1.bf16.msra.mxu0 %v124
  %156 = vmatprep.subr.bf16.mxu0 0
  %157 = vmatpush2.bf16.msra.mxu0 0
  %158 = vmatprep.subr.bf16.mxu0 0
  %159 = vmatpush2.bf16.msra.mxu0 0
  %160 = vmatprep.subr.bf16.mxu0 0
  %161 = vmatpush2.bf16.msra.mxu0 0
  %162 = vmatprep.subr.bf16.mxu0 0
  %163 = vmatpush2.bf16.msra.mxu0 0
  %164 = vmatprep.subr.bf16.mxu0 0
  %165 = vmatpush2.bf16.msra.mxu0 0
  %166 = vmatprep.subr.bf16.mxu0 0
  %167 = vmatpush2.bf16.msra.mxu0 0
  %168 = vmatprep.subr.bf16.mxu0 0
  %169 = vmatpush2.bf16.msra.mxu0 0
  %170 = vmatprep.subr.bf16.mxu0 0
  %171 = vmatpush2.bf16.msra.mxu0 0
  %172 = vmatprep.mubr.bf16.mxu0 0
  %173 = vmatmul.mubr.bf16.gmra.mxu0 %v76
  %v174 = vpop.f32.mrf.mxu0
  %v175 = vadd.f32 0.0, %v174
  %v176 = vpop.f32.mrf.mxu0
  %v177 = vpop.f32.mrf.mxu0
  %v178 = vadd.f32 0.0, %v177
  %v179 = vpop.f32.mrf.mxu0
  %180 = vmatprep.mubr.bf16.mxu0 0
  %181 = vmatmul.mubr.bf16.gmra.mxu0 %v77
  %v182 = vpop.f32.mrf.mxu0
  %v183 = vadd.f32 0.0, %v182
  %v184 = vpop.f32.mrf.mxu0
  %v185 = vpop.f32.mrf.mxu0
  %v186 = vadd.f32 0.0, %v185
  %v187 = vpop.f32.mrf.mxu0
  %188 = vmatprep.mubr.bf16.mxu0 0
  %189 = vmatmul.mubr.bf16.gmra.mxu0 %v78
  %v190 = vpop.f32.mrf.mxu0
  %v191 = vadd.f32 0.0, %v190
  %v192 = vpop.f32.mrf.mxu0
  %v193 = vpop.f32.mrf.mxu0
  %v194 = vadd.f32 0.0, %v193
  %v195 = vpop.f32.mrf.mxu0
  %196 = vmatprep.mubr.bf16.mxu0 0
  %197 = vmatmul.mubr.bf16.gmra.mxu0 %v79
  %v198 = vpop.f32.mrf.mxu0
  %v199 = vadd.f32 0.0, %v198
  %v200 = vpop.f32.mrf.mxu0
  %v201 = vpop.f32.mrf.mxu0
  %v202 = vadd.f32 0.0, %v201
  %v203 = vpop.f32.mrf.mxu0
  %204 = vmatprep.mubr.bf16.mxu0 0
  %205 = vmatmul.mubr.bf16.gmra.mxu0 %v80
  %v206 = vpop.f32.mrf.mxu0
  %v207 = vadd.f32 0.0, %v206
  %v208 = vpop.f32.mrf.mxu0
  %v209 = vpop.f32.mrf.mxu0
  %v210 = vadd.f32 0.0, %v209
  %v211 = vpop.f32.mrf.mxu0
  %212 = vmatprep.mubr.bf16.mxu0 0
  %213 = vmatmul.mubr.bf16.gmra.mxu0 %v81
  %v214 = vpop.f32.mrf.mxu0
  %v215 = vadd.f32 0.0, %v214
  %v216 = vpop.f32.mrf.mxu0
  %v217 = vpop.f32.mrf.mxu0
  %v218 = vadd.f32 0.0, %v217
  %v219 = vpop.f32.mrf.mxu0
  %220 = vmatprep.mubr.bf16.mxu0 0
  %221 = vmatmul.mubr.bf16.gmra.mxu0 %v82
  %v222 = vpop.f32.mrf.mxu0
  %v223 = vadd.f32 0.0, %v222
  %v224 = vpop.f32.mrf.mxu0
  %v225 = vpop.f32.mrf.mxu0
  %v226 = vadd.f32 0.0, %v225
  %v227 = vpop.f32.mrf.mxu0
  %228 = vmatprep.mubr.bf16.mxu0 0
  %229 = vmatmul.mubr.bf16.gmra.mxu0 %v83
  %v230 = vpop.f32.mrf.mxu0
  %v231 = vadd.f32 0.0, %v230
  %v232 = vpop.f32.mrf.mxu0
  %v233 = vpop.f32.mrf.mxu0
  %v234 = vadd.f32 0.0, %v233
  %v235 = vpop.f32.mrf.mxu0
  %236 = vdwg.mxu0
  %v237 = vpack.c.bf16 %v178, %v175
  %v238 = vpack.c.bf16 %v186, %v183
  %v239 = vpack.c.bf16 %v194, %v191
  %v240 = vpack.c.bf16 %v202, %v199
  %v241 = vpack.c.bf16 %v210, %v207
  %v242 = vpack.c.bf16 %v218, %v215
  %v243 = vpack.c.bf16 %v226, %v223
  %v244 = vpack.c.bf16 %v234, %v231
  %v253 = vunpack.c.l.b16 %v237
  %v254 = vunpack.c.h.b16 %v237
  %v255 = vunpack.c.l.b16 %v238
  %v256 = vunpack.c.h.b16 %v238
  %v257 = vunpack.c.l.b16 %v239
  %v258 = vunpack.c.h.b16 %v239
  %v259 = vunpack.c.l.b16 %v240
  %v260 = vunpack.c.h.b16 %v240
  %v261 = vunpack.c.l.b16 %v241
  %v262 = vunpack.c.h.b16 %v241
  %v263 = vunpack.c.l.b16 %v242
  %v264 = vunpack.c.h.b16 %v242
  %v265 = vunpack.c.l.b16 %v243
  %v266 = vunpack.c.h.b16 %v243
  %v267 = vunpack.c.l.b16 %v244
  %v268 = vunpack.c.h.b16 %v244
  %v269 = vpack.c.b16 %v253, %v253
  %v270 = vpack.c.b16 %v254, %v254
  %v271 = vpack.c.b16 %v255, %v255
  %v272 = vpack.c.b16 %v256, %v256
  %v273 = vpack.c.b16 %v257, %v257
  %v274 = vpack.c.b16 %v258, %v258
  %v275 = vpack.c.b16 %v259, %v259
  %v276 = vpack.c.b16 %v260, %v260
  %v277 = vpack.c.b16 %v261, %v261
  %v278 = vpack.c.b16 %v262, %v262
  %v279 = vpack.c.b16 %v263, %v263
  %v280 = vpack.c.b16 %v264, %v264
  %v281 = vpack.c.b16 %v265, %v265
  %v282 = vpack.c.b16 %v266, %v266
  %v283 = vpack.c.b16 %v267, %v267
  %v284 = vpack.c.b16 %v268, %v268
  %301 = vst [vmem:[%s2] sm:$0xf] %v269
  %302 = vst [vmem:[%s2 + $0x4] sm:$0xf] %v270
  %303 = vst [vmem:[%s2 + $0x8] sm:$0xf] %v271
  %304 = vst [vmem:[%s2 + $0xc] sm:$0xf] %v272
  %305 = vst [vmem:[%s2 + $0x10] sm:$0xf] %v273
  %306 = vst [vmem:[%s2 + $0x14] sm:$0xf] %v274
  %307 = vst [vmem:[%s2 + $0x18] sm:$0xf] %v275
  %308 = vst [vmem:[%s2 + $0x1c] sm:$0xf] %v276
  %309 = vst [vmem:[%s2 + $0x20] sm:$0xf] %v277
  %310 = vst [vmem:[%s2 + $0x24] sm:$0xf] %v278
  %311 = vst [vmem:[%s2 + $0x28] sm:$0xf] %v279
  %312 = vst [vmem:[%s2 + $0x2c] sm:$0xf] %v280
  %313 = vst [vmem:[%s2 + $0x30] sm:$0xf] %v281
  %314 = vst [vmem:[%s2 + $0x34] sm:$0xf] %v282
  %315 = vst [vmem:[%s2 + $0x38] sm:$0xf] %v283
  %316 = vst [vmem:[%s2 + $0x3c] sm:$0xf] %v284
  // Predicated region
  $region10: #{gat_forward.6} parent=0 // pred_check
    _
  $region11: #{gat_forward.6} parent=0 // pred_check_branch
    %318 = sbr.rel (0) target = $region13
  $region12: #{gat_forward.6} parent=0 // pred_region
    _
  $region13: #{gat_forward.6} parent=0 // pred_fallthru
    _
  // Predicated region
  $region14: #{gat_forward.6} parent=0 // pred_check
    _
  $region15: #{gat_forward.6} parent=0 // pred_check_branch
    %320 = sbr.rel (0) target = $region17
  $region16: #{gat_forward.6} parent=0 // pred_region
    _
  $region17: #{gat_forward.6} parent=0 // pred_fallthru
    _

// kernel: gat_forward.7
$region0: #{gat_forward.7}
  #allocation0 [shape = 'u32[]', space=smem, size = 0x4, offset = 0x4, fixed_abs, tag = 'smem constant byte address 0x4 - core index']
  #allocation1 [shape = 'u32[144,128]{1,0:T(1,128)}', space=vmem, size = 0x12000, scoped, tag = 'internal scratch']
  %s0 = inlined_call_operand.vmem [shape: bf16[128,128], index: 0, kind: input, shape index: {}]
  %s1 = inlined_call_operand.vmem [shape: bf16[128,8], index: 1, kind: input, shape index: {}]
  %s2 = inlined_call_operand.vmem [shape: bf16[1,128], index: 2, kind: input, shape index: {}]
  %s3 = inlined_call_operand.vmem [shape: bf16[128,1], index: 3, kind: input, shape index: {}]
  %s4 = inlined_call_operand.vmem [shape: f32[1,128], index: 4, kind: input, shape index: {}]
  %s5 = inlined_call_operand.vmem [shape: f32[128,128], index: 5, kind: output, shape index: {}]
  %s6 = sld [smem:[#allocation0]]
  $region30: #{gat_forward.7} parent=0
    _
  %s8 = ssub.s32 1, %s6
  %s9 = scalar_select 0, %s8, %s6
  // Predicated region
  $region2: #{gat_forward.7} parent=0 // pred_check
    _
  $region3: #{gat_forward.7} parent=0 // pred_check_branch
    %11 = sbr.rel (0) target = $region5
  $region4: #{gat_forward.7} parent=0 // pred_region
    _
  $region5: #{gat_forward.7} parent=0 // pred_fallthru
    _
  // Predicated region
  $region6: #{gat_forward.7} parent=0 // pred_check
    _
  $region7: #{gat_forward.7} parent=0 // pred_check_branch
    %13 = sbr.rel (0) target = $region9
  $region8: #{gat_forward.7} parent=0 // pred_region
    _
  $region9: #{gat_forward.7} parent=0 // pred_fallthru
    _
  // Predicated region
  $region10: #{gat_forward.7} parent=0 // pred_check
    _
  $region11: #{gat_forward.7} parent=0 // pred_check_branch
    %15 = sbr.rel (0) target = $region13
  $region12: #{gat_forward.7} parent=0 // pred_region
    _
  $region13: #{gat_forward.7} parent=0 // pred_fallthru
    _
  // Predicated region
  $region14: #{gat_forward.7} parent=0 // pred_check
    _
  $region15: #{gat_forward.7} parent=0 // pred_check_branch
    %17 = sbr.rel (0) target = $region17
  $region16: #{gat_forward.7} parent=0 // pred_region
    _
  $region17: #{gat_forward.7} parent=0 // pred_fallthru
    _
  // Predicated region
  $region18: #{gat_forward.7} parent=0 // pred_check
    _
  $region19: #{gat_forward.7} parent=0 // pred_check_branch
    %19 = sbr.rel (0) target = $region21
  $region20: #{gat_forward.7} parent=0 // pred_region
    _
  $region21: #{gat_forward.7} parent=0 // pred_fallthru
    _
  %v23 = vld [vmem:[%s0] sm:$0xf]
  %v24 = vld [vmem:[%s0 + $0x4] sm:$0xf]
  %v25 = vld [vmem:[%s0 + $0x8] sm:$0xf]
  %v26 = vld [vmem:[%s0 + $0xc] sm:$0xf]
  %v27 = vld [vmem:[%s0 + $0x10] sm:$0xf]
  %v28 = vld [vmem:[%s0 + $0x14] sm:$0xf]
  %v29 = vld [vmem:[%s0 + $0x18] sm:$0xf]
  %v30 = vld [vmem:[%s0 + $0x1c] sm:$0xf]
  %v31 = vld [vmem:[%s0 + $0x20] sm:$0xf]
  %v32 = vld [vmem:[%s0 + $0x24] sm:$0xf]
  %v33 = vld [vmem:[%s0 + $0x28] sm:$0xf]
  %v34 = vld [vmem:[%s0 + $0x2c] sm:$0xf]
  %v35 = vld [vmem:[%s0 + $0x30] sm:$0xf]
  %v36 = vld [vmem:[%s0 + $0x34] sm:$0xf]
  %v37 = vld [vmem:[%s0 + $0x38] sm:$0xf]
  %v38 = vld [vmem:[%s0 + $0x3c] sm:$0xf]
  %v39 = vld [vmem:[%s1] sm:$0xf]
  %v40 = vld [vmem:[%s1 + $0x4] sm:$0xf]
  %v41 = vld [vmem:[%s1 + $0x8] sm:$0xf]
  %v42 = vld [vmem:[%s1 + $0xc] sm:$0xf]
  %v43 = vld [vmem:[%s1 + $0x10] sm:$0xf]
  %v44 = vld [vmem:[%s1 + $0x14] sm:$0xf]
  %v45 = vld [vmem:[%s1 + $0x18] sm:$0xf]
  %v46 = vld [vmem:[%s1 + $0x1c] sm:$0xf]
  %v47 = vld [vmem:[%s1 + $0x20] sm:$0xf]
  %v48 = vld [vmem:[%s1 + $0x24] sm:$0xf]
  %v49 = vld [vmem:[%s1 + $0x28] sm:$0xf]
  %v50 = vld [vmem:[%s1 + $0x2c] sm:$0xf]
  %v51 = vld [vmem:[%s1 + $0x30] sm:$0xf]
  %v52 = vld [vmem:[%s1 + $0x34] sm:$0xf]
  %v53 = vld [vmem:[%s1 + $0x38] sm:$0xf]
  %v54 = vld [vmem:[%s1 + $0x3c] sm:$0xf]
  %v55 = vld [vmem:[%s2] sm:$0x1]
  %v56 = vld [vmem:[%s3] sm:$0xf]
  %v57 = vld [vmem:[%s3 + $0x4] sm:$0xf]
  %v58 = vld [vmem:[%s3 + $0x8] sm:$0xf]
  %v59 = vld [vmem:[%s3 + $0xc] sm:$0xf]
  %v60 = vld [vmem:[%s3 + $0x10] sm:$0xf]
  %v61 = vld [vmem:[%s3 + $0x14] sm:$0xf]
  %v62 = vld [vmem:[%s3 + $0x18] sm:$0xf]
  %v63 = vld [vmem:[%s3 + $0x1c] sm:$0xf]
  %v64 = vld [vmem:[%s3 + $0x20] sm:$0xf]
  %v65 = vld [vmem:[%s3 + $0x24] sm:$0xf]
  %v66 = vld [vmem:[%s3 + $0x28] sm:$0xf]
  %v67 = vld [vmem:[%s3 + $0x2c] sm:$0xf]
  %v68 = vld [vmem:[%s3 + $0x30] sm:$0xf]
  %v69 = vld [vmem:[%s3 + $0x34] sm:$0xf]
  %v70 = vld [vmem:[%s3 + $0x38] sm:$0xf]
  %v71 = vld [vmem:[%s3 + $0x3c] sm:$0xf]
  %v72 = vld [vmem:[%s4] sm:$0x1]
  %vm73 = vcmp.gt.bf16.partialorder %v23, 0
  %vm74 = vcmp.gt.bf16.partialorder %v24, 0
  %vm75 = vcmp.gt.bf16.partialorder %v25, 0
  %vm76 = vcmp.gt.bf16.partialorder %v26, 0
  %vm77 = vcmp.gt.bf16.partialorder %v27, 0
  %vm78 = vcmp.gt.bf16.partialorder %v28, 0
  %vm79 = vcmp.gt.bf16.partialorder %v29, 0
  %vm80 = vcmp.gt.bf16.partialorder %v30, 0
  %vm81 = vcmp.gt.bf16.partialorder %v31, 0
  %vm82 = vcmp.gt.bf16.partialorder %v32, 0
  %vm83 = vcmp.gt.bf16.partialorder %v33, 0
  %vm84 = vcmp.gt.bf16.partialorder %v34, 0
  %vm85 = vcmp.gt.bf16.partialorder %v35, 0
  %vm86 = vcmp.gt.bf16.partialorder %v36, 0
  %vm87 = vcmp.gt.bf16.partialorder %v37, 0
  %vm88 = vcmp.gt.bf16.partialorder %v38, 0
  %90 = vset.pattern.permute.xlu0 0
  %91 = vperm.xlu0 %90, %v56
  %v92 = vpop.permute.xlu0 %91
  %v95 = vunpack.c.l.s4 839922192
  %v96 = vunpack.c.0.s8 %v95
  %v97 = vlaneseq
  %v98 = vshrl.u32 %v97, 7
  %v99 = vsub.s32 %v96, %v98
  %v100 = vrot.slane %v92, %v99
  %102 = vset.pattern.permute.xlu0 0
  %103 = vperm.xlu0 %102, %v57
  %v104 = vpop.permute.xlu0 %103
  %v107 = vunpack.c.l.s4 839922192
  %v108 = vunpack.c.0.s8 %v107
  %v109 = vlaneseq
  %v110 = vshrl.u32 %v109, 7
  %v111 = vsub.s32 %v108, %v110
  %v112 = vrot.slane %v104, %v111
  %114 = vset.pattern.permute.xlu0 0
  %115 = vperm.xlu0 %114, %v58
  %v116 = vpop.permute.xlu0 %115
  %v119 = vunpack.c.l.s4 839922192
  %v120 = vunpack.c.0.s8 %v119
  %v121 = vlaneseq
  %v122 = vshrl.u32 %v121, 7
  %v123 = vsub.s32 %v120, %v122
  %v124 = vrot.slane %v116, %v123
  %126 = vset.pattern.permute.xlu0 0
  %127 = vperm.xlu0 %126, %v59
  %v128 = vpop.permute.xlu0 %127
  %v131 = vunpack.c.l.s4 839922192
  %v132 = vunpack.c.0.s8 %v131
  %v133 = vlaneseq
  %v134 = vshrl.u32 %v133, 7
  %v135 = vsub.s32 %v132, %v134
  %v136 = vrot.slane %v128, %v135
  %138 = vset.pattern.permute.xlu0 0
  %139 = vperm.xlu0 %138, %v60
  %v140 = vpop.permute.xlu0 %139
  %v143 = vunpack.c.l.s4 839922192
  %v144 = vunpack.c.0.s8 %v143
  %v145 = vlaneseq
  %v146 = vshrl.u32 %v145, 7
  %v147 = vsub.s32 %v144, %v146
  %v148 = vrot.slane %v140, %v147
  %150 = vset.pattern.permute.xlu0 0
  %151 = vperm.xlu0 %150, %v61
  %v152 = vpop.permute.xlu0 %151
  %v155 = vunpack.c.l.s4 839922192
  %v156 = vunpack.c.0.s8 %v155
  %v157 = vlaneseq
  %v158 = vshrl.u32 %v157, 7
  %v159 = vsub.s32 %v156, %v158
  %v160 = vrot.slane %v152, %v159
  %162 = vset.pattern.permute.xlu0 0
  %163 = vperm.xlu0 %162, %v62
  %v164 = vpop.permute.xlu0 %163
  %v167 = vunpack.c.l.s4 839922192
  %v168 = vunpack.c.0.s8 %v167
  %v169 = vlaneseq
  %v170 = vshrl.u32 %v169, 7
  %v171 = vsub.s32 %v168, %v170
  %v172 = vrot.slane %v164, %v171
  %174 = vset.pattern.permute.xlu0 0
  %175 = vperm.xlu0 %174, %v63
  %v176 = vpop.permute.xlu0 %175
  %v179 = vunpack.c.l.s4 839922192
  %v180 = vunpack.c.0.s8 %v179
  %v181 = vlaneseq
  %v182 = vshrl.u32 %v181, 7
  %v183 = vsub.s32 %v180, %v182
  %v184 = vrot.slane %v176, %v183
  %186 = vset.pattern.permute.xlu0 0
  %187 = vperm.xlu0 %186, %v64
  %v188 = vpop.permute.xlu0 %187
  %v191 = vunpack.c.l.s4 839922192
  %v192 = vunpack.c.0.s8 %v191
  %v193 = vlaneseq
  %v194 = vshrl.u32 %v193, 7
  %v195 = vsub.s32 %v192, %v194
  %v196 = vrot.slane %v188, %v195
  %198 = vset.pattern.permute.xlu0 0
  %199 = vperm.xlu0 %198, %v65
  %v200 = vpop.permute.xlu0 %199
  %v203 = vunpack.c.l.s4 839922192
  %v204 = vunpack.c.0.s8 %v203
  %v205 = vlaneseq
  %v206 = vshrl.u32 %v205, 7
  %v207 = vsub.s32 %v204, %v206
  %v208 = vrot.slane %v200, %v207
  %210 = vset.pattern.permute.xlu0 0
  %211 = vperm.xlu0 %210, %v66
  %v212 = vpop.permute.xlu0 %211
  %v215 = vunpack.c.l.s4 839922192
  %v216 = vunpack.c.0.s8 %v215
  %v217 = vlaneseq
  %v218 = vshrl.u32 %v217, 7
  %v219 = vsub.s32 %v216, %v218
  %v220 = vrot.slane %v212, %v219
  %222 = vset.pattern.permute.xlu0 0
  %223 = vperm.xlu0 %222, %v67
  %v224 = vpop.permute.xlu0 %223
  %v227 = vunpack.c.l.s4 839922192
  %v228 = vunpack.c.0.s8 %v227
  %v229 = vlaneseq
  %v230 = vshrl.u32 %v229, 7
  %v231 = vsub.s32 %v228, %v230
  %v232 = vrot.slane %v224, %v231
  %234 = vset.pattern.permute.xlu0 0
  %235 = vperm.xlu0 %234, %v68
  %v236 = vpop.permute.xlu0 %235
  %v239 = vunpack.c.l.s4 839922192
  %v240 = vunpack.c.0.s8 %v239
  %v241 = vlaneseq
  %v242 = vshrl.u32 %v241, 7
  %v243 = vsub.s32 %v240, %v242
  %v244 = vrot.slane %v236, %v243
  %246 = vset.pattern.permute.xlu0 0
  %247 = vperm.xlu0 %246, %v69
  %v248 = vpop.permute.xlu0 %247
  %v251 = vunpack.c.l.s4 839922192
  %v252 = vunpack.c.0.s8 %v251
  %v253 = vlaneseq
  %v254 = vshrl.u32 %v253, 7
  %v255 = vsub.s32 %v252, %v254
  %v256 = vrot.slane %v248, %v255
  %258 = vset.pattern.permute.xlu0 0
  %259 = vperm.xlu0 %258, %v70
  %v260 = vpop.permute.xlu0 %259
  %v263 = vunpack.c.l.s4 839922192
  %v264 = vunpack.c.0.s8 %v263
  %v265 = vlaneseq
  %v266 = vshrl.u32 %v265, 7
  %v267 = vsub.s32 %v264, %v266
  %v268 = vrot.slane %v260, %v267
  %270 = vset.pattern.permute.xlu0 0
  %271 = vperm.xlu0 %270, %v71
  %v272 = vpop.permute.xlu0 %271
  %v275 = vunpack.c.l.s4 839922192
  %v276 = vunpack.c.0.s8 %v275
  %v277 = vlaneseq
  %v278 = vshrl.u32 %v277, 7
  %v279 = vsub.s32 %v276, %v278
  %v280 = vrot.slane %v272, %v279
  %v282 = vpack.i.b16 %v55, %v55
  %v284 = vlaneseq
  %v285 = vshrl.u32 %v284, 7
  %v286 = vsub.s32 0, %v285
  %v287 = vrot.slane %v282, %v286
  %v289 = vunpack.c.l.b16 %v287
  %v290 = vpack.c.b16 %v289, %v289
  %v292 = vadd.bf16 %v100, %v290
  %v293 = vadd.bf16 %v112, %v290
  %v294 = vadd.bf16 %v124, %v290
  %v295 = vadd.bf16 %v136, %v290
  %v296 = vadd.bf16 %v148, %v290
  %v297 = vadd.bf16 %v160, %v290
  %v298 = vadd.bf16 %v172, %v290
  %v299 = vadd.bf16 %v184, %v290
  %v300 = vadd.bf16 %v196, %v290
  %v301 = vadd.bf16 %v208, %v290
  %v302 = vadd.bf16 %v220, %v290
  %v303 = vadd.bf16 %v232, %v290
  %v304 = vadd.bf16 %v244, %v290
  %v305 = vadd.bf16 %v256, %v290
  %v306 = vadd.bf16 %v268, %v290
  %v307 = vadd.bf16 %v280, %v290
  %vm308 = vcmp.gt.bf16.partialorder %v292, 0
  %vm309 = vcmp.gt.bf16.partialorder %v293, 0
  %vm310 = vcmp.gt.bf16.partialorder %v294, 0
  %vm311 = vcmp.gt.bf16.partialorder %v295, 0
  %vm312 = vcmp.gt.bf16.partialorder %v296, 0
  %vm313 = vcmp.gt.bf16.partialorder %v297, 0
  %vm314 = vcmp.gt.bf16.partialorder %v298, 0
  %vm315 = vcmp.gt.bf16.partialorder %v299, 0
  %vm316 = vcmp.gt.bf16.partialorder %v300, 0
  %vm317 = vcmp.gt.bf16.partialorder %v301, 0
  %vm318 = vcmp.gt.bf16.partialorder %v302, 0
  %vm319 = vcmp.gt.bf16.partialorder %v303, 0
  %vm320 = vcmp.gt.bf16.partialorder %v304, 0
  %vm321 = vcmp.gt.bf16.partialorder %v305, 0
  %vm322 = vcmp.gt.bf16.partialorder %v306, 0
  %vm323 = vcmp.gt.bf16.partialorder %v307, 0
  %v324 = vmul.bf16 %v292, 1045249613
  %v325 = vmul.bf16 %v293, 1045249613
  %v326 = vmul.bf16 %v294, 1045249613
  %v327 = vmul.bf16 %v295, 1045249613
  %v328 = vmul.bf16 %v296, 1045249613
  %v329 = vmul.bf16 %v297, 1045249613
  %v330 = vmul.bf16 %v298, 1045249613
  %v331 = vmul.bf16 %v299, 1045249613
  %v332 = vmul.bf16 %v300, 1045249613
  %v333 = vmul.bf16 %v301, 1045249613
  %v334 = vmul.bf16 %v302, 1045249613
  %v335 = vmul.bf16 %v303, 1045249613
  %v336 = vmul.bf16 %v304, 1045249613
  %v337 = vmul.bf16 %v305, 1045249613
  %v338 = vmul.bf16 %v306, 1045249613
  %v339 = vmul.bf16 %v307, 1045249613
  %v340 = vsel %vm308, %v292, %v324
  %v341 = vsel %vm309, %v293, %v325
  %v342 = vsel %vm310, %v294, %v326
  %v343 = vsel %vm311, %v295, %v327
  %v344 = vsel %vm312, %v296, %v328
  %v345 = vsel %vm313, %v297, %v329
  %v346 = vsel %vm314, %v298, %v330
  %v347 = vsel %vm315, %v299, %v331
  %v348 = vsel %vm316, %v300, %v332
  %v349 = vsel %vm317, %v301, %v333
  %v350 = vsel %vm318, %v302, %v334
  %v351 = vsel %vm319, %v303, %v335
  %v352 = vsel %vm320, %v304, %v336
  %v353 = vsel %vm321, %v305, %v337
  %v354 = vsel %vm322, %v306, %v338
  %v355 = vsel %vm323, %v307, %v339
  %v356 = vsel %vm73, %v340, 4048220490
  %v357 = vsel %vm74, %v341, 4048220490
  %v358 = vsel %vm75, %v342, 4048220490
  %v359 = vsel %vm76, %v343, 4048220490
  %v360 = vsel %vm77, %v344, 4048220490
  %v361 = vsel %vm78, %v345, 4048220490
  %v362 = vsel %vm79, %v346, 4048220490
  %v363 = vsel %vm80, %v347, 4048220490
  %v364 = vsel %vm81, %v348, 4048220490
  %v365 = vsel %vm82, %v349, 4048220490
  %v366 = vsel %vm83, %v350, 4048220490
  %v367 = vsel %vm84, %v351, 4048220490
  %v368 = vsel %vm85, %v352, 4048220490
  %v369 = vsel %vm86, %v353, 4048220490
  %v370 = vsel %vm87, %v354, 4048220490
  %v371 = vsel %vm88, %v355, 4048220490
  %v388 = vunpack.c.l.b16 %v356
  %v389 = vunpack.c.l.b16 %v357
  %v390 = vunpack.c.l.b16 %v358
  %v391 = vunpack.c.l.b16 %v359
  %v392 = vunpack.c.l.b16 %v360
  %v393 = vunpack.c.l.b16 %v361
  %v394 = vunpack.c.l.b16 %v362
  %v395 = vunpack.c.l.b16 %v363
  %v396 = vunpack.c.l.b16 %v364
  %v397 = vunpack.c.l.b16 %v365
  %v398 = vunpack.c.l.b16 %v366
  %v399 = vunpack.c.l.b16 %v367
  %v400 = vunpack.c.l.b16 %v368
  %v401 = vunpack.c.l.b16 %v369
  %v402 = vunpack.c.l.b16 %v370
  %v403 = vunpack.c.l.b16 %v371
  %v404 = vpack.c.b16 %v389, %v388
  %v405 = vpack.c.b16 %v391, %v390
  %v406 = vpack.c.b16 %v393, %v392
  %v407 = vpack.c.b16 %v395, %v394
  %v408 = vpack.c.b16 %v397, %v396
  %v409 = vpack.c.b16 %v399, %v398
  %v410 = vpack.c.b16 %v401, %v400
  %v411 = vpack.c.b16 %v403, %v402
  %420 = vmax.xlane.bf16.xlu0 %v404
  %v421 = vpop.xlane.xlu0 %420
  %422 = vmax.xlane.bf16.xlu0 %v405
  %v423 = vpop.xlane.xlu0 %422
  %424 = vmax.xlane.bf16.xlu0 %v406
  %v425 = vpop.xlane.xlu0 %424
  %426 = vmax.xlane.bf16.xlu0 %v407
  %v427 = vpop.xlane.xlu0 %426
  %428 = vmax.xlane.bf16.xlu0 %v408
  %v429 = vpop.xlane.xlu0 %428
  %430 = vmax.xlane.bf16.xlu0 %v409
  %v431 = vpop.xlane.xlu0 %430
  %432 = vmax.xlane.bf16.xlu0 %v410
  %v433 = vpop.xlane.xlu0 %432
  %434 = vmax.xlane.bf16.xlu0 %v411
  %v435 = vpop.xlane.xlu0 %434
  %v445 = vunpack.c.l.s4 839922192
  %v446 = vunpack.c.0.s8 %v445
  %v447 = vlaneseq
  %v448 = vshrl.u32 %v447, 7
  %v449 = vsub.s32 %v446, %v448
  %v450 = vrot.slane %v421, %v449
  %v452 = vunpack.c.l.s4 1985246804
  %v453 = vunpack.c.0.s8 %v452
  %v454 = vlaneseq
  %v455 = vshrl.u32 %v454, 7
  %v456 = vsub.s32 %v453, %v455
  %v457 = vrot.slane %v421, %v456
  %v459 = vunpack.c.l.s4 839922192
  %v460 = vunpack.c.0.s8 %v459
  %v461 = vlaneseq
  %v462 = vshrl.u32 %v461, 7
  %v463 = vsub.s32 %v460, %v462
  %v464 = vrot.slane %v423, %v463
  %v466 = vunpack.c.l.s4 1985246804
  %v467 = vunpack.c.0.s8 %v466
  %v468 = vlaneseq
  %v469 = vshrl.u32 %v468, 7
  %v470 = vsub.s32 %v467, %v469
  %v471 = vrot.slane %v423, %v470
  %v473 = vunpack.c.l.s4 839922192
  %v474 = vunpack.c.0.s8 %v473
  %v475 = vlaneseq
  %v476 = vshrl.u32 %v475, 7
  %v477 = vsub.s32 %v474, %v476
  %v478 = vrot.slane %v425, %v477
  %v480 = vunpack.c.l.s4 1985246804
  %v481 = vunpack.c.0.s8 %v480
  %v482 = vlaneseq
  %v483 = vshrl.u32 %v482, 7
  %v484 = vsub.s32 %v481, %v483
  %v485 = vrot.slane %v425, %v484
  %v487 = vunpack.c.l.s4 839922192
  %v488 = vunpack.c.0.s8 %v487
  %v489 = vlaneseq
  %v490 = vshrl.u32 %v489, 7
  %v491 = vsub.s32 %v488, %v490
  %v492 = vrot.slane %v427, %v491
  %v494 = vunpack.c.l.s4 1985246804
  %v495 = vunpack.c.0.s8 %v494
  %v496 = vlaneseq
  %v497 = vshrl.u32 %v496, 7
  %v498 = vsub.s32 %v495, %v497
  %v499 = vrot.slane %v427, %v498
  %v501 = vunpack.c.l.s4 839922192
  %v502 = vunpack.c.0.s8 %v501
  %v503 = vlaneseq
  %v504 = vshrl.u32 %v503, 7
  %v505 = vsub.s32 %v502, %v504
  %v506 = vrot.slane %v429, %v505
  %v508 = vunpack.c.l.s4 1985246804
  %v509 = vunpack.c.0.s8 %v508
  %v510 = vlaneseq
  %v511 = vshrl.u32 %v510, 7
  %v512 = vsub.s32 %v509, %v511
  %v513 = vrot.slane %v429, %v512
  %v515 = vunpack.c.l.s4 839922192
  %v516 = vunpack.c.0.s8 %v515
  %v517 = vlaneseq
  %v518 = vshrl.u32 %v517, 7
  %v519 = vsub.s32 %v516, %v518
  %v520 = vrot.slane %v431, %v519
  %v522 = vunpack.c.l.s4 1985246804
  %v523 = vunpack.c.0.s8 %v522
  %v524 = vlaneseq
  %v525 = vshrl.u32 %v524, 7
  %v526 = vsub.s32 %v523, %v525
  %v527 = vrot.slane %v431, %v526
  %v529 = vunpack.c.l.s4 839922192
  %v530 = vunpack.c.0.s8 %v529
  %v531 = vlaneseq
  %v532 = vshrl.u32 %v531, 7
  %v533 = vsub.s32 %v530, %v532
  %v534 = vrot.slane %v433, %v533
  %v536 = vunpack.c.l.s4 1985246804
  %v537 = vunpack.c.0.s8 %v536
  %v538 = vlaneseq
  %v539 = vshrl.u32 %v538, 7
  %v540 = vsub.s32 %v537, %v539
  %v541 = vrot.slane %v433, %v540
  %v543 = vunpack.c.l.s4 839922192
  %v544 = vunpack.c.0.s8 %v543
  %v545 = vlaneseq
  %v546 = vshrl.u32 %v545, 7
  %v547 = vsub.s32 %v544, %v546
  %v548 = vrot.slane %v435, %v547
  %v550 = vunpack.c.l.s4 1985246804
  %v551 = vunpack.c.0.s8 %v550
  %v552 = vlaneseq
  %v553 = vshrl.u32 %v552, 7
  %v554 = vsub.s32 %v551, %v553
  %v555 = vrot.slane %v435, %v554
  %v572 = vsub.bf16 %v356, %v450
  %v573 = vsub.bf16 %v357, %v457
  %v574 = vsub.bf16 %v358, %v464
  %v575 = vsub.bf16 %v359, %v471
  %v576 = vsub.bf16 %v360, %v478
  %v577 = vsub.bf16 %v361, %v485
  %v578 = vsub.bf16 %v362, %v492
  %v579 = vsub.bf16 %v363, %v499
  %v580 = vsub.bf16 %v364, %v506
  %v581 = vsub.bf16 %v365, %v513
  %v582 = vsub.bf16 %v366, %v520
  %v583 = vsub.bf16 %v367, %v527
  %v584 = vsub.bf16 %v368, %v534
  %v585 = vsub.bf16 %v369, %v541
  %v586 = vsub.bf16 %v370, %v548
  %v587 = vsub.bf16 %v371, %v555
  %v589 = vmul.bf16 %v572, 1069105081
  %v590 = vpow.bf16.pop %v589
  %v592 = vmul.bf16 %v573, 1069105081
  %v593 = vpow.bf16.pop %v592
  %v595 = vmul.bf16 %v574, 1069105081
  %v596 = vpow.bf16.pop %v595
  %v598 = vmul.bf16 %v575, 1069105081
  %v599 = vpow.bf16.pop %v598
  %v601 = vmul.bf16 %v576, 1069105081
  %v602 = vpow.bf16.pop %v601
  %v604 = vmul.bf16 %v577, 1069105081
  %v605 = vpow.bf16.pop %v604
  %v607 = vmul.bf16 %v578, 1069105081
  %v608 = vpow.bf16.pop %v607
  %v610 = vmul.bf16 %v579, 1069105081
  %v611 = vpow.bf16.pop %v610
  %v613 = vmul.bf16 %v580, 1069105081
  %v614 = vpow.bf16.pop %v613
  %v616 = vmul.bf16 %v581, 1069105081
  %v617 = vpow.bf16.pop %v616
  %v619 = vmul.bf16 %v582, 1069105081
  %v620 = vpow.bf16.pop %v619
  %v622 = vmul.bf16 %v583, 1069105081
  %v623 = vpow.bf16.pop %v622
  %v625 = vmul.bf16 %v584, 1069105081
  %v626 = vpow.bf16.pop %v625
  %v628 = vmul.bf16 %v585, 1069105081
  %v629 = vpow.bf16.pop %v628
  %v631 = vmul.bf16 %v586, 1069105081
  %v632 = vpow.bf16.pop %v631
  %v634 = vmul.bf16 %v587, 1069105081
  %v635 = vpow.bf16.pop %v634
  %v652 = vunpack.c.l.b16 %v590
  %v653 = vunpack.c.l.b16 %v593
  %v654 = vunpack.c.l.b16 %v596
  %v655 = vunpack.c.l.b16 %v599
  %v656 = vunpack.c.l.b16 %v602
  %v657 = vunpack.c.l.b16 %v605
  %v658 = vunpack.c.l.b16 %v608
  %v659 = vunpack.c.l.b16 %v611
  %v660 = vunpack.c.l.b16 %v614
  %v661 = vunpack.c.l.b16 %v617
  %v662 = vunpack.c.l.b16 %v620
  %v663 = vunpack.c.l.b16 %v623
  %v664 = vunpack.c.l.b16 %v626
  %v665 = vunpack.c.l.b16 %v629
  %v666 = vunpack.c.l.b16 %v632
  %v667 = vunpack.c.l.b16 %v635
  %v668 = vpack.c.b16 %v653, %v652
  %v669 = vpack.c.b16 %v655, %v654
  %v670 = vpack.c.b16 %v657, %v656
  %v671 = vpack.c.b16 %v659, %v658
  %v672 = vpack.c.b16 %v661, %v660
  %v673 = vpack.c.b16 %v663, %v662
  %v674 = vpack.c.b16 %v665, %v664
  %v675 = vpack.c.b16 %v667, %v666
  %v700 = vunpack.c.l.b16 %v39
  %v701 = vunpack.c.l.b16 %v40
  %v702 = vunpack.c.l.b16 %v41
  %v703 = vunpack.c.l.b16 %v42
  %v704 = vunpack.c.l.b16 %v43
  %v705 = vunpack.c.l.b16 %v44
  %v706 = vunpack.c.l.b16 %v45
  %v707 = vunpack.c.l.b16 %v46
  %v708 = vunpack.c.l.b16 %v47
  %v709 = vunpack.c.l.b16 %v48
  %v710 = vunpack.c.l.b16 %v49
  %v711 = vunpack.c.l.b16 %v50
  %v712 = vunpack.c.l.b16 %v51
  %v713 = vunpack.c.l.b16 %v52
  %v714 = vunpack.c.l.b16 %v53
  %v715 = vunpack.c.l.b16 %v54
  %v716 = vpack.c.b16 %v701, %v700
  %v717 = vpack.c.b16 %v703, %v702
  %v718 = vpack.c.b16 %v705, %v704
  %v719 = vpack.c.b16 %v707, %v706
  %v720 = vpack.c.b16 %v709, %v708
  %v721 = vpack.c.b16 %v711, %v710
  %v722 = vpack.c.b16 %v713, %v712
  %v723 = vpack.c.b16 %v715, %v714
  %732 = vmatprep.subr.bf16.mxu0 0
  %733 = vmatpush1.bf16.msra.mxu0 %v723
  %734 = vmatprep.subr.bf16.mxu0 0
  %735 = vmatpush1.bf16.msra.mxu0 %v722
  %736 = vmatprep.subr.bf16.mxu0 0
  %737 = vmatpush1.bf16.msra.mxu0 %v721
  %738 = vmatprep.subr.bf16.mxu0 0
  %739 = vmatpush1.bf16.msra.mxu0 %v720
  %740 = vmatprep.subr.bf16.mxu0 0
  %741 = vmatpush1.bf16.msra.mxu0 %v719
  %742 = vmatprep.subr.bf16.mxu0 0
  %743 = vmatpush1.bf16.msra.mxu0 %v718
  %744 = vmatprep.subr.bf16.mxu0 0
  %745 = vmatpush1.bf16.msra.mxu0 %v717
  %746 = vmatprep.subr.bf16.mxu0 0
  %747 = vmatpush1.bf16.msra.mxu0 %v716
  %748 = vmatprep.subr.bf16.mxu0 0
  %749 = vmatpush2.bf16.msra.mxu0 0
  %750 = vmatprep.subr.bf16.mxu0 0
  %751 = vmatpush2.bf16.msra.mxu0 0
  %752 = vmatprep.subr.bf16.mxu0 0
  %753 = vmatpush2.bf16.msra.mxu0 0
  %754 = vmatprep.subr.bf16.mxu0 0
  %755 = vmatpush2.bf16.msra.mxu0 0
  %756 = vmatprep.subr.bf16.mxu0 0
  %757 = vmatpush2.bf16.msra.mxu0 0
  %758 = vmatprep.subr.bf16.mxu0 0
  %759 = vmatpush2.bf16.msra.mxu0 0
  %760 = vmatprep.subr.bf16.mxu0 0
  %761 = vmatpush2.bf16.msra.mxu0 0
  %762 = vmatprep.subr.bf16.mxu0 0
  %763 = vmatpush2.bf16.msra.mxu0 0
  %764 = vmatprep.mubr.bf16.mxu0 0
  %765 = vmatmul.mubr.bf16.gmra.mxu0 %v668
  %v766 = vpop.f32.mrf.mxu0
  %v767 = vadd.f32 0.0, %v766
  %v768 = vpop.f32.mrf.mxu0
  %v769 = vpop.f32.mrf.mxu0
  %v770 = vadd.f32 0.0, %v769
  %v771 = vpop.f32.mrf.mxu0
  %772 = vmatprep.mubr.bf16.mxu0 0
  %773 = vmatmul.mubr.bf16.gmra.mxu0 %v669
  %v774 = vpop.f32.mrf.mxu0
  %v775 = vadd.f32 0.0, %v774
  %v776 = vpop.f32.mrf.mxu0
  %v777 = vpop.f32.mrf.mxu0
  %v778 = vadd.f32 0.0, %v777
  %v779 = vpop.f32.mrf.mxu0
  %780 = vmatprep.mubr.bf16.mxu0 0
  %781 = vmatmul.mubr.bf16.gmra.mxu0 %v670
  %v782 = vpop.f32.mrf.mxu0
  %v783 = vadd.f32 0.0, %v782
  %v784 = vpop.f32.mrf.mxu0
  %v785 = vpop.f32.mrf.mxu0
  %v786 = vadd.f32 0.0, %v785
  %v787 = vpop.f32.mrf.mxu0
  %788 = vmatprep.mubr.bf16.mxu0 0
  %789 = vmatmul.mubr.bf16.gmra.mxu0 %v671
  %v790 = vpop.f32.mrf.mxu0
  %v791 = vadd.f32 0.0, %v790
  %v792 = vpop.f32.mrf.mxu0
  %v793 = vpop.f32.mrf.mxu0
  %v794 = vadd.f32 0.0, %v793
  %v795 = vpop.f32.mrf.mxu0
  %796 = vmatprep.mubr.bf16.mxu0 0
  %797 = vmatmul.mubr.bf16.gmra.mxu0 %v672
  %v798 = vpop.f32.mrf.mxu0
  %v799 = vadd.f32 0.0, %v798
  %v800 = vpop.f32.mrf.mxu0
  %v801 = vpop.f32.mrf.mxu0
  %v802 = vadd.f32 0.0, %v801
  %v803 = vpop.f32.mrf.mxu0
  %804 = vmatprep.mubr.bf16.mxu0 0
  %805 = vmatmul.mubr.bf16.gmra.mxu0 %v673
  %v806 = vpop.f32.mrf.mxu0
  %v807 = vadd.f32 0.0, %v806
  %v808 = vpop.f32.mrf.mxu0
  %v809 = vpop.f32.mrf.mxu0
  %v810 = vadd.f32 0.0, %v809
  %v811 = vpop.f32.mrf.mxu0
  %812 = vmatprep.mubr.bf16.mxu0 0
  %813 = vmatmul.mubr.bf16.gmra.mxu0 %v674
  %v814 = vpop.f32.mrf.mxu0
  %v815 = vadd.f32 0.0, %v814
  %v816 = vpop.f32.mrf.mxu0
  %v817 = vpop.f32.mrf.mxu0
  %v818 = vadd.f32 0.0, %v817
  %v819 = vpop.f32.mrf.mxu0
  %820 = vmatprep.mubr.bf16.mxu0 0
  %821 = vmatmul.mubr.bf16.gmra.mxu0 %v675
  %v822 = vpop.f32.mrf.mxu0
  %v823 = vadd.f32 0.0, %v822
  %v824 = vpop.f32.mrf.mxu0
  %v825 = vpop.f32.mrf.mxu0
  %v826 = vadd.f32 0.0, %v825
  %v827 = vpop.f32.mrf.mxu0
  %828 = vdwg.mxu0
  %v829 = vrcp.pop %v767
  %v830 = vrcp.pop %v770
  %v831 = vrcp.pop %v775
  %v832 = vrcp.pop %v778
  %v833 = vrcp.pop %v783
  %v834 = vrcp.pop %v786
  %v835 = vrcp.pop %v791
  %v836 = vrcp.pop %v794
  %v837 = vrcp.pop %v799
  %v838 = vrcp.pop %v802
  %v839 = vrcp.pop %v807
  %v840 = vrcp.pop %v810
  %v841 = vrcp.pop %v815
  %v842 = vrcp.pop %v818
  %v843 = vrcp.pop %v823
  %v844 = vrcp.pop %v826
  %846 = vset.pattern.permute.xlu0 7
  %847 = vperm.xlu0 %846, %v829
  %v848 = vpop.permute.xlu0 %847
  %851 = vset.pattern.permute.xlu0 7
  %852 = vperm.xlu0 %851, %v830
  %v853 = vpop.permute.xlu0 %852
  %856 = vset.pattern.permute.xlu0 7
  %857 = vperm.xlu0 %856, %v831
  %v858 = vpop.permute.xlu0 %857
  %861 = vset.pattern.permute.xlu0 7
  %862 = vperm.xlu0 %861, %v832
  %v863 = vpop.permute.xlu0 %862
  %866 = vset.pattern.permute.xlu0 7
  %867 = vperm.xlu0 %866, %v833
  %v868 = vpop.permute.xlu0 %867
  %871 = vset.pattern.permute.xlu0 7
  %872 = vperm.xlu0 %871, %v834
  %v873 = vpop.permute.xlu0 %872
  %876 = vset.pattern.permute.xlu0 7
  %877 = vperm.xlu0 %876, %v835
  %v878 = vpop.permute.xlu0 %877
  %881 = vset.pattern.permute.xlu0 7
  %882 = vperm.xlu0 %881, %v836
  %v883 = vpop.permute.xlu0 %882
  %886 = vset.pattern.permute.xlu0 7
  %887 = vperm.xlu0 %886, %v837
  %v888 = vpop.permute.xlu0 %887
  %891 = vset.pattern.permute.xlu0 7
  %892 = vperm.xlu0 %891, %v838
  %v893 = vpop.permute.xlu0 %892
  %896 = vset.pattern.permute.xlu0 7
  %897 = vperm.xlu0 %896, %v839
  %v898 = vpop.permute.xlu0 %897
  %901 = vset.pattern.permute.xlu0 7
  %902 = vperm.xlu0 %901, %v840
  %v903 = vpop.permute.xlu0 %902
  %906 = vset.pattern.permute.xlu0 7
  %907 = vperm.xlu0 %906, %v841
  %v908 = vpop.permute.xlu0 %907
  %911 = vset.pattern.permute.xlu0 7
  %912 = vperm.xlu0 %911, %v842
  %v913 = vpop.permute.xlu0 %912
  %916 = vset.pattern.permute.xlu0 7
  %917 = vperm.xlu0 %916, %v843
  %v918 = vpop.permute.xlu0 %917
  %921 = vset.pattern.permute.xlu0 7
  %922 = vperm.xlu0 %921, %v844
  %v923 = vpop.permute.xlu0 %922
  %v925 = vmul.f32 %v767, %v848
  %v926 = vmul.f32 %v770, %v853
  %v927 = vmul.f32 %v775, %v858
  %v928 = vmul.f32 %v778, %v863
  %v929 = vmul.f32 %v783, %v868
  %v930 = vmul.f32 %v786, %v873
  %v931 = vmul.f32 %v791, %v878
  %v932 = vmul.f32 %v794, %v883
  %v933 = vmul.f32 %v799, %v888
  %v934 = vmul.f32 %v802, %v893
  %v935 = vmul.f32 %v807, %v898
  %v936 = vmul.f32 %v810, %v903
  %v937 = vmul.f32 %v815, %v908
  %v938 = vmul.f32 %v818, %v913
  %v939 = vmul.f32 %v823, %v918
  %v940 = vmul.f32 %v826, %v923
  %vm941 = vcmask 56320
  %v942 = vsel %vm941, %v925, 0.0
  %v943 = vsel %vm941, %v926, 0.0
  %v944 = vsel %vm941, %v927, 0.0
  %v945 = vsel %vm941, %v928, 0.0
  %v946 = vsel %vm941, %v929, 0.0
  %v947 = vsel %vm941, %v930, 0.0
  %v948 = vsel %vm941, %v931, 0.0
  %v949 = vsel %vm941, %v932, 0.0
  %v950 = vsel %vm941, %v933, 0.0
  %v951 = vsel %vm941, %v934, 0.0
  %v952 = vsel %vm941, %v935, 0.0
  %v953 = vsel %vm941, %v936, 0.0
  %v954 = vsel %vm941, %v937, 0.0
  %v955 = vsel %vm941, %v938, 0.0
  %v956 = vsel %vm941, %v939, 0.0
  %v957 = vsel %vm941, %v940, 0.0
  %v959 = vlaneseq
  %v960 = vshrl.u32 %v959, 7
  %v961 = vsub.s32 0, %v960
  %v962 = vrot.slane %v72, %v961
  %v964 = vadd.f32 %v942, %v962
  %v965 = vadd.f32 %v943, %v962
  %v966 = vadd.f32 %v944, %v962
  %v967 = vadd.f32 %v945, %v962
  %v968 = vadd.f32 %v946, %v962
  %v969 = vadd.f32 %v947, %v962
  %v970 = vadd.f32 %v948, %v962
  %v971 = vadd.f32 %v949, %v962
  %v972 = vadd.f32 %v950, %v962
  %v973 = vadd.f32 %v951, %v962
  %v974 = vadd.f32 %v952, %v962
  %v975 = vadd.f32 %v953, %v962
  %v976 = vadd.f32 %v954, %v962
  %v977 = vadd.f32 %v955, %v962
  %v978 = vadd.f32 %v956, %v962
  %v979 = vadd.f32 %v957, %v962
  %v980 = vlaneseq
  %v981 = vand.u32 %v980, 127
  %vm982 = vcmp.lt.s32.totalorder %v981, 7
  %v983 = vsel %vm982, %v964, -1e+30
  %v984 = vsel %vm982, %v965, -1e+30
  %v985 = vsel %vm982, %v966, -1e+30
  %v986 = vsel %vm982, %v967, -1e+30
  %v987 = vsel %vm982, %v968, -1e+30
  %v988 = vsel %vm982, %v969, -1e+30
  %v989 = vsel %vm982, %v970, -1e+30
  %v990 = vsel %vm982, %v971, -1e+30
  %v991 = vsel %vm982, %v972, -1e+30
  %v992 = vsel %vm982, %v973, -1e+30
  %v993 = vsel %vm982, %v974, -1e+30
  %v994 = vsel %vm982, %v975, -1e+30
  %v995 = vsel %vm982, %v976, -1e+30
  %v996 = vsel %vm982, %v977, -1e+30
  %v997 = vsel %vm982, %v978, -1e+30
  %v998 = vsel %vm982, %v979, -1e+30
  %999 = vmax.xlane.f32.xlu0 %v983
  %v1000 = vpop.xlane.xlu0 %999
  %1001 = vmax.xlane.f32.xlu0 %v984
  %v1002 = vpop.xlane.xlu0 %1001
  %1003 = vmax.xlane.f32.xlu0 %v985
  %v1004 = vpop.xlane.xlu0 %1003
  %1005 = vmax.xlane.f32.xlu0 %v986
  %v1006 = vpop.xlane.xlu0 %1005
  %1007 = vmax.xlane.f32.xlu0 %v987
  %v1008 = vpop.xlane.xlu0 %1007
  %1009 = vmax.xlane.f32.xlu0 %v988
  %v1010 = vpop.xlane.xlu0 %1009
  %1011 = vmax.xlane.f32.xlu0 %v989
  %v1012 = vpop.xlane.xlu0 %1011
  %1013 = vmax.xlane.f32.xlu0 %v990
  %v1014 = vpop.xlane.xlu0 %1013
  %1015 = vmax.xlane.f32.xlu0 %v991
  %v1016 = vpop.xlane.xlu0 %1015
  %1017 = vmax.xlane.f32.xlu0 %v992
  %v1018 = vpop.xlane.xlu0 %1017
  %1019 = vmax.xlane.f32.xlu0 %v993
  %v1020 = vpop.xlane.xlu0 %1019
  %1021 = vmax.xlane.f32.xlu0 %v994
  %v1022 = vpop.xlane.xlu0 %1021
  %1023 = vmax.xlane.f32.xlu0 %v995
  %v1024 = vpop.xlane.xlu0 %1023
  %1025 = vmax.xlane.f32.xlu0 %v996
  %v1026 = vpop.xlane.xlu0 %1025
  %1027 = vmax.xlane.f32.xlu0 %v997
  %v1028 = vpop.xlane.xlu0 %1027
  %1029 = vmax.xlane.f32.xlu0 %v998
  %v1030 = vpop.xlane.xlu0 %1029
  %v1031 = vsub.f32 %v964, %v1000
  %v1032 = vsub.f32 %v965, %v1002
  %v1033 = vsub.f32 %v966, %v1004
  %v1034 = vsub.f32 %v967, %v1006
  %v1035 = vsub.f32 %v968, %v1008
  %v1036 = vsub.f32 %v969, %v1010
  %v1037 = vsub.f32 %v970, %v1012
  %v1038 = vsub.f32 %v971, %v1014
  %v1039 = vsub.f32 %v972, %v1016
  %v1040 = vsub.f32 %v973, %v1018
  %v1041 = vsub.f32 %v974, %v1020
  %v1042 = vsub.f32 %v975, %v1022
  %v1043 = vsub.f32 %v976, %v1024
  %v1044 = vsub.f32 %v977, %v1026
  %v1045 = vsub.f32 %v978, %v1028
  %v1046 = vsub.f32 %v979, %v1030
  %v1047 = vmul.f32 %v1031, 1.442695
  %v1048 = vpow.pop %v1047
  %v1049 = vmul.f32 %v1032, 1.442695
  %v1050 = vpow.pop %v1049
  %v1051 = vmul.f32 %v1033, 1.442695
  %v1052 = vpow.pop %v1051
  %v1053 = vmul.f32 %v1034, 1.442695
  %v1054 = vpow.pop %v1053
  %v1055 = vmul.f32 %v1035, 1.442695
  %v1056 = vpow.pop %v1055
  %v1057 = vmul.f32 %v1036, 1.442695
  %v1058 = vpow.pop %v1057
  %v1059 = vmul.f32 %v1037, 1.442695
  %v1060 = vpow.pop %v1059
  %v1061 = vmul.f32 %v1038, 1.442695
  %v1062 = vpow.pop %v1061
  %v1063 = vmul.f32 %v1039, 1.442695
  %v1064 = vpow.pop %v1063
  %v1065 = vmul.f32 %v1040, 1.442695
  %v1066 = vpow.pop %v1065
  %v1067 = vmul.f32 %v1041, 1.442695
  %v1068 = vpow.pop %v1067
  %v1069 = vmul.f32 %v1042, 1.442695
  %v1070 = vpow.pop %v1069
  %v1071 = vmul.f32 %v1043, 1.442695
  %v1072 = vpow.pop %v1071
  %v1073 = vmul.f32 %v1044, 1.442695
  %v1074 = vpow.pop %v1073
  %v1075 = vmul.f32 %v1045, 1.442695
  %v1076 = vpow.pop %v1075
  %v1077 = vmul.f32 %v1046, 1.442695
  %v1078 = vpow.pop %v1077
  %v1079 = vsel %vm982, %v1048, 0.0
  %v1080 = vsel %vm982, %v1050, 0.0
  %v1081 = vsel %vm982, %v1052, 0.0
  %v1082 = vsel %vm982, %v1054, 0.0
  %v1083 = vsel %vm982, %v1056, 0.0
  %v1084 = vsel %vm982, %v1058, 0.0
  %v1085 = vsel %vm982, %v1060, 0.0
  %v1086 = vsel %vm982, %v1062, 0.0
  %v1087 = vsel %vm982, %v1064, 0.0
  %v1088 = vsel %vm982, %v1066, 0.0
  %v1089 = vsel %vm982, %v1068, 0.0
  %v1090 = vsel %vm982, %v1070, 0.0
  %v1091 = vsel %vm982, %v1072, 0.0
  %v1092 = vsel %vm982, %v1074, 0.0
  %v1093 = vsel %vm982, %v1076, 0.0
  %v1094 = vsel %vm982, %v1078, 0.0
  %1095 = vadd.xlane.f32.xlu0 %v1079
  %v1096 = vpop.xlane.xlu0 %1095
  %1097 = vadd.xlane.f32.xlu0 %v1080
  %v1098 = vpop.xlane.xlu0 %1097
  %1099 = vadd.xlane.f32.xlu0 %v1081
  %v1100 = vpop.xlane.xlu0 %1099
  %1101 = vadd.xlane.f32.xlu0 %v1082
  %v1102 = vpop.xlane.xlu0 %1101
  %1103 = vadd.xlane.f32.xlu0 %v1083
  %v1104 = vpop.xlane.xlu0 %1103
  %1105 = vadd.xlane.f32.xlu0 %v1084
  %v1106 = vpop.xlane.xlu0 %1105
  %1107 = vadd.xlane.f32.xlu0 %v1085
  %v1108 = vpop.xlane.xlu0 %1107
  %1109 = vadd.xlane.f32.xlu0 %v1086
  %v1110 = vpop.xlane.xlu0 %1109
  %1111 = vadd.xlane.f32.xlu0 %v1087
  %v1112 = vpop.xlane.xlu0 %1111
  %1113 = vadd.xlane.f32.xlu0 %v1088
  %v1114 = vpop.xlane.xlu0 %1113
  %1115 = vadd.xlane.f32.xlu0 %v1089
  %v1116 = vpop.xlane.xlu0 %1115
  %1117 = vadd.xlane.f32.xlu0 %v1090
  %v1118 = vpop.xlane.xlu0 %1117
  %1119 = vadd.xlane.f32.xlu0 %v1091
  %v1120 = vpop.xlane.xlu0 %1119
  %1121 = vadd.xlane.f32.xlu0 %v1092
  %v1122 = vpop.xlane.xlu0 %1121
  %1123 = vadd.xlane.f32.xlu0 %v1093
  %v1124 = vpop.xlane.xlu0 %1123
  %1125 = vadd.xlane.f32.xlu0 %v1094
  %v1126 = vpop.xlane.xlu0 %1125
  %v1127 = vlog2.pop %v1096
  %v1128 = vmul.f32 %v1127, 0.6931472
  %v1129 = vlog2.pop %v1098
  %v1130 = vmul.f32 %v1129, 0.6931472
  %v1131 = vlog2.pop %v1100
  %v1132 = vmul.f32 %v1131, 0.6931472
  %v1133 = vlog2.pop %v1102
  %v1134 = vmul.f32 %v1133, 0.6931472
  %v1135 = vlog2.pop %v1104
  %v1136 = vmul.f32 %v1135, 0.6931472
  %v1137 = vlog2.pop %v1106
  %v1138 = vmul.f32 %v1137, 0.6931472
  %v1139 = vlog2.pop %v1108
  %v1140 = vmul.f32 %v1139, 0.6931472
  %v1141 = vlog2.pop %v1110
  %v1142 = vmul.f32 %v1141, 0.6931472
  %v1143 = vlog2.pop %v1112
  %v1144 = vmul.f32 %v1143, 0.6931472
  %v1145 = vlog2.pop %v1114
  %v1146 = vmul.f32 %v1145, 0.6931472
  %v1147 = vlog2.pop %v1116
  %v1148 = vmul.f32 %v1147, 0.6931472
  %v1149 = vlog2.pop %v1118
  %v1150 = vmul.f32 %v1149, 0.6931472
  %v1151 = vlog2.pop %v1120
  %v1152 = vmul.f32 %v1151, 0.6931472
  %v1153 = vlog2.pop %v1122
  %v1154 = vmul.f32 %v1153, 0.6931472
  %v1155 = vlog2.pop %v1124
  %v1156 = vmul.f32 %v1155, 0.6931472
  %v1157 = vlog2.pop %v1126
  %v1158 = vmul.f32 %v1157, 0.6931472
  %v1159 = vadd.f32 %v1128, %v1000
  %v1160 = vadd.f32 %v1130, %v1002
  %v1161 = vadd.f32 %v1132, %v1004
  %v1162 = vadd.f32 %v1134, %v1006
  %v1163 = vadd.f32 %v1136, %v1008
  %v1164 = vadd.f32 %v1138, %v1010
  %v1165 = vadd.f32 %v1140, %v1012
  %v1166 = vadd.f32 %v1142, %v1014
  %v1167 = vadd.f32 %v1144, %v1016
  %v1168 = vadd.f32 %v1146, %v1018
  %v1169 = vadd.f32 %v1148, %v1020
  %v1170 = vadd.f32 %v1150, %v1022
  %v1171 = vadd.f32 %v1152, %v1024
  %v1172 = vadd.f32 %v1154, %v1026
  %v1173 = vadd.f32 %v1156, %v1028
  %v1174 = vadd.f32 %v1158, %v1030
  %v1175 = vsub.f32 %v964, %v1159
  %v1176 = vsub.f32 %v965, %v1160
  %v1177 = vsub.f32 %v966, %v1161
  %v1178 = vsub.f32 %v967, %v1162
  %v1179 = vsub.f32 %v968, %v1163
  %v1180 = vsub.f32 %v969, %v1164
  %v1181 = vsub.f32 %v970, %v1165
  %v1182 = vsub.f32 %v971, %v1166
  %v1183 = vsub.f32 %v972, %v1167
  %v1184 = vsub.f32 %v973, %v1168
  %v1185 = vsub.f32 %v974, %v1169
  %v1186 = vsub.f32 %v975, %v1170
  %v1187 = vsub.f32 %v976, %v1171
  %v1188 = vsub.f32 %v977, %v1172
  %v1189 = vsub.f32 %v978, %v1173
  %v1190 = vsub.f32 %v979, %v1174
  %1191 = vst [vmem:[%s5] sm:$0xff] %v1175
  %1192 = vst [vmem:[%s5 + $0x8] sm:$0xff] %v1176
  %1193 = vst [vmem:[%s5 + $0x10] sm:$0xff] %v1177
  %1194 = vst [vmem:[%s5 + $0x18] sm:$0xff] %v1178
  %1195 = vst [vmem:[%s5 + $0x20] sm:$0xff] %v1179
  %1196 = vst [vmem:[%s5 + $0x28] sm:$0xff] %v1180
  %1197 = vst [vmem:[%s5 + $0x30] sm:$0xff] %v1181
  %1198 = vst [vmem:[%s5 + $0x38] sm:$0xff] %v1182
  %1199 = vst [vmem:[%s5 + $0x40] sm:$0xff] %v1183
  %1200 = vst [vmem:[%s5 + $0x48] sm:$0xff] %v1184
  %1201 = vst [vmem:[%s5 + $0x50] sm:$0xff] %v1185
  %1202 = vst [vmem:[%s5 + $0x58] sm:$0xff] %v1186
  %1203 = vst [vmem:[%s5 + $0x60] sm:$0xff] %v1187
  %1204 = vst [vmem:[%s5 + $0x68] sm:$0xff] %v1188
  %1205 = vst [vmem:[%s5 + $0x70] sm:$0xff] %v1189
  %1206 = vst [vmem:[%s5 + $0x78] sm:$0xff] %v1190
  // Predicated region
  $region22: #{gat_forward.7} parent=0 // pred_check
    _
  $region23: #{gat_forward.7} parent=0 // pred_check_branch
    %1208 = sbr.rel (0) target = $region25
  $region24: #{gat_forward.7} parent=0 // pred_region
    _
  $region25: #{gat_forward.7} parent=0 // pred_fallthru
    _
  // Predicated region
  $region26: #{gat_forward.7} parent=0 // pred_check
    _
  $region27: #{gat_forward.7} parent=0 // pred_check_branch
    %1210 = sbr.rel (0) target = $region29
  $region28: #{gat_forward.7} parent=0 // pred_region
    _
  $region29: #{gat_forward.7} parent=0 // pred_fallthru
    _

// kernel: gat_forward.5
$region0: #{gat_forward.5}
  #allocation0 [shape = 'u32[]', space=smem, size = 0x4, offset = 0x4, fixed_abs, tag = 'smem constant byte address 0x4 - core index']
  #allocation1 [shape = 'u32[144,128]{1,0:T(1,128)}', space=vmem, size = 0x12000, scoped, tag = 'internal scratch']
  %s0 = inlined_call_operand.vmem [shape: bf16[128,128], index: 0, kind: input, shape index: {}]
  %s1 = inlined_call_operand.vmem [shape: bf16[128,72], index: 1, kind: input, shape index: {}]
  %s2 = inlined_call_operand.vmem [shape: bf16[8,128], index: 2, kind: input, shape index: {}]
  %s3 = inlined_call_operand.vmem [shape: bf16[128,8], index: 3, kind: input, shape index: {}]
  %s4 = inlined_call_operand.vmem [shape: f32[1,128], index: 4, kind: input, shape index: {}]
  %s5 = inlined_call_operand.vmem [shape: f32[128,128], index: 5, kind: output, shape index: {}]
  %s6 = sld [smem:[#allocation0]]
  $region30: #{gat_forward.5} parent=0
    _
  %s8 = ssub.s32 1, %s6
  %s9 = scalar_select 0, %s8, %s6
  // Predicated region
  $region2: #{gat_forward.5} parent=0 // pred_check
    _
  $region3: #{gat_forward.5} parent=0 // pred_check_branch
    %11 = sbr.rel (0) target = $region5
  $region4: #{gat_forward.5} parent=0 // pred_region
    _
  $region5: #{gat_forward.5} parent=0 // pred_fallthru
    _
  // Predicated region
  $region6: #{gat_forward.5} parent=0 // pred_check
    _
  $region7: #{gat_forward.5} parent=0 // pred_check_branch
    %13 = sbr.rel (0) target = $region9
  $region8: #{gat_forward.5} parent=0 // pred_region
    _
  $region9: #{gat_forward.5} parent=0 // pred_fallthru
    _
  // Predicated region
  $region10: #{gat_forward.5} parent=0 // pred_check
    _
  $region11: #{gat_forward.5} parent=0 // pred_check_branch
    %15 = sbr.rel (0) target = $region13
  $region12: #{gat_forward.5} parent=0 // pred_region
    _
  $region13: #{gat_forward.5} parent=0 // pred_fallthru
    _
  // Predicated region
  $region14: #{gat_forward.5} parent=0 // pred_check
    _
  $region15: #{gat_forward.5} parent=0 // pred_check_branch
    %17 = sbr.rel (0) target = $region17
  $region16: #{gat_forward.5} parent=0 // pred_region
    _
  $region17: #{gat_forward.5} parent=0 // pred_fallthru
    _
  // Predicated region
  $region18: #{gat_forward.5} parent=0 // pred_check
    _
  $region19: #{gat_forward.5} parent=0 // pred_check_branch
    %19 = sbr.rel (0) target = $region21
  $region20: #{gat_forward.5} parent=0 // pred_region
    _
  $region21: #{gat_forward.5} parent=0 // pred_fallthru
    _
  %v23 = vld [vmem:[%s0] sm:$0xf]
  %v24 = vld [vmem:[%s0 + $0x4] sm:$0xf]
  %v25 = vld [vmem:[%s0 + $0x8] sm:$0xf]
  %v26 = vld [vmem:[%s0 + $0xc] sm:$0xf]
  %v27 = vld [vmem:[%s0 + $0x10] sm:$0xf]
  %v28 = vld [vmem:[%s0 + $0x14] sm:$0xf]
  %v29 = vld [vmem:[%s0 + $0x18] sm:$0xf]
  %v30 = vld [vmem:[%s0 + $0x1c] sm:$0xf]
  %v31 = vld [vmem:[%s0 + $0x20] sm:$0xf]
  %v32 = vld [vmem:[%s0 + $0x24] sm:$0xf]
  %v33 = vld [vmem:[%s0 + $0x28] sm:$0xf]
  %v34 = vld [vmem:[%s0 + $0x2c] sm:$0xf]
  %v35 = vld [vmem:[%s0 + $0x30] sm:$0xf]
  %v36 = vld [vmem:[%s0 + $0x34] sm:$0xf]
  %v37 = vld [vmem:[%s0 + $0x38] sm:$0xf]
  %v38 = vld [vmem:[%s0 + $0x3c] sm:$0xf]
  %v39 = vld [vmem:[%s1] sm:$0xf]
  %v40 = vld [vmem:[%s1 + $0x4] sm:$0xf]
  %v41 = vld [vmem:[%s1 + $0x8] sm:$0xf]
  %v42 = vld [vmem:[%s1 + $0xc] sm:$0xf]
  %v43 = vld [vmem:[%s1 + $0x10] sm:$0xf]
  %v44 = vld [vmem:[%s1 + $0x14] sm:$0xf]
  %v45 = vld [vmem:[%s1 + $0x18] sm:$0xf]
  %v46 = vld [vmem:[%s1 + $0x1c] sm:$0xf]
  %v47 = vld [vmem:[%s1 + $0x20] sm:$0xf]
  %v48 = vld [vmem:[%s1 + $0x24] sm:$0xf]
  %v49 = vld [vmem:[%s1 + $0x28] sm:$0xf]
  %v50 = vld [vmem:[%s1 + $0x2c] sm:$0xf]
  %v51 = vld [vmem:[%s1 + $0x30] sm:$0xf]
  %v52 = vld [vmem:[%s1 + $0x34] sm:$0xf]
  %v53 = vld [vmem:[%s1 + $0x38] sm:$0xf]
  %v54 = vld [vmem:[%s1 + $0x3c] sm:$0xf]
  %v55 = vld [vmem:[%s2] sm:$0xf]
  %v56 = vld [vmem:[%s3] sm:$0xf]
  %v57 = vld [vmem:[%s3 + $0x4] sm:$0xf]
  %v58 = vld [vmem:[%s3 + $0x8] sm:$0xf]
  %v59 = vld [vmem:[%s3 + $0xc] sm:$0xf]
  %v60 = vld [vmem:[%s3 + $0x10] sm:$0xf]
  %v61 = vld [vmem:[%s3 + $0x14] sm:$0xf]
  %v62 = vld [vmem:[%s3 + $0x18] sm:$0xf]
  %v63 = vld [vmem:[%s3 + $0x1c] sm:$0xf]
  %v64 = vld [vmem:[%s3 + $0x20] sm:$0xf]
  %v65 = vld [vmem:[%s3 + $0x24] sm:$0xf]
  %v66 = vld [vmem:[%s3 + $0x28] sm:$0xf]
  %v67 = vld [vmem:[%s3 + $0x2c] sm:$0xf]
  %v68 = vld [vmem:[%s3 + $0x30] sm:$0xf]
  %v69 = vld [vmem:[%s3 + $0x34] sm:$0xf]
  %v70 = vld [vmem:[%s3 + $0x38] sm:$0xf]
  %v71 = vld [vmem:[%s3 + $0x3c] sm:$0xf]
  %v72 = vld [vmem:[%s4] sm:$0x1]
  %vm73 = vcmp.gt.bf16.partialorder %v23, 0
  %vm74 = vcmp.gt.bf16.partialorder %v24, 0
  %vm75 = vcmp.gt.bf16.partialorder %v25, 0
  %vm76 = vcmp.gt.bf16.partialorder %v26, 0
  %vm77 = vcmp.gt.bf16.partialorder %v27, 0
  %vm78 = vcmp.gt.bf16.partialorder %v28, 0
  %vm79 = vcmp.gt.bf16.partialorder %v29, 0
  %vm80 = vcmp.gt.bf16.partialorder %v30, 0
  %vm81 = vcmp.gt.bf16.partialorder %v31, 0
  %vm82 = vcmp.gt.bf16.partialorder %v32, 0
  %vm83 = vcmp.gt.bf16.partialorder %v33, 0
  %vm84 = vcmp.gt.bf16.partialorder %v34, 0
  %vm85 = vcmp.gt.bf16.partialorder %v35, 0
  %vm86 = vcmp.gt.bf16.partialorder %v36, 0
  %vm87 = vcmp.gt.bf16.partialorder %v37, 0
  %vm88 = vcmp.gt.bf16.partialorder %v38, 0
  %90 = vset.pattern.permute.xlu0 0
  %91 = vperm.xlu0 %90, %v56
  %v92 = vpop.permute.xlu0 %91
  %v95 = vunpack.c.l.s4 839922192
  %v96 = vunpack.c.0.s8 %v95
  %v97 = vlaneseq
  %v98 = vshrl.u32 %v97, 7
  %v99 = vsub.s32 %v96, %v98
  %v100 = vrot.slane %v92, %v99
  %102 = vset.pattern.permute.xlu0 0
  %103 = vperm.xlu0 %102, %v57
  %v104 = vpop.permute.xlu0 %103
  %v107 = vunpack.c.l.s4 839922192
  %v108 = vunpack.c.0.s8 %v107
  %v109 = vlaneseq
  %v110 = vshrl.u32 %v109, 7
  %v111 = vsub.s32 %v108, %v110
  %v112 = vrot.slane %v104, %v111
  %114 = vset.pattern.permute.xlu0 0
  %115 = vperm.xlu0 %114, %v58
  %v116 = vpop.permute.xlu0 %115
  %v119 = vunpack.c.l.s4 839922192
  %v120 = vunpack.c.0.s8 %v119
  %v121 = vlaneseq
  %v122 = vshrl.u32 %v121, 7
  %v123 = vsub.s32 %v120, %v122
  %v124 = vrot.slane %v116, %v123
  %126 = vset.pattern.permute.xlu0 0
  %127 = vperm.xlu0 %126, %v59
  %v128 = vpop.permute.xlu0 %127
  %v131 = vunpack.c.l.s4 839922192
  %v132 = vunpack.c.0.s8 %v131
  %v133 = vlaneseq
  %v134 = vshrl.u32 %v133, 7
  %v135 = vsub.s32 %v132, %v134
  %v136 = vrot.slane %v128, %v135
  %138 = vset.pattern.permute.xlu0 0
  %139 = vperm.xlu0 %138, %v60
  %v140 = vpop.permute.xlu0 %139
  %v143 = vunpack.c.l.s4 839922192
  %v144 = vunpack.c.0.s8 %v143
  %v145 = vlaneseq
  %v146 = vshrl.u32 %v145, 7
  %v147 = vsub.s32 %v144, %v146
  %v148 = vrot.slane %v140, %v147
  %150 = vset.pattern.permute.xlu0 0
  %151 = vperm.xlu0 %150, %v61
  %v152 = vpop.permute.xlu0 %151
  %v155 = vunpack.c.l.s4 839922192
  %v156 = vunpack.c.0.s8 %v155
  %v157 = vlaneseq
  %v158 = vshrl.u32 %v157, 7
  %v159 = vsub.s32 %v156, %v158
  %v160 = vrot.slane %v152, %v159
  %162 = vset.pattern.permute.xlu0 0
  %163 = vperm.xlu0 %162, %v62
  %v164 = vpop.permute.xlu0 %163
  %v167 = vunpack.c.l.s4 839922192
  %v168 = vunpack.c.0.s8 %v167
  %v169 = vlaneseq
  %v170 = vshrl.u32 %v169, 7
  %v171 = vsub.s32 %v168, %v170
  %v172 = vrot.slane %v164, %v171
  %174 = vset.pattern.permute.xlu0 0
  %175 = vperm.xlu0 %174, %v63
  %v176 = vpop.permute.xlu0 %175
  %v179 = vunpack.c.l.s4 839922192
  %v180 = vunpack.c.0.s8 %v179
  %v181 = vlaneseq
  %v182 = vshrl.u32 %v181, 7
  %v183 = vsub.s32 %v180, %v182
  %v184 = vrot.slane %v176, %v183
  %186 = vset.pattern.permute.xlu0 0
  %187 = vperm.xlu0 %186, %v64
  %v188 = vpop.permute.xlu0 %187
  %v191 = vunpack.c.l.s4 839922192
  %v192 = vunpack.c.0.s8 %v191
  %v193 = vlaneseq
  %v194 = vshrl.u32 %v193, 7
  %v195 = vsub.s32 %v192, %v194
  %v196 = vrot.slane %v188, %v195
  %198 = vset.pattern.permute.xlu0 0
  %199 = vperm.xlu0 %198, %v65
  %v200 = vpop.permute.xlu0 %199
  %v203 = vunpack.c.l.s4 839922192
  %v204 = vunpack.c.0.s8 %v203
  %v205 = vlaneseq
  %v206 = vshrl.u32 %v205, 7
  %v207 = vsub.s32 %v204, %v206
  %v208 = vrot.slane %v200, %v207
  %210 = vset.pattern.permute.xlu0 0
  %211 = vperm.xlu0 %210, %v66
  %v212 = vpop.permute.xlu0 %211
  %v215 = vunpack.c.l.s4 839922192
  %v216 = vunpack.c.0.s8 %v215
  %v217 = vlaneseq
  %v218 = vshrl.u32 %v217, 7
  %v219 = vsub.s32 %v216, %v218
  %v220 = vrot.slane %v212, %v219
  %222 = vset.pattern.permute.xlu0 0
  %223 = vperm.xlu0 %222, %v67
  %v224 = vpop.permute.xlu0 %223
  %v227 = vunpack.c.l.s4 839922192
  %v228 = vunpack.c.0.s8 %v227
  %v229 = vlaneseq
  %v230 = vshrl.u32 %v229, 7
  %v231 = vsub.s32 %v228, %v230
  %v232 = vrot.slane %v224, %v231
  %234 = vset.pattern.permute.xlu0 0
  %235 = vperm.xlu0 %234, %v68
  %v236 = vpop.permute.xlu0 %235
  %v239 = vunpack.c.l.s4 839922192
  %v240 = vunpack.c.0.s8 %v239
  %v241 = vlaneseq
  %v242 = vshrl.u32 %v241, 7
  %v243 = vsub.s32 %v240, %v242
  %v244 = vrot.slane %v236, %v243
  %246 = vset.pattern.permute.xlu0 0
  %247 = vperm.xlu0 %246, %v69
  %v248 = vpop.permute.xlu0 %247
  %v251 = vunpack.c.l.s4 839922192
  %v252 = vunpack.c.0.s8 %v251
  %v253 = vlaneseq
  %v254 = vshrl.u32 %v253, 7
  %v255 = vsub.s32 %v252, %v254
  %v256 = vrot.slane %v248, %v255
  %258 = vset.pattern.permute.xlu0 0
  %259 = vperm.xlu0 %258, %v70
  %v260 = vpop.permute.xlu0 %259
  %v263 = vunpack.c.l.s4 839922192
  %v264 = vunpack.c.0.s8 %v263
  %v265 = vlaneseq
  %v266 = vshrl.u32 %v265, 7
  %v267 = vsub.s32 %v264, %v266
  %v268 = vrot.slane %v260, %v267
  %270 = vset.pattern.permute.xlu0 0
  %271 = vperm.xlu0 %270, %v71
  %v272 = vpop.permute.xlu0 %271
  %v275 = vunpack.c.l.s4 839922192
  %v276 = vunpack.c.0.s8 %v275
  %v277 = vlaneseq
  %v278 = vshrl.u32 %v277, 7
  %v279 = vsub.s32 %v276, %v278
  %v280 = vrot.slane %v272, %v279
  %v282 = vpack.i.b16 %v55, %v55
  %v284 = vlaneseq
  %v285 = vshrl.u32 %v284, 7
  %v286 = vsub.s32 0, %v285
  %v287 = vrot.slane %v282, %v286
  %v289 = vunpack.c.l.b16 %v287
  %v290 = vpack.c.b16 %v289, %v289
  %v292 = vadd.bf16 %v100, %v290
  %v293 = vadd.bf16 %v112, %v290
  %v294 = vadd.bf16 %v124, %v290
  %v295 = vadd.bf16 %v136, %v290
  %v296 = vadd.bf16 %v148, %v290
  %v297 = vadd.bf16 %v160, %v290
  %v298 = vadd.bf16 %v172, %v290
  %v299 = vadd.bf16 %v184, %v290
  %v300 = vadd.bf16 %v196, %v290
  %v301 = vadd.bf16 %v208, %v290
  %v302 = vadd.bf16 %v220, %v290
  %v303 = vadd.bf16 %v232, %v290
  %v304 = vadd.bf16 %v244, %v290
  %v305 = vadd.bf16 %v256, %v290
  %v306 = vadd.bf16 %v268, %v290
  %v307 = vadd.bf16 %v280, %v290
  %vm308 = vcmp.gt.bf16.partialorder %v292, 0
  %vm309 = vcmp.gt.bf16.partialorder %v293, 0
  %vm310 = vcmp.gt.bf16.partialorder %v294, 0
  %vm311 = vcmp.gt.bf16.partialorder %v295, 0
  %vm312 = vcmp.gt.bf16.partialorder %v296, 0
  %vm313 = vcmp.gt.bf16.partialorder %v297, 0
  %vm314 = vcmp.gt.bf16.partialorder %v298, 0
  %vm315 = vcmp.gt.bf16.partialorder %v299, 0
  %vm316 = vcmp.gt.bf16.partialorder %v300, 0
  %vm317 = vcmp.gt.bf16.partialorder %v301, 0
  %vm318 = vcmp.gt.bf16.partialorder %v302, 0
  %vm319 = vcmp.gt.bf16.partialorder %v303, 0
  %vm320 = vcmp.gt.bf16.partialorder %v304, 0
  %vm321 = vcmp.gt.bf16.partialorder %v305, 0
  %vm322 = vcmp.gt.bf16.partialorder %v306, 0
  %vm323 = vcmp.gt.bf16.partialorder %v307, 0
  %v324 = vmul.bf16 %v292, 1045249613
  %v325 = vmul.bf16 %v293, 1045249613
  %v326 = vmul.bf16 %v294, 1045249613
  %v327 = vmul.bf16 %v295, 1045249613
  %v328 = vmul.bf16 %v296, 1045249613
  %v329 = vmul.bf16 %v297, 1045249613
  %v330 = vmul.bf16 %v298, 1045249613
  %v331 = vmul.bf16 %v299, 1045249613
  %v332 = vmul.bf16 %v300, 1045249613
  %v333 = vmul.bf16 %v301, 1045249613
  %v334 = vmul.bf16 %v302, 1045249613
  %v335 = vmul.bf16 %v303, 1045249613
  %v336 = vmul.bf16 %v304, 1045249613
  %v337 = vmul.bf16 %v305, 1045249613
  %v338 = vmul.bf16 %v306, 1045249613
  %v339 = vmul.bf16 %v307, 1045249613
  %v340 = vsel %vm308, %v292, %v324
  %v341 = vsel %vm309, %v293, %v325
  %v342 = vsel %vm310, %v294, %v326
  %v343 = vsel %vm311, %v295, %v327
  %v344 = vsel %vm312, %v296, %v328
  %v345 = vsel %vm313, %v297, %v329
  %v346 = vsel %vm314, %v298, %v330
  %v347 = vsel %vm315, %v299, %v331
  %v348 = vsel %vm316, %v300, %v332
  %v349 = vsel %vm317, %v301, %v333
  %v350 = vsel %vm318, %v302, %v334
  %v351 = vsel %vm319, %v303, %v335
  %v352 = vsel %vm320, %v304, %v336
  %v353 = vsel %vm321, %v305, %v337
  %v354 = vsel %vm322, %v306, %v338
  %v355 = vsel %vm323, %v307, %v339
  %v356 = vsel %vm73, %v340, 4048220490
  %v357 = vsel %vm74, %v341, 4048220490
  %v358 = vsel %vm75, %v342, 4048220490
  %v359 = vsel %vm76, %v343, 4048220490
  %v360 = vsel %vm77, %v344, 4048220490
  %v361 = vsel %vm78, %v345, 4048220490
  %v362 = vsel %vm79, %v346, 4048220490
  %v363 = vsel %vm80, %v347, 4048220490
  %v364 = vsel %vm81, %v348, 4048220490
  %v365 = vsel %vm82, %v349, 4048220490
  %v366 = vsel %vm83, %v350, 4048220490
  %v367 = vsel %vm84, %v351, 4048220490
  %v368 = vsel %vm85, %v352, 4048220490
  %v369 = vsel %vm86, %v353, 4048220490
  %v370 = vsel %vm87, %v354, 4048220490
  %v371 = vsel %vm88, %v355, 4048220490
  %v388 = vunpack.c.l.b16 %v356
  %v389 = vunpack.c.l.b16 %v357
  %v390 = vunpack.c.l.b16 %v358
  %v391 = vunpack.c.l.b16 %v359
  %v392 = vunpack.c.l.b16 %v360
  %v393 = vunpack.c.l.b16 %v361
  %v394 = vunpack.c.l.b16 %v362
  %v395 = vunpack.c.l.b16 %v363
  %v396 = vunpack.c.l.b16 %v364
  %v397 = vunpack.c.l.b16 %v365
  %v398 = vunpack.c.l.b16 %v366
  %v399 = vunpack.c.l.b16 %v367
  %v400 = vunpack.c.l.b16 %v368
  %v401 = vunpack.c.l.b16 %v369
  %v402 = vunpack.c.l.b16 %v370
  %v403 = vunpack.c.l.b16 %v371
  %v404 = vpack.c.b16 %v389, %v388
  %v405 = vpack.c.b16 %v391, %v390
  %v406 = vpack.c.b16 %v393, %v392
  %v407 = vpack.c.b16 %v395, %v394
  %v408 = vpack.c.b16 %v397, %v396
  %v409 = vpack.c.b16 %v399, %v398
  %v410 = vpack.c.b16 %v401, %v400
  %v411 = vpack.c.b16 %v403, %v402
  %420 = vmax.xlane.bf16.xlu0 %v404
  %v421 = vpop.xlane.xlu0 %420
  %422 = vmax.xlane.bf16.xlu0 %v405
  %v423 = vpop.xlane.xlu0 %422
  %424 = vmax.xlane.bf16.xlu0 %v406
  %v425 = vpop.xlane.xlu0 %424
  %426 = vmax.xlane.bf16.xlu0 %v407
  %v427 = vpop.xlane.xlu0 %426
  %428 = vmax.xlane.bf16.xlu0 %v408
  %v429 = vpop.xlane.xlu0 %428
  %430 = vmax.xlane.bf16.xlu0 %v409
  %v431 = vpop.xlane.xlu0 %430
  %432 = vmax.xlane.bf16.xlu0 %v410
  %v433 = vpop.xlane.xlu0 %432
  %434 = vmax.xlane.bf16.xlu0 %v411
  %v435 = vpop.xlane.xlu0 %434
  %v445 = vunpack.c.l.s4 839922192
  %v446 = vunpack.c.0.s8 %v445
  %v447 = vlaneseq
  %v448 = vshrl.u32 %v447, 7
  %v449 = vsub.s32 %v446, %v448
  %v450 = vrot.slane %v421, %v449
  %v452 = vunpack.c.l.s4 1985246804
  %v453 = vunpack.c.0.s8 %v452
  %v454 = vlaneseq
  %v455 = vshrl.u32 %v454, 7
  %v456 = vsub.s32 %v453, %v455
  %v457 = vrot.slane %v421, %v456
  %v459 = vunpack.c.l.s4 839922192
  %v460 = vunpack.c.0.s8 %v459
  %v461 = vlaneseq
  %v462 = vshrl.u32 %v461, 7
  %v463 = vsub.s32 %v460, %v462
  %v464 = vrot.slane %v423, %v463
  %v466 = vunpack.c.l.s4 1985246804
  %v467 = vunpack.c.0.s8 %v466
  %v468 = vlaneseq
  %v469 = vshrl.u32 %v468, 7
  %v470 = vsub.s32 %v467, %v469
  %v471 = vrot.slane %v423, %v470
  %v473 = vunpack.c.l.s4 839922192
  %v474 = vunpack.c.0.s8 %v473
  %v475 = vlaneseq
  %v476 = vshrl.u32 %v475, 7
  %v477 = vsub.s32 %v474, %v476
  %v478 = vrot.slane %v425, %v477
  %v480 = vunpack.c.l.s4 1985246804
  %v481 = vunpack.c.0.s8 %v480
  %v482 = vlaneseq
  %v483 = vshrl.u32 %v482, 7
  %v484 = vsub.s32 %v481, %v483
  %v485 = vrot.slane %v425, %v484
  %v487 = vunpack.c.l.s4 839922192
  %v488 = vunpack.c.0.s8 %v487
  %v489 = vlaneseq
  %v490 = vshrl.u32 %v489, 7
  %v491 = vsub.s32 %v488, %v490
  %v492 = vrot.slane %v427, %v491
  %v494 = vunpack.c.l.s4 1985246804
  %v495 = vunpack.c.0.s8 %v494
  %v496 = vlaneseq
  %v497 = vshrl.u32 %v496, 7
  %v498 = vsub.s32 %v495, %v497
  %v499 = vrot.slane %v427, %v498
  %v501 = vunpack.c.l.s4 839922192
  %v502 = vunpack.c.0.s8 %v501
  %v503 = vlaneseq
  %v504 = vshrl.u32 %v503, 7
  %v505 = vsub.s32 %v502, %v504
  %v506 = vrot.slane %v429, %v505
  %v508 = vunpack.c.l.s4 1985246804
  %v509 = vunpack.c.0.s8 %v508
  %v510 = vlaneseq
  %v511 = vshrl.u32 %v510, 7
  %v512 = vsub.s32 %v509, %v511
  %v513 = vrot.slane %v429, %v512
  %v515 = vunpack.c.l.s4 839922192
  %v516 = vunpack.c.0.s8 %v515
  %v517 = vlaneseq
  %v518 = vshrl.u32 %v517, 7
  %v519 = vsub.s32 %v516, %v518
  %v520 = vrot.slane %v431, %v519
  %v522 = vunpack.c.l.s4 1985246804
  %v523 = vunpack.c.0.s8 %v522
  %v524 = vlaneseq
  %v525 = vshrl.u32 %v524, 7
  %v526 = vsub.s32 %v523, %v525
  %v527 = vrot.slane %v431, %v526
  %v529 = vunpack.c.l.s4 839922192
  %v530 = vunpack.c.0.s8 %v529
  %v531 = vlaneseq
  %v532 = vshrl.u32 %v531, 7
  %v533 = vsub.s32 %v530, %v532
  %v534 = vrot.slane %v433, %v533
  %v536 = vunpack.c.l.s4 1985246804
  %v537 = vunpack.c.0.s8 %v536
  %v538 = vlaneseq
  %v539 = vshrl.u32 %v538, 7
  %v540 = vsub.s32 %v537, %v539
  %v541 = vrot.slane %v433, %v540
  %v543 = vunpack.c.l.s4 839922192
  %v544 = vunpack.c.0.s8 %v543
  %v545 = vlaneseq
  %v546 = vshrl.u32 %v545, 7
  %v547 = vsub.s32 %v544, %v546
  %v548 = vrot.slane %v435, %v547
  %v550 = vunpack.c.l.s4 1985246804
  %v551 = vunpack.c.0.s8 %v550
  %v552 = vlaneseq
  %v553 = vshrl.u32 %v552, 7
  %v554 = vsub.s32 %v551, %v553
  %v555 = vrot.slane %v435, %v554
  %v572 = vsub.bf16 %v356, %v450
  %v573 = vsub.bf16 %v357, %v457
  %v574 = vsub.bf16 %v358, %v464
  %v575 = vsub.bf16 %v359, %v471
  %v576 = vsub.bf16 %v360, %v478
  %v577 = vsub.bf16 %v361, %v485
  %v578 = vsub.bf16 %v362, %v492
  %v579 = vsub.bf16 %v363, %v499
  %v580 = vsub.bf16 %v364, %v506
  %v581 = vsub.bf16 %v365, %v513
  %v582 = vsub.bf16 %v366, %v520
  %v583 = vsub.bf16 %v367, %v527
  %v584 = vsub.bf16 %v368, %v534
  %v585 = vsub.bf16 %v369, %v541
  %v586 = vsub.bf16 %v370, %v548
  %v587 = vsub.bf16 %v371, %v555
  %v589 = vmul.bf16 %v572, 1069105081
  %v590 = vpow.bf16.pop %v589
  %v592 = vmul.bf16 %v573, 1069105081
  %v593 = vpow.bf16.pop %v592
  %v595 = vmul.bf16 %v574, 1069105081
  %v596 = vpow.bf16.pop %v595
  %v598 = vmul.bf16 %v575, 1069105081
  %v599 = vpow.bf16.pop %v598
  %v601 = vmul.bf16 %v576, 1069105081
  %v602 = vpow.bf16.pop %v601
  %v604 = vmul.bf16 %v577, 1069105081
  %v605 = vpow.bf16.pop %v604
  %v607 = vmul.bf16 %v578, 1069105081
  %v608 = vpow.bf16.pop %v607
  %v610 = vmul.bf16 %v579, 1069105081
  %v611 = vpow.bf16.pop %v610
  %v613 = vmul.bf16 %v580, 1069105081
  %v614 = vpow.bf16.pop %v613
  %v616 = vmul.bf16 %v581, 1069105081
  %v617 = vpow.bf16.pop %v616
  %v619 = vmul.bf16 %v582, 1069105081
  %v620 = vpow.bf16.pop %v619
  %v622 = vmul.bf16 %v583, 1069105081
  %v623 = vpow.bf16.pop %v622
  %v625 = vmul.bf16 %v584, 1069105081
  %v626 = vpow.bf16.pop %v625
  %v628 = vmul.bf16 %v585, 1069105081
  %v629 = vpow.bf16.pop %v628
  %v631 = vmul.bf16 %v586, 1069105081
  %v632 = vpow.bf16.pop %v631
  %v634 = vmul.bf16 %v587, 1069105081
  %v635 = vpow.bf16.pop %v634
  %v652 = vunpack.c.l.b16 %v590
  %v653 = vunpack.c.l.b16 %v593
  %v654 = vunpack.c.l.b16 %v596
  %v655 = vunpack.c.l.b16 %v599
  %v656 = vunpack.c.l.b16 %v602
  %v657 = vunpack.c.l.b16 %v605
  %v658 = vunpack.c.l.b16 %v608
  %v659 = vunpack.c.l.b16 %v611
  %v660 = vunpack.c.l.b16 %v614
  %v661 = vunpack.c.l.b16 %v617
  %v662 = vunpack.c.l.b16 %v620
  %v663 = vunpack.c.l.b16 %v623
  %v664 = vunpack.c.l.b16 %v626
  %v665 = vunpack.c.l.b16 %v629
  %v666 = vunpack.c.l.b16 %v632
  %v667 = vunpack.c.l.b16 %v635
  %v668 = vpack.c.b16 %v653, %v652
  %v669 = vpack.c.b16 %v655, %v654
  %v670 = vpack.c.b16 %v657, %v656
  %v671 = vpack.c.b16 %v659, %v658
  %v672 = vpack.c.b16 %v661, %v660
  %v673 = vpack.c.b16 %v663, %v662
  %v674 = vpack.c.b16 %v665, %v664
  %v675 = vpack.c.b16 %v667, %v666
  %v700 = vunpack.c.l.b16 %v39
  %v701 = vunpack.c.l.b16 %v40
  %v702 = vunpack.c.l.b16 %v41
  %v703 = vunpack.c.l.b16 %v42
  %v704 = vunpack.c.l.b16 %v43
  %v705 = vunpack.c.l.b16 %v44
  %v706 = vunpack.c.l.b16 %v45
  %v707 = vunpack.c.l.b16 %v46
  %v708 = vunpack.c.l.b16 %v47
  %v709 = vunpack.c.l.b16 %v48
  %v710 = vunpack.c.l.b16 %v49
  %v711 = vunpack.c.l.b16 %v50
  %v712 = vunpack.c.l.b16 %v51
  %v713 = vunpack.c.l.b16 %v52
  %v714 = vunpack.c.l.b16 %v53
  %v715 = vunpack.c.l.b16 %v54
  %v716 = vpack.c.b16 %v701, %v700
  %v717 = vpack.c.b16 %v703, %v702
  %v718 = vpack.c.b16 %v705, %v704
  %v719 = vpack.c.b16 %v707, %v706
  %v720 = vpack.c.b16 %v709, %v708
  %v721 = vpack.c.b16 %v711, %v710
  %v722 = vpack.c.b16 %v713, %v712
  %v723 = vpack.c.b16 %v715, %v714
  %732 = vmatprep.subr.bf16.mxu0 0
  %733 = vmatpush1.bf16.msra.mxu0 %v723
  %734 = vmatprep.subr.bf16.mxu0 0
  %735 = vmatpush1.bf16.msra.mxu0 %v722
  %736 = vmatprep.subr.bf16.mxu0 0
  %737 = vmatpush1.bf16.msra.mxu0 %v721
  %738 = vmatprep.subr.bf16.mxu0 0
  %739 = vmatpush1.bf16.msra.mxu0 %v720
  %740 = vmatprep.subr.bf16.mxu0 0
  %741 = vmatpush1.bf16.msra.mxu0 %v719
  %742 = vmatprep.subr.bf16.mxu0 0
  %743 = vmatpush1.bf16.msra.mxu0 %v718
  %744 = vmatprep.subr.bf16.mxu0 0
  %745 = vmatpush1.bf16.msra.mxu0 %v717
  %746 = vmatprep.subr.bf16.mxu0 0
  %747 = vmatpush1.bf16.msra.mxu0 %v716
  %748 = vmatprep.subr.bf16.mxu0 0
  %749 = vmatpush2.bf16.msra.mxu0 0
  %750 = vmatprep.subr.bf16.mxu0 0
  %751 = vmatpush2.bf16.msra.mxu0 0
  %752 = vmatprep.subr.bf16.mxu0 0
  %753 = vmatpush2.bf16.msra.mxu0 0
  %754 = vmatprep.subr.bf16.mxu0 0
  %755 = vmatpush2.bf16.msra.mxu0 0
  %756 = vmatprep.subr.bf16.mxu0 0
  %757 = vmatpush2.bf16.msra.mxu0 0
  %758 = vmatprep.subr.bf16.mxu0 0
  %759 = vmatpush2.bf16.msra.mxu0 0
  %760 = vmatprep.subr.bf16.mxu0 0
  %761 = vmatpush2.bf16.msra.mxu0 0
  %762 = vmatprep.subr.bf16.mxu0 0
  %763 = vmatpush2.bf16.msra.mxu0 0
  %764 = vmatprep.mubr.bf16.mxu0 0
  %765 = vmatmul.mubr.bf16.gmra.mxu0 %v668
  %v766 = vpop.f32.mrf.mxu0
  %v767 = vadd.f32 0.0, %v766
  %v768 = vpop.f32.mrf.mxu0
  %v769 = vpop.f32.mrf.mxu0
  %v770 = vadd.f32 0.0, %v769
  %v771 = vpop.f32.mrf.mxu0
  %772 = vmatprep.mubr.bf16.mxu0 0
  %773 = vmatmul.mubr.bf16.gmra.mxu0 %v669
  %v774 = vpop.f32.mrf.mxu0
  %v775 = vadd.f32 0.0, %v774
  %v776 = vpop.f32.mrf.mxu0
  %v777 = vpop.f32.mrf.mxu0
  %v778 = vadd.f32 0.0, %v777
  %v779 = vpop.f32.mrf.mxu0
  %780 = vmatprep.mubr.bf16.mxu0 0
  %781 = vmatmul.mubr.bf16.gmra.mxu0 %v670
  %v782 = vpop.f32.mrf.mxu0
  %v783 = vadd.f32 0.0, %v782
  %v784 = vpop.f32.mrf.mxu0
  %v785 = vpop.f32.mrf.mxu0
  %v786 = vadd.f32 0.0, %v785
  %v787 = vpop.f32.mrf.mxu0
  %788 = vmatprep.mubr.bf16.mxu0 0
  %789 = vmatmul.mubr.bf16.gmra.mxu0 %v671
  %v790 = vpop.f32.mrf.mxu0
  %v791 = vadd.f32 0.0, %v790
  %v792 = vpop.f32.mrf.mxu0
  %v793 = vpop.f32.mrf.mxu0
  %v794 = vadd.f32 0.0, %v793
  %v795 = vpop.f32.mrf.mxu0
  %796 = vmatprep.mubr.bf16.mxu0 0
  %797 = vmatmul.mubr.bf16.gmra.mxu0 %v672
  %v798 = vpop.f32.mrf.mxu0
  %v799 = vadd.f32 0.0, %v798
  %v800 = vpop.f32.mrf.mxu0
  %v801 = vpop.f32.mrf.mxu0
  %v802 = vadd.f32 0.0, %v801
  %v803 = vpop.f32.mrf.mxu0
  %804 = vmatprep.mubr.bf16.mxu0 0
  %805 = vmatmul.mubr.bf16.gmra.mxu0 %v673
  %v806 = vpop.f32.mrf.mxu0
  %v807 = vadd.f32 0.0, %v806
  %v808 = vpop.f32.mrf.mxu0
  %v809 = vpop.f32.mrf.mxu0
  %v810 = vadd.f32 0.0, %v809
  %v811 = vpop.f32.mrf.mxu0
  %812 = vmatprep.mubr.bf16.mxu0 0
  %813 = vmatmul.mubr.bf16.gmra.mxu0 %v674
  %v814 = vpop.f32.mrf.mxu0
  %v815 = vadd.f32 0.0, %v814
  %v816 = vpop.f32.mrf.mxu0
  %v817 = vpop.f32.mrf.mxu0
  %v818 = vadd.f32 0.0, %v817
  %v819 = vpop.f32.mrf.mxu0
  %820 = vmatprep.mubr.bf16.mxu0 0
  %821 = vmatmul.mubr.bf16.gmra.mxu0 %v675
  %v822 = vpop.f32.mrf.mxu0
  %v823 = vadd.f32 0.0, %v822
  %v824 = vpop.f32.mrf.mxu0
  %v825 = vpop.f32.mrf.mxu0
  %v826 = vadd.f32 0.0, %v825
  %v827 = vpop.f32.mrf.mxu0
  %828 = vdwg.mxu0
  %v829 = vrcp.pop %v767
  %v830 = vrcp.pop %v770
  %v831 = vrcp.pop %v775
  %v832 = vrcp.pop %v778
  %v833 = vrcp.pop %v783
  %v834 = vrcp.pop %v786
  %v835 = vrcp.pop %v791
  %v836 = vrcp.pop %v794
  %v837 = vrcp.pop %v799
  %v838 = vrcp.pop %v802
  %v839 = vrcp.pop %v807
  %v840 = vrcp.pop %v810
  %v841 = vrcp.pop %v815
  %v842 = vrcp.pop %v818
  %v843 = vrcp.pop %v823
  %v844 = vrcp.pop %v826
  %846 = vset.pattern.permute.xlu0 8
  %847 = vperm.xlu0 %846, %v829
  %v848 = vpop.permute.xlu0 %847
  %851 = vset.pattern.permute.xlu0 8
  %852 = vperm.xlu0 %851, %v830
  %v853 = vpop.permute.xlu0 %852
  %856 = vset.pattern.permute.xlu0 8
  %857 = vperm.xlu0 %856, %v831
  %v858 = vpop.permute.xlu0 %857
  %861 = vset.pattern.permute.xlu0 8
  %862 = vperm.xlu0 %861, %v832
  %v863 = vpop.permute.xlu0 %862
  %866 = vset.pattern.permute.xlu0 8
  %867 = vperm.xlu0 %866, %v833
  %v868 = vpop.permute.xlu0 %867
  %871 = vset.pattern.permute.xlu0 8
  %872 = vperm.xlu0 %871, %v834
  %v873 = vpop.permute.xlu0 %872
  %876 = vset.pattern.permute.xlu0 8
  %877 = vperm.xlu0 %876, %v835
  %v878 = vpop.permute.xlu0 %877
  %881 = vset.pattern.permute.xlu0 8
  %882 = vperm.xlu0 %881, %v836
  %v883 = vpop.permute.xlu0 %882
  %886 = vset.pattern.permute.xlu0 8
  %887 = vperm.xlu0 %886, %v837
  %v888 = vpop.permute.xlu0 %887
  %891 = vset.pattern.permute.xlu0 8
  %892 = vperm.xlu0 %891, %v838
  %v893 = vpop.permute.xlu0 %892
  %896 = vset.pattern.permute.xlu0 8
  %897 = vperm.xlu0 %896, %v839
  %v898 = vpop.permute.xlu0 %897
  %901 = vset.pattern.permute.xlu0 8
  %902 = vperm.xlu0 %901, %v840
  %v903 = vpop.permute.xlu0 %902
  %906 = vset.pattern.permute.xlu0 8
  %907 = vperm.xlu0 %906, %v841
  %v908 = vpop.permute.xlu0 %907
  %911 = vset.pattern.permute.xlu0 8
  %912 = vperm.xlu0 %911, %v842
  %v913 = vpop.permute.xlu0 %912
  %916 = vset.pattern.permute.xlu0 8
  %917 = vperm.xlu0 %916, %v843
  %v918 = vpop.permute.xlu0 %917
  %921 = vset.pattern.permute.xlu0 8
  %922 = vperm.xlu0 %921, %v844
  %v923 = vpop.permute.xlu0 %922
  %v925 = vmul.f32 %v767, %v848
  %v926 = vmul.f32 %v770, %v853
  %v927 = vmul.f32 %v775, %v858
  %v928 = vmul.f32 %v778, %v863
  %v929 = vmul.f32 %v783, %v868
  %v930 = vmul.f32 %v786, %v873
  %v931 = vmul.f32 %v791, %v878
  %v932 = vmul.f32 %v794, %v883
  %v933 = vmul.f32 %v799, %v888
  %v934 = vmul.f32 %v802, %v893
  %v935 = vmul.f32 %v807, %v898
  %v936 = vmul.f32 %v810, %v903
  %v937 = vmul.f32 %v815, %v908
  %v938 = vmul.f32 %v818, %v913
  %v939 = vmul.f32 %v823, %v918
  %v940 = vmul.f32 %v826, %v923
  %941 = vset.pattern.permute.xlu0 1
  %942 = vperm.xlu0 %941, %v56
  %v943 = vpop.permute.xlu0 %942
  %v946 = vunpack.c.l.s4 839922192
  %v947 = vunpack.c.0.s8 %v946
  %v948 = vlaneseq
  %v949 = vshrl.u32 %v948, 7
  %v950 = vsub.s32 %v947, %v949
  %v951 = vrot.slane %v943, %v950
  %952 = vset.pattern.permute.xlu0 1
  %953 = vperm.xlu0 %952, %v57
  %v954 = vpop.permute.xlu0 %953
  %v957 = vunpack.c.l.s4 839922192
  %v958 = vunpack.c.0.s8 %v957
  %v959 = vlaneseq
  %v960 = vshrl.u32 %v959, 7
  %v961 = vsub.s32 %v958, %v960
  %v962 = vrot.slane %v954, %v961
  %963 = vset.pattern.permute.xlu0 1
  %964 = vperm.xlu0 %963, %v58
  %v965 = vpop.permute.xlu0 %964
  %v968 = vunpack.c.l.s4 839922192
  %v969 = vunpack.c.0.s8 %v968
  %v970 = vlaneseq
  %v971 = vshrl.u32 %v970, 7
  %v972 = vsub.s32 %v969, %v971
  %v973 = vrot.slane %v965, %v972
  %974 = vset.pattern.permute.xlu0 1
  %975 = vperm.xlu0 %974, %v59
  %v976 = vpop.permute.xlu0 %975
  %v979 = vunpack.c.l.s4 839922192
  %v980 = vunpack.c.0.s8 %v979
  %v981 = vlaneseq
  %v982 = vshrl.u32 %v981, 7
  %v983 = vsub.s32 %v980, %v982
  %v984 = vrot.slane %v976, %v983
  %985 = vset.pattern.permute.xlu0 1
  %986 = vperm.xlu0 %985, %v60
  %v987 = vpop.permute.xlu0 %986
  %v990 = vunpack.c.l.s4 839922192
  %v991 = vunpack.c.0.s8 %v990
  %v992 = vlaneseq
  %v993 = vshrl.u32 %v992, 7
  %v994 = vsub.s32 %v991, %v993
  %v995 = vrot.slane %v987, %v994
  %996 = vset.pattern.permute.xlu0 1
  %997 = vperm.xlu0 %996, %v61
  %v998 = vpop.permute.xlu0 %997
  %v1001 = vunpack.c.l.s4 839922192
  %v1002 = vunpack.c.0.s8 %v1001
  %v1003 = vlaneseq
  %v1004 = vshrl.u32 %v1003, 7
  %v1005 = vsub.s32 %v1002, %v1004
  %v1006 = vrot.slane %v998, %v1005
  %1007 = vset.pattern.permute.xlu0 1
  %1008 = vperm.xlu0 %1007, %v62
  %v1009 = vpop.permute.xlu0 %1008
  %v1012 = vunpack.c.l.s4 839922192
  %v1013 = vunpack.c.0.s8 %v1012
  %v1014 = vlaneseq
  %v1015 = vshrl.u32 %v1014, 7
  %v1016 = vsub.s32 %v1013, %v1015
  %v1017 = vrot.slane %v1009, %v1016
  %1018 = vset.pattern.permute.xlu0 1
  %1019 = vperm.xlu0 %1018, %v63
  %v1020 = vpop.permute.xlu0 %1019
  %v1023 = vunpack.c.l.s4 839922192
  %v1024 = vunpack.c.0.s8 %v1023
  %v1025 = vlaneseq
  %v1026 = vshrl.u32 %v1025, 7
  %v1027 = vsub.s32 %v1024, %v1026
  %v1028 = vrot.slane %v1020, %v1027
  %1029 = vset.pattern.permute.xlu0 1
  %1030 = vperm.xlu0 %1029, %v64
  %v1031 = vpop.permute.xlu0 %1030
  %v1034 = vunpack.c.l.s4 839922192
  %v1035 = vunpack.c.0.s8 %v1034
  %v1036 = vlaneseq
  %v1037 = vshrl.u32 %v1036, 7
  %v1038 = vsub.s32 %v1035, %v1037
  %v1039 = vrot.slane %v1031, %v1038
  %1040 = vset.pattern.permute.xlu0 1
  %1041 = vperm.xlu0 %1040, %v65
  %v1042 = vpop.permute.xlu0 %1041
  %v1045 = vunpack.c.l.s4 839922192
  %v1046 = vunpack.c.0.s8 %v1045
  %v1047 = vlaneseq
  %v1048 = vshrl.u32 %v1047, 7
  %v1049 = vsub.s32 %v1046, %v1048
  %v1050 = vrot.slane %v1042, %v1049
  %1051 = vset.pattern.permute.xlu0 1
  %1052 = vperm.xlu0 %1051, %v66
  %v1053 = vpop.permute.xlu0 %1052
  %v1056 = vunpack.c.l.s4 839922192
  %v1057 = vunpack.c.0.s8 %v1056
  %v1058 = vlaneseq
  %v1059 = vshrl.u32 %v1058, 7
  %v1060 = vsub.s32 %v1057, %v1059
  %v1061 = vrot.slane %v1053, %v1060
  %1062 = vset.pattern.permute.xlu0 1
  %1063 = vperm.xlu0 %1062, %v67
  %v1064 = vpop.permute.xlu0 %1063
  %v1067 = vunpack.c.l.s4 839922192
  %v1068 = vunpack.c.0.s8 %v1067
  %v1069 = vlaneseq
  %v1070 = vshrl.u32 %v1069, 7
  %v1071 = vsub.s32 %v1068, %v1070
  %v1072 = vrot.slane %v1064, %v1071
  %1073 = vset.pattern.permute.xlu0 1
  %1074 = vperm.xlu0 %1073, %v68
  %v1075 = vpop.permute.xlu0 %1074
  %v1078 = vunpack.c.l.s4 839922192
  %v1079 = vunpack.c.0.s8 %v1078
  %v1080 = vlaneseq
  %v1081 = vshrl.u32 %v1080, 7
  %v1082 = vsub.s32 %v1079, %v1081
  %v1083 = vrot.slane %v1075, %v1082
  %1084 = vset.pattern.permute.xlu0 1
  %1085 = vperm.xlu0 %1084, %v69
  %v1086 = vpop.permute.xlu0 %1085
  %v1089 = vunpack.c.l.s4 839922192
  %v1090 = vunpack.c.0.s8 %v1089
  %v1091 = vlaneseq
  %v1092 = vshrl.u32 %v1091, 7
  %v1093 = vsub.s32 %v1090, %v1092
  %v1094 = vrot.slane %v1086, %v1093
  %1095 = vset.pattern.permute.xlu0 1
  %1096 = vperm.xlu0 %1095, %v70
  %v1097 = vpop.permute.xlu0 %1096
  %v1100 = vunpack.c.l.s4 839922192
  %v1101 = vunpack.c.0.s8 %v1100
  %v1102 = vlaneseq
  %v1103 = vshrl.u32 %v1102, 7
  %v1104 = vsub.s32 %v1101, %v1103
  %v1105 = vrot.slane %v1097, %v1104
  %1106 = vset.pattern.permute.xlu0 1
  %1107 = vperm.xlu0 %1106, %v71
  %v1108 = vpop.permute.xlu0 %1107
  %v1111 = vunpack.c.l.s4 839922192
  %v1112 = vunpack.c.0.s8 %v1111
  %v1113 = vlaneseq
  %v1114 = vshrl.u32 %v1113, 7
  %v1115 = vsub.s32 %v1112, %v1114
  %v1116 = vrot.slane %v1108, %v1115
  %v1117 = vshrl.u32 %v55, 16
  %v1118 = vpack.i.b16 %v1117, %v1117
  %v1120 = vlaneseq
  %v1121 = vshrl.u32 %v1120, 7
  %v1122 = vsub.s32 0, %v1121
  %v1123 = vrot.slane %v1118, %v1122
  %v1125 = vunpack.c.l.b16 %v1123
  %v1126 = vpack.c.b16 %v1125, %v1125
  %v1128 = vadd.bf16 %v951, %v1126
  %v1129 = vadd.bf16 %v962, %v1126
  %v1130 = vadd.bf16 %v973, %v1126
  %v1131 = vadd.bf16 %v984, %v1126
  %v1132 = vadd.bf16 %v995, %v1126
  %v1133 = vadd.bf16 %v1006, %v1126
  %v1134 = vadd.bf16 %v1017, %v1126
  %v1135 = vadd.bf16 %v1028, %v1126
  %v1136 = vadd.bf16 %v1039, %v1126
  %v1137 = vadd.bf16 %v1050, %v1126
  %v1138 = vadd.bf16 %v1061, %v1126
  %v1139 = vadd.bf16 %v1072, %v1126
  %v1140 = vadd.bf16 %v1083, %v1126
  %v1141 = vadd.bf16 %v1094, %v1126
  %v1142 = vadd.bf16 %v1105, %v1126
  %v1143 = vadd.bf16 %v1116, %v1126
  %vm1144 = vcmp.gt.bf16.partialorder %v1128, 0
  %vm1145 = vcmp.gt.bf16.partialorder %v1129, 0
  %vm1146 = vcmp.gt.bf16.partialorder %v1130, 0
  %vm1147 = vcmp.gt.bf16.partialorder %v1131, 0
  %vm1148 = vcmp.gt.bf16.partialorder %v1132, 0
  %vm1149 = vcmp.gt.bf16.partialorder %v1133, 0
  %vm1150 = vcmp.gt.bf16.partialorder %v1134, 0
  %vm1151 = vcmp.gt.bf16.partialorder %v1135, 0
  %vm1152 = vcmp.gt.bf16.partialorder %v1136, 0
  %vm1153 = vcmp.gt.bf16.partialorder %v1137, 0
  %vm1154 = vcmp.gt.bf16.partialorder %v1138, 0
  %vm1155 = vcmp.gt.bf16.partialorder %v1139, 0
  %vm1156 = vcmp.gt.bf16.partialorder %v1140, 0
  %vm1157 = vcmp.gt.bf16.partialorder %v1141, 0
  %vm1158 = vcmp.gt.bf16.partialorder %v1142, 0
  %vm1159 = vcmp.gt.bf16.partialorder %v1143, 0
  %v1160 = vmul.bf16 %v1128, 1045249613
  %v1161 = vmul.bf16 %v1129, 1045249613
  %v1162 = vmul.bf16 %v1130, 1045249613
  %v1163 = vmul.bf16 %v1131, 1045249613
  %v1164 = vmul.bf16 %v1132, 1045249613
  %v1165 = vmul.bf16 %v1133, 1045249613
  %v1166 = vmul.bf16 %v1134, 1045249613
  %v1167 = vmul.bf16 %v1135, 1045249613
  %v1168 = vmul.bf16 %v1136, 1045249613
  %v1169 = vmul.bf16 %v1137, 1045249613
  %v1170 = vmul.bf16 %v1138, 1045249613
  %v1171 = vmul.bf16 %v1139, 1045249613
  %v1172 = vmul.bf16 %v1140, 1045249613
  %v1173 = vmul.bf16 %v1141, 1045249613
  %v1174 = vmul.bf16 %v1142, 1045249613
  %v1175 = vmul.bf16 %v1143, 1045249613
  %v1176 = vsel %vm1144, %v1128, %v1160
  %v1177 = vsel %vm1145, %v1129, %v1161
  %v1178 = vsel %vm1146, %v1130, %v1162
  %v1179 = vsel %vm1147, %v1131, %v1163
  %v1180 = vsel %vm1148, %v1132, %v1164
  %v1181 = vsel %vm1149, %v1133, %v1165
  %v1182 = vsel %vm1150, %v1134, %v1166
  %v1183 = vsel %vm1151, %v1135, %v1167
  %v1184 = vsel %vm1152, %v1136, %v1168
  %v1185 = vsel %vm1153, %v1137, %v1169
  %v1186 = vsel %vm1154, %v1138, %v1170
  %v1187 = vsel %vm1155, %v1139, %v1171
  %v1188 = vsel %vm1156, %v1140, %v1172
  %v1189 = vsel %vm1157, %v1141, %v1173
  %v1190 = vsel %vm1158, %v1142, %v1174
  %v1191 = vsel %vm1159, %v1143, %v1175
  %v1192 = vsel %vm73, %v1176, 4048220490
  %v1193 = vsel %vm74, %v1177, 4048220490
  %v1194 = vsel %vm75, %v1178, 4048220490
  %v1195 = vsel %vm76, %v1179, 4048220490
  %v1196 = vsel %vm77, %v1180, 4048220490
  %v1197 = vsel %vm78, %v1181, 4048220490
  %v1198 = vsel %vm79, %v1182, 4048220490
  %v1199 = vsel %vm80, %v1183, 4048220490
  %v1200 = vsel %vm81, %v1184, 4048220490
  %v1201 = vsel %vm82, %v1185, 4048220490
  %v1202 = vsel %vm83, %v1186, 4048220490
  %v1203 = vsel %vm84, %v1187, 4048220490
  %v1204 = vsel %vm85, %v1188, 4048220490
  %v1205 = vsel %vm86, %v1189, 4048220490
  %v1206 = vsel %vm87, %v1190, 4048220490
  %v1207 = vsel %vm88, %v1191, 4048220490
  %v1224 = vunpack.c.l.b16 %v1192
  %v1225 = vunpack.c.l.b16 %v1193
  %v1226 = vunpack.c.l.b16 %v1194
  %v1227 = vunpack.c.l.b16 %v1195
  %v1228 = vunpack.c.l.b16 %v1196
  %v1229 = vunpack.c.l.b16 %v1197
  %v1230 = vunpack.c.l.b16 %v1198
  %v1231 = vunpack.c.l.b16 %v1199
  %v1232 = vunpack.c.l.b16 %v1200
  %v1233 = vunpack.c.l.b16 %v1201
  %v1234 = vunpack.c.l.b16 %v1202
  %v1235 = vunpack.c.l.b16 %v1203
  %v1236 = vunpack.c.l.b16 %v1204
  %v1237 = vunpack.c.l.b16 %v1205
  %v1238 = vunpack.c.l.b16 %v1206
  %v1239 = vunpack.c.l.b16 %v1207
  %v1240 = vpack.c.b16 %v1225, %v1224
  %v1241 = vpack.c.b16 %v1227, %v1226
  %v1242 = vpack.c.b16 %v1229, %v1228
  %v1243 = vpack.c.b16 %v1231, %v1230
  %v1244 = vpack.c.b16 %v1233, %v1232
  %v1245 = vpack.c.b16 %v1235, %v1234
  %v1246 = vpack.c.b16 %v1237, %v1236
  %v1247 = vpack.c.b16 %v1239, %v1238
  %1256 = vmax.xlane.bf16.xlu0 %v1240
  %v1257 = vpop.xlane.xlu0 %1256
  %1258 = vmax.xlane.bf16.xlu0 %v1241
  %v1259 = vpop.xlane.xlu0 %1258
  %1260 = vmax.xlane.bf16.xlu0 %v1242
  %v1261 = vpop.xlane.xlu0 %1260
  %1262 = vmax.xlane.bf16.xlu0 %v1243
  %v1263 = vpop.xlane.xlu0 %1262
  %1264 = vmax.xlane.bf16.xlu0 %v1244
  %v1265 = vpop.xlane.xlu0 %1264
  %1266 = vmax.xlane.bf16.xlu0 %v1245
  %v1267 = vpop.xlane.xlu0 %1266
  %1268 = vmax.xlane.bf16.xlu0 %v1246
  %v1269 = vpop.xlane.xlu0 %1268
  %1270 = vmax.xlane.bf16.xlu0 %v1247
  %v1271 = vpop.xlane.xlu0 %1270
  %v1281 = vunpack.c.l.s4 839922192
  %v1282 = vunpack.c.0.s8 %v1281
  %v1283 = vlaneseq
  %v1284 = vshrl.u32 %v1283, 7
  %v1285 = vsub.s32 %v1282, %v1284
  %v1286 = vrot.slane %v1257, %v1285
  %v1288 = vunpack.c.l.s4 1985246804
  %v1289 = vunpack.c.0.s8 %v1288
  %v1290 = vlaneseq
  %v1291 = vshrl.u32 %v1290, 7
  %v1292 = vsub.s32 %v1289, %v1291
  %v1293 = vrot.slane %v1257, %v1292
  %v1295 = vunpack.c.l.s4 839922192
  %v1296 = vunpack.c.0.s8 %v1295
  %v1297 = vlaneseq
  %v1298 = vshrl.u32 %v1297, 7
  %v1299 = vsub.s32 %v1296, %v1298
  %v1300 = vrot.slane %v1259, %v1299
  %v1302 = vunpack.c.l.s4 1985246804
  %v1303 = vunpack.c.0.s8 %v1302
  %v1304 = vlaneseq
  %v1305 = vshrl.u32 %v1304, 7
  %v1306 = vsub.s32 %v1303, %v1305
  %v1307 = vrot.slane %v1259, %v1306
  %v1309 = vunpack.c.l.s4 839922192
  %v1310 = vunpack.c.0.s8 %v1309
  %v1311 = vlaneseq
  %v1312 = vshrl.u32 %v1311, 7
  %v1313 = vsub.s32 %v1310, %v1312
  %v1314 = vrot.slane %v1261, %v1313
  %v1316 = vunpack.c.l.s4 1985246804
  %v1317 = vunpack.c.0.s8 %v1316
  %v1318 = vlaneseq
  %v1319 = vshrl.u32 %v1318, 7
  %v1320 = vsub.s32 %v1317, %v1319
  %v1321 = vrot.slane %v1261, %v1320
  %v1323 = vunpack.c.l.s4 839922192
  %v1324 = vunpack.c.0.s8 %v1323
  %v1325 = vlaneseq
  %v1326 = vshrl.u32 %v1325, 7
  %v1327 = vsub.s32 %v1324, %v1326
  %v1328 = vrot.slane %v1263, %v1327
  %v1330 = vunpack.c.l.s4 1985246804
  %v1331 = vunpack.c.0.s8 %v1330
  %v1332 = vlaneseq
  %v1333 = vshrl.u32 %v1332, 7
  %v1334 = vsub.s32 %v1331, %v1333
  %v1335 = vrot.slane %v1263, %v1334
  %v1337 = vunpack.c.l.s4 839922192
  %v1338 = vunpack.c.0.s8 %v1337
  %v1339 = vlaneseq
  %v1340 = vshrl.u32 %v1339, 7
  %v1341 = vsub.s32 %v1338, %v1340
  %v1342 = vrot.slane %v1265, %v1341
  %v1344 = vunpack.c.l.s4 1985246804
  %v1345 = vunpack.c.0.s8 %v1344
  %v1346 = vlaneseq
  %v1347 = vshrl.u32 %v1346, 7
  %v1348 = vsub.s32 %v1345, %v1347
  %v1349 = vrot.slane %v1265, %v1348
  %v1351 = vunpack.c.l.s4 839922192
  %v1352 = vunpack.c.0.s8 %v1351
  %v1353 = vlaneseq
  %v1354 = vshrl.u32 %v1353, 7
  %v1355 = vsub.s32 %v1352, %v1354
  %v1356 = vrot.slane %v1267, %v1355
  %v1358 = vunpack.c.l.s4 1985246804
  %v1359 = vunpack.c.0.s8 %v1358
  %v1360 = vlaneseq
  %v1361 = vshrl.u32 %v1360, 7
  %v1362 = vsub.s32 %v1359, %v1361
  %v1363 = vrot.slane %v1267, %v1362
  %v1365 = vunpack.c.l.s4 839922192
  %v1366 = vunpack.c.0.s8 %v1365
  %v1367 = vlaneseq
  %v1368 = vshrl.u32 %v1367, 7
  %v1369 = vsub.s32 %v1366, %v1368
  %v1370 = vrot.slane %v1269, %v1369
  %v1372 = vunpack.c.l.s4 1985246804
  %v1373 = vunpack.c.0.s8 %v1372
  %v1374 = vlaneseq
  %v1375 = vshrl.u32 %v1374, 7
  %v1376 = vsub.s32 %v1373, %v1375
  %v1377 = vrot.slane %v1269, %v1376
  %v1379 = vunpack.c.l.s4 839922192
  %v1380 = vunpack.c.0.s8 %v1379
  %v1381 = vlaneseq
  %v1382 = vshrl.u32 %v1381, 7
  %v1383 = vsub.s32 %v1380, %v1382
  %v1384 = vrot.slane %v1271, %v1383
  %v1386 = vunpack.c.l.s4 1985246804
  %v1387 = vunpack.c.0.s8 %v1386
  %v1388 = vlaneseq
  %v1389 = vshrl.u32 %v1388, 7
  %v1390 = vsub.s32 %v1387, %v1389
  %v1391 = vrot.slane %v1271, %v1390
  %v1408 = vsub.bf16 %v1192, %v1286
  %v1409 = vsub.bf16 %v1193, %v1293
  %v1410 = vsub.bf16 %v1194, %v1300
  %v1411 = vsub.bf16 %v1195, %v1307
  %v1412 = vsub.bf16 %v1196, %v1314
  %v1413 = vsub.bf16 %v1197, %v1321
  %v1414 = vsub.bf16 %v1198, %v1328
  %v1415 = vsub.bf16 %v1199, %v1335
  %v1416 = vsub.bf16 %v1200, %v1342
  %v1417 = vsub.bf16 %v1201, %v1349
  %v1418 = vsub.bf16 %v1202, %v1356
  %v1419 = vsub.bf16 %v1203, %v1363
  %v1420 = vsub.bf16 %v1204, %v1370
  %v1421 = vsub.bf16 %v1205, %v1377
  %v1422 = vsub.bf16 %v1206, %v1384
  %v1423 = vsub.bf16 %v1207, %v1391
  %v1425 = vmul.bf16 %v1408, 1069105081
  %v1426 = vpow.bf16.pop %v1425
  %v1428 = vmul.bf16 %v1409, 1069105081
  %v1429 = vpow.bf16.pop %v1428
  %v1431 = vmul.bf16 %v1410, 1069105081
  %v1432 = vpow.bf16.pop %v1431
  %v1434 = vmul.bf16 %v1411, 1069105081
  %v1435 = vpow.bf16.pop %v1434
  %v1437 = vmul.bf16 %v1412, 1069105081
  %v1438 = vpow.bf16.pop %v1437
  %v1440 = vmul.bf16 %v1413, 1069105081
  %v1441 = vpow.bf16.pop %v1440
  %v1443 = vmul.bf16 %v1414, 1069105081
  %v1444 = vpow.bf16.pop %v1443
  %v1446 = vmul.bf16 %v1415, 1069105081
  %v1447 = vpow.bf16.pop %v1446
  %v1449 = vmul.bf16 %v1416, 1069105081
  %v1450 = vpow.bf16.pop %v1449
  %v1452 = vmul.bf16 %v1417, 1069105081
  %v1453 = vpow.bf16.pop %v1452
  %v1455 = vmul.bf16 %v1418, 1069105081
  %v1456 = vpow.bf16.pop %v1455
  %v1458 = vmul.bf16 %v1419, 1069105081
  %v1459 = vpow.bf16.pop %v1458
  %v1461 = vmul.bf16 %v1420, 1069105081
  %v1462 = vpow.bf16.pop %v1461
  %v1464 = vmul.bf16 %v1421, 1069105081
  %v1465 = vpow.bf16.pop %v1464
  %v1467 = vmul.bf16 %v1422, 1069105081
  %v1468 = vpow.bf16.pop %v1467
  %v1470 = vmul.bf16 %v1423, 1069105081
  %v1471 = vpow.bf16.pop %v1470
  %v1488 = vunpack.c.l.b16 %v1426
  %v1489 = vunpack.c.l.b16 %v1429
  %v1490 = vunpack.c.l.b16 %v1432
  %v1491 = vunpack.c.l.b16 %v1435
  %v1492 = vunpack.c.l.b16 %v1438
  %v1493 = vunpack.c.l.b16 %v1441
  %v1494 = vunpack.c.l.b16 %v1444
  %v1495 = vunpack.c.l.b16 %v1447
  %v1496 = vunpack.c.l.b16 %v1450
  %v1497 = vunpack.c.l.b16 %v1453
  %v1498 = vunpack.c.l.b16 %v1456
  %v1499 = vunpack.c.l.b16 %v1459
  %v1500 = vunpack.c.l.b16 %v1462
  %v1501 = vunpack.c.l.b16 %v1465
  %v1502 = vunpack.c.l.b16 %v1468
  %v1503 = vunpack.c.l.b16 %v1471
  %v1504 = vpack.c.b16 %v1489, %v1488
  %v1505 = vpack.c.b16 %v1491, %v1490
  %v1506 = vpack.c.b16 %v1493, %v1492
  %v1507 = vpack.c.b16 %v1495, %v1494
  %v1508 = vpack.c.b16 %v1497, %v1496
  %v1509 = vpack.c.b16 %v1499, %v1498
  %v1510 = vpack.c.b16 %v1501, %v1500
  %v1511 = vpack.c.b16 %v1503, %v1502
  %1520 = vrot.lane.b32.xlu0 %v716, 119
  %v1521 = vpop.permute.xlu0 %1520
  %1522 = vrot.lane.b32.xlu0 %v717, 119
  %v1523 = vpop.permute.xlu0 %1522
  %1524 = vrot.lane.b32.xlu0 %v718, 119
  %v1525 = vpop.permute.xlu0 %1524
  %1526 = vrot.lane.b32.xlu0 %v719, 119
  %v1527 = vpop.permute.xlu0 %1526
  %1528 = vrot.lane.b32.xlu0 %v720, 119
  %v1529 = vpop.permute.xlu0 %1528
  %1530 = vrot.lane.b32.xlu0 %v721, 119
  %v1531 = vpop.permute.xlu0 %1530
  %1532 = vrot.lane.b32.xlu0 %v722, 119
  %v1533 = vpop.permute.xlu0 %1532
  %1534 = vrot.lane.b32.xlu0 %v723, 119
  %v1535 = vpop.permute.xlu0 %1534
  %1544 = vmatprep.subr.bf16.mxu0 0
  %1545 = vmatpush1.bf16.msra.mxu0 %v1535
  %1546 = vmatprep.subr.bf16.mxu0 0
  %1547 = vmatpush1.bf16.msra.mxu0 %v1533
  %1548 = vmatprep.subr.bf16.mxu0 0
  %1549 = vmatpush1.bf16.msra.mxu0 %v1531
  %1550 = vmatprep.subr.bf16.mxu0 0
  %1551 = vmatpush1.bf16.msra.mxu0 %v1529
  %1552 = vmatprep.subr.bf16.mxu0 0
  %1553 = vmatpush1.bf16.msra.mxu0 %v1527
  %1554 = vmatprep.subr.bf16.mxu0 0
  %1555 = vmatpush1.bf16.msra.mxu0 %v1525
  %1556 = vmatprep.subr.bf16.mxu0 0
  %1557 = vmatpush1.bf16.msra.mxu0 %v1523
  %1558 = vmatprep.subr.bf16.mxu0 0
  %1559 = vmatpush1.bf16.msra.mxu0 %v1521
  %1560 = vmatprep.subr.bf16.mxu0 0
  %1561 = vmatpush2.bf16.msra.mxu0 0
  %1562 = vmatprep.subr.bf16.mxu0 0
  %1563 = vmatpush2.bf16.msra.mxu0 0
  %1564 = vmatprep.subr.bf16.mxu0 0
  %1565 = vmatpush2.bf16.msra.mxu0 0
  %1566 = vmatprep.subr.bf16.mxu0 0
  %1567 = vmatpush2.bf16.msra.mxu0 0
  %1568 = vmatprep.subr.bf16.mxu0 0
  %1569 = vmatpush2.bf16.msra.mxu0 0
  %1570 = vmatprep.subr.bf16.mxu0 0
  %1571 = vmatpush2.bf16.msra.mxu0 0
  %1572 = vmatprep.subr.bf16.mxu0 0
  %1573 = vmatpush2.bf16.msra.mxu0 0
  %1574 = vmatprep.subr.bf16.mxu0 0
  %1575 = vmatpush2.bf16.msra.mxu0 0
  %1576 = vmatprep.mubr.bf16.mxu0 0
  %1577 = vmatmul.mubr.bf16.gmra.mxu0 %v1504
  %v1578 = vpop.f32.mrf.mxu0
  %v1579 = vadd.f32 0.0, %v1578
  %v1580 = vpop.f32.mrf.mxu0
  %v1581 = vpop.f32.mrf.mxu0
  %v1582 = vadd.f32 0.0, %v1581
  %v1583 = vpop.f32.mrf.mxu0
  %1584 = vmatprep.mubr.bf16.mxu0 0
  %1585 = vmatmul.mubr.bf16.gmra.mxu0 %v1505
  %v1586 = vpop.f32.mrf.mxu0
  %v1587 = vadd.f32 0.0, %v1586
  %v1588 = vpop.f32.mrf.mxu0
  %v1589 = vpop.f32.mrf.mxu0
  %v1590 = vadd.f32 0.0, %v1589
  %v1591 = vpop.f32.mrf.mxu0
  %1592 = vmatprep.mubr.bf16.mxu0 0
  %1593 = vmatmul.mubr.bf16.gmra.mxu0 %v1506
  %v1594 = vpop.f32.mrf.mxu0
  %v1595 = vadd.f32 0.0, %v1594
  %v1596 = vpop.f32.mrf.mxu0
  %v1597 = vpop.f32.mrf.mxu0
  %v1598 = vadd.f32 0.0, %v1597
  %v1599 = vpop.f32.mrf.mxu0
  %1600 = vmatprep.mubr.bf16.mxu0 0
  %1601 = vmatmul.mubr.bf16.gmra.mxu0 %v1507
  %v1602 = vpop.f32.mrf.mxu0
  %v1603 = vadd.f32 0.0, %v1602
  %v1604 = vpop.f32.mrf.mxu0
  %v1605 = vpop.f32.mrf.mxu0
  %v1606 = vadd.f32 0.0, %v1605
  %v1607 = vpop.f32.mrf.mxu0
  %1608 = vmatprep.mubr.bf16.mxu0 0
  %1609 = vmatmul.mubr.bf16.gmra.mxu0 %v1508
  %v1610 = vpop.f32.mrf.mxu0
  %v1611 = vadd.f32 0.0, %v1610
  %v1612 = vpop.f32.mrf.mxu0
  %v1613 = vpop.f32.mrf.mxu0
  %v1614 = vadd.f32 0.0, %v1613
  %v1615 = vpop.f32.mrf.mxu0
  %1616 = vmatprep.mubr.bf16.mxu0 0
  %1617 = vmatmul.mubr.bf16.gmra.mxu0 %v1509
  %v1618 = vpop.f32.mrf.mxu0
  %v1619 = vadd.f32 0.0, %v1618
  %v1620 = vpop.f32.mrf.mxu0
  %v1621 = vpop.f32.mrf.mxu0
  %v1622 = vadd.f32 0.0, %v1621
  %v1623 = vpop.f32.mrf.mxu0
  %1624 = vmatprep.mubr.bf16.mxu0 0
  %1625 = vmatmul.mubr.bf16.gmra.mxu0 %v1510
  %v1626 = vpop.f32.mrf.mxu0
  %v1627 = vadd.f32 0.0, %v1626
  %v1628 = vpop.f32.mrf.mxu0
  %v1629 = vpop.f32.mrf.mxu0
  %v1630 = vadd.f32 0.0, %v1629
  %v1631 = vpop.f32.mrf.mxu0
  %1632 = vmatprep.mubr.bf16.mxu0 0
  %1633 = vmatmul.mubr.bf16.gmra.mxu0 %v1511
  %v1634 = vpop.f32.mrf.mxu0
  %v1635 = vadd.f32 0.0, %v1634
  %v1636 = vpop.f32.mrf.mxu0
  %v1637 = vpop.f32.mrf.mxu0
  %v1638 = vadd.f32 0.0, %v1637
  %v1639 = vpop.f32.mrf.mxu0
  %1640 = vdwg.mxu0
  %v1641 = vrcp.pop %v1579
  %v1642 = vrcp.pop %v1582
  %v1643 = vrcp.pop %v1587
  %v1644 = vrcp.pop %v1590
  %v1645 = vrcp.pop %v1595
  %v1646 = vrcp.pop %v1598
  %v1647 = vrcp.pop %v1603
  %v1648 = vrcp.pop %v1606
  %v1649 = vrcp.pop %v1611
  %v1650 = vrcp.pop %v1614
  %v1651 = vrcp.pop %v1619
  %v1652 = vrcp.pop %v1622
  %v1653 = vrcp.pop %v1627
  %v1654 = vrcp.pop %v1630
  %v1655 = vrcp.pop %v1635
  %v1656 = vrcp.pop %v1638
  %1658 = vset.pattern.permute.xlu0 8
  %1659 = vperm.xlu0 %1658, %v1641
  %v1660 = vpop.permute.xlu0 %1659
  %1663 = vset.pattern.permute.xlu0 8
  %1664 = vperm.xlu0 %1663, %v1642
  %v1665 = vpop.permute.xlu0 %1664
  %1668 = vset.pattern.permute.xlu0 8
  %1669 = vperm.xlu0 %1668, %v1643
  %v1670 = vpop.permute.xlu0 %1669
  %1673 = vset.pattern.permute.xlu0 8
  %1674 = vperm.xlu0 %1673, %v1644
  %v1675 = vpop.permute.xlu0 %1674
  %1678 = vset.pattern.permute.xlu0 8
  %1679 = vperm.xlu0 %1678, %v1645
  %v1680 = vpop.permute.xlu0 %1679
  %1683 = vset.pattern.permute.xlu0 8
  %1684 = vperm.xlu0 %1683, %v1646
  %v1685 = vpop.permute.xlu0 %1684
  %1688 = vset.pattern.permute.xlu0 8
  %1689 = vperm.xlu0 %1688, %v1647
  %v1690 = vpop.permute.xlu0 %1689
  %1693 = vset.pattern.permute.xlu0 8
  %1694 = vperm.xlu0 %1693, %v1648
  %v1695 = vpop.permute.xlu0 %1694
  %1698 = vset.pattern.permute.xlu0 8
  %1699 = vperm.xlu0 %1698, %v1649
  %v1700 = vpop.permute.xlu0 %1699
  %1703 = vset.pattern.permute.xlu0 8
  %1704 = vperm.xlu0 %1703, %v1650
  %v1705 = vpop.permute.xlu0 %1704
  %1708 = vset.pattern.permute.xlu0 8
  %1709 = vperm.xlu0 %1708, %v1651
  %v1710 = vpop.permute.xlu0 %1709
  %1713 = vset.pattern.permute.xlu0 8
  %1714 = vperm.xlu0 %1713, %v1652
  %v1715 = vpop.permute.xlu0 %1714
  %1718 = vset.pattern.permute.xlu0 8
  %1719 = vperm.xlu0 %1718, %v1653
  %v1720 = vpop.permute.xlu0 %1719
  %1723 = vset.pattern.permute.xlu0 8
  %1724 = vperm.xlu0 %1723, %v1654
  %v1725 = vpop.permute.xlu0 %1724
  %1728 = vset.pattern.permute.xlu0 8
  %1729 = vperm.xlu0 %1728, %v1655
  %v1730 = vpop.permute.xlu0 %1729
  %1733 = vset.pattern.permute.xlu0 8
  %1734 = vperm.xlu0 %1733, %v1656
  %v1735 = vpop.permute.xlu0 %1734
  %v1737 = vmul.f32 %v1579, %v1660
  %v1738 = vmul.f32 %v1582, %v1665
  %v1739 = vmul.f32 %v1587, %v1670
  %v1740 = vmul.f32 %v1590, %v1675
  %v1741 = vmul.f32 %v1595, %v1680
  %v1742 = vmul.f32 %v1598, %v1685
  %v1743 = vmul.f32 %v1603, %v1690
  %v1744 = vmul.f32 %v1606, %v1695
  %v1745 = vmul.f32 %v1611, %v1700
  %v1746 = vmul.f32 %v1614, %v1705
  %v1747 = vmul.f32 %v1619, %v1710
  %v1748 = vmul.f32 %v1622, %v1715
  %v1749 = vmul.f32 %v1627, %v1720
  %v1750 = vmul.f32 %v1630, %v1725
  %v1751 = vmul.f32 %v1635, %v1730
  %v1752 = vmul.f32 %v1638, %v1735
  %1753 = vset.pattern.permute.xlu0 2
  %1754 = vperm.xlu0 %1753, %v56
  %v1755 = vpop.permute.xlu0 %1754
  %v1758 = vunpack.c.l.s4 839922192
  %v1759 = vunpack.c.0.s8 %v1758
  %v1760 = vlaneseq
  %v1761 = vshrl.u32 %v1760, 7
  %v1762 = vsub.s32 %v1759, %v1761
  %v1763 = vrot.slane %v1755, %v1762
  %1764 = vset.pattern.permute.xlu0 2
  %1765 = vperm.xlu0 %1764, %v57
  %v1766 = vpop.permute.xlu0 %1765
  %v1769 = vunpack.c.l.s4 839922192
  %v1770 = vunpack.c.0.s8 %v1769
  %v1771 = vlaneseq
  %v1772 = vshrl.u32 %v1771, 7
  %v1773 = vsub.s32 %v1770, %v1772
  %v1774 = vrot.slane %v1766, %v1773
  %1775 = vset.pattern.permute.xlu0 2
  %1776 = vperm.xlu0 %1775, %v58
  %v1777 = vpop.permute.xlu0 %1776
  %v1780 = vunpack.c.l.s4 839922192
  %v1781 = vunpack.c.0.s8 %v1780
  %v1782 = vlaneseq
  %v1783 = vshrl.u32 %v1782, 7
  %v1784 = vsub.s32 %v1781, %v1783
  %v1785 = vrot.slane %v1777, %v1784
  %1786 = vset.pattern.permute.xlu0 2
  %1787 = vperm.xlu0 %1786, %v59
  %v1788 = vpop.permute.xlu0 %1787
  %v1791 = vunpack.c.l.s4 839922192
  %v1792 = vunpack.c.0.s8 %v1791
  %v1793 = vlaneseq
  %v1794 = vshrl.u32 %v1793, 7
  %v1795 = vsub.s32 %v1792, %v1794
  %v1796 = vrot.slane %v1788, %v1795
  %1797 = vset.pattern.permute.xlu0 2
  %1798 = vperm.xlu0 %1797, %v60
  %v1799 = vpop.permute.xlu0 %1798
  %v1802 = vunpack.c.l.s4 839922192
  %v1803 = vunpack.c.0.s8 %v1802
  %v1804 = vlaneseq
  %v1805 = vshrl.u32 %v1804, 7
  %v1806 = vsub.s32 %v1803, %v1805
  %v1807 = vrot.slane %v1799, %v1806
  %1808 = vset.pattern.permute.xlu0 2
  %1809 = vperm.xlu0 %1808, %v61
  %v1810 = vpop.permute.xlu0 %1809
  %v1813 = vunpack.c.l.s4 839922192
  %v1814 = vunpack.c.0.s8 %v1813
  %v1815 = vlaneseq
  %v1816 = vshrl.u32 %v1815, 7
  %v1817 = vsub.s32 %v1814, %v1816
  %v1818 = vrot.slane %v1810, %v1817
  %1819 = vset.pattern.permute.xlu0 2
  %1820 = vperm.xlu0 %1819, %v62
  %v1821 = vpop.permute.xlu0 %1820
  %v1824 = vunpack.c.l.s4 839922192
  %v1825 = vunpack.c.0.s8 %v1824
  %v1826 = vlaneseq
  %v1827 = vshrl.u32 %v1826, 7
  %v1828 = vsub.s32 %v1825, %v1827
  %v1829 = vrot.slane %v1821, %v1828
  %1830 = vset.pattern.permute.xlu0 2
  %1831 = vperm.xlu0 %1830, %v63
  %v1832 = vpop.permute.xlu0 %1831
  %v1835 = vunpack.c.l.s4 839922192
  %v1836 = vunpack.c.0.s8 %v1835
  %v1837 = vlaneseq
  %v1838 = vshrl.u32 %v1837, 7
  %v1839 = vsub.s32 %v1836, %v1838
  %v1840 = vrot.slane %v1832, %v1839
  %1841 = vset.pattern.permute.xlu0 2
  %1842 = vperm.xlu0 %1841, %v64
  %v1843 = vpop.permute.xlu0 %1842
  %v1846 = vunpack.c.l.s4 839922192
  %v1847 = vunpack.c.0.s8 %v1846
  %v1848 = vlaneseq
  %v1849 = vshrl.u32 %v1848, 7
  %v1850 = vsub.s32 %v1847, %v1849
  %v1851 = vrot.slane %v1843, %v1850
  %1852 = vset.pattern.permute.xlu0 2
  %1853 = vperm.xlu0 %1852, %v65
  %v1854 = vpop.permute.xlu0 %1853
  %v1857 = vunpack.c.l.s4 839922192
  %v1858 = vunpack.c.0.s8 %v1857
  %v1859 = vlaneseq
  %v1860 = vshrl.u32 %v1859, 7
  %v1861 = vsub.s32 %v1858, %v1860
  %v1862 = vrot.slane %v1854, %v1861
  %1863 = vset.pattern.permute.xlu0 2
  %1864 = vperm.xlu0 %1863, %v66
  %v1865 = vpop.permute.xlu0 %1864
  %v1868 = vunpack.c.l.s4 839922192
  %v1869 = vunpack.c.0.s8 %v1868
  %v1870 = vlaneseq
  %v1871 = vshrl.u32 %v1870, 7
  %v1872 = vsub.s32 %v1869, %v1871
  %v1873 = vrot.slane %v1865, %v1872
  %1874 = vset.pattern.permute.xlu0 2
  %1875 = vperm.xlu0 %1874, %v67
  %v1876 = vpop.permute.xlu0 %1875
  %v1879 = vunpack.c.l.s4 839922192
  %v1880 = vunpack.c.0.s8 %v1879
  %v1881 = vlaneseq
  %v1882 = vshrl.u32 %v1881, 7
  %v1883 = vsub.s32 %v1880, %v1882
  %v1884 = vrot.slane %v1876, %v1883
  %1885 = vset.pattern.permute.xlu0 2
  %1886 = vperm.xlu0 %1885, %v68
  %v1887 = vpop.permute.xlu0 %1886
  %v1890 = vunpack.c.l.s4 839922192
  %v1891 = vunpack.c.0.s8 %v1890
  %v1892 = vlaneseq
  %v1893 = vshrl.u32 %v1892, 7
  %v1894 = vsub.s32 %v1891, %v1893
  %v1895 = vrot.slane %v1887, %v1894
  %1896 = vset.pattern.permute.xlu0 2
  %1897 = vperm.xlu0 %1896, %v69
  %v1898 = vpop.permute.xlu0 %1897
  %v1901 = vunpack.c.l.s4 839922192
  %v1902 = vunpack.c.0.s8 %v1901
  %v1903 = vlaneseq
  %v1904 = vshrl.u32 %v1903, 7
  %v1905 = vsub.s32 %v1902, %v1904
  %v1906 = vrot.slane %v1898, %v1905
  %1907 = vset.pattern.permute.xlu0 2
  %1908 = vperm.xlu0 %1907, %v70
  %v1909 = vpop.permute.xlu0 %1908
  %v1912 = vunpack.c.l.s4 839922192
  %v1913 = vunpack.c.0.s8 %v1912
  %v1914 = vlaneseq
  %v1915 = vshrl.u32 %v1914, 7
  %v1916 = vsub.s32 %v1913, %v1915
  %v1917 = vrot.slane %v1909, %v1916
  %1918 = vset.pattern.permute.xlu0 2
  %1919 = vperm.xlu0 %1918, %v71
  %v1920 = vpop.permute.xlu0 %1919
  %v1923 = vunpack.c.l.s4 839922192
  %v1924 = vunpack.c.0.s8 %v1923
  %v1925 = vlaneseq
  %v1926 = vshrl.u32 %v1925, 7
  %v1927 = vsub.s32 %v1924, %v1926
  %v1928 = vrot.slane %v1920, %v1927
  %v1929 = vlaneseq
  %v1930 = vshrl.u32 %v1929, 7
  %v1931 = vsub.s32 1, %v1930
  %v1932 = vrot.slane %v282, %v1931
  %v1934 = vunpack.c.l.b16 %v1932
  %v1935 = vpack.c.b16 %v1934, %v1934
  %v1937 = vadd.bf16 %v1763, %v1935
  %v1938 = vadd.bf16 %v1774, %v1935
  %v1939 = vadd.bf16 %v1785, %v1935
  %v1940 = vadd.bf16 %v1796, %v1935
  %v1941 = vadd.bf16 %v1807, %v1935
  %v1942 = vadd.bf16 %v1818, %v1935
  %v1943 = vadd.bf16 %v1829, %v1935
  %v1944 = vadd.bf16 %v1840, %v1935
  %v1945 = vadd.bf16 %v1851, %v1935
  %v1946 = vadd.bf16 %v1862, %v1935
  %v1947 = vadd.bf16 %v1873, %v1935
  %v1948 = vadd.bf16 %v1884, %v1935
  %v1949 = vadd.bf16 %v1895, %v1935
  %v1950 = vadd.bf16 %v1906, %v1935
  %v1951 = vadd.bf16 %v1917, %v1935
  %v1952 = vadd.bf16 %v1928, %v1935
  %vm1953 = vcmp.gt.bf16.partialorder %v1937, 0
  %vm1954 = vcmp.gt.bf16.partialorder %v1938, 0
  %vm1955 = vcmp.gt.bf16.partialorder %v1939, 0
  %vm1956 = vcmp.gt.bf16.partialorder %v1940, 0
  %vm1957 = vcmp.gt.bf16.partialorder %v1941, 0
  %vm1958 = vcmp.gt.bf16.partialorder %v1942, 0
  %vm1959 = vcmp.gt.bf16.partialorder %v1943, 0
  %vm1960 = vcmp.gt.bf16.partialorder %v1944, 0
  %vm1961 = vcmp.gt.bf16.partialorder %v1945, 0
  %vm1962 = vcmp.gt.bf16.partialorder %v1946, 0
  %vm1963 = vcmp.gt.bf16.partialorder %v1947, 0
  %vm1964 = vcmp.gt.bf16.partialorder %v1948, 0
  %vm1965 = vcmp.gt.bf16.partialorder %v1949, 0
  %vm1966 = vcmp.gt.bf16.partialorder %v1950, 0
  %vm1967 = vcmp.gt.bf16.partialorder %v1951, 0
  %vm1968 = vcmp.gt.bf16.partialorder %v1952, 0
  %v1969 = vmul.bf16 %v1937, 1045249613
  %v1970 = vmul.bf16 %v1938, 1045249613
  %v1971 = vmul.bf16 %v1939, 1045249613
  %v1972 = vmul.bf16 %v1940, 1045249613
  %v1973 = vmul.bf16 %v1941, 1045249613
  %v1974 = vmul.bf16 %v1942, 1045249613
  %v1975 = vmul.bf16 %v1943, 1045249613
  %v1976 = vmul.bf16 %v1944, 1045249613
  %v1977 = vmul.bf16 %v1945, 1045249613
  %v1978 = vmul.bf16 %v1946, 1045249613
  %v1979 = vmul.bf16 %v1947, 1045249613
  %v1980 = vmul.bf16 %v1948, 1045249613
  %v1981 = vmul.bf16 %v1949, 1045249613
  %v1982 = vmul.bf16 %v1950, 1045249613
  %v1983 = vmul.bf16 %v1951, 1045249613
  %v1984 = vmul.bf16 %v1952, 1045249613
  %v1985 = vsel %vm1953, %v1937, %v1969
  %v1986 = vsel %vm1954, %v1938, %v1970
  %v1987 = vsel %vm1955, %v1939, %v1971
  %v1988 = vsel %vm1956, %v1940, %v1972
  %v1989 = vsel %vm1957, %v1941, %v1973
  %v1990 = vsel %vm1958, %v1942, %v1974
  %v1991 = vsel %vm1959, %v1943, %v1975
  %v1992 = vsel %vm1960, %v1944, %v1976
  %v1993 = vsel %vm1961, %v1945, %v1977
  %v1994 = vsel %vm1962, %v1946, %v1978
  %v1995 = vsel %vm1963, %v1947, %v1979
  %v1996 = vsel %vm1964, %v1948, %v1980
  %v1997 = vsel %vm1965, %v1949, %v1981
  %v1998 = vsel %vm1966, %v1950, %v1982
  %v1999 = vsel %vm1967, %v1951, %v1983
  %v2000 = vsel %vm1968, %v1952, %v1984
  %v2001 = vsel %vm73, %v1985, 4048220490
  %v2002 = vsel %vm74, %v1986, 4048220490
  %v2003 = vsel %vm75, %v1987, 4048220490
  %v2004 = vsel %vm76, %v1988, 4048220490
  %v2005 = vsel %vm77, %v1989, 4048220490
  %v2006 = vsel %vm78, %v1990, 4048220490
  %v2007 = vsel %vm79, %v1991, 4048220490
  %v2008 = vsel %vm80, %v1992, 4048220490
  %v2009 = vsel %vm81, %v1993, 4048220490
  %v2010 = vsel %vm82, %v1994, 4048220490
  %v2011 = vsel %vm83, %v1995, 4048220490
  %v2012 = vsel %vm84, %v1996, 4048220490
  %v2013 = vsel %vm85, %v1997, 4048220490
  %v2014 = vsel %vm86, %v1998, 4048220490
  %v2015 = vsel %vm87, %v1999, 4048220490
  %v2016 = vsel %vm88, %v2000, 4048220490
  %v2033 = vunpack.c.l.b16 %v2001
  %v2034 = vunpack.c.l.b16 %v2002
  %v2035 = vunpack.c.l.b16 %v2003
  %v2036 = vunpack.c.l.b16 %v2004
  %v2037 = vunpack.c.l.b16 %v2005
  %v2038 = vunpack.c.l.b16 %v2006
  %v2039 = vunpack.c.l.b16 %v2007
  %v2040 = vunpack.c.l.b16 %v2008
  %v2041 = vunpack.c.l.b16 %v2009
  %v2042 = vunpack.c.l.b16 %v2010
  %v2043 = vunpack.c.l.b16 %v2011
  %v2044 = vunpack.c.l.b16 %v2012
  %v2045 = vunpack.c.l.b16 %v2013
  %v2046 = vunpack.c.l.b16 %v2014
  %v2047 = vunpack.c.l.b16 %v2015
  %v2048 = vunpack.c.l.b16 %v2016
  %v2049 = vpack.c.b16 %v2034, %v2033
  %v2050 = vpack.c.b16 %v2036, %v2035
  %v2051 = vpack.c.b16 %v2038, %v2037
  %v2052 = vpack.c.b16 %v2040, %v2039
  %v2053 = vpack.c.b16 %v2042, %v2041
  %v2054 = vpack.c.b16 %v2044, %v2043
  %v2055 = vpack.c.b16 %v2046, %v2045
  %v2056 = vpack.c.b16 %v2048, %v2047
  %2065 = vmax.xlane.bf16.xlu0 %v2049
  %v2066 = vpop.xlane.xlu0 %2065
  %2067 = vmax.xlane.bf16.xlu0 %v2050
  %v2068 = vpop.xlane.xlu0 %2067
  %2069 = vmax.xlane.bf16.xlu0 %v2051
  %v2070 = vpop.xlane.xlu0 %2069
  %2071 = vmax.xlane.bf16.xlu0 %v2052
  %v2072 = vpop.xlane.xlu0 %2071
  %2073 = vmax.xlane.bf16.xlu0 %v2053
  %v2074 = vpop.xlane.xlu0 %2073
  %2075 = vmax.xlane.bf16.xlu0 %v2054
  %v2076 = vpop.xlane.xlu0 %2075
  %2077 = vmax.xlane.bf16.xlu0 %v2055
  %v2078 = vpop.xlane.xlu0 %2077
  %2079 = vmax.xlane.bf16.xlu0 %v2056
  %v2080 = vpop.xlane.xlu0 %2079
  %v2090 = vunpack.c.l.s4 839922192
  %v2091 = vunpack.c.0.s8 %v2090
  %v2092 = vlaneseq
  %v2093 = vshrl.u32 %v2092, 7
  %v2094 = vsub.s32 %v2091, %v2093
  %v2095 = vrot.slane %v2066, %v2094
  %v2097 = vunpack.c.l.s4 1985246804
  %v2098 = vunpack.c.0.s8 %v2097
  %v2099 = vlaneseq
  %v2100 = vshrl.u32 %v2099, 7
  %v2101 = vsub.s32 %v2098, %v2100
  %v2102 = vrot.slane %v2066, %v2101
  %v2104 = vunpack.c.l.s4 839922192
  %v2105 = vunpack.c.0.s8 %v2104
  %v2106 = vlaneseq
  %v2107 = vshrl.u32 %v2106, 7
  %v2108 = vsub.s32 %v2105, %v2107
  %v2109 = vrot.slane %v2068, %v2108
  %v2111 = vunpack.c.l.s4 1985246804
  %v2112 = vunpack.c.0.s8 %v2111
  %v2113 = vlaneseq
  %v2114 = vshrl.u32 %v2113, 7
  %v2115 = vsub.s32 %v2112, %v2114
  %v2116 = vrot.slane %v2068, %v2115
  %v2118 = vunpack.c.l.s4 839922192
  %v2119 = vunpack.c.0.s8 %v2118
  %v2120 = vlaneseq
  %v2121 = vshrl.u32 %v2120, 7
  %v2122 = vsub.s32 %v2119, %v2121
  %v2123 = vrot.slane %v2070, %v2122
  %v2125 = vunpack.c.l.s4 1985246804
  %v2126 = vunpack.c.0.s8 %v2125
  %v2127 = vlaneseq
  %v2128 = vshrl.u32 %v2127, 7
  %v2129 = vsub.s32 %v2126, %v2128
  %v2130 = vrot.slane %v2070, %v2129
  %v2132 = vunpack.c.l.s4 839922192
  %v2133 = vunpack.c.0.s8 %v2132
  %v2134 = vlaneseq
  %v2135 = vshrl.u32 %v2134, 7
  %v2136 = vsub.s32 %v2133, %v2135
  %v2137 = vrot.slane %v2072, %v2136
  %v2139 = vunpack.c.l.s4 1985246804
  %v2140 = vunpack.c.0.s8 %v2139
  %v2141 = vlaneseq
  %v2142 = vshrl.u32 %v2141, 7
  %v2143 = vsub.s32 %v2140, %v2142
  %v2144 = vrot.slane %v2072, %v2143
  %v2146 = vunpack.c.l.s4 839922192
  %v2147 = vunpack.c.0.s8 %v2146
  %v2148 = vlaneseq
  %v2149 = vshrl.u32 %v2148, 7
  %v2150 = vsub.s32 %v2147, %v2149
  %v2151 = vrot.slane %v2074, %v2150
  %v2153 = vunpack.c.l.s4 1985246804
  %v2154 = vunpack.c.0.s8 %v2153
  %v2155 = vlaneseq
  %v2156 = vshrl.u32 %v2155, 7
  %v2157 = vsub.s32 %v2154, %v2156
  %v2158 = vrot.slane %v2074, %v2157
  %v2160 = vunpack.c.l.s4 839922192
  %v2161 = vunpack.c.0.s8 %v2160
  %v2162 = vlaneseq
  %v2163 = vshrl.u32 %v2162, 7
  %v2164 = vsub.s32 %v2161, %v2163
  %v2165 = vrot.slane %v2076, %v2164
  %v2167 = vunpack.c.l.s4 1985246804
  %v2168 = vunpack.c.0.s8 %v2167
  %v2169 = vlaneseq
  %v2170 = vshrl.u32 %v2169, 7
  %v2171 = vsub.s32 %v2168, %v2170
  %v2172 = vrot.slane %v2076, %v2171
  %v2174 = vunpack.c.l.s4 839922192
  %v2175 = vunpack.c.0.s8 %v2174
  %v2176 = vlaneseq
  %v2177 = vshrl.u32 %v2176, 7
  %v2178 = vsub.s32 %v2175, %v2177
  %v2179 = vrot.slane %v2078, %v2178
  %v2181 = vunpack.c.l.s4 1985246804
  %v2182 = vunpack.c.0.s8 %v2181
  %v2183 = vlaneseq
  %v2184 = vshrl.u32 %v2183, 7
  %v2185 = vsub.s32 %v2182, %v2184
  %v2186 = vrot.slane %v2078, %v2185
  %v2188 = vunpack.c.l.s4 839922192
  %v2189 = vunpack.c.0.s8 %v2188
  %v2190 = vlaneseq
  %v2191 = vshrl.u32 %v2190, 7
  %v2192 = vsub.s32 %v2189, %v2191
  %v2193 = vrot.slane %v2080, %v2192
  %v2195 = vunpack.c.l.s4 1985246804
  %v2196 = vunpack.c.0.s8 %v2195
  %v2197 = vlaneseq
  %v2198 = vshrl.u32 %v2197, 7
  %v2199 = vsub.s32 %v2196, %v2198
  %v2200 = vrot.slane %v2080, %v2199
  %v2217 = vsub.bf16 %v2001, %v2095
  %v2218 = vsub.bf16 %v2002, %v2102
  %v2219 = vsub.bf16 %v2003, %v2109
  %v2220 = vsub.bf16 %v2004, %v2116
  %v2221 = vsub.bf16 %v2005, %v2123
  %v2222 = vsub.bf16 %v2006, %v2130
  %v2223 = vsub.bf16 %v2007, %v2137
  %v2224 = vsub.bf16 %v2008, %v2144
  %v2225 = vsub.bf16 %v2009, %v2151
  %v2226 = vsub.bf16 %v2010, %v2158
  %v2227 = vsub.bf16 %v2011, %v2165
  %v2228 = vsub.bf16 %v2012, %v2172
  %v2229 = vsub.bf16 %v2013, %v2179
  %v2230 = vsub.bf16 %v2014, %v2186
  %v2231 = vsub.bf16 %v2015, %v2193
  %v2232 = vsub.bf16 %v2016, %v2200
  %v2234 = vmul.bf16 %v2217, 1069105081
  %v2235 = vpow.bf16.pop %v2234
  %v2237 = vmul.bf16 %v2218, 1069105081
  %v2238 = vpow.bf16.pop %v2237
  %v2240 = vmul.bf16 %v2219, 1069105081
  %v2241 = vpow.bf16.pop %v2240
  %v2243 = vmul.bf16 %v2220, 1069105081
  %v2244 = vpow.bf16.pop %v2243
  %v2246 = vmul.bf16 %v2221, 1069105081
  %v2247 = vpow.bf16.pop %v2246
  %v2249 = vmul.bf16 %v2222, 1069105081
  %v2250 = vpow.bf16.pop %v2249
  %v2252 = vmul.bf16 %v2223, 1069105081
  %v2253 = vpow.bf16.pop %v2252
  %v2255 = vmul.bf16 %v2224, 1069105081
  %v2256 = vpow.bf16.pop %v2255
  %v2258 = vmul.bf16 %v2225, 1069105081
  %v2259 = vpow.bf16.pop %v2258
  %v2261 = vmul.bf16 %v2226, 1069105081
  %v2262 = vpow.bf16.pop %v2261
  %v2264 = vmul.bf16 %v2227, 1069105081
  %v2265 = vpow.bf16.pop %v2264
  %v2267 = vmul.bf16 %v2228, 1069105081
  %v2268 = vpow.bf16.pop %v2267
  %v2270 = vmul.bf16 %v2229, 1069105081
  %v2271 = vpow.bf16.pop %v2270
  %v2273 = vmul.bf16 %v2230, 1069105081
  %v2274 = vpow.bf16.pop %v2273
  %v2276 = vmul.bf16 %v2231, 1069105081
  %v2277 = vpow.bf16.pop %v2276
  %v2279 = vmul.bf16 %v2232, 1069105081
  %v2280 = vpow.bf16.pop %v2279
  %v2297 = vunpack.c.l.b16 %v2235
  %v2298 = vunpack.c.l.b16 %v2238
  %v2299 = vunpack.c.l.b16 %v2241
  %v2300 = vunpack.c.l.b16 %v2244
  %v2301 = vunpack.c.l.b16 %v2247
  %v2302 = vunpack.c.l.b16 %v2250
  %v2303 = vunpack.c.l.b16 %v2253
  %v2304 = vunpack.c.l.b16 %v2256
  %v2305 = vunpack.c.l.b16 %v2259
  %v2306 = vunpack.c.l.b16 %v2262
  %v2307 = vunpack.c.l.b16 %v2265
  %v2308 = vunpack.c.l.b16 %v2268
  %v2309 = vunpack.c.l.b16 %v2271
  %v2310 = vunpack.c.l.b16 %v2274
  %v2311 = vunpack.c.l.b16 %v2277
  %v2312 = vunpack.c.l.b16 %v2280
  %v2313 = vpack.c.b16 %v2298, %v2297
  %v2314 = vpack.c.b16 %v2300, %v2299
  %v2315 = vpack.c.b16 %v2302, %v2301
  %v2316 = vpack.c.b16 %v2304, %v2303
  %v2317 = vpack.c.b16 %v2306, %v2305
  %v2318 = vpack.c.b16 %v2308, %v2307
  %v2319 = vpack.c.b16 %v2310, %v2309
  %v2320 = vpack.c.b16 %v2312, %v2311
  %2329 = vrot.lane.b32.xlu0 %v716, 110
  %v2330 = vpop.permute.xlu0 %2329
  %2331 = vrot.lane.b32.xlu0 %v717, 110
  %v2332 = vpop.permute.xlu0 %2331
  %2333 = vrot.lane.b32.xlu0 %v718, 110
  %v2334 = vpop.permute.xlu0 %2333
  %2335 = vrot.lane.b32.xlu0 %v719, 110
  %v2336 = vpop.permute.xlu0 %2335
  %2337 = vrot.lane.b32.xlu0 %v720, 110
  %v2338 = vpop.permute.xlu0 %2337
  %2339 = vrot.lane.b32.xlu0 %v721, 110
  %v2340 = vpop.permute.xlu0 %2339
  %2341 = vrot.lane.b32.xlu0 %v722, 110
  %v2342 = vpop.permute.xlu0 %2341
  %2343 = vrot.lane.b32.xlu0 %v723, 110
  %v2344 = vpop.permute.xlu0 %2343
  %2353 = vmatprep.subr.bf16.mxu0 0
  %2354 = vmatpush1.bf16.msra.mxu0 %v2344
  %2355 = vmatprep.subr.bf16.mxu0 0
  %2356 = vmatpush1.bf16.msra.mxu0 %v2342
  %2357 = vmatprep.subr.bf16.mxu0 0
  %2358 = vmatpush1.bf16.msra.mxu0 %v2340
  %2359 = vmatprep.subr.bf16.mxu0 0
  %2360 = vmatpush1.bf16.msra.mxu0 %v2338
  %2361 = vmatprep.subr.bf16.mxu0 0
  %2362 = vmatpush1.bf16.msra.mxu0 %v2336
  %2363 = vmatprep.subr.bf16.mxu0 0
  %2364 = vmatpush1.bf16.msra.mxu0 %v2334
  %2365 = vmatprep.subr.bf16.mxu0 0
  %2366 = vmatpush1.bf16.msra.mxu0 %v2332
  %2367 = vmatprep.subr.bf16.mxu0 0
  %2368 = vmatpush1.bf16.msra.mxu0 %v2330
  %2369 = vmatprep.subr.bf16.mxu0 0
  %2370 = vmatpush2.bf16.msra.mxu0 0
  %2371 = vmatprep.subr.bf16.mxu0 0
  %2372 = vmatpush2.bf16.msra.mxu0 0
  %2373 = vmatprep.subr.bf16.mxu0 0
  %2374 = vmatpush2.bf16.msra.mxu0 0
  %2375 = vmatprep.subr.bf16.mxu0 0
  %2376 = vmatpush2.bf16.msra.mxu0 0
  %2377 = vmatprep.subr.bf16.mxu0 0
  %2378 = vmatpush2.bf16.msra.mxu0 0
  %2379 = vmatprep.subr.bf16.mxu0 0
  %2380 = vmatpush2.bf16.msra.mxu0 0
  %2381 = vmatprep.subr.bf16.mxu0 0
  %2382 = vmatpush2.bf16.msra.mxu0 0
  %2383 = vmatprep.subr.bf16.mxu0 0
  %2384 = vmatpush2.bf16.msra.mxu0 0
  %2385 = vmatprep.mubr.bf16.mxu0 0
  %2386 = vmatmul.mubr.bf16.gmra.mxu0 %v2313
  %v2387 = vpop.f32.mrf.mxu0
  %v2388 = vadd.f32 0.0, %v2387
  %v2389 = vpop.f32.mrf.mxu0
  %v2390 = vpop.f32.mrf.mxu0
  %v2391 = vadd.f32 0.0, %v2390
  %v2392 = vpop.f32.mrf.mxu0
  %2393 = vmatprep.mubr.bf16.mxu0 0
  %2394 = vmatmul.mubr.bf16.gmra.mxu0 %v2314
  %v2395 = vpop.f32.mrf.mxu0
  %v2396 = vadd.f32 0.0, %v2395
  %v2397 = vpop.f32.mrf.mxu0
  %v2398 = vpop.f32.mrf.mxu0
  %v2399 = vadd.f32 0.0, %v2398
  %v2400 = vpop.f32.mrf.mxu0
  %2401 = vmatprep.mubr.bf16.mxu0 0
  %2402 = vmatmul.mubr.bf16.gmra.mxu0 %v2315
  %v2403 = vpop.f32.mrf.mxu0
  %v2404 = vadd.f32 0.0, %v2403
  %v2405 = vpop.f32.mrf.mxu0
  %v2406 = vpop.f32.mrf.mxu0
  %v2407 = vadd.f32 0.0, %v2406
  %v2408 = vpop.f32.mrf.mxu0
  %2409 = vmatprep.mubr.bf16.mxu0 0
  %2410 = vmatmul.mubr.bf16.gmra.mxu0 %v2316
  %v2411 = vpop.f32.mrf.mxu0
  %v2412 = vadd.f32 0.0, %v2411
  %v2413 = vpop.f32.mrf.mxu0
  %v2414 = vpop.f32.mrf.mxu0
  %v2415 = vadd.f32 0.0, %v2414
  %v2416 = vpop.f32.mrf.mxu0
  %2417 = vmatprep.mubr.bf16.mxu0 0
  %2418 = vmatmul.mubr.bf16.gmra.mxu0 %v2317
  %v2419 = vpop.f32.mrf.mxu0
  %v2420 = vadd.f32 0.0, %v2419
  %v2421 = vpop.f32.mrf.mxu0
  %v2422 = vpop.f32.mrf.mxu0
  %v2423 = vadd.f32 0.0, %v2422
  %v2424 = vpop.f32.mrf.mxu0
  %2425 = vmatprep.mubr.bf16.mxu0 0
  %2426 = vmatmul.mubr.bf16.gmra.mxu0 %v2318
  %v2427 = vpop.f32.mrf.mxu0
  %v2428 = vadd.f32 0.0, %v2427
  %v2429 = vpop.f32.mrf.mxu0
  %v2430 = vpop.f32.mrf.mxu0
  %v2431 = vadd.f32 0.0, %v2430
  %v2432 = vpop.f32.mrf.mxu0
  %2433 = vmatprep.mubr.bf16.mxu0 0
  %2434 = vmatmul.mubr.bf16.gmra.mxu0 %v2319
  %v2435 = vpop.f32.mrf.mxu0
  %v2436 = vadd.f32 0.0, %v2435
  %v2437 = vpop.f32.mrf.mxu0
  %v2438 = vpop.f32.mrf.mxu0
  %v2439 = vadd.f32 0.0, %v2438
  %v2440 = vpop.f32.mrf.mxu0
  %2441 = vmatprep.mubr.bf16.mxu0 0
  %2442 = vmatmul.mubr.bf16.gmra.mxu0 %v2320
  %v2443 = vpop.f32.mrf.mxu0
  %v2444 = vadd.f32 0.0, %v2443
  %v2445 = vpop.f32.mrf.mxu0
  %v2446 = vpop.f32.mrf.mxu0
  %v2447 = vadd.f32 0.0, %v2446
  %v2448 = vpop.f32.mrf.mxu0
  %2449 = vdwg.mxu0
  %v2450 = vrcp.pop %v2388
  %v2451 = vrcp.pop %v2391
  %v2452 = vrcp.pop %v2396
  %v2453 = vrcp.pop %v2399
  %v2454 = vrcp.pop %v2404
  %v2455 = vrcp.pop %v2407
  %v2456 = vrcp.pop %v2412
  %v2457 = vrcp.pop %v2415
  %v2458 = vrcp.pop %v2420
  %v2459 = vrcp.pop %v2423
  %v2460 = vrcp.pop %v2428
  %v2461 = vrcp.pop %v2431
  %v2462 = vrcp.pop %v2436
  %v2463 = vrcp.pop %v2439
  %v2464 = vrcp.pop %v2444
  %v2465 = vrcp.pop %v2447
  %2467 = vset.pattern.permute.xlu0 8
  %2468 = vperm.xlu0 %2467, %v2450
  %v2469 = vpop.permute.xlu0 %2468
  %2472 = vset.pattern.permute.xlu0 8
  %2473 = vperm.xlu0 %2472, %v2451
  %v2474 = vpop.permute.xlu0 %2473
  %2477 = vset.pattern.permute.xlu0 8
  %2478 = vperm.xlu0 %2477, %v2452
  %v2479 = vpop.permute.xlu0 %2478
  %2482 = vset.pattern.permute.xlu0 8
  %2483 = vperm.xlu0 %2482, %v2453
  %v2484 = vpop.permute.xlu0 %2483
  %2487 = vset.pattern.permute.xlu0 8
  %2488 = vperm.xlu0 %2487, %v2454
  %v2489 = vpop.permute.xlu0 %2488
  %2492 = vset.pattern.permute.xlu0 8
  %2493 = vperm.xlu0 %2492, %v2455
  %v2494 = vpop.permute.xlu0 %2493
  %2497 = vset.pattern.permute.xlu0 8
  %2498 = vperm.xlu0 %2497, %v2456
  %v2499 = vpop.permute.xlu0 %2498
  %2502 = vset.pattern.permute.xlu0 8
  %2503 = vperm.xlu0 %2502, %v2457
  %v2504 = vpop.permute.xlu0 %2503
  %2507 = vset.pattern.permute.xlu0 8
  %2508 = vperm.xlu0 %2507, %v2458
  %v2509 = vpop.permute.xlu0 %2508
  %2512 = vset.pattern.permute.xlu0 8
  %2513 = vperm.xlu0 %2512, %v2459
  %v2514 = vpop.permute.xlu0 %2513
  %2517 = vset.pattern.permute.xlu0 8
  %2518 = vperm.xlu0 %2517, %v2460
  %v2519 = vpop.permute.xlu0 %2518
  %2522 = vset.pattern.permute.xlu0 8
  %2523 = vperm.xlu0 %2522, %v2461
  %v2524 = vpop.permute.xlu0 %2523
  %2527 = vset.pattern.permute.xlu0 8
  %2528 = vperm.xlu0 %2527, %v2462
  %v2529 = vpop.permute.xlu0 %2528
  %2532 = vset.pattern.permute.xlu0 8
  %2533 = vperm.xlu0 %2532, %v2463
  %v2534 = vpop.permute.xlu0 %2533
  %2537 = vset.pattern.permute.xlu0 8
  %2538 = vperm.xlu0 %2537, %v2464
  %v2539 = vpop.permute.xlu0 %2538
  %2542 = vset.pattern.permute.xlu0 8
  %2543 = vperm.xlu0 %2542, %v2465
  %v2544 = vpop.permute.xlu0 %2543
  %v2546 = vmul.f32 %v2388, %v2469
  %v2547 = vmul.f32 %v2391, %v2474
  %v2548 = vmul.f32 %v2396, %v2479
  %v2549 = vmul.f32 %v2399, %v2484
  %v2550 = vmul.f32 %v2404, %v2489
  %v2551 = vmul.f32 %v2407, %v2494
  %v2552 = vmul.f32 %v2412, %v2499
  %v2553 = vmul.f32 %v2415, %v2504
  %v2554 = vmul.f32 %v2420, %v2509
  %v2555 = vmul.f32 %v2423, %v2514
  %v2556 = vmul.f32 %v2428, %v2519
  %v2557 = vmul.f32 %v2431, %v2524
  %v2558 = vmul.f32 %v2436, %v2529
  %v2559 = vmul.f32 %v2439, %v2534
  %v2560 = vmul.f32 %v2444, %v2539
  %v2561 = vmul.f32 %v2447, %v2544
  %2562 = vset.pattern.permute.xlu0 3
  %2563 = vperm.xlu0 %2562, %v56
  %v2564 = vpop.permute.xlu0 %2563
  %v2567 = vunpack.c.l.s4 839922192
  %v2568 = vunpack.c.0.s8 %v2567
  %v2569 = vlaneseq
  %v2570 = vshrl.u32 %v2569, 7
  %v2571 = vsub.s32 %v2568, %v2570
  %v2572 = vrot.slane %v2564, %v2571
  %2573 = vset.pattern.permute.xlu0 3
  %2574 = vperm.xlu0 %2573, %v57
  %v2575 = vpop.permute.xlu0 %2574
  %v2578 = vunpack.c.l.s4 839922192
  %v2579 = vunpack.c.0.s8 %v2578
  %v2580 = vlaneseq
  %v2581 = vshrl.u32 %v2580, 7
  %v2582 = vsub.s32 %v2579, %v2581
  %v2583 = vrot.slane %v2575, %v2582
  %2584 = vset.pattern.permute.xlu0 3
  %2585 = vperm.xlu0 %2584, %v58
  %v2586 = vpop.permute.xlu0 %2585
  %v2589 = vunpack.c.l.s4 839922192
  %v2590 = vunpack.c.0.s8 %v2589
  %v2591 = vlaneseq
  %v2592 = vshrl.u32 %v2591, 7
  %v2593 = vsub.s32 %v2590, %v2592
  %v2594 = vrot.slane %v2586, %v2593
  %2595 = vset.pattern.permute.xlu0 3
  %2596 = vperm.xlu0 %2595, %v59
  %v2597 = vpop.permute.xlu0 %2596
  %v2600 = vunpack.c.l.s4 839922192
  %v2601 = vunpack.c.0.s8 %v2600
  %v2602 = vlaneseq
  %v2603 = vshrl.u32 %v2602, 7
  %v2604 = vsub.s32 %v2601, %v2603
  %v2605 = vrot.slane %v2597, %v2604
  %2606 = vset.pattern.permute.xlu0 3
  %2607 = vperm.xlu0 %2606, %v60
  %v2608 = vpop.permute.xlu0 %2607
  %v2611 = vunpack.c.l.s4 839922192
  %v2612 = vunpack.c.0.s8 %v2611
  %v2613 = vlaneseq
  %v2614 = vshrl.u32 %v2613, 7
  %v2615 = vsub.s32 %v2612, %v2614
  %v2616 = vrot.slane %v2608, %v2615
  %2617 = vset.pattern.permute.xlu0 3
  %2618 = vperm.xlu0 %2617, %v61
  %v2619 = vpop.permute.xlu0 %2618
  %v2622 = vunpack.c.l.s4 839922192
  %v2623 = vunpack.c.0.s8 %v2622
  %v2624 = vlaneseq
  %v2625 = vshrl.u32 %v2624, 7
  %v2626 = vsub.s32 %v2623, %v2625
  %v2627 = vrot.slane %v2619, %v2626
  %2628 = vset.pattern.permute.xlu0 3
  %2629 = vperm.xlu0 %2628, %v62
  %v2630 = vpop.permute.xlu0 %2629
  %v2633 = vunpack.c.l.s4 839922192
  %v2634 = vunpack.c.0.s8 %v2633
  %v2635 = vlaneseq
  %v2636 = vshrl.u32 %v2635, 7
  %v2637 = vsub.s32 %v2634, %v2636
  %v2638 = vrot.slane %v2630, %v2637
  %2639 = vset.pattern.permute.xlu0 3
  %2640 = vperm.xlu0 %2639, %v63
  %v2641 = vpop.permute.xlu0 %2640
  %v2644 = vunpack.c.l.s4 839922192
  %v2645 = vunpack.c.0.s8 %v2644
  %v2646 = vlaneseq
  %v2647 = vshrl.u32 %v2646, 7
  %v2648 = vsub.s32 %v2645, %v2647
  %v2649 = vrot.slane %v2641, %v2648
  %2650 = vset.pattern.permute.xlu0 3
  %2651 = vperm.xlu0 %2650, %v64
  %v2652 = vpop.permute.xlu0 %2651
  %v2655 = vunpack.c.l.s4 839922192
  %v2656 = vunpack.c.0.s8 %v2655
  %v2657 = vlaneseq
  %v2658 = vshrl.u32 %v2657, 7
  %v2659 = vsub.s32 %v2656, %v2658
  %v2660 = vrot.slane %v2652, %v2659
  %2661 = vset.pattern.permute.xlu0 3
  %2662 = vperm.xlu0 %2661, %v65
  %v2663 = vpop.permute.xlu0 %2662
  %v2666 = vunpack.c.l.s4 839922192
  %v2667 = vunpack.c.0.s8 %v2666
  %v2668 = vlaneseq
  %v2669 = vshrl.u32 %v2668, 7
  %v2670 = vsub.s32 %v2667, %v2669
  %v2671 = vrot.slane %v2663, %v2670
  %2672 = vset.pattern.permute.xlu0 3
  %2673 = vperm.xlu0 %2672, %v66
  %v2674 = vpop.permute.xlu0 %2673
  %v2677 = vunpack.c.l.s4 839922192
  %v2678 = vunpack.c.0.s8 %v2677
  %v2679 = vlaneseq
  %v2680 = vshrl.u32 %v2679, 7
  %v2681 = vsub.s32 %v2678, %v2680
  %v2682 = vrot.slane %v2674, %v2681
  %2683 = vset.pattern.permute.xlu0 3
  %2684 = vperm.xlu0 %2683, %v67
  %v2685 = vpop.permute.xlu0 %2684
  %v2688 = vunpack.c.l.s4 839922192
  %v2689 = vunpack.c.0.s8 %v2688
  %v2690 = vlaneseq
  %v2691 = vshrl.u32 %v2690, 7
  %v2692 = vsub.s32 %v2689, %v2691
  %v2693 = vrot.slane %v2685, %v2692
  %2694 = vset.pattern.permute.xlu0 3
  %2695 = vperm.xlu0 %2694, %v68
  %v2696 = vpop.permute.xlu0 %2695
  %v2699 = vunpack.c.l.s4 839922192
  %v2700 = vunpack.c.0.s8 %v2699
  %v2701 = vlaneseq
  %v2702 = vshrl.u32 %v2701, 7
  %v2703 = vsub.s32 %v2700, %v2702
  %v2704 = vrot.slane %v2696, %v2703
  %2705 = vset.pattern.permute.xlu0 3
  %2706 = vperm.xlu0 %2705, %v69
  %v2707 = vpop.permute.xlu0 %2706
  %v2710 = vunpack.c.l.s4 839922192
  %v2711 = vunpack.c.0.s8 %v2710
  %v2712 = vlaneseq
  %v2713 = vshrl.u32 %v2712, 7
  %v2714 = vsub.s32 %v2711, %v2713
  %v2715 = vrot.slane %v2707, %v2714
  %2716 = vset.pattern.permute.xlu0 3
  %2717 = vperm.xlu0 %2716, %v70
  %v2718 = vpop.permute.xlu0 %2717
  %v2721 = vunpack.c.l.s4 839922192
  %v2722 = vunpack.c.0.s8 %v2721
  %v2723 = vlaneseq
  %v2724 = vshrl.u32 %v2723, 7
  %v2725 = vsub.s32 %v2722, %v2724
  %v2726 = vrot.slane %v2718, %v2725
  %2727 = vset.pattern.permute.xlu0 3
  %2728 = vperm.xlu0 %2727, %v71
  %v2729 = vpop.permute.xlu0 %2728
  %v2732 = vunpack.c.l.s4 839922192
  %v2733 = vunpack.c.0.s8 %v2732
  %v2734 = vlaneseq
  %v2735 = vshrl.u32 %v2734, 7
  %v2736 = vsub.s32 %v2733, %v2735
  %v2737 = vrot.slane %v2729, %v2736
  %v2738 = vlaneseq
  %v2739 = vshrl.u32 %v2738, 7
  %v2740 = vsub.s32 1, %v2739
  %v2741 = vrot.slane %v1118, %v2740
  %v2743 = vunpack.c.l.b16 %v2741
  %v2744 = vpack.c.b16 %v2743, %v2743
  %v2746 = vadd.bf16 %v2572, %v2744
  %v2747 = vadd.bf16 %v2583, %v2744
  %v2748 = vadd.bf16 %v2594, %v2744
  %v2749 = vadd.bf16 %v2605, %v2744
  %v2750 = vadd.bf16 %v2616, %v2744
  %v2751 = vadd.bf16 %v2627, %v2744
  %v2752 = vadd.bf16 %v2638, %v2744
  %v2753 = vadd.bf16 %v2649, %v2744
  %v2754 = vadd.bf16 %v2660, %v2744
  %v2755 = vadd.bf16 %v2671, %v2744
  %v2756 = vadd.bf16 %v2682, %v2744
  %v2757 = vadd.bf16 %v2693, %v2744
  %v2758 = vadd.bf16 %v2704, %v2744
  %v2759 = vadd.bf16 %v2715, %v2744
  %v2760 = vadd.bf16 %v2726, %v2744
  %v2761 = vadd.bf16 %v2737, %v2744
  %vm2762 = vcmp.gt.bf16.partialorder %v2746, 0
  %vm2763 = vcmp.gt.bf16.partialorder %v2747, 0
  %vm2764 = vcmp.gt.bf16.partialorder %v2748, 0
  %vm2765 = vcmp.gt.bf16.partialorder %v2749, 0
  %vm2766 = vcmp.gt.bf16.partialorder %v2750, 0
  %vm2767 = vcmp.gt.bf16.partialorder %v2751, 0
  %vm2768 = vcmp.gt.bf16.partialorder %v2752, 0
  %vm2769 = vcmp.gt.bf16.partialorder %v2753, 0
  %vm2770 = vcmp.gt.bf16.partialorder %v2754, 0
  %vm2771 = vcmp.gt.bf16.partialorder %v2755, 0
  %vm2772 = vcmp.gt.bf16.partialorder %v2756, 0
  %vm2773 = vcmp.gt.bf16.partialorder %v2757, 0
  %vm2774 = vcmp.gt.bf16.partialorder %v2758, 0
  %vm2775 = vcmp.gt.bf16.partialorder %v2759, 0
  %vm2776 = vcmp.gt.bf16.partialorder %v2760, 0
  %vm2777 = vcmp.gt.bf16.partialorder %v2761, 0
  %v2778 = vmul.bf16 %v2746, 1045249613
  %v2779 = vmul.bf16 %v2747, 1045249613
  %v2780 = vmul.bf16 %v2748, 1045249613
  %v2781 = vmul.bf16 %v2749, 1045249613
  %v2782 = vmul.bf16 %v2750, 1045249613
  %v2783 = vmul.bf16 %v2751, 1045249613
  %v2784 = vmul.bf16 %v2752, 1045249613
  %v2785 = vmul.bf16 %v2753, 1045249613
  %v2786 = vmul.bf16 %v2754, 1045249613
  %v2787 = vmul.bf16 %v2755, 1045249613
  %v2788 = vmul.bf16 %v2756, 1045249613
  %v2789 = vmul.bf16 %v2757, 1045249613
  %v2790 = vmul.bf16 %v2758, 1045249613
  %v2791 = vmul.bf16 %v2759, 1045249613
  %v2792 = vmul.bf16 %v2760, 1045249613
  %v2793 = vmul.bf16 %v2761, 1045249613
  %v2794 = vsel %vm2762, %v2746, %v2778
  %v2795 = vsel %vm2763, %v2747, %v2779
  %v2796 = vsel %vm2764, %v2748, %v2780
  %v2797 = vsel %vm2765, %v2749, %v2781
  %v2798 = vsel %vm2766, %v2750, %v2782
  %v2799 = vsel %vm2767, %v2751, %v2783
  %v2800 = vsel %vm2768, %v2752, %v2784
  %v2801 = vsel %vm2769, %v2753, %v2785
  %v2802 = vsel %vm2770, %v2754, %v2786
  %v2803 = vsel %vm2771, %v2755, %v2787
  %v2804 = vsel %vm2772, %v2756, %v2788
  %v2805 = vsel %vm2773, %v2757, %v2789
  %v2806 = vsel %vm2774, %v2758, %v2790
  %v2807 = vsel %vm2775, %v2759, %v2791
  %v2808 = vsel %vm2776, %v2760, %v2792
  %v2809 = vsel %vm2777, %v2761, %v2793
  %v2810 = vsel %vm73, %v2794, 4048220490
  %v2811 = vsel %vm74, %v2795, 4048220490
  %v2812 = vsel %vm75, %v2796, 4048220490
  %v2813 = vsel %vm76, %v2797, 4048220490
  %v2814 = vsel %vm77, %v2798, 4048220490
  %v2815 = vsel %vm78, %v2799, 4048220490
  %v2816 = vsel %vm79, %v2800, 4048220490
  %v2817 = vsel %vm80, %v2801, 4048220490
  %v2818 = vsel %vm81, %v2802, 4048220490
  %v2819 = vsel %vm82, %v2803, 4048220490
  %v2820 = vsel %vm83, %v2804, 4048220490
  %v2821 = vsel %vm84, %v2805, 4048220490
  %v2822 = vsel %vm85, %v2806, 4048220490
  %v2823 = vsel %vm86, %v2807, 4048220490
  %v2824 = vsel %vm87, %v2808, 4048220490
  %v2825 = vsel %vm88, %v2809, 4048220490
  %v2842 = vunpack.c.l.b16 %v2810
  %v2843 = vunpack.c.l.b16 %v2811
  %v2844 = vunpack.c.l.b16 %v2812
  %v2845 = vunpack.c.l.b16 %v2813
  %v2846 = vunpack.c.l.b16 %v2814
  %v2847 = vunpack.c.l.b16 %v2815
  %v2848 = vunpack.c.l.b16 %v2816
  %v2849 = vunpack.c.l.b16 %v2817
  %v2850 = vunpack.c.l.b16 %v2818
  %v2851 = vunpack.c.l.b16 %v2819
  %v2852 = vunpack.c.l.b16 %v2820
  %v2853 = vunpack.c.l.b16 %v2821
  %v2854 = vunpack.c.l.b16 %v2822
  %v2855 = vunpack.c.l.b16 %v2823
  %v2856 = vunpack.c.l.b16 %v2824
  %v2857 = vunpack.c.l.b16 %v2825
  %v2858 = vpack.c.b16 %v2843, %v2842
  %v2859 = vpack.c.b16 %v2845, %v2844
  %v2860 = vpack.c.b16 %v2847, %v2846
  %v2861 = vpack.c.b16 %v2849, %v2848
  %v2862 = vpack.c.b16 %v2851, %v2850
  %v2863 = vpack.c.b16 %v2853, %v2852
  %v2864 = vpack.c.b16 %v2855, %v2854
  %v2865 = vpack.c.b16 %v2857, %v2856
  %2874 = vmax.xlane.bf16.xlu0 %v2858
  %v2875 = vpop.xlane.xlu0 %2874
  %2876 = vmax.xlane.bf16.xlu0 %v2859
  %v2877 = vpop.xlane.xlu0 %2876
  %2878 = vmax.xlane.bf16.xlu0 %v2860
  %v2879 = vpop.xlane.xlu0 %2878
  %2880 = vmax.xlane.bf16.xlu0 %v2861
  %v2881 = vpop.xlane.xlu0 %2880
  %2882 = vmax.xlane.bf16.xlu0 %v2862
  %v2883 = vpop.xlane.xlu0 %2882
  %2884 = vmax.xlane.bf16.xlu0 %v2863
  %v2885 = vpop.xlane.xlu0 %2884
  %2886 = vmax.xlane.bf16.xlu0 %v2864
  %v2887 = vpop.xlane.xlu0 %2886
  %2888 = vmax.xlane.bf16.xlu0 %v2865
  %v2889 = vpop.xlane.xlu0 %2888
  %v2899 = vunpack.c.l.s4 839922192
  %v2900 = vunpack.c.0.s8 %v2899
  %v2901 = vlaneseq
  %v2902 = vshrl.u32 %v2901, 7
  %v2903 = vsub.s32 %v2900, %v2902
  %v2904 = vrot.slane %v2875, %v2903
  %v2906 = vunpack.c.l.s4 1985246804
  %v2907 = vunpack.c.0.s8 %v2906
  %v2908 = vlaneseq
  %v2909 = vshrl.u32 %v2908, 7
  %v2910 = vsub.s32 %v2907, %v2909
  %v2911 = vrot.slane %v2875, %v2910
  %v2913 = vunpack.c.l.s4 839922192
  %v2914 = vunpack.c.0.s8 %v2913
  %v2915 = vlaneseq
  %v2916 = vshrl.u32 %v2915, 7
  %v2917 = vsub.s32 %v2914, %v2916
  %v2918 = vrot.slane %v2877, %v2917
  %v2920 = vunpack.c.l.s4 1985246804
  %v2921 = vunpack.c.0.s8 %v2920
  %v2922 = vlaneseq
  %v2923 = vshrl.u32 %v2922, 7
  %v2924 = vsub.s32 %v2921, %v2923
  %v2925 = vrot.slane %v2877, %v2924
  %v2927 = vunpack.c.l.s4 839922192
  %v2928 = vunpack.c.0.s8 %v2927
  %v2929 = vlaneseq
  %v2930 = vshrl.u32 %v2929, 7
  %v2931 = vsub.s32 %v2928, %v2930
  %v2932 = vrot.slane %v2879, %v2931
  %v2934 = vunpack.c.l.s4 1985246804
  %v2935 = vunpack.c.0.s8 %v2934
  %v2936 = vlaneseq
  %v2937 = vshrl.u32 %v2936, 7
  %v2938 = vsub.s32 %v2935, %v2937
  %v2939 = vrot.slane %v2879, %v2938
  %v2941 = vunpack.c.l.s4 839922192
  %v2942 = vunpack.c.0.s8 %v2941
  %v2943 = vlaneseq
  %v2944 = vshrl.u32 %v2943, 7
  %v2945 = vsub.s32 %v2942, %v2944
  %v2946 = vrot.slane %v2881, %v2945
  %v2948 = vunpack.c.l.s4 1985246804
  %v2949 = vunpack.c.0.s8 %v2948
  %v2950 = vlaneseq
  %v2951 = vshrl.u32 %v2950, 7
  %v2952 = vsub.s32 %v2949, %v2951
  %v2953 = vrot.slane %v2881, %v2952
  %v2955 = vunpack.c.l.s4 839922192
  %v2956 = vunpack.c.0.s8 %v2955
  %v2957 = vlaneseq
  %v2958 = vshrl.u32 %v2957, 7
  %v2959 = vsub.s32 %v2956, %v2958
  %v2960 = vrot.slane %v2883, %v2959
  %v2962 = vunpack.c.l.s4 1985246804
  %v2963 = vunpack.c.0.s8 %v2962
  %v2964 = vlaneseq
  %v2965 = vshrl.u32 %v2964, 7
  %v2966 = vsub.s32 %v2963, %v2965
  %v2967 = vrot.slane %v2883, %v2966
  %v2969 = vunpack.c.l.s4 839922192
  %v2970 = vunpack.c.0.s8 %v2969
  %v2971 = vlaneseq
  %v2972 = vshrl.u32 %v2971, 7
  %v2973 = vsub.s32 %v2970, %v2972
  %v2974 = vrot.slane %v2885, %v2973
  %v2976 = vunpack.c.l.s4 1985246804
  %v2977 = vunpack.c.0.s8 %v2976
  %v2978 = vlaneseq
  %v2979 = vshrl.u32 %v2978, 7
  %v2980 = vsub.s32 %v2977, %v2979
  %v2981 = vrot.slane %v2885, %v2980
  %v2983 = vunpack.c.l.s4 839922192
  %v2984 = vunpack.c.0.s8 %v2983
  %v2985 = vlaneseq
  %v2986 = vshrl.u32 %v2985, 7
  %v2987 = vsub.s32 %v2984, %v2986
  %v2988 = vrot.slane %v2887, %v2987
  %v2990 = vunpack.c.l.s4 1985246804
  %v2991 = vunpack.c.0.s8 %v2990
  %v2992 = vlaneseq
  %v2993 = vshrl.u32 %v2992, 7
  %v2994 = vsub.s32 %v2991, %v2993
  %v2995 = vrot.slane %v2887, %v2994
  %v2997 = vunpack.c.l.s4 839922192
  %v2998 = vunpack.c.0.s8 %v2997
  %v2999 = vlaneseq
  %v3000 = vshrl.u32 %v2999, 7
  %v3001 = vsub.s32 %v2998, %v3000
  %v3002 = vrot.slane %v2889, %v3001
  %v3004 = vunpack.c.l.s4 1985246804
  %v3005 = vunpack.c.0.s8 %v3004
  %v3006 = vlaneseq
  %v3007 = vshrl.u32 %v3006, 7
  %v3008 = vsub.s32 %v3005, %v3007
  %v3009 = vrot.slane %v2889, %v3008
  %v3026 = vsub.bf16 %v2810, %v2904
  %v3027 = vsub.bf16 %v2811, %v2911
  %v3028 = vsub.bf16 %v2812, %v2918
  %v3029 = vsub.bf16 %v2813, %v2925
  %v3030 = vsub.bf16 %v2814, %v2932
  %v3031 = vsub.bf16 %v2815, %v2939
  %v3032 = vsub.bf16 %v2816, %v2946
  %v3033 = vsub.bf16 %v2817, %v2953
  %v3034 = vsub.bf16 %v2818, %v2960
  %v3035 = vsub.bf16 %v2819, %v2967
  %v3036 = vsub.bf16 %v2820, %v2974
  %v3037 = vsub.bf16 %v2821, %v2981
  %v3038 = vsub.bf16 %v2822, %v2988
  %v3039 = vsub.bf16 %v2823, %v2995
  %v3040 = vsub.bf16 %v2824, %v3002
  %v3041 = vsub.bf16 %v2825, %v3009
  %v3043 = vmul.bf16 %v3026, 1069105081
  %v3044 = vpow.bf16.pop %v3043
  %v3046 = vmul.bf16 %v3027, 1069105081
  %v3047 = vpow.bf16.pop %v3046
  %v3049 = vmul.bf16 %v3028, 1069105081
  %v3050 = vpow.bf16.pop %v3049
  %v3052 = vmul.bf16 %v3029, 1069105081
  %v3053 = vpow.bf16.pop %v3052
  %v3055 = vmul.bf16 %v3030, 1069105081
  %v3056 = vpow.bf16.pop %v3055
  %v3058 = vmul.bf16 %v3031, 1069105081
  %v3059 = vpow.bf16.pop %v3058
  %v3061 = vmul.bf16 %v3032, 1069105081
  %v3062 = vpow.bf16.pop %v3061
  %v3064 = vmul.bf16 %v3033, 1069105081
  %v3065 = vpow.bf16.pop %v3064
  %v3067 = vmul.bf16 %v3034, 1069105081
  %v3068 = vpow.bf16.pop %v3067
  %v3070 = vmul.bf16 %v3035, 1069105081
  %v3071 = vpow.bf16.pop %v3070
  %v3073 = vmul.bf16 %v3036, 1069105081
  %v3074 = vpow.bf16.pop %v3073
  %v3076 = vmul.bf16 %v3037, 1069105081
  %v3077 = vpow.bf16.pop %v3076
  %v3079 = vmul.bf16 %v3038, 1069105081
  %v3080 = vpow.bf16.pop %v3079
  %v3082 = vmul.bf16 %v3039, 1069105081
  %v3083 = vpow.bf16.pop %v3082
  %v3085 = vmul.bf16 %v3040, 1069105081
  %v3086 = vpow.bf16.pop %v3085
  %v3088 = vmul.bf16 %v3041, 1069105081
  %v3089 = vpow.bf16.pop %v3088
  %v3106 = vunpack.c.l.b16 %v3044
  %v3107 = vunpack.c.l.b16 %v3047
  %v3108 = vunpack.c.l.b16 %v3050
  %v3109 = vunpack.c.l.b16 %v3053
  %v3110 = vunpack.c.l.b16 %v3056
  %v3111 = vunpack.c.l.b16 %v3059
  %v3112 = vunpack.c.l.b16 %v3062
  %v3113 = vunpack.c.l.b16 %v3065
  %v3114 = vunpack.c.l.b16 %v3068
  %v3115 = vunpack.c.l.b16 %v3071
  %v3116 = vunpack.c.l.b16 %v3074
  %v3117 = vunpack.c.l.b16 %v3077
  %v3118 = vunpack.c.l.b16 %v3080
  %v3119 = vunpack.c.l.b16 %v3083
  %v3120 = vunpack.c.l.b16 %v3086
  %v3121 = vunpack.c.l.b16 %v3089
  %v3122 = vpack.c.b16 %v3107, %v3106
  %v3123 = vpack.c.b16 %v3109, %v3108
  %v3124 = vpack.c.b16 %v3111, %v3110
  %v3125 = vpack.c.b16 %v3113, %v3112
  %v3126 = vpack.c.b16 %v3115, %v3114
  %v3127 = vpack.c.b16 %v3117, %v3116
  %v3128 = vpack.c.b16 %v3119, %v3118
  %v3129 = vpack.c.b16 %v3121, %v3120
  %3138 = vrot.lane.b32.xlu0 %v716, 101
  %v3139 = vpop.permute.xlu0 %3138
  %3140 = vrot.lane.b32.xlu0 %v717, 101
  %v3141 = vpop.permute.xlu0 %3140
  %3142 = vrot.lane.b32.xlu0 %v718, 101
  %v3143 = vpop.permute.xlu0 %3142
  %3144 = vrot.lane.b32.xlu0 %v719, 101
  %v3145 = vpop.permute.xlu0 %3144
  %3146 = vrot.lane.b32.xlu0 %v720, 101
  %v3147 = vpop.permute.xlu0 %3146
  %3148 = vrot.lane.b32.xlu0 %v721, 101
  %v3149 = vpop.permute.xlu0 %3148
  %3150 = vrot.lane.b32.xlu0 %v722, 101
  %v3151 = vpop.permute.xlu0 %3150
  %3152 = vrot.lane.b32.xlu0 %v723, 101
  %v3153 = vpop.permute.xlu0 %3152
  %3162 = vmatprep.subr.bf16.mxu0 0
  %3163 = vmatpush1.bf16.msra.mxu0 %v3153
  %3164 = vmatprep.subr.bf16.mxu0 0
  %3165 = vmatpush1.bf16.msra.mxu0 %v3151
  %3166 = vmatprep.subr.bf16.mxu0 0
  %3167 = vmatpush1.bf16.msra.mxu0 %v3149
  %3168 = vmatprep.subr.bf16.mxu0 0
  %3169 = vmatpush1.bf16.msra.mxu0 %v3147
  %3170 = vmatprep.subr.bf16.mxu0 0
  %3171 = vmatpush1.bf16.msra.mxu0 %v3145
  %3172 = vmatprep.subr.bf16.mxu0 0
  %3173 = vmatpush1.bf16.msra.mxu0 %v3143
  %3174 = vmatprep.subr.bf16.mxu0 0
  %3175 = vmatpush1.bf16.msra.mxu0 %v3141
  %3176 = vmatprep.subr.bf16.mxu0 0
  %3177 = vmatpush1.bf16.msra.mxu0 %v3139
  %3178 = vmatprep.subr.bf16.mxu0 0
  %3179 = vmatpush2.bf16.msra.mxu0 0
  %3180 = vmatprep.subr.bf16.mxu0 0
  %3181 = vmatpush2.bf16.msra.mxu0 0
  %3182 = vmatprep.subr.bf16.mxu0 0
  %3183 = vmatpush2.bf16.msra.mxu0 0
  %3184 = vmatprep.subr.bf16.mxu0 0
  %3185 = vmatpush2.bf16.msra.mxu0 0
  %3186 = vmatprep.subr.bf16.mxu0 0
  %3187 = vmatpush2.bf16.msra.mxu0 0
  %3188 = vmatprep.subr.bf16.mxu0 0
  %3189 = vmatpush2.bf16.msra.mxu0 0
  %3190 = vmatprep.subr.bf16.mxu0 0
  %3191 = vmatpush2.bf16.msra.mxu0 0
  %3192 = vmatprep.subr.bf16.mxu0 0
  %3193 = vmatpush2.bf16.msra.mxu0 0
  %3194 = vmatprep.mubr.bf16.mxu0 0
  %3195 = vmatmul.mubr.bf16.gmra.mxu0 %v3122
  %v3196 = vpop.f32.mrf.mxu0
  %v3197 = vadd.f32 0.0, %v3196
  %v3198 = vpop.f32.mrf.mxu0
  %v3199 = vpop.f32.mrf.mxu0
  %v3200 = vadd.f32 0.0, %v3199
  %v3201 = vpop.f32.mrf.mxu0
  %3202 = vmatprep.mubr.bf16.mxu0 0
  %3203 = vmatmul.mubr.bf16.gmra.mxu0 %v3123
  %v3204 = vpop.f32.mrf.mxu0
  %v3205 = vadd.f32 0.0, %v3204
  %v3206 = vpop.f32.mrf.mxu0
  %v3207 = vpop.f32.mrf.mxu0
  %v3208 = vadd.f32 0.0, %v3207
  %v3209 = vpop.f32.mrf.mxu0
  %3210 = vmatprep.mubr.bf16.mxu0 0
  %3211 = vmatmul.mubr.bf16.gmra.mxu0 %v3124
  %v3212 = vpop.f32.mrf.mxu0
  %v3213 = vadd.f32 0.0, %v3212
  %v3214 = vpop.f32.mrf.mxu0
  %v3215 = vpop.f32.mrf.mxu0
  %v3216 = vadd.f32 0.0, %v3215
  %v3217 = vpop.f32.mrf.mxu0
  %3218 = vmatprep.mubr.bf16.mxu0 0
  %3219 = vmatmul.mubr.bf16.gmra.mxu0 %v3125
  %v3220 = vpop.f32.mrf.mxu0
  %v3221 = vadd.f32 0.0, %v3220
  %v3222 = vpop.f32.mrf.mxu0
  %v3223 = vpop.f32.mrf.mxu0
  %v3224 = vadd.f32 0.0, %v3223
  %v3225 = vpop.f32.mrf.mxu0
  %3226 = vmatprep.mubr.bf16.mxu0 0
  %3227 = vmatmul.mubr.bf16.gmra.mxu0 %v3126
  %v3228 = vpop.f32.mrf.mxu0
  %v3229 = vadd.f32 0.0, %v3228
  %v3230 = vpop.f32.mrf.mxu0
  %v3231 = vpop.f32.mrf.mxu0
  %v3232 = vadd.f32 0.0, %v3231
  %v3233 = vpop.f32.mrf.mxu0
  %3234 = vmatprep.mubr.bf16.mxu0 0
  %3235 = vmatmul.mubr.bf16.gmra.mxu0 %v3127
  %v3236 = vpop.f32.mrf.mxu0
  %v3237 = vadd.f32 0.0, %v3236
  %v3238 = vpop.f32.mrf.mxu0
  %v3239 = vpop.f32.mrf.mxu0
  %v3240 = vadd.f32 0.0, %v3239
  %v3241 = vpop.f32.mrf.mxu0
  %3242 = vmatprep.mubr.bf16.mxu0 0
  %3243 = vmatmul.mubr.bf16.gmra.mxu0 %v3128
  %v3244 = vpop.f32.mrf.mxu0
  %v3245 = vadd.f32 0.0, %v3244
  %v3246 = vpop.f32.mrf.mxu0
  %v3247 = vpop.f32.mrf.mxu0
  %v3248 = vadd.f32 0.0, %v3247
  %v3249 = vpop.f32.mrf.mxu0
  %3250 = vmatprep.mubr.bf16.mxu0 0
  %3251 = vmatmul.mubr.bf16.gmra.mxu0 %v3129
  %v3252 = vpop.f32.mrf.mxu0
  %v3253 = vadd.f32 0.0, %v3252
  %v3254 = vpop.f32.mrf.mxu0
  %v3255 = vpop.f32.mrf.mxu0
  %v3256 = vadd.f32 0.0, %v3255
  %v3257 = vpop.f32.mrf.mxu0
  %3258 = vdwg.mxu0
  %v3259 = vrcp.pop %v3197
  %v3260 = vrcp.pop %v3200
  %v3261 = vrcp.pop %v3205
  %v3262 = vrcp.pop %v3208
  %v3263 = vrcp.pop %v3213
  %v3264 = vrcp.pop %v3216
  %v3265 = vrcp.pop %v3221
  %v3266 = vrcp.pop %v3224
  %v3267 = vrcp.pop %v3229
  %v3268 = vrcp.pop %v3232
  %v3269 = vrcp.pop %v3237
  %v3270 = vrcp.pop %v3240
  %v3271 = vrcp.pop %v3245
  %v3272 = vrcp.pop %v3248
  %v3273 = vrcp.pop %v3253
  %v3274 = vrcp.pop %v3256
  %3276 = vset.pattern.permute.xlu0 8
  %3277 = vperm.xlu0 %3276, %v3259
  %v3278 = vpop.permute.xlu0 %3277
  %3281 = vset.pattern.permute.xlu0 8
  %3282 = vperm.xlu0 %3281, %v3260
  %v3283 = vpop.permute.xlu0 %3282
  %3286 = vset.pattern.permute.xlu0 8
  %3287 = vperm.xlu0 %3286, %v3261
  %v3288 = vpop.permute.xlu0 %3287
  %3291 = vset.pattern.permute.xlu0 8
  %3292 = vperm.xlu0 %3291, %v3262
  %v3293 = vpop.permute.xlu0 %3292
  %3296 = vset.pattern.permute.xlu0 8
  %3297 = vperm.xlu0 %3296, %v3263
  %v3298 = vpop.permute.xlu0 %3297
  %3301 = vset.pattern.permute.xlu0 8
  %3302 = vperm.xlu0 %3301, %v3264
  %v3303 = vpop.permute.xlu0 %3302
  %3306 = vset.pattern.permute.xlu0 8
  %3307 = vperm.xlu0 %3306, %v3265
  %v3308 = vpop.permute.xlu0 %3307
  %3311 = vset.pattern.permute.xlu0 8
  %3312 = vperm.xlu0 %3311, %v3266
  %v3313 = vpop.permute.xlu0 %3312
  %3316 = vset.pattern.permute.xlu0 8
  %3317 = vperm.xlu0 %3316, %v3267
  %v3318 = vpop.permute.xlu0 %3317
  %3321 = vset.pattern.permute.xlu0 8
  %3322 = vperm.xlu0 %3321, %v3268
  %v3323 = vpop.permute.xlu0 %3322
  %3326 = vset.pattern.permute.xlu0 8
  %3327 = vperm.xlu0 %3326, %v3269
  %v3328 = vpop.permute.xlu0 %3327
  %3331 = vset.pattern.permute.xlu0 8
  %3332 = vperm.xlu0 %3331, %v3270
  %v3333 = vpop.permute.xlu0 %3332
  %3336 = vset.pattern.permute.xlu0 8
  %3337 = vperm.xlu0 %3336, %v3271
  %v3338 = vpop.permute.xlu0 %3337
  %3341 = vset.pattern.permute.xlu0 8
  %3342 = vperm.xlu0 %3341, %v3272
  %v3343 = vpop.permute.xlu0 %3342
  %3346 = vset.pattern.permute.xlu0 8
  %3347 = vperm.xlu0 %3346, %v3273
  %v3348 = vpop.permute.xlu0 %3347
  %3351 = vset.pattern.permute.xlu0 8
  %3352 = vperm.xlu0 %3351, %v3274
  %v3353 = vpop.permute.xlu0 %3352
  %v3355 = vmul.f32 %v3197, %v3278
  %v3356 = vmul.f32 %v3200, %v3283
  %v3357 = vmul.f32 %v3205, %v3288
  %v3358 = vmul.f32 %v3208, %v3293
  %v3359 = vmul.f32 %v3213, %v3298
  %v3360 = vmul.f32 %v3216, %v3303
  %v3361 = vmul.f32 %v3221, %v3308
  %v3362 = vmul.f32 %v3224, %v3313
  %v3363 = vmul.f32 %v3229, %v3318
  %v3364 = vmul.f32 %v3232, %v3323
  %v3365 = vmul.f32 %v3237, %v3328
  %v3366 = vmul.f32 %v3240, %v3333
  %v3367 = vmul.f32 %v3245, %v3338
  %v3368 = vmul.f32 %v3248, %v3343
  %v3369 = vmul.f32 %v3253, %v3348
  %v3370 = vmul.f32 %v3256, %v3353
  %3371 = vset.pattern.permute.xlu0 4
  %3372 = vperm.xlu0 %3371, %v56
  %v3373 = vpop.permute.xlu0 %3372
  %v3376 = vunpack.c.l.s4 839922192
  %v3377 = vunpack.c.0.s8 %v3376
  %v3378 = vlaneseq
  %v3379 = vshrl.u32 %v3378, 7
  %v3380 = vsub.s32 %v3377, %v3379
  %v3381 = vrot.slane %v3373, %v3380
  %3382 = vset.pattern.permute.xlu0 4
  %3383 = vperm.xlu0 %3382, %v57
  %v3384 = vpop.permute.xlu0 %3383
  %v3387 = vunpack.c.l.s4 839922192
  %v3388 = vunpack.c.0.s8 %v3387
  %v3389 = vlaneseq
  %v3390 = vshrl.u32 %v3389, 7
  %v3391 = vsub.s32 %v3388, %v3390
  %v3392 = vrot.slane %v3384, %v3391
  %3393 = vset.pattern.permute.xlu0 4
  %3394 = vperm.xlu0 %3393, %v58
  %v3395 = vpop.permute.xlu0 %3394
  %v3398 = vunpack.c.l.s4 839922192
  %v3399 = vunpack.c.0.s8 %v3398
  %v3400 = vlaneseq
  %v3401 = vshrl.u32 %v3400, 7
  %v3402 = vsub.s32 %v3399, %v3401
  %v3403 = vrot.slane %v3395, %v3402
  %3404 = vset.pattern.permute.xlu0 4
  %3405 = vperm.xlu0 %3404, %v59
  %v3406 = vpop.permute.xlu0 %3405
  %v3409 = vunpack.c.l.s4 839922192
  %v3410 = vunpack.c.0.s8 %v3409
  %v3411 = vlaneseq
  %v3412 = vshrl.u32 %v3411, 7
  %v3413 = vsub.s32 %v3410, %v3412
  %v3414 = vrot.slane %v3406, %v3413
  %3415 = vset.pattern.permute.xlu0 4
  %3416 = vperm.xlu0 %3415, %v60
  %v3417 = vpop.permute.xlu0 %3416
  %v3420 = vunpack.c.l.s4 839922192
  %v3421 = vunpack.c.0.s8 %v3420
  %v3422 = vlaneseq
  %v3423 = vshrl.u32 %v3422, 7
  %v3424 = vsub.s32 %v3421, %v3423
  %v3425 = vrot.slane %v3417, %v3424
  %3426 = vset.pattern.permute.xlu0 4
  %3427 = vperm.xlu0 %3426, %v61
  %v3428 = vpop.permute.xlu0 %3427
  %v3431 = vunpack.c.l.s4 839922192
  %v3432 = vunpack.c.0.s8 %v3431
  %v3433 = vlaneseq
  %v3434 = vshrl.u32 %v3433, 7
  %v3435 = vsub.s32 %v3432, %v3434
  %v3436 = vrot.slane %v3428, %v3435
  %3437 = vset.pattern.permute.xlu0 4
  %3438 = vperm.xlu0 %3437, %v62
  %v3439 = vpop.permute.xlu0 %3438
  %v3442 = vunpack.c.l.s4 839922192
  %v3443 = vunpack.c.0.s8 %v3442
  %v3444 = vlaneseq
  %v3445 = vshrl.u32 %v3444, 7
  %v3446 = vsub.s32 %v3443, %v3445
  %v3447 = vrot.slane %v3439, %v3446
  %3448 = vset.pattern.permute.xlu0 4
  %3449 = vperm.xlu0 %3448, %v63
  %v3450 = vpop.permute.xlu0 %3449
  %v3453 = vunpack.c.l.s4 839922192
  %v3454 = vunpack.c.0.s8 %v3453
  %v3455 = vlaneseq
  %v3456 = vshrl.u32 %v3455, 7
  %v3457 = vsub.s32 %v3454, %v3456
  %v3458 = vrot.slane %v3450, %v3457
  %3459 = vset.pattern.permute.xlu0 4
  %3460 = vperm.xlu0 %3459, %v64
  %v3461 = vpop.permute.xlu0 %3460
  %v3464 = vunpack.c.l.s4 839922192
  %v3465 = vunpack.c.0.s8 %v3464
  %v3466 = vlaneseq
  %v3467 = vshrl.u32 %v3466, 7
  %v3468 = vsub.s32 %v3465, %v3467
  %v3469 = vrot.slane %v3461, %v3468
  %3470 = vset.pattern.permute.xlu0 4
  %3471 = vperm.xlu0 %3470, %v65
  %v3472 = vpop.permute.xlu0 %3471
  %v3475 = vunpack.c.l.s4 839922192
  %v3476 = vunpack.c.0.s8 %v3475
  %v3477 = vlaneseq
  %v3478 = vshrl.u32 %v3477, 7
  %v3479 = vsub.s32 %v3476, %v3478
  %v3480 = vrot.slane %v3472, %v3479
  %3481 = vset.pattern.permute.xlu0 4
  %3482 = vperm.xlu0 %3481, %v66
  %v3483 = vpop.permute.xlu0 %3482
  %v3486 = vunpack.c.l.s4 839922192
  %v3487 = vunpack.c.0.s8 %v3486
  %v3488 = vlaneseq
  %v3489 = vshrl.u32 %v3488, 7
  %v3490 = vsub.s32 %v3487, %v3489
  %v3491 = vrot.slane %v3483, %v3490
  %3492 = vset.pattern.permute.xlu0 4
  %3493 = vperm.xlu0 %3492, %v67
  %v3494 = vpop.permute.xlu0 %3493
  %v3497 = vunpack.c.l.s4 839922192
  %v3498 = vunpack.c.0.s8 %v3497
  %v3499 = vlaneseq
  %v3500 = vshrl.u32 %v3499, 7
  %v3501 = vsub.s32 %v3498, %v3500
  %v3502 = vrot.slane %v3494, %v3501
  %3503 = vset.pattern.permute.xlu0 4
  %3504 = vperm.xlu0 %3503, %v68
  %v3505 = vpop.permute.xlu0 %3504
  %v3508 = vunpack.c.l.s4 839922192
  %v3509 = vunpack.c.0.s8 %v3508
  %v3510 = vlaneseq
  %v3511 = vshrl.u32 %v3510, 7
  %v3512 = vsub.s32 %v3509, %v3511
  %v3513 = vrot.slane %v3505, %v3512
  %3514 = vset.pattern.permute.xlu0 4
  %3515 = vperm.xlu0 %3514, %v69
  %v3516 = vpop.permute.xlu0 %3515
  %v3519 = vunpack.c.l.s4 839922192
  %v3520 = vunpack.c.0.s8 %v3519
  %v3521 = vlaneseq
  %v3522 = vshrl.u32 %v3521, 7
  %v3523 = vsub.s32 %v3520, %v3522
  %v3524 = vrot.slane %v3516, %v3523
  %3525 = vset.pattern.permute.xlu0 4
  %3526 = vperm.xlu0 %3525, %v70
  %v3527 = vpop.permute.xlu0 %3526
  %v3530 = vunpack.c.l.s4 839922192
  %v3531 = vunpack.c.0.s8 %v3530
  %v3532 = vlaneseq
  %v3533 = vshrl.u32 %v3532, 7
  %v3534 = vsub.s32 %v3531, %v3533
  %v3535 = vrot.slane %v3527, %v3534
  %3536 = vset.pattern.permute.xlu0 4
  %3537 = vperm.xlu0 %3536, %v71
  %v3538 = vpop.permute.xlu0 %3537
  %v3541 = vunpack.c.l.s4 839922192
  %v3542 = vunpack.c.0.s8 %v3541
  %v3543 = vlaneseq
  %v3544 = vshrl.u32 %v3543, 7
  %v3545 = vsub.s32 %v3542, %v3544
  %v3546 = vrot.slane %v3538, %v3545
  %v3547 = vlaneseq
  %v3548 = vshrl.u32 %v3547, 7
  %v3549 = vsub.s32 2, %v3548
  %v3550 = vrot.slane %v282, %v3549
  %v3552 = vunpack.c.l.b16 %v3550
  %v3553 = vpack.c.b16 %v3552, %v3552
  %v3555 = vadd.bf16 %v3381, %v3553
  %v3556 = vadd.bf16 %v3392, %v3553
  %v3557 = vadd.bf16 %v3403, %v3553
  %v3558 = vadd.bf16 %v3414, %v3553
  %v3559 = vadd.bf16 %v3425, %v3553
  %v3560 = vadd.bf16 %v3436, %v3553
  %v3561 = vadd.bf16 %v3447, %v3553
  %v3562 = vadd.bf16 %v3458, %v3553
  %v3563 = vadd.bf16 %v3469, %v3553
  %v3564 = vadd.bf16 %v3480, %v3553
  %v3565 = vadd.bf16 %v3491, %v3553
  %v3566 = vadd.bf16 %v3502, %v3553
  %v3567 = vadd.bf16 %v3513, %v3553
  %v3568 = vadd.bf16 %v3524, %v3553
  %v3569 = vadd.bf16 %v3535, %v3553
  %v3570 = vadd.bf16 %v3546, %v3553
  %vm3571 = vcmp.gt.bf16.partialorder %v3555, 0
  %vm3572 = vcmp.gt.bf16.partialorder %v3556, 0
  %vm3573 = vcmp.gt.bf16.partialorder %v3557, 0
  %vm3574 = vcmp.gt.bf16.partialorder %v3558, 0
  %vm3575 = vcmp.gt.bf16.partialorder %v3559, 0
  %vm3576 = vcmp.gt.bf16.partialorder %v3560, 0
  %vm3577 = vcmp.gt.bf16.partialorder %v3561, 0
  %vm3578 = vcmp.gt.bf16.partialorder %v3562, 0
  %vm3579 = vcmp.gt.bf16.partialorder %v3563, 0
  %vm3580 = vcmp.gt.bf16.partialorder %v3564, 0
  %vm3581 = vcmp.gt.bf16.partialorder %v3565, 0
  %vm3582 = vcmp.gt.bf16.partialorder %v3566, 0
  %vm3583 = vcmp.gt.bf16.partialorder %v3567, 0
  %vm3584 = vcmp.gt.bf16.partialorder %v3568, 0
  %vm3585 = vcmp.gt.bf16.partialorder %v3569, 0
  %vm3586 = vcmp.gt.bf16.partialorder %v3570, 0
  %v3587 = vmul.bf16 %v3555, 1045249613
  %v3588 = vmul.bf16 %v3556, 1045249613
  %v3589 = vmul.bf16 %v3557, 1045249613
  %v3590 = vmul.bf16 %v3558, 1045249613
  %v3591 = vmul.bf16 %v3559, 1045249613
  %v3592 = vmul.bf16 %v3560, 1045249613
  %v3593 = vmul.bf16 %v3561, 1045249613
  %v3594 = vmul.bf16 %v3562, 1045249613
  %v3595 = vmul.bf16 %v3563, 1045249613
  %v3596 = vmul.bf16 %v3564, 1045249613
  %v3597 = vmul.bf16 %v3565, 1045249613
  %v3598 = vmul.bf16 %v3566, 1045249613
  %v3599 = vmul.bf16 %v3567, 1045249613
  %v3600 = vmul.bf16 %v3568, 1045249613
  %v3601 = vmul.bf16 %v3569, 1045249613
  %v3602 = vmul.bf16 %v3570, 1045249613
  %v3603 = vsel %vm3571, %v3555, %v3587
  %v3604 = vsel %vm3572, %v3556, %v3588
  %v3605 = vsel %vm3573, %v3557, %v3589
  %v3606 = vsel %vm3574, %v3558, %v3590
  %v3607 = vsel %vm3575, %v3559, %v3591
  %v3608 = vsel %vm3576, %v3560, %v3592
  %v3609 = vsel %vm3577, %v3561, %v3593
  %v3610 = vsel %vm3578, %v3562, %v3594
  %v3611 = vsel %vm3579, %v3563, %v3595
  %v3612 = vsel %vm3580, %v3564, %v3596
  %v3613 = vsel %vm3581, %v3565, %v3597
  %v3614 = vsel %vm3582, %v3566, %v3598
  %v3615 = vsel %vm3583, %v3567, %v3599
  %v3616 = vsel %vm3584, %v3568, %v3600
  %v3617 = vsel %vm3585, %v3569, %v3601
  %v3618 = vsel %vm3586, %v3570, %v3602
  %v3619 = vsel %vm73, %v3603, 4048220490
  %v3620 = vsel %vm74, %v3604, 4048220490
  %v3621 = vsel %vm75, %v3605, 4048220490
  %v3622 = vsel %vm76, %v3606, 4048220490
  %v3623 = vsel %vm77, %v3607, 4048220490
  %v3624 = vsel %vm78, %v3608, 4048220490
  %v3625 = vsel %vm79, %v3609, 4048220490
  %v3626 = vsel %vm80, %v3610, 4048220490
  %v3627 = vsel %vm81, %v3611, 4048220490
  %v3628 = vsel %vm82, %v3612, 4048220490
  %v3629 = vsel %vm83, %v3613, 4048220490
  %v3630 = vsel %vm84, %v3614, 4048220490
  %v3631 = vsel %vm85, %v3615, 4048220490
  %v3632 = vsel %vm86, %v3616, 4048220490
  %v3633 = vsel %vm87, %v3617, 4048220490
  %v3634 = vsel %vm88, %v3618, 4048220490
  %v3651 = vunpack.c.l.b16 %v3619
  %v3652 = vunpack.c.l.b16 %v3620
  %v3653 = vunpack.c.l.b16 %v3621
  %v3654 = vunpack.c.l.b16 %v3622
  %v3655 = vunpack.c.l.b16 %v3623
  %v3656 = vunpack.c.l.b16 %v3624
  %v3657 = vunpack.c.l.b16 %v3625
  %v3658 = vunpack.c.l.b16 %v3626
  %v3659 = vunpack.c.l.b16 %v3627
  %v3660 = vunpack.c.l.b16 %v3628
  %v3661 = vunpack.c.l.b16 %v3629
  %v3662 = vunpack.c.l.b16 %v3630
  %v3663 = vunpack.c.l.b16 %v3631
  %v3664 = vunpack.c.l.b16 %v3632
  %v3665 = vunpack.c.l.b16 %v3633
  %v3666 = vunpack.c.l.b16 %v3634
  %v3667 = vpack.c.b16 %v3652, %v3651
  %v3668 = vpack.c.b16 %v3654, %v3653
  %v3669 = vpack.c.b16 %v3656, %v3655
  %v3670 = vpack.c.b16 %v3658, %v3657
  %v3671 = vpack.c.b16 %v3660, %v3659
  %v3672 = vpack.c.b16 %v3662, %v3661
  %v3673 = vpack.c.b16 %v3664, %v3663
  %v3674 = vpack.c.b16 %v3666, %v3665
  %3683 = vmax.xlane.bf16.xlu0 %v3667
  %v3684 = vpop.xlane.xlu0 %3683
  %3685 = vmax.xlane.bf16.xlu0 %v3668
  %v3686 = vpop.xlane.xlu0 %3685
  %3687 = vmax.xlane.bf16.xlu0 %v3669
  %v3688 = vpop.xlane.xlu0 %3687
  %3689 = vmax.xlane.bf16.xlu0 %v3670
  %v3690 = vpop.xlane.xlu0 %3689
  %3691 = vmax.xlane.bf16.xlu0 %v3671
  %v3692 = vpop.xlane.xlu0 %3691
  %3693 = vmax.xlane.bf16.xlu0 %v3672
  %v3694 = vpop.xlane.xlu0 %3693
  %3695 = vmax.xlane.bf16.xlu0 %v3673
  %v3696 = vpop.xlane.xlu0 %3695
  %3697 = vmax.xlane.bf16.xlu0 %v3674
  %v3698 = vpop.xlane.xlu0 %3697
  %v3708 = vunpack.c.l.s4 839922192
  %v3709 = vunpack.c.0.s8 %v3708
  %v3710 = vlaneseq
  %v3711 = vshrl.u32 %v3710, 7
  %v3712 = vsub.s32 %v3709, %v3711
  %v3713 = vrot.slane %v3684, %v3712
  %v3715 = vunpack.c.l.s4 1985246804
  %v3716 = vunpack.c.0.s8 %v3715
  %v3717 = vlaneseq
  %v3718 = vshrl.u32 %v3717, 7
  %v3719 = vsub.s32 %v3716, %v3718
  %v3720 = vrot.slane %v3684, %v3719
  %v3722 = vunpack.c.l.s4 839922192
  %v3723 = vunpack.c.0.s8 %v3722
  %v3724 = vlaneseq
  %v3725 = vshrl.u32 %v3724, 7
  %v3726 = vsub.s32 %v3723, %v3725
  %v3727 = vrot.slane %v3686, %v3726
  %v3729 = vunpack.c.l.s4 1985246804
  %v3730 = vunpack.c.0.s8 %v3729
  %v3731 = vlaneseq
  %v3732 = vshrl.u32 %v3731, 7
  %v3733 = vsub.s32 %v3730, %v3732
  %v3734 = vrot.slane %v3686, %v3733
  %v3736 = vunpack.c.l.s4 839922192
  %v3737 = vunpack.c.0.s8 %v3736
  %v3738 = vlaneseq
  %v3739 = vshrl.u32 %v3738, 7
  %v3740 = vsub.s32 %v3737, %v3739
  %v3741 = vrot.slane %v3688, %v3740
  %v3743 = vunpack.c.l.s4 1985246804
  %v3744 = vunpack.c.0.s8 %v3743
  %v3745 = vlaneseq
  %v3746 = vshrl.u32 %v3745, 7
  %v3747 = vsub.s32 %v3744, %v3746
  %v3748 = vrot.slane %v3688, %v3747
  %v3750 = vunpack.c.l.s4 839922192
  %v3751 = vunpack.c.0.s8 %v3750
  %v3752 = vlaneseq
  %v3753 = vshrl.u32 %v3752, 7
  %v3754 = vsub.s32 %v3751, %v3753
  %v3755 = vrot.slane %v3690, %v3754
  %v3757 = vunpack.c.l.s4 1985246804
  %v3758 = vunpack.c.0.s8 %v3757
  %v3759 = vlaneseq
  %v3760 = vshrl.u32 %v3759, 7
  %v3761 = vsub.s32 %v3758, %v3760
  %v3762 = vrot.slane %v3690, %v3761
  %v3764 = vunpack.c.l.s4 839922192
  %v3765 = vunpack.c.0.s8 %v3764
  %v3766 = vlaneseq
  %v3767 = vshrl.u32 %v3766, 7
  %v3768 = vsub.s32 %v3765, %v3767
  %v3769 = vrot.slane %v3692, %v3768
  %v3771 = vunpack.c.l.s4 1985246804
  %v3772 = vunpack.c.0.s8 %v3771
  %v3773 = vlaneseq
  %v3774 = vshrl.u32 %v3773, 7
  %v3775 = vsub.s32 %v3772, %v3774
  %v3776 = vrot.slane %v3692, %v3775
  %v3778 = vunpack.c.l.s4 839922192
  %v3779 = vunpack.c.0.s8 %v3778
  %v3780 = vlaneseq
  %v3781 = vshrl.u32 %v3780, 7
  %v3782 = vsub.s32 %v3779, %v3781
  %v3783 = vrot.slane %v3694, %v3782
  %v3785 = vunpack.c.l.s4 1985246804
  %v3786 = vunpack.c.0.s8 %v3785
  %v3787 = vlaneseq
  %v3788 = vshrl.u32 %v3787, 7
  %v3789 = vsub.s32 %v3786, %v3788
  %v3790 = vrot.slane %v3694, %v3789
  %v3792 = vunpack.c.l.s4 839922192
  %v3793 = vunpack.c.0.s8 %v3792
  %v3794 = vlaneseq
  %v3795 = vshrl.u32 %v3794, 7
  %v3796 = vsub.s32 %v3793, %v3795
  %v3797 = vrot.slane %v3696, %v3796
  %v3799 = vunpack.c.l.s4 1985246804
  %v3800 = vunpack.c.0.s8 %v3799
  %v3801 = vlaneseq
  %v3802 = vshrl.u32 %v3801, 7
  %v3803 = vsub.s32 %v3800, %v3802
  %v3804 = vrot.slane %v3696, %v3803
  %v3806 = vunpack.c.l.s4 839922192
  %v3807 = vunpack.c.0.s8 %v3806
  %v3808 = vlaneseq
  %v3809 = vshrl.u32 %v3808, 7
  %v3810 = vsub.s32 %v3807, %v3809
  %v3811 = vrot.slane %v3698, %v3810
  %v3813 = vunpack.c.l.s4 1985246804
  %v3814 = vunpack.c.0.s8 %v3813
  %v3815 = vlaneseq
  %v3816 = vshrl.u32 %v3815, 7
  %v3817 = vsub.s32 %v3814, %v3816
  %v3818 = vrot.slane %v3698, %v3817
  %v3835 = vsub.bf16 %v3619, %v3713
  %v3836 = vsub.bf16 %v3620, %v3720
  %v3837 = vsub.bf16 %v3621, %v3727
  %v3838 = vsub.bf16 %v3622, %v3734
  %v3839 = vsub.bf16 %v3623, %v3741
  %v3840 = vsub.bf16 %v3624, %v3748
  %v3841 = vsub.bf16 %v3625, %v3755
  %v3842 = vsub.bf16 %v3626, %v3762
  %v3843 = vsub.bf16 %v3627, %v3769
  %v3844 = vsub.bf16 %v3628, %v3776
  %v3845 = vsub.bf16 %v3629, %v3783
  %v3846 = vsub.bf16 %v3630, %v3790
  %v3847 = vsub.bf16 %v3631, %v3797
  %v3848 = vsub.bf16 %v3632, %v3804
  %v3849 = vsub.bf16 %v3633, %v3811
  %v3850 = vsub.bf16 %v3634, %v3818
  %v3852 = vmul.bf16 %v3835, 1069105081
  %v3853 = vpow.bf16.pop %v3852
  %v3855 = vmul.bf16 %v3836, 1069105081
  %v3856 = vpow.bf16.pop %v3855
  %v3858 = vmul.bf16 %v3837, 1069105081
  %v3859 = vpow.bf16.pop %v3858
  %v3861 = vmul.bf16 %v3838, 1069105081
  %v3862 = vpow.bf16.pop %v3861
  %v3864 = vmul.bf16 %v3839, 1069105081
  %v3865 = vpow.bf16.pop %v3864
  %v3867 = vmul.bf16 %v3840, 1069105081
  %v3868 = vpow.bf16.pop %v3867
  %v3870 = vmul.bf16 %v3841, 1069105081
  %v3871 = vpow.bf16.pop %v3870
  %v3873 = vmul.bf16 %v3842, 1069105081
  %v3874 = vpow.bf16.pop %v3873
  %v3876 = vmul.bf16 %v3843, 1069105081
  %v3877 = vpow.bf16.pop %v3876
  %v3879 = vmul.bf16 %v3844, 1069105081
  %v3880 = vpow.bf16.pop %v3879
  %v3882 = vmul.bf16 %v3845, 1069105081
  %v3883 = vpow.bf16.pop %v3882
  %v3885 = vmul.bf16 %v3846, 1069105081
  %v3886 = vpow.bf16.pop %v3885
  %v3888 = vmul.bf16 %v3847, 1069105081
  %v3889 = vpow.bf16.pop %v3888
  %v3891 = vmul.bf16 %v3848, 1069105081
  %v3892 = vpow.bf16.pop %v3891
  %v3894 = vmul.bf16 %v3849, 1069105081
  %v3895 = vpow.bf16.pop %v3894
  %v3897 = vmul.bf16 %v3850, 1069105081
  %v3898 = vpow.bf16.pop %v3897
  %v3915 = vunpack.c.l.b16 %v3853
  %v3916 = vunpack.c.l.b16 %v3856
  %v3917 = vunpack.c.l.b16 %v3859
  %v3918 = vunpack.c.l.b16 %v3862
  %v3919 = vunpack.c.l.b16 %v3865
  %v3920 = vunpack.c.l.b16 %v3868
  %v3921 = vunpack.c.l.b16 %v3871
  %v3922 = vunpack.c.l.b16 %v3874
  %v3923 = vunpack.c.l.b16 %v3877
  %v3924 = vunpack.c.l.b16 %v3880
  %v3925 = vunpack.c.l.b16 %v3883
  %v3926 = vunpack.c.l.b16 %v3886
  %v3927 = vunpack.c.l.b16 %v3889
  %v3928 = vunpack.c.l.b16 %v3892
  %v3929 = vunpack.c.l.b16 %v3895
  %v3930 = vunpack.c.l.b16 %v3898
  %v3931 = vpack.c.b16 %v3916, %v3915
  %v3932 = vpack.c.b16 %v3918, %v3917
  %v3933 = vpack.c.b16 %v3920, %v3919
  %v3934 = vpack.c.b16 %v3922, %v3921
  %v3935 = vpack.c.b16 %v3924, %v3923
  %v3936 = vpack.c.b16 %v3926, %v3925
  %v3937 = vpack.c.b16 %v3928, %v3927
  %v3938 = vpack.c.b16 %v3930, %v3929
  %3947 = vrot.lane.b32.xlu0 %v716, 92
  %v3948 = vpop.permute.xlu0 %3947
  %3949 = vrot.lane.b32.xlu0 %v717, 92
  %v3950 = vpop.permute.xlu0 %3949
  %3951 = vrot.lane.b32.xlu0 %v718, 92
  %v3952 = vpop.permute.xlu0 %3951
  %3953 = vrot.lane.b32.xlu0 %v719, 92
  %v3954 = vpop.permute.xlu0 %3953
  %3955 = vrot.lane.b32.xlu0 %v720, 92
  %v3956 = vpop.permute.xlu0 %3955
  %3957 = vrot.lane.b32.xlu0 %v721, 92
  %v3958 = vpop.permute.xlu0 %3957
  %3959 = vrot.lane.b32.xlu0 %v722, 92
  %v3960 = vpop.permute.xlu0 %3959
  %3961 = vrot.lane.b32.xlu0 %v723, 92
  %v3962 = vpop.permute.xlu0 %3961
  %3971 = vmatprep.subr.bf16.mxu0 0
  %3972 = vmatpush1.bf16.msra.mxu0 %v3962
  %3973 = vmatprep.subr.bf16.mxu0 0
  %3974 = vmatpush1.bf16.msra.mxu0 %v3960
  %3975 = vmatprep.subr.bf16.mxu0 0
  %3976 = vmatpush1.bf16.msra.mxu0 %v3958
  %3977 = vmatprep.subr.bf16.mxu0 0
  %3978 = vmatpush1.bf16.msra.mxu0 %v3956
  %3979 = vmatprep.subr.bf16.mxu0 0
  %3980 = vmatpush1.bf16.msra.mxu0 %v3954
  %3981 = vmatprep.subr.bf16.mxu0 0
  %3982 = vmatpush1.bf16.msra.mxu0 %v3952
  %3983 = vmatprep.subr.bf16.mxu0 0
  %3984 = vmatpush1.bf16.msra.mxu0 %v3950
  %3985 = vmatprep.subr.bf16.mxu0 0
  %3986 = vmatpush1.bf16.msra.mxu0 %v3948
  %3987 = vmatprep.subr.bf16.mxu0 0
  %3988 = vmatpush2.bf16.msra.mxu0 0
  %3989 = vmatprep.subr.bf16.mxu0 0
  %3990 = vmatpush2.bf16.msra.mxu0 0
  %3991 = vmatprep.subr.bf16.mxu0 0
  %3992 = vmatpush2.bf16.msra.mxu0 0
  %3993 = vmatprep.subr.bf16.mxu0 0
  %3994 = vmatpush2.bf16.msra.mxu0 0
  %3995 = vmatprep.subr.bf16.mxu0 0
  %3996 = vmatpush2.bf16.msra.mxu0 0
  %3997 = vmatprep.subr.bf16.mxu0 0
  %3998 = vmatpush2.bf16.msra.mxu0 0
  %3999 = vmatprep.subr.bf16.mxu0 0
  %4000 = vmatpush2.bf16.msra.mxu0 0
  %4001 = vmatprep.subr.bf16.mxu0 0
  %4002 = vmatpush2.bf16.msra.mxu0 0
  %4003 = vmatprep.mubr.bf16.mxu0 0
  %4004 = vmatmul.mubr.bf16.gmra.mxu0 %v3931
  %v4005 = vpop.f32.mrf.mxu0
  %v4006 = vadd.f32 0.0, %v4005
  %v4007 = vpop.f32.mrf.mxu0
  %v4008 = vpop.f32.mrf.mxu0
  %v4009 = vadd.f32 0.0, %v4008
  %v4010 = vpop.f32.mrf.mxu0
  %4011 = vmatprep.mubr.bf16.mxu0 0
  %4012 = vmatmul.mubr.bf16.gmra.mxu0 %v3932
  %v4013 = vpop.f32.mrf.mxu0
  %v4014 = vadd.f32 0.0, %v4013
  %v4015 = vpop.f32.mrf.mxu0
  %v4016 = vpop.f32.mrf.mxu0
  %v4017 = vadd.f32 0.0, %v4016
  %v4018 = vpop.f32.mrf.mxu0
  %4019 = vmatprep.mubr.bf16.mxu0 0
  %4020 = vmatmul.mubr.bf16.gmra.mxu0 %v3933
  %v4021 = vpop.f32.mrf.mxu0
  %v4022 = vadd.f32 0.0, %v4021
  %v4023 = vpop.f32.mrf.mxu0
  %v4024 = vpop.f32.mrf.mxu0
  %v4025 = vadd.f32 0.0, %v4024
  %v4026 = vpop.f32.mrf.mxu0
  %4027 = vmatprep.mubr.bf16.mxu0 0
  %4028 = vmatmul.mubr.bf16.gmra.mxu0 %v3934
  %v4029 = vpop.f32.mrf.mxu0
  %v4030 = vadd.f32 0.0, %v4029
  %v4031 = vpop.f32.mrf.mxu0
  %v4032 = vpop.f32.mrf.mxu0
  %v4033 = vadd.f32 0.0, %v4032
  %v4034 = vpop.f32.mrf.mxu0
  %4035 = vmatprep.mubr.bf16.mxu0 0
  %4036 = vmatmul.mubr.bf16.gmra.mxu0 %v3935
  %v4037 = vpop.f32.mrf.mxu0
  %v4038 = vadd.f32 0.0, %v4037
  %v4039 = vpop.f32.mrf.mxu0
  %v4040 = vpop.f32.mrf.mxu0
  %v4041 = vadd.f32 0.0, %v4040
  %v4042 = vpop.f32.mrf.mxu0
  %4043 = vmatprep.mubr.bf16.mxu0 0
  %4044 = vmatmul.mubr.bf16.gmra.mxu0 %v3936
  %v4045 = vpop.f32.mrf.mxu0
  %v4046 = vadd.f32 0.0, %v4045
  %v4047 = vpop.f32.mrf.mxu0
  %v4048 = vpop.f32.mrf.mxu0
  %v4049 = vadd.f32 0.0, %v4048
  %v4050 = vpop.f32.mrf.mxu0
  %4051 = vmatprep.mubr.bf16.mxu0 0
  %4052 = vmatmul.mubr.bf16.gmra.mxu0 %v3937
  %v4053 = vpop.f32.mrf.mxu0
  %v4054 = vadd.f32 0.0, %v4053
  %v4055 = vpop.f32.mrf.mxu0
  %v4056 = vpop.f32.mrf.mxu0
  %v4057 = vadd.f32 0.0, %v4056
  %v4058 = vpop.f32.mrf.mxu0
  %4059 = vmatprep.mubr.bf16.mxu0 0
  %4060 = vmatmul.mubr.bf16.gmra.mxu0 %v3938
  %v4061 = vpop.f32.mrf.mxu0
  %v4062 = vadd.f32 0.0, %v4061
  %v4063 = vpop.f32.mrf.mxu0
  %v4064 = vpop.f32.mrf.mxu0
  %v4065 = vadd.f32 0.0, %v4064
  %v4066 = vpop.f32.mrf.mxu0
  %4067 = vdwg.mxu0
  %v4068 = vrcp.pop %v4006
  %v4069 = vrcp.pop %v4009
  %v4070 = vrcp.pop %v4014
  %v4071 = vrcp.pop %v4017
  %v4072 = vrcp.pop %v4022
  %v4073 = vrcp.pop %v4025
  %v4074 = vrcp.pop %v4030
  %v4075 = vrcp.pop %v4033
  %v4076 = vrcp.pop %v4038
  %v4077 = vrcp.pop %v4041
  %v4078 = vrcp.pop %v4046
  %v4079 = vrcp.pop %v4049
  %v4080 = vrcp.pop %v4054
  %v4081 = vrcp.pop %v4057
  %v4082 = vrcp.pop %v4062
  %v4083 = vrcp.pop %v4065
  %4085 = vset.pattern.permute.xlu0 8
  %4086 = vperm.xlu0 %4085, %v4068
  %v4087 = vpop.permute.xlu0 %4086
  %4090 = vset.pattern.permute.xlu0 8
  %4091 = vperm.xlu0 %4090, %v4069
  %v4092 = vpop.permute.xlu0 %4091
  %4095 = vset.pattern.permute.xlu0 8
  %4096 = vperm.xlu0 %4095, %v4070
  %v4097 = vpop.permute.xlu0 %4096
  %4100 = vset.pattern.permute.xlu0 8
  %4101 = vperm.xlu0 %4100, %v4071
  %v4102 = vpop.permute.xlu0 %4101
  %4105 = vset.pattern.permute.xlu0 8
  %4106 = vperm.xlu0 %4105, %v4072
  %v4107 = vpop.permute.xlu0 %4106
  %4110 = vset.pattern.permute.xlu0 8
  %4111 = vperm.xlu0 %4110, %v4073
  %v4112 = vpop.permute.xlu0 %4111
  %4115 = vset.pattern.permute.xlu0 8
  %4116 = vperm.xlu0 %4115, %v4074
  %v4117 = vpop.permute.xlu0 %4116
  %4120 = vset.pattern.permute.xlu0 8
  %4121 = vperm.xlu0 %4120, %v4075
  %v4122 = vpop.permute.xlu0 %4121
  %4125 = vset.pattern.permute.xlu0 8
  %4126 = vperm.xlu0 %4125, %v4076
  %v4127 = vpop.permute.xlu0 %4126
  %4130 = vset.pattern.permute.xlu0 8
  %4131 = vperm.xlu0 %4130, %v4077
  %v4132 = vpop.permute.xlu0 %4131
  %4135 = vset.pattern.permute.xlu0 8
  %4136 = vperm.xlu0 %4135, %v4078
  %v4137 = vpop.permute.xlu0 %4136
  %4140 = vset.pattern.permute.xlu0 8
  %4141 = vperm.xlu0 %4140, %v4079
  %v4142 = vpop.permute.xlu0 %4141
  %4145 = vset.pattern.permute.xlu0 8
  %4146 = vperm.xlu0 %4145, %v4080
  %v4147 = vpop.permute.xlu0 %4146
  %4150 = vset.pattern.permute.xlu0 8
  %4151 = vperm.xlu0 %4150, %v4081
  %v4152 = vpop.permute.xlu0 %4151
  %4155 = vset.pattern.permute.xlu0 8
  %4156 = vperm.xlu0 %4155, %v4082
  %v4157 = vpop.permute.xlu0 %4156
  %4160 = vset.pattern.permute.xlu0 8
  %4161 = vperm.xlu0 %4160, %v4083
  %v4162 = vpop.permute.xlu0 %4161
  %v4164 = vmul.f32 %v4006, %v4087
  %v4165 = vmul.f32 %v4009, %v4092
  %v4166 = vmul.f32 %v4014, %v4097
  %v4167 = vmul.f32 %v4017, %v4102
  %v4168 = vmul.f32 %v4022, %v4107
  %v4169 = vmul.f32 %v4025, %v4112
  %v4170 = vmul.f32 %v4030, %v4117
  %v4171 = vmul.f32 %v4033, %v4122
  %v4172 = vmul.f32 %v4038, %v4127
  %v4173 = vmul.f32 %v4041, %v4132
  %v4174 = vmul.f32 %v4046, %v4137
  %v4175 = vmul.f32 %v4049, %v4142
  %v4176 = vmul.f32 %v4054, %v4147
  %v4177 = vmul.f32 %v4057, %v4152
  %v4178 = vmul.f32 %v4062, %v4157
  %v4179 = vmul.f32 %v4065, %v4162
  %4180 = vset.pattern.permute.xlu0 5
  %4181 = vperm.xlu0 %4180, %v56
  %v4182 = vpop.permute.xlu0 %4181
  %v4185 = vunpack.c.l.s4 839922192
  %v4186 = vunpack.c.0.s8 %v4185
  %v4187 = vlaneseq
  %v4188 = vshrl.u32 %v4187, 7
  %v4189 = vsub.s32 %v4186, %v4188
  %v4190 = vrot.slane %v4182, %v4189
  %4191 = vset.pattern.permute.xlu0 5
  %4192 = vperm.xlu0 %4191, %v57
  %v4193 = vpop.permute.xlu0 %4192
  %v4196 = vunpack.c.l.s4 839922192
  %v4197 = vunpack.c.0.s8 %v4196
  %v4198 = vlaneseq
  %v4199 = vshrl.u32 %v4198, 7
  %v4200 = vsub.s32 %v4197, %v4199
  %v4201 = vrot.slane %v4193, %v4200
  %4202 = vset.pattern.permute.xlu0 5
  %4203 = vperm.xlu0 %4202, %v58
  %v4204 = vpop.permute.xlu0 %4203
  %v4207 = vunpack.c.l.s4 839922192
  %v4208 = vunpack.c.0.s8 %v4207
  %v4209 = vlaneseq
  %v4210 = vshrl.u32 %v4209, 7
  %v4211 = vsub.s32 %v4208, %v4210
  %v4212 = vrot.slane %v4204, %v4211
  %4213 = vset.pattern.permute.xlu0 5
  %4214 = vperm.xlu0 %4213, %v59
  %v4215 = vpop.permute.xlu0 %4214
  %v4218 = vunpack.c.l.s4 839922192
  %v4219 = vunpack.c.0.s8 %v4218
  %v4220 = vlaneseq
  %v4221 = vshrl.u32 %v4220, 7
  %v4222 = vsub.s32 %v4219, %v4221
  %v4223 = vrot.slane %v4215, %v4222
  %4224 = vset.pattern.permute.xlu0 5
  %4225 = vperm.xlu0 %4224, %v60
  %v4226 = vpop.permute.xlu0 %4225
  %v4229 = vunpack.c.l.s4 839922192
  %v4230 = vunpack.c.0.s8 %v4229
  %v4231 = vlaneseq
  %v4232 = vshrl.u32 %v4231, 7
  %v4233 = vsub.s32 %v4230, %v4232
  %v4234 = vrot.slane %v4226, %v4233
  %4235 = vset.pattern.permute.xlu0 5
  %4236 = vperm.xlu0 %4235, %v61
  %v4237 = vpop.permute.xlu0 %4236
  %v4240 = vunpack.c.l.s4 839922192
  %v4241 = vunpack.c.0.s8 %v4240
  %v4242 = vlaneseq
  %v4243 = vshrl.u32 %v4242, 7
  %v4244 = vsub.s32 %v4241, %v4243
  %v4245 = vrot.slane %v4237, %v4244
  %4246 = vset.pattern.permute.xlu0 5
  %4247 = vperm.xlu0 %4246, %v62
  %v4248 = vpop.permute.xlu0 %4247
  %v4251 = vunpack.c.l.s4 839922192
  %v4252 = vunpack.c.0.s8 %v4251
  %v4253 = vlaneseq
  %v4254 = vshrl.u32 %v4253, 7
  %v4255 = vsub.s32 %v4252, %v4254
  %v4256 = vrot.slane %v4248, %v4255
  %4257 = vset.pattern.permute.xlu0 5
  %4258 = vperm.xlu0 %4257, %v63
  %v4259 = vpop.permute.xlu0 %4258
  %v4262 = vunpack.c.l.s4 839922192
  %v4263 = vunpack.c.0.s8 %v4262
  %v4264 = vlaneseq
  %v4265 = vshrl.u32 %v4264, 7
  %v4266 = vsub.s32 %v4263, %v4265
  %v4267 = vrot.slane %v4259, %v4266
  %4268 = vset.pattern.permute.xlu0 5
  %4269 = vperm.xlu0 %4268, %v64
  %v4270 = vpop.permute.xlu0 %4269
  %v4273 = vunpack.c.l.s4 839922192
  %v4274 = vunpack.c.0.s8 %v4273
  %v4275 = vlaneseq
  %v4276 = vshrl.u32 %v4275, 7
  %v4277 = vsub.s32 %v4274, %v4276
  %v4278 = vrot.slane %v4270, %v4277
  %4279 = vset.pattern.permute.xlu0 5
  %4280 = vperm.xlu0 %4279, %v65
  %v4281 = vpop.permute.xlu0 %4280
  %v4284 = vunpack.c.l.s4 839922192
  %v4285 = vunpack.c.0.s8 %v4284
  %v4286 = vlaneseq
  %v4287 = vshrl.u32 %v4286, 7
  %v4288 = vsub.s32 %v4285, %v4287
  %v4289 = vrot.slane %v4281, %v4288
  %4290 = vset.pattern.permute.xlu0 5
  %4291 = vperm.xlu0 %4290, %v66
  %v4292 = vpop.permute.xlu0 %4291
  %v4295 = vunpack.c.l.s4 839922192
  %v4296 = vunpack.c.0.s8 %v4295
  %v4297 = vlaneseq
  %v4298 = vshrl.u32 %v4297, 7
  %v4299 = vsub.s32 %v4296, %v4298
  %v4300 = vrot.slane %v4292, %v4299
  %4301 = vset.pattern.permute.xlu0 5
  %4302 = vperm.xlu0 %4301, %v67
  %v4303 = vpop.permute.xlu0 %4302
  %v4306 = vunpack.c.l.s4 839922192
  %v4307 = vunpack.c.0.s8 %v4306
  %v4308 = vlaneseq
  %v4309 = vshrl.u32 %v4308, 7
  %v4310 = vsub.s32 %v4307, %v4309
  %v4311 = vrot.slane %v4303, %v4310
  %4312 = vset.pattern.permute.xlu0 5
  %4313 = vperm.xlu0 %4312, %v68
  %v4314 = vpop.permute.xlu0 %4313
  %v4317 = vunpack.c.l.s4 839922192
  %v4318 = vunpack.c.0.s8 %v4317
  %v4319 = vlaneseq
  %v4320 = vshrl.u32 %v4319, 7
  %v4321 = vsub.s32 %v4318, %v4320
  %v4322 = vrot.slane %v4314, %v4321
  %4323 = vset.pattern.permute.xlu0 5
  %4324 = vperm.xlu0 %4323, %v69
  %v4325 = vpop.permute.xlu0 %4324
  %v4328 = vunpack.c.l.s4 839922192
  %v4329 = vunpack.c.0.s8 %v4328
  %v4330 = vlaneseq
  %v4331 = vshrl.u32 %v4330, 7
  %v4332 = vsub.s32 %v4329, %v4331
  %v4333 = vrot.slane %v4325, %v4332
  %4334 = vset.pattern.permute.xlu0 5
  %4335 = vperm.xlu0 %4334, %v70
  %v4336 = vpop.permute.xlu0 %4335
  %v4339 = vunpack.c.l.s4 839922192
  %v4340 = vunpack.c.0.s8 %v4339
  %v4341 = vlaneseq
  %v4342 = vshrl.u32 %v4341, 7
  %v4343 = vsub.s32 %v4340, %v4342
  %v4344 = vrot.slane %v4336, %v4343
  %4345 = vset.pattern.permute.xlu0 5
  %4346 = vperm.xlu0 %4345, %v71
  %v4347 = vpop.permute.xlu0 %4346
  %v4350 = vunpack.c.l.s4 839922192
  %v4351 = vunpack.c.0.s8 %v4350
  %v4352 = vlaneseq
  %v4353 = vshrl.u32 %v4352, 7
  %v4354 = vsub.s32 %v4351, %v4353
  %v4355 = vrot.slane %v4347, %v4354
  %v4356 = vlaneseq
  %v4357 = vshrl.u32 %v4356, 7
  %v4358 = vsub.s32 2, %v4357
  %v4359 = vrot.slane %v1118, %v4358
  %v4361 = vunpack.c.l.b16 %v4359
  %v4362 = vpack.c.b16 %v4361, %v4361
  %v4364 = vadd.bf16 %v4190, %v4362
  %v4365 = vadd.bf16 %v4201, %v4362
  %v4366 = vadd.bf16 %v4212, %v4362
  %v4367 = vadd.bf16 %v4223, %v4362
  %v4368 = vadd.bf16 %v4234, %v4362
  %v4369 = vadd.bf16 %v4245, %v4362
  %v4370 = vadd.bf16 %v4256, %v4362
  %v4371 = vadd.bf16 %v4267, %v4362
  %v4372 = vadd.bf16 %v4278, %v4362
  %v4373 = vadd.bf16 %v4289, %v4362
  %v4374 = vadd.bf16 %v4300, %v4362
  %v4375 = vadd.bf16 %v4311, %v4362
  %v4376 = vadd.bf16 %v4322, %v4362
  %v4377 = vadd.bf16 %v4333, %v4362
  %v4378 = vadd.bf16 %v4344, %v4362
  %v4379 = vadd.bf16 %v4355, %v4362
  %vm4380 = vcmp.gt.bf16.partialorder %v4364, 0
  %vm4381 = vcmp.gt.bf16.partialorder %v4365, 0
  %vm4382 = vcmp.gt.bf16.partialorder %v4366, 0
  %vm4383 = vcmp.gt.bf16.partialorder %v4367, 0
  %vm4384 = vcmp.gt.bf16.partialorder %v4368, 0
  %vm4385 = vcmp.gt.bf16.partialorder %v4369, 0
  %vm4386 = vcmp.gt.bf16.partialorder %v4370, 0
  %vm4387 = vcmp.gt.bf16.partialorder %v4371, 0
  %vm4388 = vcmp.gt.bf16.partialorder %v4372, 0
  %vm4389 = vcmp.gt.bf16.partialorder %v4373, 0
  %vm4390 = vcmp.gt.bf16.partialorder %v4374, 0
  %vm4391 = vcmp.gt.bf16.partialorder %v4375, 0
  %vm4392 = vcmp.gt.bf16.partialorder %v4376, 0
  %vm4393 = vcmp.gt.bf16.partialorder %v4377, 0
  %vm4394 = vcmp.gt.bf16.partialorder %v4378, 0
  %vm4395 = vcmp.gt.bf16.partialorder %v4379, 0
  %v4396 = vmul.bf16 %v4364, 1045249613
  %v4397 = vmul.bf16 %v4365, 1045249613
  %v4398 = vmul.bf16 %v4366, 1045249613
  %v4399 = vmul.bf16 %v4367, 1045249613
  %v4400 = vmul.bf16 %v4368, 1045249613
  %v4401 = vmul.bf16 %v4369, 1045249613
  %v4402 = vmul.bf16 %v4370, 1045249613
  %v4403 = vmul.bf16 %v4371, 1045249613
  %v4404 = vmul.bf16 %v4372, 1045249613
  %v4405 = vmul.bf16 %v4373, 1045249613
  %v4406 = vmul.bf16 %v4374, 1045249613
  %v4407 = vmul.bf16 %v4375, 1045249613
  %v4408 = vmul.bf16 %v4376, 1045249613
  %v4409 = vmul.bf16 %v4377, 1045249613
  %v4410 = vmul.bf16 %v4378, 1045249613
  %v4411 = vmul.bf16 %v4379, 1045249613
  %v4412 = vsel %vm4380, %v4364, %v4396
  %v4413 = vsel %vm4381, %v4365, %v4397
  %v4414 = vsel %vm4382, %v4366, %v4398
  %v4415 = vsel %vm4383, %v4367, %v4399
  %v4416 = vsel %vm4384, %v4368, %v4400
  %v4417 = vsel %vm4385, %v4369, %v4401
  %v4418 = vsel %vm4386, %v4370, %v4402
  %v4419 = vsel %vm4387, %v4371, %v4403
  %v4420 = vsel %vm4388, %v4372, %v4404
  %v4421 = vsel %vm4389, %v4373, %v4405
  %v4422 = vsel %vm4390, %v4374, %v4406
  %v4423 = vsel %vm4391, %v4375, %v4407
  %v4424 = vsel %vm4392, %v4376, %v4408
  %v4425 = vsel %vm4393, %v4377, %v4409
  %v4426 = vsel %vm4394, %v4378, %v4410
  %v4427 = vsel %vm4395, %v4379, %v4411
  %v4428 = vsel %vm73, %v4412, 4048220490
  %v4429 = vsel %vm74, %v4413, 4048220490
  %v4430 = vsel %vm75, %v4414, 4048220490
  %v4431 = vsel %vm76, %v4415, 4048220490
  %v4432 = vsel %vm77, %v4416, 4048220490
  %v4433 = vsel %vm78, %v4417, 4048220490
  %v4434 = vsel %vm79, %v4418, 4048220490
  %v4435 = vsel %vm80, %v4419, 4048220490
  %v4436 = vsel %vm81, %v4420, 4048220490
  %v4437 = vsel %vm82, %v4421, 4048220490
  %v4438 = vsel %vm83, %v4422, 4048220490
  %v4439 = vsel %vm84, %v4423, 4048220490
  %v4440 = vsel %vm85, %v4424, 4048220490
  %v4441 = vsel %vm86, %v4425, 4048220490
  %v4442 = vsel %vm87, %v4426, 4048220490
  %v4443 = vsel %vm88, %v4427, 4048220490
  %v4460 = vunpack.c.l.b16 %v4428
  %v4461 = vunpack.c.l.b16 %v4429
  %v4462 = vunpack.c.l.b16 %v4430
  %v4463 = vunpack.c.l.b16 %v4431
  %v4464 = vunpack.c.l.b16 %v4432
  %v4465 = vunpack.c.l.b16 %v4433
  %v4466 = vunpack.c.l.b16 %v4434
  %v4467 = vunpack.c.l.b16 %v4435
  %v4468 = vunpack.c.l.b16 %v4436
  %v4469 = vunpack.c.l.b16 %v4437
  %v4470 = vunpack.c.l.b16 %v4438
  %v4471 = vunpack.c.l.b16 %v4439
  %v4472 = vunpack.c.l.b16 %v4440
  %v4473 = vunpack.c.l.b16 %v4441
  %v4474 = vunpack.c.l.b16 %v4442
  %v4475 = vunpack.c.l.b16 %v4443
  %v4476 = vpack.c.b16 %v4461, %v4460
  %v4477 = vpack.c.b16 %v4463, %v4462
  %v4478 = vpack.c.b16 %v4465, %v4464
  %v4479 = vpack.c.b16 %v4467, %v4466
  %v4480 = vpack.c.b16 %v4469, %v4468
  %v4481 = vpack.c.b16 %v4471, %v4470
  %v4482 = vpack.c.b16 %v4473, %v4472
  %v4483 = vpack.c.b16 %v4475, %v4474
  %4492 = vmax.xlane.bf16.xlu0 %v4476
  %v4493 = vpop.xlane.xlu0 %4492
  %4494 = vmax.xlane.bf16.xlu0 %v4477
  %v4495 = vpop.xlane.xlu0 %4494
  %4496 = vmax.xlane.bf16.xlu0 %v4478
  %v4497 = vpop.xlane.xlu0 %4496
  %4498 = vmax.xlane.bf16.xlu0 %v4479
  %v4499 = vpop.xlane.xlu0 %4498
  %4500 = vmax.xlane.bf16.xlu0 %v4480
  %v4501 = vpop.xlane.xlu0 %4500
  %4502 = vmax.xlane.bf16.xlu0 %v4481
  %v4503 = vpop.xlane.xlu0 %4502
  %4504 = vmax.xlane.bf16.xlu0 %v4482
  %v4505 = vpop.xlane.xlu0 %4504
  %4506 = vmax.xlane.bf16.xlu0 %v4483
  %v4507 = vpop.xlane.xlu0 %4506
  %v4517 = vunpack.c.l.s4 839922192
  %v4518 = vunpack.c.0.s8 %v4517
  %v4519 = vlaneseq
  %v4520 = vshrl.u32 %v4519, 7
  %v4521 = vsub.s32 %v4518, %v4520
  %v4522 = vrot.slane %v4493, %v4521
  %v4524 = vunpack.c.l.s4 1985246804
  %v4525 = vunpack.c.0.s8 %v4524
  %v4526 = vlaneseq
  %v4527 = vshrl.u32 %v4526, 7
  %v4528 = vsub.s32 %v4525, %v4527
  %v4529 = vrot.slane %v4493, %v4528
  %v4531 = vunpack.c.l.s4 839922192
  %v4532 = vunpack.c.0.s8 %v4531
  %v4533 = vlaneseq
  %v4534 = vshrl.u32 %v4533, 7
  %v4535 = vsub.s32 %v4532, %v4534
  %v4536 = vrot.slane %v4495, %v4535
  %v4538 = vunpack.c.l.s4 1985246804
  %v4539 = vunpack.c.0.s8 %v4538
  %v4540 = vlaneseq
  %v4541 = vshrl.u32 %v4540, 7
  %v4542 = vsub.s32 %v4539, %v4541
  %v4543 = vrot.slane %v4495, %v4542
  %v4545 = vunpack.c.l.s4 839922192
  %v4546 = vunpack.c.0.s8 %v4545
  %v4547 = vlaneseq
  %v4548 = vshrl.u32 %v4547, 7
  %v4549 = vsub.s32 %v4546, %v4548
  %v4550 = vrot.slane %v4497, %v4549
  %v4552 = vunpack.c.l.s4 1985246804
  %v4553 = vunpack.c.0.s8 %v4552
  %v4554 = vlaneseq
  %v4555 = vshrl.u32 %v4554, 7
  %v4556 = vsub.s32 %v4553, %v4555
  %v4557 = vrot.slane %v4497, %v4556
  %v4559 = vunpack.c.l.s4 839922192
  %v4560 = vunpack.c.0.s8 %v4559
  %v4561 = vlaneseq
  %v4562 = vshrl.u32 %v4561, 7
  %v4563 = vsub.s32 %v4560, %v4562
  %v4564 = vrot.slane %v4499, %v4563
  %v4566 = vunpack.c.l.s4 1985246804
  %v4567 = vunpack.c.0.s8 %v4566
  %v4568 = vlaneseq
  %v4569 = vshrl.u32 %v4568, 7
  %v4570 = vsub.s32 %v4567, %v4569
  %v4571 = vrot.slane %v4499, %v4570
  %v4573 = vunpack.c.l.s4 839922192
  %v4574 = vunpack.c.0.s8 %v4573
  %v4575 = vlaneseq
  %v4576 = vshrl.u32 %v4575, 7
  %v4577 = vsub.s32 %v4574, %v4576
  %v4578 = vrot.slane %v4501, %v4577
  %v4580 = vunpack.c.l.s4 1985246804
  %v4581 = vunpack.c.0.s8 %v4580
  %v4582 = vlaneseq
  %v4583 = vshrl.u32 %v4582, 7
  %v4584 = vsub.s32 %v4581, %v4583
  %v4585 = vrot.slane %v4501, %v4584
  %v4587 = vunpack.c.l.s4 839922192
  %v4588 = vunpack.c.0.s8 %v4587
  %v4589 = vlaneseq
  %v4590 = vshrl.u32 %v4589, 7
  %v4591 = vsub.s32 %v4588, %v4590
  %v4592 = vrot.slane %v4503, %v4591
  %v4594 = vunpack.c.l.s4 1985246804
  %v4595 = vunpack.c.0.s8 %v4594
  %v4596 = vlaneseq
  %v4597 = vshrl.u32 %v4596, 7
  %v4598 = vsub.s32 %v4595, %v4597
  %v4599 = vrot.slane %v4503, %v4598
  %v4601 = vunpack.c.l.s4 839922192
  %v4602 = vunpack.c.0.s8 %v4601
  %v4603 = vlaneseq
  %v4604 = vshrl.u32 %v4603, 7
  %v4605 = vsub.s32 %v4602, %v4604
  %v4606 = vrot.slane %v4505, %v4605
  %v4608 = vunpack.c.l.s4 1985246804
  %v4609 = vunpack.c.0.s8 %v4608
  %v4610 = vlaneseq
  %v4611 = vshrl.u32 %v4610, 7
  %v4612 = vsub.s32 %v4609, %v4611
  %v4613 = vrot.slane %v4505, %v4612
  %v4615 = vunpack.c.l.s4 839922192
  %v4616 = vunpack.c.0.s8 %v4615
  %v4617 = vlaneseq
  %v4618 = vshrl.u32 %v4617, 7
  %v4619 = vsub.s32 %v4616, %v4618
  %v4620 = vrot.slane %v4507, %v4619
  %v4622 = vunpack.c.l.s4 1985246804
  %v4623 = vunpack.c.0.s8 %v4622
  %v4624 = vlaneseq
  %v4625 = vshrl.u32 %v4624, 7
  %v4626 = vsub.s32 %v4623, %v4625
  %v4627 = vrot.slane %v4507, %v4626
  %v4644 = vsub.bf16 %v4428, %v4522
  %v4645 = vsub.bf16 %v4429, %v4529
  %v4646 = vsub.bf16 %v4430, %v4536
  %v4647 = vsub.bf16 %v4431, %v4543
  %v4648 = vsub.bf16 %v4432, %v4550
  %v4649 = vsub.bf16 %v4433, %v4557
  %v4650 = vsub.bf16 %v4434, %v4564
  %v4651 = vsub.bf16 %v4435, %v4571
  %v4652 = vsub.bf16 %v4436, %v4578
  %v4653 = vsub.bf16 %v4437, %v4585
  %v4654 = vsub.bf16 %v4438, %v4592
  %v4655 = vsub.bf16 %v4439, %v4599
  %v4656 = vsub.bf16 %v4440, %v4606
  %v4657 = vsub.bf16 %v4441, %v4613
  %v4658 = vsub.bf16 %v4442, %v4620
  %v4659 = vsub.bf16 %v4443, %v4627
  %v4661 = vmul.bf16 %v4644, 1069105081
  %v4662 = vpow.bf16.pop %v4661
  %v4664 = vmul.bf16 %v4645, 1069105081
  %v4665 = vpow.bf16.pop %v4664
  %v4667 = vmul.bf16 %v4646, 1069105081
  %v4668 = vpow.bf16.pop %v4667
  %v4670 = vmul.bf16 %v4647, 1069105081
  %v4671 = vpow.bf16.pop %v4670
  %v4673 = vmul.bf16 %v4648, 1069105081
  %v4674 = vpow.bf16.pop %v4673
  %v4676 = vmul.bf16 %v4649, 1069105081
  %v4677 = vpow.bf16.pop %v4676
  %v4679 = vmul.bf16 %v4650, 1069105081
  %v4680 = vpow.bf16.pop %v4679
  %v4682 = vmul.bf16 %v4651, 1069105081
  %v4683 = vpow.bf16.pop %v4682
  %v4685 = vmul.bf16 %v4652, 1069105081
  %v4686 = vpow.bf16.pop %v4685
  %v4688 = vmul.bf16 %v4653, 1069105081
  %v4689 = vpow.bf16.pop %v4688
  %v4691 = vmul.bf16 %v4654, 1069105081
  %v4692 = vpow.bf16.pop %v4691
  %v4694 = vmul.bf16 %v4655, 1069105081
  %v4695 = vpow.bf16.pop %v4694
  %v4697 = vmul.bf16 %v4656, 1069105081
  %v4698 = vpow.bf16.pop %v4697
  %v4700 = vmul.bf16 %v4657, 1069105081
  %v4701 = vpow.bf16.pop %v4700
  %v4703 = vmul.bf16 %v4658, 1069105081
  %v4704 = vpow.bf16.pop %v4703
  %v4706 = vmul.bf16 %v4659, 1069105081
  %v4707 = vpow.bf16.pop %v4706
  %v4724 = vunpack.c.l.b16 %v4662
  %v4725 = vunpack.c.l.b16 %v4665
  %v4726 = vunpack.c.l.b16 %v4668
  %v4727 = vunpack.c.l.b16 %v4671
  %v4728 = vunpack.c.l.b16 %v4674
  %v4729 = vunpack.c.l.b16 %v4677
  %v4730 = vunpack.c.l.b16 %v4680
  %v4731 = vunpack.c.l.b16 %v4683
  %v4732 = vunpack.c.l.b16 %v4686
  %v4733 = vunpack.c.l.b16 %v4689
  %v4734 = vunpack.c.l.b16 %v4692
  %v4735 = vunpack.c.l.b16 %v4695
  %v4736 = vunpack.c.l.b16 %v4698
  %v4737 = vunpack.c.l.b16 %v4701
  %v4738 = vunpack.c.l.b16 %v4704
  %v4739 = vunpack.c.l.b16 %v4707
  %v4740 = vpack.c.b16 %v4725, %v4724
  %v4741 = vpack.c.b16 %v4727, %v4726
  %v4742 = vpack.c.b16 %v4729, %v4728
  %v4743 = vpack.c.b16 %v4731, %v4730
  %v4744 = vpack.c.b16 %v4733, %v4732
  %v4745 = vpack.c.b16 %v4735, %v4734
  %v4746 = vpack.c.b16 %v4737, %v4736
  %v4747 = vpack.c.b16 %v4739, %v4738
  %4756 = vrot.lane.b32.xlu0 %v716, 83
  %v4757 = vpop.permute.xlu0 %4756
  %4758 = vrot.lane.b32.xlu0 %v717, 83
  %v4759 = vpop.permute.xlu0 %4758
  %4760 = vrot.lane.b32.xlu0 %v718, 83
  %v4761 = vpop.permute.xlu0 %4760
  %4762 = vrot.lane.b32.xlu0 %v719, 83
  %v4763 = vpop.permute.xlu0 %4762
  %4764 = vrot.lane.b32.xlu0 %v720, 83
  %v4765 = vpop.permute.xlu0 %4764
  %4766 = vrot.lane.b32.xlu0 %v721, 83
  %v4767 = vpop.permute.xlu0 %4766
  %4768 = vrot.lane.b32.xlu0 %v722, 83
  %v4769 = vpop.permute.xlu0 %4768
  %4770 = vrot.lane.b32.xlu0 %v723, 83
  %v4771 = vpop.permute.xlu0 %4770
  %4780 = vmatprep.subr.bf16.mxu0 0
  %4781 = vmatpush1.bf16.msra.mxu0 %v4771
  %4782 = vmatprep.subr.bf16.mxu0 0
  %4783 = vmatpush1.bf16.msra.mxu0 %v4769
  %4784 = vmatprep.subr.bf16.mxu0 0
  %4785 = vmatpush1.bf16.msra.mxu0 %v4767
  %4786 = vmatprep.subr.bf16.mxu0 0
  %4787 = vmatpush1.bf16.msra.mxu0 %v4765
  %4788 = vmatprep.subr.bf16.mxu0 0
  %4789 = vmatpush1.bf16.msra.mxu0 %v4763
  %4790 = vmatprep.subr.bf16.mxu0 0
  %4791 = vmatpush1.bf16.msra.mxu0 %v4761
  %4792 = vmatprep.subr.bf16.mxu0 0
  %4793 = vmatpush1.bf16.msra.mxu0 %v4759
  %4794 = vmatprep.subr.bf16.mxu0 0
  %4795 = vmatpush1.bf16.msra.mxu0 %v4757
  %4796 = vmatprep.subr.bf16.mxu0 0
  %4797 = vmatpush2.bf16.msra.mxu0 0
  %4798 = vmatprep.subr.bf16.mxu0 0
  %4799 = vmatpush2.bf16.msra.mxu0 0
  %4800 = vmatprep.subr.bf16.mxu0 0
  %4801 = vmatpush2.bf16.msra.mxu0 0
  %4802 = vmatprep.subr.bf16.mxu0 0
  %4803 = vmatpush2.bf16.msra.mxu0 0
  %4804 = vmatprep.subr.bf16.mxu0 0
  %4805 = vmatpush2.bf16.msra.mxu0 0
  %4806 = vmatprep.subr.bf16.mxu0 0
  %4807 = vmatpush2.bf16.msra.mxu0 0
  %4808 = vmatprep.subr.bf16.mxu0 0
  %4809 = vmatpush2.bf16.msra.mxu0 0
  %4810 = vmatprep.subr.bf16.mxu0 0
  %4811 = vmatpush2.bf16.msra.mxu0 0
  %4812 = vmatprep.mubr.bf16.mxu0 0
  %4813 = vmatmul.mubr.bf16.gmra.mxu0 %v4740
  %v4814 = vpop.f32.mrf.mxu0
  %v4815 = vadd.f32 0.0, %v4814
  %v4816 = vpop.f32.mrf.mxu0
  %v4817 = vpop.f32.mrf.mxu0
  %v4818 = vadd.f32 0.0, %v4817
  %v4819 = vpop.f32.mrf.mxu0
  %4820 = vmatprep.mubr.bf16.mxu0 0
  %4821 = vmatmul.mubr.bf16.gmra.mxu0 %v4741
  %v4822 = vpop.f32.mrf.mxu0
  %v4823 = vadd.f32 0.0, %v4822
  %v4824 = vpop.f32.mrf.mxu0
  %v4825 = vpop.f32.mrf.mxu0
  %v4826 = vadd.f32 0.0, %v4825
  %v4827 = vpop.f32.mrf.mxu0
  %4828 = vmatprep.mubr.bf16.mxu0 0
  %4829 = vmatmul.mubr.bf16.gmra.mxu0 %v4742
  %v4830 = vpop.f32.mrf.mxu0
  %v4831 = vadd.f32 0.0, %v4830
  %v4832 = vpop.f32.mrf.mxu0
  %v4833 = vpop.f32.mrf.mxu0
  %v4834 = vadd.f32 0.0, %v4833
  %v4835 = vpop.f32.mrf.mxu0
  %4836 = vmatprep.mubr.bf16.mxu0 0
  %4837 = vmatmul.mubr.bf16.gmra.mxu0 %v4743
  %v4838 = vpop.f32.mrf.mxu0
  %v4839 = vadd.f32 0.0, %v4838
  %v4840 = vpop.f32.mrf.mxu0
  %v4841 = vpop.f32.mrf.mxu0
  %v4842 = vadd.f32 0.0, %v4841
  %v4843 = vpop.f32.mrf.mxu0
  %4844 = vmatprep.mubr.bf16.mxu0 0
  %4845 = vmatmul.mubr.bf16.gmra.mxu0 %v4744
  %v4846 = vpop.f32.mrf.mxu0
  %v4847 = vadd.f32 0.0, %v4846
  %v4848 = vpop.f32.mrf.mxu0
  %v4849 = vpop.f32.mrf.mxu0
  %v4850 = vadd.f32 0.0, %v4849
  %v4851 = vpop.f32.mrf.mxu0
  %4852 = vmatprep.mubr.bf16.mxu0 0
  %4853 = vmatmul.mubr.bf16.gmra.mxu0 %v4745
  %v4854 = vpop.f32.mrf.mxu0
  %v4855 = vadd.f32 0.0, %v4854
  %v4856 = vpop.f32.mrf.mxu0
  %v4857 = vpop.f32.mrf.mxu0
  %v4858 = vadd.f32 0.0, %v4857
  %v4859 = vpop.f32.mrf.mxu0
  %4860 = vmatprep.mubr.bf16.mxu0 0
  %4861 = vmatmul.mubr.bf16.gmra.mxu0 %v4746
  %v4862 = vpop.f32.mrf.mxu0
  %v4863 = vadd.f32 0.0, %v4862
  %v4864 = vpop.f32.mrf.mxu0
  %v4865 = vpop.f32.mrf.mxu0
  %v4866 = vadd.f32 0.0, %v4865
  %v4867 = vpop.f32.mrf.mxu0
  %4868 = vmatprep.mubr.bf16.mxu0 0
  %4869 = vmatmul.mubr.bf16.gmra.mxu0 %v4747
  %v4870 = vpop.f32.mrf.mxu0
  %v4871 = vadd.f32 0.0, %v4870
  %v4872 = vpop.f32.mrf.mxu0
  %v4873 = vpop.f32.mrf.mxu0
  %v4874 = vadd.f32 0.0, %v4873
  %v4875 = vpop.f32.mrf.mxu0
  %4876 = vdwg.mxu0
  %v4877 = vrcp.pop %v4815
  %v4878 = vrcp.pop %v4818
  %v4879 = vrcp.pop %v4823
  %v4880 = vrcp.pop %v4826
  %v4881 = vrcp.pop %v4831
  %v4882 = vrcp.pop %v4834
  %v4883 = vrcp.pop %v4839
  %v4884 = vrcp.pop %v4842
  %v4885 = vrcp.pop %v4847
  %v4886 = vrcp.pop %v4850
  %v4887 = vrcp.pop %v4855
  %v4888 = vrcp.pop %v4858
  %v4889 = vrcp.pop %v4863
  %v4890 = vrcp.pop %v4866
  %v4891 = vrcp.pop %v4871
  %v4892 = vrcp.pop %v4874
  %4894 = vset.pattern.permute.xlu0 8
  %4895 = vperm.xlu0 %4894, %v4877
  %v4896 = vpop.permute.xlu0 %4895
  %4899 = vset.pattern.permute.xlu0 8
  %4900 = vperm.xlu0 %4899, %v4878
  %v4901 = vpop.permute.xlu0 %4900
  %4904 = vset.pattern.permute.xlu0 8
  %4905 = vperm.xlu0 %4904, %v4879
  %v4906 = vpop.permute.xlu0 %4905
  %4909 = vset.pattern.permute.xlu0 8
  %4910 = vperm.xlu0 %4909, %v4880
  %v4911 = vpop.permute.xlu0 %4910
  %4914 = vset.pattern.permute.xlu0 8
  %4915 = vperm.xlu0 %4914, %v4881
  %v4916 = vpop.permute.xlu0 %4915
  %4919 = vset.pattern.permute.xlu0 8
  %4920 = vperm.xlu0 %4919, %v4882
  %v4921 = vpop.permute.xlu0 %4920
  %4924 = vset.pattern.permute.xlu0 8
  %4925 = vperm.xlu0 %4924, %v4883
  %v4926 = vpop.permute.xlu0 %4925
  %4929 = vset.pattern.permute.xlu0 8
  %4930 = vperm.xlu0 %4929, %v4884
  %v4931 = vpop.permute.xlu0 %4930
  %4934 = vset.pattern.permute.xlu0 8
  %4935 = vperm.xlu0 %4934, %v4885
  %v4936 = vpop.permute.xlu0 %4935
  %4939 = vset.pattern.permute.xlu0 8
  %4940 = vperm.xlu0 %4939, %v4886
  %v4941 = vpop.permute.xlu0 %4940
  %4944 = vset.pattern.permute.xlu0 8
  %4945 = vperm.xlu0 %4944, %v4887
  %v4946 = vpop.permute.xlu0 %4945
  %4949 = vset.pattern.permute.xlu0 8
  %4950 = vperm.xlu0 %4949, %v4888
  %v4951 = vpop.permute.xlu0 %4950
  %4954 = vset.pattern.permute.xlu0 8
  %4955 = vperm.xlu0 %4954, %v4889
  %v4956 = vpop.permute.xlu0 %4955
  %4959 = vset.pattern.permute.xlu0 8
  %4960 = vperm.xlu0 %4959, %v4890
  %v4961 = vpop.permute.xlu0 %4960
  %4964 = vset.pattern.permute.xlu0 8
  %4965 = vperm.xlu0 %4964, %v4891
  %v4966 = vpop.permute.xlu0 %4965
  %4969 = vset.pattern.permute.xlu0 8
  %4970 = vperm.xlu0 %4969, %v4892
  %v4971 = vpop.permute.xlu0 %4970
  %v4973 = vmul.f32 %v4815, %v4896
  %v4974 = vmul.f32 %v4818, %v4901
  %v4975 = vmul.f32 %v4823, %v4906
  %v4976 = vmul.f32 %v4826, %v4911
  %v4977 = vmul.f32 %v4831, %v4916
  %v4978 = vmul.f32 %v4834, %v4921
  %v4979 = vmul.f32 %v4839, %v4926
  %v4980 = vmul.f32 %v4842, %v4931
  %v4981 = vmul.f32 %v4847, %v4936
  %v4982 = vmul.f32 %v4850, %v4941
  %v4983 = vmul.f32 %v4855, %v4946
  %v4984 = vmul.f32 %v4858, %v4951
  %v4985 = vmul.f32 %v4863, %v4956
  %v4986 = vmul.f32 %v4866, %v4961
  %v4987 = vmul.f32 %v4871, %v4966
  %v4988 = vmul.f32 %v4874, %v4971
  %4989 = vset.pattern.permute.xlu0 6
  %4990 = vperm.xlu0 %4989, %v56
  %v4991 = vpop.permute.xlu0 %4990
  %v4994 = vunpack.c.l.s4 839922192
  %v4995 = vunpack.c.0.s8 %v4994
  %v4996 = vlaneseq
  %v4997 = vshrl.u32 %v4996, 7
  %v4998 = vsub.s32 %v4995, %v4997
  %v4999 = vrot.slane %v4991, %v4998
  %5000 = vset.pattern.permute.xlu0 6
  %5001 = vperm.xlu0 %5000, %v57
  %v5002 = vpop.permute.xlu0 %5001
  %v5005 = vunpack.c.l.s4 839922192
  %v5006 = vunpack.c.0.s8 %v5005
  %v5007 = vlaneseq
  %v5008 = vshrl.u32 %v5007, 7
  %v5009 = vsub.s32 %v5006, %v5008
  %v5010 = vrot.slane %v5002, %v5009
  %5011 = vset.pattern.permute.xlu0 6
  %5012 = vperm.xlu0 %5011, %v58
  %v5013 = vpop.permute.xlu0 %5012
  %v5016 = vunpack.c.l.s4 839922192
  %v5017 = vunpack.c.0.s8 %v5016
  %v5018 = vlaneseq
  %v5019 = vshrl.u32 %v5018, 7
  %v5020 = vsub.s32 %v5017, %v5019
  %v5021 = vrot.slane %v5013, %v5020
  %5022 = vset.pattern.permute.xlu0 6
  %5023 = vperm.xlu0 %5022, %v59
  %v5024 = vpop.permute.xlu0 %5023
  %v5027 = vunpack.c.l.s4 839922192
  %v5028 = vunpack.c.0.s8 %v5027
  %v5029 = vlaneseq
  %v5030 = vshrl.u32 %v5029, 7
  %v5031 = vsub.s32 %v5028, %v5030
  %v5032 = vrot.slane %v5024, %v5031
  %5033 = vset.pattern.permute.xlu0 6
  %5034 = vperm.xlu0 %5033, %v60
  %v5035 = vpop.permute.xlu0 %5034
  %v5038 = vunpack.c.l.s4 839922192
  %v5039 = vunpack.c.0.s8 %v5038
  %v5040 = vlaneseq
  %v5041 = vshrl.u32 %v5040, 7
  %v5042 = vsub.s32 %v5039, %v5041
  %v5043 = vrot.slane %v5035, %v5042
  %5044 = vset.pattern.permute.xlu0 6
  %5045 = vperm.xlu0 %5044, %v61
  %v5046 = vpop.permute.xlu0 %5045
  %v5049 = vunpack.c.l.s4 839922192
  %v5050 = vunpack.c.0.s8 %v5049
  %v5051 = vlaneseq
  %v5052 = vshrl.u32 %v5051, 7
  %v5053 = vsub.s32 %v5050, %v5052
  %v5054 = vrot.slane %v5046, %v5053
  %5055 = vset.pattern.permute.xlu0 6
  %5056 = vperm.xlu0 %5055, %v62
  %v5057 = vpop.permute.xlu0 %5056
  %v5060 = vunpack.c.l.s4 839922192
  %v5061 = vunpack.c.0.s8 %v5060
  %v5062 = vlaneseq
  %v5063 = vshrl.u32 %v5062, 7
  %v5064 = vsub.s32 %v5061, %v5063
  %v5065 = vrot.slane %v5057, %v5064
  %5066 = vset.pattern.permute.xlu0 6
  %5067 = vperm.xlu0 %5066, %v63
  %v5068 = vpop.permute.xlu0 %5067
  %v5071 = vunpack.c.l.s4 839922192
  %v5072 = vunpack.c.0.s8 %v5071
  %v5073 = vlaneseq
  %v5074 = vshrl.u32 %v5073, 7
  %v5075 = vsub.s32 %v5072, %v5074
  %v5076 = vrot.slane %v5068, %v5075
  %5077 = vset.pattern.permute.xlu0 6
  %5078 = vperm.xlu0 %5077, %v64
  %v5079 = vpop.permute.xlu0 %5078
  %v5082 = vunpack.c.l.s4 839922192
  %v5083 = vunpack.c.0.s8 %v5082
  %v5084 = vlaneseq
  %v5085 = vshrl.u32 %v5084, 7
  %v5086 = vsub.s32 %v5083, %v5085
  %v5087 = vrot.slane %v5079, %v5086
  %5088 = vset.pattern.permute.xlu0 6
  %5089 = vperm.xlu0 %5088, %v65
  %v5090 = vpop.permute.xlu0 %5089
  %v5093 = vunpack.c.l.s4 839922192
  %v5094 = vunpack.c.0.s8 %v5093
  %v5095 = vlaneseq
  %v5096 = vshrl.u32 %v5095, 7
  %v5097 = vsub.s32 %v5094, %v5096
  %v5098 = vrot.slane %v5090, %v5097
  %5099 = vset.pattern.permute.xlu0 6
  %5100 = vperm.xlu0 %5099, %v66
  %v5101 = vpop.permute.xlu0 %5100
  %v5104 = vunpack.c.l.s4 839922192
  %v5105 = vunpack.c.0.s8 %v5104
  %v5106 = vlaneseq
  %v5107 = vshrl.u32 %v5106, 7
  %v5108 = vsub.s32 %v5105, %v5107
  %v5109 = vrot.slane %v5101, %v5108
  %5110 = vset.pattern.permute.xlu0 6
  %5111 = vperm.xlu0 %5110, %v67
  %v5112 = vpop.permute.xlu0 %5111
  %v5115 = vunpack.c.l.s4 839922192
  %v5116 = vunpack.c.0.s8 %v5115
  %v5117 = vlaneseq
  %v5118 = vshrl.u32 %v5117, 7
  %v5119 = vsub.s32 %v5116, %v5118
  %v5120 = vrot.slane %v5112, %v5119
  %5121 = vset.pattern.permute.xlu0 6
  %5122 = vperm.xlu0 %5121, %v68
  %v5123 = vpop.permute.xlu0 %5122
  %v5126 = vunpack.c.l.s4 839922192
  %v5127 = vunpack.c.0.s8 %v5126
  %v5128 = vlaneseq
  %v5129 = vshrl.u32 %v5128, 7
  %v5130 = vsub.s32 %v5127, %v5129
  %v5131 = vrot.slane %v5123, %v5130
  %5132 = vset.pattern.permute.xlu0 6
  %5133 = vperm.xlu0 %5132, %v69
  %v5134 = vpop.permute.xlu0 %5133
  %v5137 = vunpack.c.l.s4 839922192
  %v5138 = vunpack.c.0.s8 %v5137
  %v5139 = vlaneseq
  %v5140 = vshrl.u32 %v5139, 7
  %v5141 = vsub.s32 %v5138, %v5140
  %v5142 = vrot.slane %v5134, %v5141
  %5143 = vset.pattern.permute.xlu0 6
  %5144 = vperm.xlu0 %5143, %v70
  %v5145 = vpop.permute.xlu0 %5144
  %v5148 = vunpack.c.l.s4 839922192
  %v5149 = vunpack.c.0.s8 %v5148
  %v5150 = vlaneseq
  %v5151 = vshrl.u32 %v5150, 7
  %v5152 = vsub.s32 %v5149, %v5151
  %v5153 = vrot.slane %v5145, %v5152
  %5154 = vset.pattern.permute.xlu0 6
  %5155 = vperm.xlu0 %5154, %v71
  %v5156 = vpop.permute.xlu0 %5155
  %v5159 = vunpack.c.l.s4 839922192
  %v5160 = vunpack.c.0.s8 %v5159
  %v5161 = vlaneseq
  %v5162 = vshrl.u32 %v5161, 7
  %v5163 = vsub.s32 %v5160, %v5162
  %v5164 = vrot.slane %v5156, %v5163
  %v5165 = vlaneseq
  %v5166 = vshrl.u32 %v5165, 7
  %v5167 = vsub.s32 3, %v5166
  %v5168 = vrot.slane %v282, %v5167
  %v5170 = vunpack.c.l.b16 %v5168
  %v5171 = vpack.c.b16 %v5170, %v5170
  %v5173 = vadd.bf16 %v4999, %v5171
  %v5174 = vadd.bf16 %v5010, %v5171
  %v5175 = vadd.bf16 %v5021, %v5171
  %v5176 = vadd.bf16 %v5032, %v5171
  %v5177 = vadd.bf16 %v5043, %v5171
  %v5178 = vadd.bf16 %v5054, %v5171
  %v5179 = vadd.bf16 %v5065, %v5171
  %v5180 = vadd.bf16 %v5076, %v5171
  %v5181 = vadd.bf16 %v5087, %v5171
  %v5182 = vadd.bf16 %v5098, %v5171
  %v5183 = vadd.bf16 %v5109, %v5171
  %v5184 = vadd.bf16 %v5120, %v5171
  %v5185 = vadd.bf16 %v5131, %v5171
  %v5186 = vadd.bf16 %v5142, %v5171
  %v5187 = vadd.bf16 %v5153, %v5171
  %v5188 = vadd.bf16 %v5164, %v5171
  %vm5189 = vcmp.gt.bf16.partialorder %v5173, 0
  %vm5190 = vcmp.gt.bf16.partialorder %v5174, 0
  %vm5191 = vcmp.gt.bf16.partialorder %v5175, 0
  %vm5192 = vcmp.gt.bf16.partialorder %v5176, 0
  %vm5193 = vcmp.gt.bf16.partialorder %v5177, 0
  %vm5194 = vcmp.gt.bf16.partialorder %v5178, 0
  %vm5195 = vcmp.gt.bf16.partialorder %v5179, 0
  %vm5196 = vcmp.gt.bf16.partialorder %v5180, 0
  %vm5197 = vcmp.gt.bf16.partialorder %v5181, 0
  %vm5198 = vcmp.gt.bf16.partialorder %v5182, 0
  %vm5199 = vcmp.gt.bf16.partialorder %v5183, 0
  %vm5200 = vcmp.gt.bf16.partialorder %v5184, 0
  %vm5201 = vcmp.gt.bf16.partialorder %v5185, 0
  %vm5202 = vcmp.gt.bf16.partialorder %v5186, 0
  %vm5203 = vcmp.gt.bf16.partialorder %v5187, 0
  %vm5204 = vcmp.gt.bf16.partialorder %v5188, 0
  %v5205 = vmul.bf16 %v5173, 1045249613
  %v5206 = vmul.bf16 %v5174, 1045249613
  %v5207 = vmul.bf16 %v5175, 1045249613
  %v5208 = vmul.bf16 %v5176, 1045249613
  %v5209 = vmul.bf16 %v5177, 1045249613
  %v5210 = vmul.bf16 %v5178, 1045249613
  %v5211 = vmul.bf16 %v5179, 1045249613
  %v5212 = vmul.bf16 %v5180, 1045249613
  %v5213 = vmul.bf16 %v5181, 1045249613
  %v5214 = vmul.bf16 %v5182, 1045249613
  %v5215 = vmul.bf16 %v5183, 1045249613
  %v5216 = vmul.bf16 %v5184, 1045249613
  %v5217 = vmul.bf16 %v5185, 1045249613
  %v5218 = vmul.bf16 %v5186, 1045249613
  %v5219 = vmul.bf16 %v5187, 1045249613
  %v5220 = vmul.bf16 %v5188, 1045249613
  %v5221 = vsel %vm5189, %v5173, %v5205
  %v5222 = vsel %vm5190, %v5174, %v5206
  %v5223 = vsel %vm5191, %v5175, %v5207
  %v5224 = vsel %vm5192, %v5176, %v5208
  %v5225 = vsel %vm5193, %v5177, %v5209
  %v5226 = vsel %vm5194, %v5178, %v5210
  %v5227 = vsel %vm5195, %v5179, %v5211
  %v5228 = vsel %vm5196, %v5180, %v5212
  %v5229 = vsel %vm5197, %v5181, %v5213
  %v5230 = vsel %vm5198, %v5182, %v5214
  %v5231 = vsel %vm5199, %v5183, %v5215
  %v5232 = vsel %vm5200, %v5184, %v5216
  %v5233 = vsel %vm5201, %v5185, %v5217
  %v5234 = vsel %vm5202, %v5186, %v5218
  %v5235 = vsel %vm5203, %v5187, %v5219
  %v5236 = vsel %vm5204, %v5188, %v5220
  %v5237 = vsel %vm73, %v5221, 4048220490
  %v5238 = vsel %vm74, %v5222, 4048220490
  %v5239 = vsel %vm75, %v5223, 4048220490
  %v5240 = vsel %vm76, %v5224, 4048220490
  %v5241 = vsel %vm77, %v5225, 4048220490
  %v5242 = vsel %vm78, %v5226, 4048220490
  %v5243 = vsel %vm79, %v5227, 4048220490
  %v5244 = vsel %vm80, %v5228, 4048220490
  %v5245 = vsel %vm81, %v5229, 4048220490
  %v5246 = vsel %vm82, %v5230, 4048220490
  %v5247 = vsel %vm83, %v5231, 4048220490
  %v5248 = vsel %vm84, %v5232, 4048220490
  %v5249 = vsel %vm85, %v5233, 4048220490
  %v5250 = vsel %vm86, %v5234, 4048220490
  %v5251 = vsel %vm87, %v5235, 4048220490
  %v5252 = vsel %vm88, %v5236, 4048220490
  %v5269 = vunpack.c.l.b16 %v5237
  %v5270 = vunpack.c.l.b16 %v5238
  %v5271 = vunpack.c.l.b16 %v5239
  %v5272 = vunpack.c.l.b16 %v5240
  %v5273 = vunpack.c.l.b16 %v5241
  %v5274 = vunpack.c.l.b16 %v5242
  %v5275 = vunpack.c.l.b16 %v5243
  %v5276 = vunpack.c.l.b16 %v5244
  %v5277 = vunpack.c.l.b16 %v5245
  %v5278 = vunpack.c.l.b16 %v5246
  %v5279 = vunpack.c.l.b16 %v5247
  %v5280 = vunpack.c.l.b16 %v5248
  %v5281 = vunpack.c.l.b16 %v5249
  %v5282 = vunpack.c.l.b16 %v5250
  %v5283 = vunpack.c.l.b16 %v5251
  %v5284 = vunpack.c.l.b16 %v5252
  %v5285 = vpack.c.b16 %v5270, %v5269
  %v5286 = vpack.c.b16 %v5272, %v5271
  %v5287 = vpack.c.b16 %v5274, %v5273
  %v5288 = vpack.c.b16 %v5276, %v5275
  %v5289 = vpack.c.b16 %v5278, %v5277
  %v5290 = vpack.c.b16 %v5280, %v5279
  %v5291 = vpack.c.b16 %v5282, %v5281
  %v5292 = vpack.c.b16 %v5284, %v5283
  %5301 = vmax.xlane.bf16.xlu0 %v5285
  %v5302 = vpop.xlane.xlu0 %5301
  %5303 = vmax.xlane.bf16.xlu0 %v5286
  %v5304 = vpop.xlane.xlu0 %5303
  %5305 = vmax.xlane.bf16.xlu0 %v5287
  %v5306 = vpop.xlane.xlu0 %5305
  %5307 = vmax.xlane.bf16.xlu0 %v5288
  %v5308 = vpop.xlane.xlu0 %5307
  %5309 = vmax.xlane.bf16.xlu0 %v5289
  %v5310 = vpop.xlane.xlu0 %5309
  %5311 = vmax.xlane.bf16.xlu0 %v5290
  %v5312 = vpop.xlane.xlu0 %5311
  %5313 = vmax.xlane.bf16.xlu0 %v5291
  %v5314 = vpop.xlane.xlu0 %5313
  %5315 = vmax.xlane.bf16.xlu0 %v5292
  %v5316 = vpop.xlane.xlu0 %5315
  %v5326 = vunpack.c.l.s4 839922192
  %v5327 = vunpack.c.0.s8 %v5326
  %v5328 = vlaneseq
  %v5329 = vshrl.u32 %v5328, 7
  %v5330 = vsub.s32 %v5327, %v5329
  %v5331 = vrot.slane %v5302, %v5330
  %v5333 = vunpack.c.l.s4 1985246804
  %v5334 = vunpack.c.0.s8 %v5333
  %v5335 = vlaneseq
  %v5336 = vshrl.u32 %v5335, 7
  %v5337 = vsub.s32 %v5334, %v5336
  %v5338 = vrot.slane %v5302, %v5337
  %v5340 = vunpack.c.l.s4 839922192
  %v5341 = vunpack.c.0.s8 %v5340
  %v5342 = vlaneseq
  %v5343 = vshrl.u32 %v5342, 7
  %v5344 = vsub.s32 %v5341, %v5343
  %v5345 = vrot.slane %v5304, %v5344
  %v5347 = vunpack.c.l.s4 1985246804
  %v5348 = vunpack.c.0.s8 %v5347
  %v5349 = vlaneseq
  %v5350 = vshrl.u32 %v5349, 7
  %v5351 = vsub.s32 %v5348, %v5350
  %v5352 = vrot.slane %v5304, %v5351
  %v5354 = vunpack.c.l.s4 839922192
  %v5355 = vunpack.c.0.s8 %v5354
  %v5356 = vlaneseq
  %v5357 = vshrl.u32 %v5356, 7
  %v5358 = vsub.s32 %v5355, %v5357
  %v5359 = vrot.slane %v5306, %v5358
  %v5361 = vunpack.c.l.s4 1985246804
  %v5362 = vunpack.c.0.s8 %v5361
  %v5363 = vlaneseq
  %v5364 = vshrl.u32 %v5363, 7
  %v5365 = vsub.s32 %v5362, %v5364
  %v5366 = vrot.slane %v5306, %v5365
  %v5368 = vunpack.c.l.s4 839922192
  %v5369 = vunpack.c.0.s8 %v5368
  %v5370 = vlaneseq
  %v5371 = vshrl.u32 %v5370, 7
  %v5372 = vsub.s32 %v5369, %v5371
  %v5373 = vrot.slane %v5308, %v5372
  %v5375 = vunpack.c.l.s4 1985246804
  %v5376 = vunpack.c.0.s8 %v5375
  %v5377 = vlaneseq
  %v5378 = vshrl.u32 %v5377, 7
  %v5379 = vsub.s32 %v5376, %v5378
  %v5380 = vrot.slane %v5308, %v5379
  %v5382 = vunpack.c.l.s4 839922192
  %v5383 = vunpack.c.0.s8 %v5382
  %v5384 = vlaneseq
  %v5385 = vshrl.u32 %v5384, 7
  %v5386 = vsub.s32 %v5383, %v5385
  %v5387 = vrot.slane %v5310, %v5386
  %v5389 = vunpack.c.l.s4 1985246804
  %v5390 = vunpack.c.0.s8 %v5389
  %v5391 = vlaneseq
  %v5392 = vshrl.u32 %v5391, 7
  %v5393 = vsub.s32 %v5390, %v5392
  %v5394 = vrot.slane %v5310, %v5393
  %v5396 = vunpack.c.l.s4 839922192
  %v5397 = vunpack.c.0.s8 %v5396
  %v5398 = vlaneseq
  %v5399 = vshrl.u32 %v5398, 7
  %v5400 = vsub.s32 %v5397, %v5399
  %v5401 = vrot.slane %v5312, %v5400
  %v5403 = vunpack.c.l.s4 1985246804
  %v5404 = vunpack.c.0.s8 %v5403
  %v5405 = vlaneseq
  %v5406 = vshrl.u32 %v5405, 7
  %v5407 = vsub.s32 %v5404, %v5406
  %v5408 = vrot.slane %v5312, %v5407
  %v5410 = vunpack.c.l.s4 839922192
  %v5411 = vunpack.c.0.s8 %v5410
  %v5412 = vlaneseq
  %v5413 = vshrl.u32 %v5412, 7
  %v5414 = vsub.s32 %v5411, %v5413
  %v5415 = vrot.slane %v5314, %v5414
  %v5417 = vunpack.c.l.s4 1985246804
  %v5418 = vunpack.c.0.s8 %v5417
  %v5419 = vlaneseq
  %v5420 = vshrl.u32 %v5419, 7
  %v5421 = vsub.s32 %v5418, %v5420
  %v5422 = vrot.slane %v5314, %v5421
  %v5424 = vunpack.c.l.s4 839922192
  %v5425 = vunpack.c.0.s8 %v5424
  %v5426 = vlaneseq
  %v5427 = vshrl.u32 %v5426, 7
  %v5428 = vsub.s32 %v5425, %v5427
  %v5429 = vrot.slane %v5316, %v5428
  %v5431 = vunpack.c.l.s4 1985246804
  %v5432 = vunpack.c.0.s8 %v5431
  %v5433 = vlaneseq
  %v5434 = vshrl.u32 %v5433, 7
  %v5435 = vsub.s32 %v5432, %v5434
  %v5436 = vrot.slane %v5316, %v5435
  %v5453 = vsub.bf16 %v5237, %v5331
  %v5454 = vsub.bf16 %v5238, %v5338
  %v5455 = vsub.bf16 %v5239, %v5345
  %v5456 = vsub.bf16 %v5240, %v5352
  %v5457 = vsub.bf16 %v5241, %v5359
  %v5458 = vsub.bf16 %v5242, %v5366
  %v5459 = vsub.bf16 %v5243, %v5373
  %v5460 = vsub.bf16 %v5244, %v5380
  %v5461 = vsub.bf16 %v5245, %v5387
  %v5462 = vsub.bf16 %v5246, %v5394
  %v5463 = vsub.bf16 %v5247, %v5401
  %v5464 = vsub.bf16 %v5248, %v5408
  %v5465 = vsub.bf16 %v5249, %v5415
  %v5466 = vsub.bf16 %v5250, %v5422
  %v5467 = vsub.bf16 %v5251, %v5429
  %v5468 = vsub.bf16 %v5252, %v5436
  %v5470 = vmul.bf16 %v5453, 1069105081
  %v5471 = vpow.bf16.pop %v5470
  %v5473 = vmul.bf16 %v5454, 1069105081
  %v5474 = vpow.bf16.pop %v5473
  %v5476 = vmul.bf16 %v5455, 1069105081
  %v5477 = vpow.bf16.pop %v5476
  %v5479 = vmul.bf16 %v5456, 1069105081
  %v5480 = vpow.bf16.pop %v5479
  %v5482 = vmul.bf16 %v5457, 1069105081
  %v5483 = vpow.bf16.pop %v5482
  %v5485 = vmul.bf16 %v5458, 1069105081
  %v5486 = vpow.bf16.pop %v5485
  %v5488 = vmul.bf16 %v5459, 1069105081
  %v5489 = vpow.bf16.pop %v5488
  %v5491 = vmul.bf16 %v5460, 1069105081
  %v5492 = vpow.bf16.pop %v5491
  %v5494 = vmul.bf16 %v5461, 1069105081
  %v5495 = vpow.bf16.pop %v5494
  %v5497 = vmul.bf16 %v5462, 1069105081
  %v5498 = vpow.bf16.pop %v5497
  %v5500 = vmul.bf16 %v5463, 1069105081
  %v5501 = vpow.bf16.pop %v5500
  %v5503 = vmul.bf16 %v5464, 1069105081
  %v5504 = vpow.bf16.pop %v5503
  %v5506 = vmul.bf16 %v5465, 1069105081
  %v5507 = vpow.bf16.pop %v5506
  %v5509 = vmul.bf16 %v5466, 1069105081
  %v5510 = vpow.bf16.pop %v5509
  %v5512 = vmul.bf16 %v5467, 1069105081
  %v5513 = vpow.bf16.pop %v5512
  %v5515 = vmul.bf16 %v5468, 1069105081
  %v5516 = vpow.bf16.pop %v5515
  %v5533 = vunpack.c.l.b16 %v5471
  %v5534 = vunpack.c.l.b16 %v5474
  %v5535 = vunpack.c.l.b16 %v5477
  %v5536 = vunpack.c.l.b16 %v5480
  %v5537 = vunpack.c.l.b16 %v5483
  %v5538 = vunpack.c.l.b16 %v5486
  %v5539 = vunpack.c.l.b16 %v5489
  %v5540 = vunpack.c.l.b16 %v5492
  %v5541 = vunpack.c.l.b16 %v5495
  %v5542 = vunpack.c.l.b16 %v5498
  %v5543 = vunpack.c.l.b16 %v5501
  %v5544 = vunpack.c.l.b16 %v5504
  %v5545 = vunpack.c.l.b16 %v5507
  %v5546 = vunpack.c.l.b16 %v5510
  %v5547 = vunpack.c.l.b16 %v5513
  %v5548 = vunpack.c.l.b16 %v5516
  %v5549 = vpack.c.b16 %v5534, %v5533
  %v5550 = vpack.c.b16 %v5536, %v5535
  %v5551 = vpack.c.b16 %v5538, %v5537
  %v5552 = vpack.c.b16 %v5540, %v5539
  %v5553 = vpack.c.b16 %v5542, %v5541
  %v5554 = vpack.c.b16 %v5544, %v5543
  %v5555 = vpack.c.b16 %v5546, %v5545
  %v5556 = vpack.c.b16 %v5548, %v5547
  %5565 = vrot.lane.b32.xlu0 %v716, 74
  %v5566 = vpop.permute.xlu0 %5565
  %5567 = vrot.lane.b32.xlu0 %v717, 74
  %v5568 = vpop.permute.xlu0 %5567
  %5569 = vrot.lane.b32.xlu0 %v718, 74
  %v5570 = vpop.permute.xlu0 %5569
  %5571 = vrot.lane.b32.xlu0 %v719, 74
  %v5572 = vpop.permute.xlu0 %5571
  %5573 = vrot.lane.b32.xlu0 %v720, 74
  %v5574 = vpop.permute.xlu0 %5573
  %5575 = vrot.lane.b32.xlu0 %v721, 74
  %v5576 = vpop.permute.xlu0 %5575
  %5577 = vrot.lane.b32.xlu0 %v722, 74
  %v5578 = vpop.permute.xlu0 %5577
  %5579 = vrot.lane.b32.xlu0 %v723, 74
  %v5580 = vpop.permute.xlu0 %5579
  %5589 = vmatprep.subr.bf16.mxu0 0
  %5590 = vmatpush1.bf16.msra.mxu0 %v5580
  %5591 = vmatprep.subr.bf16.mxu0 0
  %5592 = vmatpush1.bf16.msra.mxu0 %v5578
  %5593 = vmatprep.subr.bf16.mxu0 0
  %5594 = vmatpush1.bf16.msra.mxu0 %v5576
  %5595 = vmatprep.subr.bf16.mxu0 0
  %5596 = vmatpush1.bf16.msra.mxu0 %v5574
  %5597 = vmatprep.subr.bf16.mxu0 0
  %5598 = vmatpush1.bf16.msra.mxu0 %v5572
  %5599 = vmatprep.subr.bf16.mxu0 0
  %5600 = vmatpush1.bf16.msra.mxu0 %v5570
  %5601 = vmatprep.subr.bf16.mxu0 0
  %5602 = vmatpush1.bf16.msra.mxu0 %v5568
  %5603 = vmatprep.subr.bf16.mxu0 0
  %5604 = vmatpush1.bf16.msra.mxu0 %v5566
  %5605 = vmatprep.subr.bf16.mxu0 0
  %5606 = vmatpush2.bf16.msra.mxu0 0
  %5607 = vmatprep.subr.bf16.mxu0 0
  %5608 = vmatpush2.bf16.msra.mxu0 0
  %5609 = vmatprep.subr.bf16.mxu0 0
  %5610 = vmatpush2.bf16.msra.mxu0 0
  %5611 = vmatprep.subr.bf16.mxu0 0
  %5612 = vmatpush2.bf16.msra.mxu0 0
  %5613 = vmatprep.subr.bf16.mxu0 0
  %5614 = vmatpush2.bf16.msra.mxu0 0
  %5615 = vmatprep.subr.bf16.mxu0 0
  %5616 = vmatpush2.bf16.msra.mxu0 0
  %5617 = vmatprep.subr.bf16.mxu0 0
  %5618 = vmatpush2.bf16.msra.mxu0 0
  %5619 = vmatprep.subr.bf16.mxu0 0
  %5620 = vmatpush2.bf16.msra.mxu0 0
  %5621 = vmatprep.mubr.bf16.mxu0 0
  %5622 = vmatmul.mubr.bf16.gmra.mxu0 %v5549
  %v5623 = vpop.f32.mrf.mxu0
  %v5624 = vadd.f32 0.0, %v5623
  %v5625 = vpop.f32.mrf.mxu0
  %v5626 = vpop.f32.mrf.mxu0
  %v5627 = vadd.f32 0.0, %v5626
  %v5628 = vpop.f32.mrf.mxu0
  %5629 = vmatprep.mubr.bf16.mxu0 0
  %5630 = vmatmul.mubr.bf16.gmra.mxu0 %v5550
  %v5631 = vpop.f32.mrf.mxu0
  %v5632 = vadd.f32 0.0, %v5631
  %v5633 = vpop.f32.mrf.mxu0
  %v5634 = vpop.f32.mrf.mxu0
  %v5635 = vadd.f32 0.0, %v5634
  %v5636 = vpop.f32.mrf.mxu0
  %5637 = vmatprep.mubr.bf16.mxu0 0
  %5638 = vmatmul.mubr.bf16.gmra.mxu0 %v5551
  %v5639 = vpop.f32.mrf.mxu0
  %v5640 = vadd.f32 0.0, %v5639
  %v5641 = vpop.f32.mrf.mxu0
  %v5642 = vpop.f32.mrf.mxu0
  %v5643 = vadd.f32 0.0, %v5642
  %v5644 = vpop.f32.mrf.mxu0
  %5645 = vmatprep.mubr.bf16.mxu0 0
  %5646 = vmatmul.mubr.bf16.gmra.mxu0 %v5552
  %v5647 = vpop.f32.mrf.mxu0
  %v5648 = vadd.f32 0.0, %v5647
  %v5649 = vpop.f32.mrf.mxu0
  %v5650 = vpop.f32.mrf.mxu0
  %v5651 = vadd.f32 0.0, %v5650
  %v5652 = vpop.f32.mrf.mxu0
  %5653 = vmatprep.mubr.bf16.mxu0 0
  %5654 = vmatmul.mubr.bf16.gmra.mxu0 %v5553
  %v5655 = vpop.f32.mrf.mxu0
  %v5656 = vadd.f32 0.0, %v5655
  %v5657 = vpop.f32.mrf.mxu0
  %v5658 = vpop.f32.mrf.mxu0
  %v5659 = vadd.f32 0.0, %v5658
  %v5660 = vpop.f32.mrf.mxu0
  %5661 = vmatprep.mubr.bf16.mxu0 0
  %5662 = vmatmul.mubr.bf16.gmra.mxu0 %v5554
  %v5663 = vpop.f32.mrf.mxu0
  %v5664 = vadd.f32 0.0, %v5663
  %v5665 = vpop.f32.mrf.mxu0
  %v5666 = vpop.f32.mrf.mxu0
  %v5667 = vadd.f32 0.0, %v5666
  %v5668 = vpop.f32.mrf.mxu0
  %5669 = vmatprep.mubr.bf16.mxu0 0
  %5670 = vmatmul.mubr.bf16.gmra.mxu0 %v5555
  %v5671 = vpop.f32.mrf.mxu0
  %v5672 = vadd.f32 0.0, %v5671
  %v5673 = vpop.f32.mrf.mxu0
  %v5674 = vpop.f32.mrf.mxu0
  %v5675 = vadd.f32 0.0, %v5674
  %v5676 = vpop.f32.mrf.mxu0
  %5677 = vmatprep.mubr.bf16.mxu0 0
  %5678 = vmatmul.mubr.bf16.gmra.mxu0 %v5556
  %v5679 = vpop.f32.mrf.mxu0
  %v5680 = vadd.f32 0.0, %v5679
  %v5681 = vpop.f32.mrf.mxu0
  %v5682 = vpop.f32.mrf.mxu0
  %v5683 = vadd.f32 0.0, %v5682
  %v5684 = vpop.f32.mrf.mxu0
  %5685 = vdwg.mxu0
  %v5686 = vrcp.pop %v5624
  %v5687 = vrcp.pop %v5627
  %v5688 = vrcp.pop %v5632
  %v5689 = vrcp.pop %v5635
  %v5690 = vrcp.pop %v5640
  %v5691 = vrcp.pop %v5643
  %v5692 = vrcp.pop %v5648
  %v5693 = vrcp.pop %v5651
  %v5694 = vrcp.pop %v5656
  %v5695 = vrcp.pop %v5659
  %v5696 = vrcp.pop %v5664
  %v5697 = vrcp.pop %v5667
  %v5698 = vrcp.pop %v5672
  %v5699 = vrcp.pop %v5675
  %v5700 = vrcp.pop %v5680
  %v5701 = vrcp.pop %v5683
  %5703 = vset.pattern.permute.xlu0 8
  %5704 = vperm.xlu0 %5703, %v5686
  %v5705 = vpop.permute.xlu0 %5704
  %5708 = vset.pattern.permute.xlu0 8
  %5709 = vperm.xlu0 %5708, %v5687
  %v5710 = vpop.permute.xlu0 %5709
  %5713 = vset.pattern.permute.xlu0 8
  %5714 = vperm.xlu0 %5713, %v5688
  %v5715 = vpop.permute.xlu0 %5714
  %5718 = vset.pattern.permute.xlu0 8
  %5719 = vperm.xlu0 %5718, %v5689
  %v5720 = vpop.permute.xlu0 %5719
  %5723 = vset.pattern.permute.xlu0 8
  %5724 = vperm.xlu0 %5723, %v5690
  %v5725 = vpop.permute.xlu0 %5724
  %5728 = vset.pattern.permute.xlu0 8
  %5729 = vperm.xlu0 %5728, %v5691
  %v5730 = vpop.permute.xlu0 %5729
  %5733 = vset.pattern.permute.xlu0 8
  %5734 = vperm.xlu0 %5733, %v5692
  %v5735 = vpop.permute.xlu0 %5734
  %5738 = vset.pattern.permute.xlu0 8
  %5739 = vperm.xlu0 %5738, %v5693
  %v5740 = vpop.permute.xlu0 %5739
  %5743 = vset.pattern.permute.xlu0 8
  %5744 = vperm.xlu0 %5743, %v5694
  %v5745 = vpop.permute.xlu0 %5744
  %5748 = vset.pattern.permute.xlu0 8
  %5749 = vperm.xlu0 %5748, %v5695
  %v5750 = vpop.permute.xlu0 %5749
  %5753 = vset.pattern.permute.xlu0 8
  %5754 = vperm.xlu0 %5753, %v5696
  %v5755 = vpop.permute.xlu0 %5754
  %5758 = vset.pattern.permute.xlu0 8
  %5759 = vperm.xlu0 %5758, %v5697
  %v5760 = vpop.permute.xlu0 %5759
  %5763 = vset.pattern.permute.xlu0 8
  %5764 = vperm.xlu0 %5763, %v5698
  %v5765 = vpop.permute.xlu0 %5764
  %5768 = vset.pattern.permute.xlu0 8
  %5769 = vperm.xlu0 %5768, %v5699
  %v5770 = vpop.permute.xlu0 %5769
  %5773 = vset.pattern.permute.xlu0 8
  %5774 = vperm.xlu0 %5773, %v5700
  %v5775 = vpop.permute.xlu0 %5774
  %5778 = vset.pattern.permute.xlu0 8
  %5779 = vperm.xlu0 %5778, %v5701
  %v5780 = vpop.permute.xlu0 %5779
  %v5782 = vmul.f32 %v5624, %v5705
  %v5783 = vmul.f32 %v5627, %v5710
  %v5784 = vmul.f32 %v5632, %v5715
  %v5785 = vmul.f32 %v5635, %v5720
  %v5786 = vmul.f32 %v5640, %v5725
  %v5787 = vmul.f32 %v5643, %v5730
  %v5788 = vmul.f32 %v5648, %v5735
  %v5789 = vmul.f32 %v5651, %v5740
  %v5790 = vmul.f32 %v5656, %v5745
  %v5791 = vmul.f32 %v5659, %v5750
  %v5792 = vmul.f32 %v5664, %v5755
  %v5793 = vmul.f32 %v5667, %v5760
  %v5794 = vmul.f32 %v5672, %v5765
  %v5795 = vmul.f32 %v5675, %v5770
  %v5796 = vmul.f32 %v5680, %v5775
  %v5797 = vmul.f32 %v5683, %v5780
  %5798 = vset.pattern.permute.xlu0 7
  %5799 = vperm.xlu0 %5798, %v56
  %v5800 = vpop.permute.xlu0 %5799
  %v5803 = vunpack.c.l.s4 839922192
  %v5804 = vunpack.c.0.s8 %v5803
  %v5805 = vlaneseq
  %v5806 = vshrl.u32 %v5805, 7
  %v5807 = vsub.s32 %v5804, %v5806
  %v5808 = vrot.slane %v5800, %v5807
  %5809 = vset.pattern.permute.xlu0 7
  %5810 = vperm.xlu0 %5809, %v57
  %v5811 = vpop.permute.xlu0 %5810
  %v5814 = vunpack.c.l.s4 839922192
  %v5815 = vunpack.c.0.s8 %v5814
  %v5816 = vlaneseq
  %v5817 = vshrl.u32 %v5816, 7
  %v5818 = vsub.s32 %v5815, %v5817
  %v5819 = vrot.slane %v5811, %v5818
  %5820 = vset.pattern.permute.xlu0 7
  %5821 = vperm.xlu0 %5820, %v58
  %v5822 = vpop.permute.xlu0 %5821
  %v5825 = vunpack.c.l.s4 839922192
  %v5826 = vunpack.c.0.s8 %v5825
  %v5827 = vlaneseq
  %v5828 = vshrl.u32 %v5827, 7
  %v5829 = vsub.s32 %v5826, %v5828
  %v5830 = vrot.slane %v5822, %v5829
  %5831 = vset.pattern.permute.xlu0 7
  %5832 = vperm.xlu0 %5831, %v59
  %v5833 = vpop.permute.xlu0 %5832
  %v5836 = vunpack.c.l.s4 839922192
  %v5837 = vunpack.c.0.s8 %v5836
  %v5838 = vlaneseq
  %v5839 = vshrl.u32 %v5838, 7
  %v5840 = vsub.s32 %v5837, %v5839
  %v5841 = vrot.slane %v5833, %v5840
  %5842 = vset.pattern.permute.xlu0 7
  %5843 = vperm.xlu0 %5842, %v60
  %v5844 = vpop.permute.xlu0 %5843
  %v5847 = vunpack.c.l.s4 839922192
  %v5848 = vunpack.c.0.s8 %v5847
  %v5849 = vlaneseq
  %v5850 = vshrl.u32 %v5849, 7
  %v5851 = vsub.s32 %v5848, %v5850
  %v5852 = vrot.slane %v5844, %v5851
  %5853 = vset.pattern.permute.xlu0 7
  %5854 = vperm.xlu0 %5853, %v61
  %v5855 = vpop.permute.xlu0 %5854
  %v5858 = vunpack.c.l.s4 839922192
  %v5859 = vunpack.c.0.s8 %v5858
  %v5860 = vlaneseq
  %v5861 = vshrl.u32 %v5860, 7
  %v5862 = vsub.s32 %v5859, %v5861
  %v5863 = vrot.slane %v5855, %v5862
  %5864 = vset.pattern.permute.xlu0 7
  %5865 = vperm.xlu0 %5864, %v62
  %v5866 = vpop.permute.xlu0 %5865
  %v5869 = vunpack.c.l.s4 839922192
  %v5870 = vunpack.c.0.s8 %v5869
  %v5871 = vlaneseq
  %v5872 = vshrl.u32 %v5871, 7
  %v5873 = vsub.s32 %v5870, %v5872
  %v5874 = vrot.slane %v5866, %v5873
  %5875 = vset.pattern.permute.xlu0 7
  %5876 = vperm.xlu0 %5875, %v63
  %v5877 = vpop.permute.xlu0 %5876
  %v5880 = vunpack.c.l.s4 839922192
  %v5881 = vunpack.c.0.s8 %v5880
  %v5882 = vlaneseq
  %v5883 = vshrl.u32 %v5882, 7
  %v5884 = vsub.s32 %v5881, %v5883
  %v5885 = vrot.slane %v5877, %v5884
  %5886 = vset.pattern.permute.xlu0 7
  %5887 = vperm.xlu0 %5886, %v64
  %v5888 = vpop.permute.xlu0 %5887
  %v5891 = vunpack.c.l.s4 839922192
  %v5892 = vunpack.c.0.s8 %v5891
  %v5893 = vlaneseq
  %v5894 = vshrl.u32 %v5893, 7
  %v5895 = vsub.s32 %v5892, %v5894
  %v5896 = vrot.slane %v5888, %v5895
  %5897 = vset.pattern.permute.xlu0 7
  %5898 = vperm.xlu0 %5897, %v65
  %v5899 = vpop.permute.xlu0 %5898
  %v5902 = vunpack.c.l.s4 839922192
  %v5903 = vunpack.c.0.s8 %v5902
  %v5904 = vlaneseq
  %v5905 = vshrl.u32 %v5904, 7
  %v5906 = vsub.s32 %v5903, %v5905
  %v5907 = vrot.slane %v5899, %v5906
  %5908 = vset.pattern.permute.xlu0 7
  %5909 = vperm.xlu0 %5908, %v66
  %v5910 = vpop.permute.xlu0 %5909
  %v5913 = vunpack.c.l.s4 839922192
  %v5914 = vunpack.c.0.s8 %v5913
  %v5915 = vlaneseq
  %v5916 = vshrl.u32 %v5915, 7
  %v5917 = vsub.s32 %v5914, %v5916
  %v5918 = vrot.slane %v5910, %v5917
  %5919 = vset.pattern.permute.xlu0 7
  %5920 = vperm.xlu0 %5919, %v67
  %v5921 = vpop.permute.xlu0 %5920
  %v5924 = vunpack.c.l.s4 839922192
  %v5925 = vunpack.c.0.s8 %v5924
  %v5926 = vlaneseq
  %v5927 = vshrl.u32 %v5926, 7
  %v5928 = vsub.s32 %v5925, %v5927
  %v5929 = vrot.slane %v5921, %v5928
  %5930 = vset.pattern.permute.xlu0 7
  %5931 = vperm.xlu0 %5930, %v68
  %v5932 = vpop.permute.xlu0 %5931
  %v5935 = vunpack.c.l.s4 839922192
  %v5936 = vunpack.c.0.s8 %v5935
  %v5937 = vlaneseq
  %v5938 = vshrl.u32 %v5937, 7
  %v5939 = vsub.s32 %v5936, %v5938
  %v5940 = vrot.slane %v5932, %v5939
  %5941 = vset.pattern.permute.xlu0 7
  %5942 = vperm.xlu0 %5941, %v69
  %v5943 = vpop.permute.xlu0 %5942
  %v5946 = vunpack.c.l.s4 839922192
  %v5947 = vunpack.c.0.s8 %v5946
  %v5948 = vlaneseq
  %v5949 = vshrl.u32 %v5948, 7
  %v5950 = vsub.s32 %v5947, %v5949
  %v5951 = vrot.slane %v5943, %v5950
  %5952 = vset.pattern.permute.xlu0 7
  %5953 = vperm.xlu0 %5952, %v70
  %v5954 = vpop.permute.xlu0 %5953
  %v5957 = vunpack.c.l.s4 839922192
  %v5958 = vunpack.c.0.s8 %v5957
  %v5959 = vlaneseq
  %v5960 = vshrl.u32 %v5959, 7
  %v5961 = vsub.s32 %v5958, %v5960
  %v5962 = vrot.slane %v5954, %v5961
  %5963 = vset.pattern.permute.xlu0 7
  %5964 = vperm.xlu0 %5963, %v71
  %v5965 = vpop.permute.xlu0 %5964
  %v5968 = vunpack.c.l.s4 839922192
  %v5969 = vunpack.c.0.s8 %v5968
  %v5970 = vlaneseq
  %v5971 = vshrl.u32 %v5970, 7
  %v5972 = vsub.s32 %v5969, %v5971
  %v5973 = vrot.slane %v5965, %v5972
  %v5974 = vlaneseq
  %v5975 = vshrl.u32 %v5974, 7
  %v5976 = vsub.s32 3, %v5975
  %v5977 = vrot.slane %v1118, %v5976
  %v5979 = vunpack.c.l.b16 %v5977
  %v5980 = vpack.c.b16 %v5979, %v5979
  %v5982 = vadd.bf16 %v5808, %v5980
  %v5983 = vadd.bf16 %v5819, %v5980
  %v5984 = vadd.bf16 %v5830, %v5980
  %v5985 = vadd.bf16 %v5841, %v5980
  %v5986 = vadd.bf16 %v5852, %v5980
  %v5987 = vadd.bf16 %v5863, %v5980
  %v5988 = vadd.bf16 %v5874, %v5980
  %v5989 = vadd.bf16 %v5885, %v5980
  %v5990 = vadd.bf16 %v5896, %v5980
  %v5991 = vadd.bf16 %v5907, %v5980
  %v5992 = vadd.bf16 %v5918, %v5980
  %v5993 = vadd.bf16 %v5929, %v5980
  %v5994 = vadd.bf16 %v5940, %v5980
  %v5995 = vadd.bf16 %v5951, %v5980
  %v5996 = vadd.bf16 %v5962, %v5980
  %v5997 = vadd.bf16 %v5973, %v5980
  %vm5998 = vcmp.gt.bf16.partialorder %v5982, 0
  %vm5999 = vcmp.gt.bf16.partialorder %v5983, 0
  %vm6000 = vcmp.gt.bf16.partialorder %v5984, 0
  %vm6001 = vcmp.gt.bf16.partialorder %v5985, 0
  %vm6002 = vcmp.gt.bf16.partialorder %v5986, 0
  %vm6003 = vcmp.gt.bf16.partialorder %v5987, 0
  %vm6004 = vcmp.gt.bf16.partialorder %v5988, 0
  %vm6005 = vcmp.gt.bf16.partialorder %v5989, 0
  %vm6006 = vcmp.gt.bf16.partialorder %v5990, 0
  %vm6007 = vcmp.gt.bf16.partialorder %v5991, 0
  %vm6008 = vcmp.gt.bf16.partialorder %v5992, 0
  %vm6009 = vcmp.gt.bf16.partialorder %v5993, 0
  %vm6010 = vcmp.gt.bf16.partialorder %v5994, 0
  %vm6011 = vcmp.gt.bf16.partialorder %v5995, 0
  %vm6012 = vcmp.gt.bf16.partialorder %v5996, 0
  %vm6013 = vcmp.gt.bf16.partialorder %v5997, 0
  %v6014 = vmul.bf16 %v5982, 1045249613
  %v6015 = vmul.bf16 %v5983, 1045249613
  %v6016 = vmul.bf16 %v5984, 1045249613
  %v6017 = vmul.bf16 %v5985, 1045249613
  %v6018 = vmul.bf16 %v5986, 1045249613
  %v6019 = vmul.bf16 %v5987, 1045249613
  %v6020 = vmul.bf16 %v5988, 1045249613
  %v6021 = vmul.bf16 %v5989, 1045249613
  %v6022 = vmul.bf16 %v5990, 1045249613
  %v6023 = vmul.bf16 %v5991, 1045249613
  %v6024 = vmul.bf16 %v5992, 1045249613
  %v6025 = vmul.bf16 %v5993, 1045249613
  %v6026 = vmul.bf16 %v5994, 1045249613
  %v6027 = vmul.bf16 %v5995, 1045249613
  %v6028 = vmul.bf16 %v5996, 1045249613
  %v6029 = vmul.bf16 %v5997, 1045249613
  %v6030 = vsel %vm5998, %v5982, %v6014
  %v6031 = vsel %vm5999, %v5983, %v6015
  %v6032 = vsel %vm6000, %v5984, %v6016
  %v6033 = vsel %vm6001, %v5985, %v6017
  %v6034 = vsel %vm6002, %v5986, %v6018
  %v6035 = vsel %vm6003, %v5987, %v6019
  %v6036 = vsel %vm6004, %v5988, %v6020
  %v6037 = vsel %vm6005, %v5989, %v6021
  %v6038 = vsel %vm6006, %v5990, %v6022
  %v6039 = vsel %vm6007, %v5991, %v6023
  %v6040 = vsel %vm6008, %v5992, %v6024
  %v6041 = vsel %vm6009, %v5993, %v6025
  %v6042 = vsel %vm6010, %v5994, %v6026
  %v6043 = vsel %vm6011, %v5995, %v6027
  %v6044 = vsel %vm6012, %v5996, %v6028
  %v6045 = vsel %vm6013, %v5997, %v6029
  %v6046 = vsel %vm73, %v6030, 4048220490
  %v6047 = vsel %vm74, %v6031, 4048220490
  %v6048 = vsel %vm75, %v6032, 4048220490
  %v6049 = vsel %vm76, %v6033, 4048220490
  %v6050 = vsel %vm77, %v6034, 4048220490
  %v6051 = vsel %vm78, %v6035, 4048220490
  %v6052 = vsel %vm79, %v6036, 4048220490
  %v6053 = vsel %vm80, %v6037, 4048220490
  %v6054 = vsel %vm81, %v6038, 4048220490
  %v6055 = vsel %vm82, %v6039, 4048220490
  %v6056 = vsel %vm83, %v6040, 4048220490
  %v6057 = vsel %vm84, %v6041, 4048220490
  %v6058 = vsel %vm85, %v6042, 4048220490
  %v6059 = vsel %vm86, %v6043, 4048220490
  %v6060 = vsel %vm87, %v6044, 4048220490
  %v6061 = vsel %vm88, %v6045, 4048220490
  %v6078 = vunpack.c.l.b16 %v6046
  %v6079 = vunpack.c.l.b16 %v6047
  %v6080 = vunpack.c.l.b16 %v6048
  %v6081 = vunpack.c.l.b16 %v6049
  %v6082 = vunpack.c.l.b16 %v6050
  %v6083 = vunpack.c.l.b16 %v6051
  %v6084 = vunpack.c.l.b16 %v6052
  %v6085 = vunpack.c.l.b16 %v6053
  %v6086 = vunpack.c.l.b16 %v6054
  %v6087 = vunpack.c.l.b16 %v6055
  %v6088 = vunpack.c.l.b16 %v6056
  %v6089 = vunpack.c.l.b16 %v6057
  %v6090 = vunpack.c.l.b16 %v6058
  %v6091 = vunpack.c.l.b16 %v6059
  %v6092 = vunpack.c.l.b16 %v6060
  %v6093 = vunpack.c.l.b16 %v6061
  %v6094 = vpack.c.b16 %v6079, %v6078
  %v6095 = vpack.c.b16 %v6081, %v6080
  %v6096 = vpack.c.b16 %v6083, %v6082
  %v6097 = vpack.c.b16 %v6085, %v6084
  %v6098 = vpack.c.b16 %v6087, %v6086
  %v6099 = vpack.c.b16 %v6089, %v6088
  %v6100 = vpack.c.b16 %v6091, %v6090
  %v6101 = vpack.c.b16 %v6093, %v6092
  %6110 = vmax.xlane.bf16.xlu0 %v6094
  %v6111 = vpop.xlane.xlu0 %6110
  %6112 = vmax.xlane.bf16.xlu0 %v6095
  %v6113 = vpop.xlane.xlu0 %6112
  %6114 = vmax.xlane.bf16.xlu0 %v6096
  %v6115 = vpop.xlane.xlu0 %6114
  %6116 = vmax.xlane.bf16.xlu0 %v6097
  %v6117 = vpop.xlane.xlu0 %6116
  %6118 = vmax.xlane.bf16.xlu0 %v6098
  %v6119 = vpop.xlane.xlu0 %6118
  %6120 = vmax.xlane.bf16.xlu0 %v6099
  %v6121 = vpop.xlane.xlu0 %6120
  %6122 = vmax.xlane.bf16.xlu0 %v6100
  %v6123 = vpop.xlane.xlu0 %6122
  %6124 = vmax.xlane.bf16.xlu0 %v6101
  %v6125 = vpop.xlane.xlu0 %6124
  %v6135 = vunpack.c.l.s4 839922192
  %v6136 = vunpack.c.0.s8 %v6135
  %v6137 = vlaneseq
  %v6138 = vshrl.u32 %v6137, 7
  %v6139 = vsub.s32 %v6136, %v6138
  %v6140 = vrot.slane %v6111, %v6139
  %v6142 = vunpack.c.l.s4 1985246804
  %v6143 = vunpack.c.0.s8 %v6142
  %v6144 = vlaneseq
  %v6145 = vshrl.u32 %v6144, 7
  %v6146 = vsub.s32 %v6143, %v6145
  %v6147 = vrot.slane %v6111, %v6146
  %v6149 = vunpack.c.l.s4 839922192
  %v6150 = vunpack.c.0.s8 %v6149
  %v6151 = vlaneseq
  %v6152 = vshrl.u32 %v6151, 7
  %v6153 = vsub.s32 %v6150, %v6152
  %v6154 = vrot.slane %v6113, %v6153
  %v6156 = vunpack.c.l.s4 1985246804
  %v6157 = vunpack.c.0.s8 %v6156
  %v6158 = vlaneseq
  %v6159 = vshrl.u32 %v6158, 7
  %v6160 = vsub.s32 %v6157, %v6159
  %v6161 = vrot.slane %v6113, %v6160
  %v6163 = vunpack.c.l.s4 839922192
  %v6164 = vunpack.c.0.s8 %v6163
  %v6165 = vlaneseq
  %v6166 = vshrl.u32 %v6165, 7
  %v6167 = vsub.s32 %v6164, %v6166
  %v6168 = vrot.slane %v6115, %v6167
  %v6170 = vunpack.c.l.s4 1985246804
  %v6171 = vunpack.c.0.s8 %v6170
  %v6172 = vlaneseq
  %v6173 = vshrl.u32 %v6172, 7
  %v6174 = vsub.s32 %v6171, %v6173
  %v6175 = vrot.slane %v6115, %v6174
  %v6177 = vunpack.c.l.s4 839922192
  %v6178 = vunpack.c.0.s8 %v6177
  %v6179 = vlaneseq
  %v6180 = vshrl.u32 %v6179, 7
  %v6181 = vsub.s32 %v6178, %v6180
  %v6182 = vrot.slane %v6117, %v6181
  %v6184 = vunpack.c.l.s4 1985246804
  %v6185 = vunpack.c.0.s8 %v6184
  %v6186 = vlaneseq
  %v6187 = vshrl.u32 %v6186, 7
  %v6188 = vsub.s32 %v6185, %v6187
  %v6189 = vrot.slane %v6117, %v6188
  %v6191 = vunpack.c.l.s4 839922192
  %v6192 = vunpack.c.0.s8 %v6191
  %v6193 = vlaneseq
  %v6194 = vshrl.u32 %v6193, 7
  %v6195 = vsub.s32 %v6192, %v6194
  %v6196 = vrot.slane %v6119, %v6195
  %v6198 = vunpack.c.l.s4 1985246804
  %v6199 = vunpack.c.0.s8 %v6198
  %v6200 = vlaneseq
  %v6201 = vshrl.u32 %v6200, 7
  %v6202 = vsub.s32 %v6199, %v6201
  %v6203 = vrot.slane %v6119, %v6202
  %v6205 = vunpack.c.l.s4 839922192
  %v6206 = vunpack.c.0.s8 %v6205
  %v6207 = vlaneseq
  %v6208 = vshrl.u32 %v6207, 7
  %v6209 = vsub.s32 %v6206, %v6208
  %v6210 = vrot.slane %v6121, %v6209
  %v6212 = vunpack.c.l.s4 1985246804
  %v6213 = vunpack.c.0.s8 %v6212
  %v6214 = vlaneseq
  %v6215 = vshrl.u32 %v6214, 7
  %v6216 = vsub.s32 %v6213, %v6215
  %v6217 = vrot.slane %v6121, %v6216
  %v6219 = vunpack.c.l.s4 839922192
  %v6220 = vunpack.c.0.s8 %v6219
  %v6221 = vlaneseq
  %v6222 = vshrl.u32 %v6221, 7
  %v6223 = vsub.s32 %v6220, %v6222
  %v6224 = vrot.slane %v6123, %v6223
  %v6226 = vunpack.c.l.s4 1985246804
  %v6227 = vunpack.c.0.s8 %v6226
  %v6228 = vlaneseq
  %v6229 = vshrl.u32 %v6228, 7
  %v6230 = vsub.s32 %v6227, %v6229
  %v6231 = vrot.slane %v6123, %v6230
  %v6233 = vunpack.c.l.s4 839922192
  %v6234 = vunpack.c.0.s8 %v6233
  %v6235 = vlaneseq
  %v6236 = vshrl.u32 %v6235, 7
  %v6237 = vsub.s32 %v6234, %v6236
  %v6238 = vrot.slane %v6125, %v6237
  %v6240 = vunpack.c.l.s4 1985246804
  %v6241 = vunpack.c.0.s8 %v6240
  %v6242 = vlaneseq
  %v6243 = vshrl.u32 %v6242, 7
  %v6244 = vsub.s32 %v6241, %v6243
  %v6245 = vrot.slane %v6125, %v6244
  %v6262 = vsub.bf16 %v6046, %v6140
  %v6263 = vsub.bf16 %v6047, %v6147
  %v6264 = vsub.bf16 %v6048, %v6154
  %v6265 = vsub.bf16 %v6049, %v6161
  %v6266 = vsub.bf16 %v6050, %v6168
  %v6267 = vsub.bf16 %v6051, %v6175
  %v6268 = vsub.bf16 %v6052, %v6182
  %v6269 = vsub.bf16 %v6053, %v6189
  %v6270 = vsub.bf16 %v6054, %v6196
  %v6271 = vsub.bf16 %v6055, %v6203
  %v6272 = vsub.bf16 %v6056, %v6210
  %v6273 = vsub.bf16 %v6057, %v6217
  %v6274 = vsub.bf16 %v6058, %v6224
  %v6275 = vsub.bf16 %v6059, %v6231
  %v6276 = vsub.bf16 %v6060, %v6238
  %v6277 = vsub.bf16 %v6061, %v6245
  %v6279 = vmul.bf16 %v6262, 1069105081
  %v6280 = vpow.bf16.pop %v6279
  %v6282 = vmul.bf16 %v6263, 1069105081
  %v6283 = vpow.bf16.pop %v6282
  %v6285 = vmul.bf16 %v6264, 1069105081
  %v6286 = vpow.bf16.pop %v6285
  %v6288 = vmul.bf16 %v6265, 1069105081
  %v6289 = vpow.bf16.pop %v6288
  %v6291 = vmul.bf16 %v6266, 1069105081
  %v6292 = vpow.bf16.pop %v6291
  %v6294 = vmul.bf16 %v6267, 1069105081
  %v6295 = vpow.bf16.pop %v6294
  %v6297 = vmul.bf16 %v6268, 1069105081
  %v6298 = vpow.bf16.pop %v6297
  %v6300 = vmul.bf16 %v6269, 1069105081
  %v6301 = vpow.bf16.pop %v6300
  %v6303 = vmul.bf16 %v6270, 1069105081
  %v6304 = vpow.bf16.pop %v6303
  %v6306 = vmul.bf16 %v6271, 1069105081
  %v6307 = vpow.bf16.pop %v6306
  %v6309 = vmul.bf16 %v6272, 1069105081
  %v6310 = vpow.bf16.pop %v6309
  %v6312 = vmul.bf16 %v6273, 1069105081
  %v6313 = vpow.bf16.pop %v6312
  %v6315 = vmul.bf16 %v6274, 1069105081
  %v6316 = vpow.bf16.pop %v6315
  %v6318 = vmul.bf16 %v6275, 1069105081
  %v6319 = vpow.bf16.pop %v6318
  %v6321 = vmul.bf16 %v6276, 1069105081
  %v6322 = vpow.bf16.pop %v6321
  %v6324 = vmul.bf16 %v6277, 1069105081
  %v6325 = vpow.bf16.pop %v6324
  %v6342 = vunpack.c.l.b16 %v6280
  %v6343 = vunpack.c.l.b16 %v6283
  %v6344 = vunpack.c.l.b16 %v6286
  %v6345 = vunpack.c.l.b16 %v6289
  %v6346 = vunpack.c.l.b16 %v6292
  %v6347 = vunpack.c.l.b16 %v6295
  %v6348 = vunpack.c.l.b16 %v6298
  %v6349 = vunpack.c.l.b16 %v6301
  %v6350 = vunpack.c.l.b16 %v6304
  %v6351 = vunpack.c.l.b16 %v6307
  %v6352 = vunpack.c.l.b16 %v6310
  %v6353 = vunpack.c.l.b16 %v6313
  %v6354 = vunpack.c.l.b16 %v6316
  %v6355 = vunpack.c.l.b16 %v6319
  %v6356 = vunpack.c.l.b16 %v6322
  %v6357 = vunpack.c.l.b16 %v6325
  %v6358 = vpack.c.b16 %v6343, %v6342
  %v6359 = vpack.c.b16 %v6345, %v6344
  %v6360 = vpack.c.b16 %v6347, %v6346
  %v6361 = vpack.c.b16 %v6349, %v6348
  %v6362 = vpack.c.b16 %v6351, %v6350
  %v6363 = vpack.c.b16 %v6353, %v6352
  %v6364 = vpack.c.b16 %v6355, %v6354
  %v6365 = vpack.c.b16 %v6357, %v6356
  %6374 = vrot.lane.b32.xlu0 %v716, 65
  %v6375 = vpop.permute.xlu0 %6374
  %6376 = vrot.lane.b32.xlu0 %v717, 65
  %v6377 = vpop.permute.xlu0 %6376
  %6378 = vrot.lane.b32.xlu0 %v718, 65
  %v6379 = vpop.permute.xlu0 %6378
  %6380 = vrot.lane.b32.xlu0 %v719, 65
  %v6381 = vpop.permute.xlu0 %6380
  %6382 = vrot.lane.b32.xlu0 %v720, 65
  %v6383 = vpop.permute.xlu0 %6382
  %6384 = vrot.lane.b32.xlu0 %v721, 65
  %v6385 = vpop.permute.xlu0 %6384
  %6386 = vrot.lane.b32.xlu0 %v722, 65
  %v6387 = vpop.permute.xlu0 %6386
  %6388 = vrot.lane.b32.xlu0 %v723, 65
  %v6389 = vpop.permute.xlu0 %6388
  %6398 = vmatprep.subr.bf16.mxu0 0
  %6399 = vmatpush1.bf16.msra.mxu0 %v6389
  %6400 = vmatprep.subr.bf16.mxu0 0
  %6401 = vmatpush1.bf16.msra.mxu0 %v6387
  %6402 = vmatprep.subr.bf16.mxu0 0
  %6403 = vmatpush1.bf16.msra.mxu0 %v6385
  %6404 = vmatprep.subr.bf16.mxu0 0
  %6405 = vmatpush1.bf16.msra.mxu0 %v6383
  %6406 = vmatprep.subr.bf16.mxu0 0
  %6407 = vmatpush1.bf16.msra.mxu0 %v6381
  %6408 = vmatprep.subr.bf16.mxu0 0
  %6409 = vmatpush1.bf16.msra.mxu0 %v6379
  %6410 = vmatprep.subr.bf16.mxu0 0
  %6411 = vmatpush1.bf16.msra.mxu0 %v6377
  %6412 = vmatprep.subr.bf16.mxu0 0
  %6413 = vmatpush1.bf16.msra.mxu0 %v6375
  %6414 = vmatprep.subr.bf16.mxu0 0
  %6415 = vmatpush2.bf16.msra.mxu0 0
  %6416 = vmatprep.subr.bf16.mxu0 0
  %6417 = vmatpush2.bf16.msra.mxu0 0
  %6418 = vmatprep.subr.bf16.mxu0 0
  %6419 = vmatpush2.bf16.msra.mxu0 0
  %6420 = vmatprep.subr.bf16.mxu0 0
  %6421 = vmatpush2.bf16.msra.mxu0 0
  %6422 = vmatprep.subr.bf16.mxu0 0
  %6423 = vmatpush2.bf16.msra.mxu0 0
  %6424 = vmatprep.subr.bf16.mxu0 0
  %6425 = vmatpush2.bf16.msra.mxu0 0
  %6426 = vmatprep.subr.bf16.mxu0 0
  %6427 = vmatpush2.bf16.msra.mxu0 0
  %6428 = vmatprep.subr.bf16.mxu0 0
  %6429 = vmatpush2.bf16.msra.mxu0 0
  %6430 = vmatprep.mubr.bf16.mxu0 0
  %6431 = vmatmul.mubr.bf16.gmra.mxu0 %v6358
  %v6432 = vpop.f32.mrf.mxu0
  %v6433 = vadd.f32 0.0, %v6432
  %v6434 = vpop.f32.mrf.mxu0
  %v6435 = vpop.f32.mrf.mxu0
  %v6436 = vadd.f32 0.0, %v6435
  %v6437 = vpop.f32.mrf.mxu0
  %6438 = vmatprep.mubr.bf16.mxu0 0
  %6439 = vmatmul.mubr.bf16.gmra.mxu0 %v6359
  %v6440 = vpop.f32.mrf.mxu0
  %v6441 = vadd.f32 0.0, %v6440
  %v6442 = vpop.f32.mrf.mxu0
  %v6443 = vpop.f32.mrf.mxu0
  %v6444 = vadd.f32 0.0, %v6443
  %v6445 = vpop.f32.mrf.mxu0
  %6446 = vmatprep.mubr.bf16.mxu0 0
  %6447 = vmatmul.mubr.bf16.gmra.mxu0 %v6360
  %v6448 = vpop.f32.mrf.mxu0
  %v6449 = vadd.f32 0.0, %v6448
  %v6450 = vpop.f32.mrf.mxu0
  %v6451 = vpop.f32.mrf.mxu0
  %v6452 = vadd.f32 0.0, %v6451
  %v6453 = vpop.f32.mrf.mxu0
  %6454 = vmatprep.mubr.bf16.mxu0 0
  %6455 = vmatmul.mubr.bf16.gmra.mxu0 %v6361
  %v6456 = vpop.f32.mrf.mxu0
  %v6457 = vadd.f32 0.0, %v6456
  %v6458 = vpop.f32.mrf.mxu0
  %v6459 = vpop.f32.mrf.mxu0
  %v6460 = vadd.f32 0.0, %v6459
  %v6461 = vpop.f32.mrf.mxu0
  %6462 = vmatprep.mubr.bf16.mxu0 0
  %6463 = vmatmul.mubr.bf16.gmra.mxu0 %v6362
  %v6464 = vpop.f32.mrf.mxu0
  %v6465 = vadd.f32 0.0, %v6464
  %v6466 = vpop.f32.mrf.mxu0
  %v6467 = vpop.f32.mrf.mxu0
  %v6468 = vadd.f32 0.0, %v6467
  %v6469 = vpop.f32.mrf.mxu0
  %6470 = vmatprep.mubr.bf16.mxu0 0
  %6471 = vmatmul.mubr.bf16.gmra.mxu0 %v6363
  %v6472 = vpop.f32.mrf.mxu0
  %v6473 = vadd.f32 0.0, %v6472
  %v6474 = vpop.f32.mrf.mxu0
  %v6475 = vpop.f32.mrf.mxu0
  %v6476 = vadd.f32 0.0, %v6475
  %v6477 = vpop.f32.mrf.mxu0
  %6478 = vmatprep.mubr.bf16.mxu0 0
  %6479 = vmatmul.mubr.bf16.gmra.mxu0 %v6364
  %v6480 = vpop.f32.mrf.mxu0
  %v6481 = vadd.f32 0.0, %v6480
  %v6482 = vpop.f32.mrf.mxu0
  %v6483 = vpop.f32.mrf.mxu0
  %v6484 = vadd.f32 0.0, %v6483
  %v6485 = vpop.f32.mrf.mxu0
  %6486 = vmatprep.mubr.bf16.mxu0 0
  %6487 = vmatmul.mubr.bf16.gmra.mxu0 %v6365
  %v6488 = vpop.f32.mrf.mxu0
  %v6489 = vadd.f32 0.0, %v6488
  %v6490 = vpop.f32.mrf.mxu0
  %v6491 = vpop.f32.mrf.mxu0
  %v6492 = vadd.f32 0.0, %v6491
  %v6493 = vpop.f32.mrf.mxu0
  %6494 = vdwg.mxu0
  %v6495 = vrcp.pop %v6433
  %v6496 = vrcp.pop %v6436
  %v6497 = vrcp.pop %v6441
  %v6498 = vrcp.pop %v6444
  %v6499 = vrcp.pop %v6449
  %v6500 = vrcp.pop %v6452
  %v6501 = vrcp.pop %v6457
  %v6502 = vrcp.pop %v6460
  %v6503 = vrcp.pop %v6465
  %v6504 = vrcp.pop %v6468
  %v6505 = vrcp.pop %v6473
  %v6506 = vrcp.pop %v6476
  %v6507 = vrcp.pop %v6481
  %v6508 = vrcp.pop %v6484
  %v6509 = vrcp.pop %v6489
  %v6510 = vrcp.pop %v6492
  %6512 = vset.pattern.permute.xlu0 8
  %6513 = vperm.xlu0 %6512, %v6495
  %v6514 = vpop.permute.xlu0 %6513
  %6517 = vset.pattern.permute.xlu0 8
  %6518 = vperm.xlu0 %6517, %v6496
  %v6519 = vpop.permute.xlu0 %6518
  %6522 = vset.pattern.permute.xlu0 8
  %6523 = vperm.xlu0 %6522, %v6497
  %v6524 = vpop.permute.xlu0 %6523
  %6527 = vset.pattern.permute.xlu0 8
  %6528 = vperm.xlu0 %6527, %v6498
  %v6529 = vpop.permute.xlu0 %6528
  %6532 = vset.pattern.permute.xlu0 8
  %6533 = vperm.xlu0 %6532, %v6499
  %v6534 = vpop.permute.xlu0 %6533
  %6537 = vset.pattern.permute.xlu0 8
  %6538 = vperm.xlu0 %6537, %v6500
  %v6539 = vpop.permute.xlu0 %6538
  %6542 = vset.pattern.permute.xlu0 8
  %6543 = vperm.xlu0 %6542, %v6501
  %v6544 = vpop.permute.xlu0 %6543
  %6547 = vset.pattern.permute.xlu0 8
  %6548 = vperm.xlu0 %6547, %v6502
  %v6549 = vpop.permute.xlu0 %6548
  %6552 = vset.pattern.permute.xlu0 8
  %6553 = vperm.xlu0 %6552, %v6503
  %v6554 = vpop.permute.xlu0 %6553
  %6557 = vset.pattern.permute.xlu0 8
  %6558 = vperm.xlu0 %6557, %v6504
  %v6559 = vpop.permute.xlu0 %6558
  %6562 = vset.pattern.permute.xlu0 8
  %6563 = vperm.xlu0 %6562, %v6505
  %v6564 = vpop.permute.xlu0 %6563
  %6567 = vset.pattern.permute.xlu0 8
  %6568 = vperm.xlu0 %6567, %v6506
  %v6569 = vpop.permute.xlu0 %6568
  %6572 = vset.pattern.permute.xlu0 8
  %6573 = vperm.xlu0 %6572, %v6507
  %v6574 = vpop.permute.xlu0 %6573
  %6577 = vset.pattern.permute.xlu0 8
  %6578 = vperm.xlu0 %6577, %v6508
  %v6579 = vpop.permute.xlu0 %6578
  %6582 = vset.pattern.permute.xlu0 8
  %6583 = vperm.xlu0 %6582, %v6509
  %v6584 = vpop.permute.xlu0 %6583
  %6587 = vset.pattern.permute.xlu0 8
  %6588 = vperm.xlu0 %6587, %v6510
  %v6589 = vpop.permute.xlu0 %6588
  %v6591 = vmul.f32 %v6433, %v6514
  %v6592 = vmul.f32 %v6436, %v6519
  %v6593 = vmul.f32 %v6441, %v6524
  %v6594 = vmul.f32 %v6444, %v6529
  %v6595 = vmul.f32 %v6449, %v6534
  %v6596 = vmul.f32 %v6452, %v6539
  %v6597 = vmul.f32 %v6457, %v6544
  %v6598 = vmul.f32 %v6460, %v6549
  %v6599 = vmul.f32 %v6465, %v6554
  %v6600 = vmul.f32 %v6468, %v6559
  %v6601 = vmul.f32 %v6473, %v6564
  %v6602 = vmul.f32 %v6476, %v6569
  %v6603 = vmul.f32 %v6481, %v6574
  %v6604 = vmul.f32 %v6484, %v6579
  %v6605 = vmul.f32 %v6489, %v6584
  %v6606 = vmul.f32 %v6492, %v6589
  %6623 = vrot.lane.b32.xlu0 %v1737, 8
  %v6624 = vpop.permute.xlu0 %6623
  %6625 = vrot.lane.b32.xlu0 %v1738, 8
  %v6626 = vpop.permute.xlu0 %6625
  %6627 = vrot.lane.b32.xlu0 %v1739, 8
  %v6628 = vpop.permute.xlu0 %6627
  %6629 = vrot.lane.b32.xlu0 %v1740, 8
  %v6630 = vpop.permute.xlu0 %6629
  %6631 = vrot.lane.b32.xlu0 %v1741, 8
  %v6632 = vpop.permute.xlu0 %6631
  %6633 = vrot.lane.b32.xlu0 %v1742, 8
  %v6634 = vpop.permute.xlu0 %6633
  %6635 = vrot.lane.b32.xlu0 %v1743, 8
  %v6636 = vpop.permute.xlu0 %6635
  %6637 = vrot.lane.b32.xlu0 %v1744, 8
  %v6638 = vpop.permute.xlu0 %6637
  %6639 = vrot.lane.b32.xlu0 %v1745, 8
  %v6640 = vpop.permute.xlu0 %6639
  %6641 = vrot.lane.b32.xlu0 %v1746, 8
  %v6642 = vpop.permute.xlu0 %6641
  %6643 = vrot.lane.b32.xlu0 %v1747, 8
  %v6644 = vpop.permute.xlu0 %6643
  %6645 = vrot.lane.b32.xlu0 %v1748, 8
  %v6646 = vpop.permute.xlu0 %6645
  %6647 = vrot.lane.b32.xlu0 %v1749, 8
  %v6648 = vpop.permute.xlu0 %6647
  %6649 = vrot.lane.b32.xlu0 %v1750, 8
  %v6650 = vpop.permute.xlu0 %6649
  %6651 = vrot.lane.b32.xlu0 %v1751, 8
  %v6652 = vpop.permute.xlu0 %6651
  %6653 = vrot.lane.b32.xlu0 %v1752, 8
  %v6654 = vpop.permute.xlu0 %6653
  %6687 = vrot.lane.b32.xlu0 %v2546, 16
  %v6688 = vpop.permute.xlu0 %6687
  %6689 = vrot.lane.b32.xlu0 %v2547, 16
  %v6690 = vpop.permute.xlu0 %6689
  %6691 = vrot.lane.b32.xlu0 %v2548, 16
  %v6692 = vpop.permute.xlu0 %6691
  %6693 = vrot.lane.b32.xlu0 %v2549, 16
  %v6694 = vpop.permute.xlu0 %6693
  %6695 = vrot.lane.b32.xlu0 %v2550, 16
  %v6696 = vpop.permute.xlu0 %6695
  %6697 = vrot.lane.b32.xlu0 %v2551, 16
  %v6698 = vpop.permute.xlu0 %6697
  %6699 = vrot.lane.b32.xlu0 %v2552, 16
  %v6700 = vpop.permute.xlu0 %6699
  %6701 = vrot.lane.b32.xlu0 %v2553, 16
  %v6702 = vpop.permute.xlu0 %6701
  %6703 = vrot.lane.b32.xlu0 %v2554, 16
  %v6704 = vpop.permute.xlu0 %6703
  %6705 = vrot.lane.b32.xlu0 %v2555, 16
  %v6706 = vpop.permute.xlu0 %6705
  %6707 = vrot.lane.b32.xlu0 %v2556, 16
  %v6708 = vpop.permute.xlu0 %6707
  %6709 = vrot.lane.b32.xlu0 %v2557, 16
  %v6710 = vpop.permute.xlu0 %6709
  %6711 = vrot.lane.b32.xlu0 %v2558, 16
  %v6712 = vpop.permute.xlu0 %6711
  %6713 = vrot.lane.b32.xlu0 %v2559, 16
  %v6714 = vpop.permute.xlu0 %6713
  %6715 = vrot.lane.b32.xlu0 %v2560, 16
  %v6716 = vpop.permute.xlu0 %6715
  %6717 = vrot.lane.b32.xlu0 %v2561, 16
  %v6718 = vpop.permute.xlu0 %6717
  %6751 = vrot.lane.b32.xlu0 %v3355, 24
  %v6752 = vpop.permute.xlu0 %6751
  %6753 = vrot.lane.b32.xlu0 %v3356, 24
  %v6754 = vpop.permute.xlu0 %6753
  %6755 = vrot.lane.b32.xlu0 %v3357, 24
  %v6756 = vpop.permute.xlu0 %6755
  %6757 = vrot.lane.b32.xlu0 %v3358, 24
  %v6758 = vpop.permute.xlu0 %6757
  %6759 = vrot.lane.b32.xlu0 %v3359, 24
  %v6760 = vpop.permute.xlu0 %6759
  %6761 = vrot.lane.b32.xlu0 %v3360, 24
  %v6762 = vpop.permute.xlu0 %6761
  %6763 = vrot.lane.b32.xlu0 %v3361, 24
  %v6764 = vpop.permute.xlu0 %6763
  %6765 = vrot.lane.b32.xlu0 %v3362, 24
  %v6766 = vpop.permute.xlu0 %6765
  %6767 = vrot.lane.b32.xlu0 %v3363, 24
  %v6768 = vpop.permute.xlu0 %6767
  %6769 = vrot.lane.b32.xlu0 %v3364, 24
  %v6770 = vpop.permute.xlu0 %6769
  %6771 = vrot.lane.b32.xlu0 %v3365, 24
  %v6772 = vpop.permute.xlu0 %6771
  %6773 = vrot.lane.b32.xlu0 %v3366, 24
  %v6774 = vpop.permute.xlu0 %6773
  %6775 = vrot.lane.b32.xlu0 %v3367, 24
  %v6776 = vpop.permute.xlu0 %6775
  %6777 = vrot.lane.b32.xlu0 %v3368, 24
  %v6778 = vpop.permute.xlu0 %6777
  %6779 = vrot.lane.b32.xlu0 %v3369, 24
  %v6780 = vpop.permute.xlu0 %6779
  %6781 = vrot.lane.b32.xlu0 %v3370, 24
  %v6782 = vpop.permute.xlu0 %6781
  %6815 = vrot.lane.b32.xlu0 %v4164, 32
  %v6816 = vpop.permute.xlu0 %6815
  %6817 = vrot.lane.b32.xlu0 %v4165, 32
  %v6818 = vpop.permute.xlu0 %6817
  %6819 = vrot.lane.b32.xlu0 %v4166, 32
  %v6820 = vpop.permute.xlu0 %6819
  %6821 = vrot.lane.b32.xlu0 %v4167, 32
  %v6822 = vpop.permute.xlu0 %6821
  %6823 = vrot.lane.b32.xlu0 %v4168, 32
  %v6824 = vpop.permute.xlu0 %6823
  %6825 = vrot.lane.b32.xlu0 %v4169, 32
  %v6826 = vpop.permute.xlu0 %6825
  %6827 = vrot.lane.b32.xlu0 %v4170, 32
  %v6828 = vpop.permute.xlu0 %6827
  %6829 = vrot.lane.b32.xlu0 %v4171, 32
  %v6830 = vpop.permute.xlu0 %6829
  %6831 = vrot.lane.b32.xlu0 %v4172, 32
  %v6832 = vpop.permute.xlu0 %6831
  %6833 = vrot.lane.b32.xlu0 %v4173, 32
  %v6834 = vpop.permute.xlu0 %6833
  %6835 = vrot.lane.b32.xlu0 %v4174, 32
  %v6836 = vpop.permute.xlu0 %6835
  %6837 = vrot.lane.b32.xlu0 %v4175, 32
  %v6838 = vpop.permute.xlu0 %6837
  %6839 = vrot.lane.b32.xlu0 %v4176, 32
  %v6840 = vpop.permute.xlu0 %6839
  %6841 = vrot.lane.b32.xlu0 %v4177, 32
  %v6842 = vpop.permute.xlu0 %6841
  %6843 = vrot.lane.b32.xlu0 %v4178, 32
  %v6844 = vpop.permute.xlu0 %6843
  %6845 = vrot.lane.b32.xlu0 %v4179, 32
  %v6846 = vpop.permute.xlu0 %6845
  %6879 = vrot.lane.b32.xlu0 %v4973, 40
  %v6880 = vpop.permute.xlu0 %6879
  %6881 = vrot.lane.b32.xlu0 %v4974, 40
  %v6882 = vpop.permute.xlu0 %6881
  %6883 = vrot.lane.b32.xlu0 %v4975, 40
  %v6884 = vpop.permute.xlu0 %6883
  %6885 = vrot.lane.b32.xlu0 %v4976, 40
  %v6886 = vpop.permute.xlu0 %6885
  %6887 = vrot.lane.b32.xlu0 %v4977, 40
  %v6888 = vpop.permute.xlu0 %6887
  %6889 = vrot.lane.b32.xlu0 %v4978, 40
  %v6890 = vpop.permute.xlu0 %6889
  %6891 = vrot.lane.b32.xlu0 %v4979, 40
  %v6892 = vpop.permute.xlu0 %6891
  %6893 = vrot.lane.b32.xlu0 %v4980, 40
  %v6894 = vpop.permute.xlu0 %6893
  %6895 = vrot.lane.b32.xlu0 %v4981, 40
  %v6896 = vpop.permute.xlu0 %6895
  %6897 = vrot.lane.b32.xlu0 %v4982, 40
  %v6898 = vpop.permute.xlu0 %6897
  %6899 = vrot.lane.b32.xlu0 %v4983, 40
  %v6900 = vpop.permute.xlu0 %6899
  %6901 = vrot.lane.b32.xlu0 %v4984, 40
  %v6902 = vpop.permute.xlu0 %6901
  %6903 = vrot.lane.b32.xlu0 %v4985, 40
  %v6904 = vpop.permute.xlu0 %6903
  %6905 = vrot.lane.b32.xlu0 %v4986, 40
  %v6906 = vpop.permute.xlu0 %6905
  %6907 = vrot.lane.b32.xlu0 %v4987, 40
  %v6908 = vpop.permute.xlu0 %6907
  %6909 = vrot.lane.b32.xlu0 %v4988, 40
  %v6910 = vpop.permute.xlu0 %6909
  %6943 = vrot.lane.b32.xlu0 %v5782, 48
  %v6944 = vpop.permute.xlu0 %6943
  %6945 = vrot.lane.b32.xlu0 %v5783, 48
  %v6946 = vpop.permute.xlu0 %6945
  %6947 = vrot.lane.b32.xlu0 %v5784, 48
  %v6948 = vpop.permute.xlu0 %6947
  %6949 = vrot.lane.b32.xlu0 %v5785, 48
  %v6950 = vpop.permute.xlu0 %6949
  %6951 = vrot.lane.b32.xlu0 %v5786, 48
  %v6952 = vpop.permute.xlu0 %6951
  %6953 = vrot.lane.b32.xlu0 %v5787, 48
  %v6954 = vpop.permute.xlu0 %6953
  %6955 = vrot.lane.b32.xlu0 %v5788, 48
  %v6956 = vpop.permute.xlu0 %6955
  %6957 = vrot.lane.b32.xlu0 %v5789, 48
  %v6958 = vpop.permute.xlu0 %6957
  %6959 = vrot.lane.b32.xlu0 %v5790, 48
  %v6960 = vpop.permute.xlu0 %6959
  %6961 = vrot.lane.b32.xlu0 %v5791, 48
  %v6962 = vpop.permute.xlu0 %6961
  %6963 = vrot.lane.b32.xlu0 %v5792, 48
  %v6964 = vpop.permute.xlu0 %6963
  %6965 = vrot.lane.b32.xlu0 %v5793, 48
  %v6966 = vpop.permute.xlu0 %6965
  %6967 = vrot.lane.b32.xlu0 %v5794, 48
  %v6968 = vpop.permute.xlu0 %6967
  %6969 = vrot.lane.b32.xlu0 %v5795, 48
  %v6970 = vpop.permute.xlu0 %6969
  %6971 = vrot.lane.b32.xlu0 %v5796, 48
  %v6972 = vpop.permute.xlu0 %6971
  %6973 = vrot.lane.b32.xlu0 %v5797, 48
  %v6974 = vpop.permute.xlu0 %6973
  %7007 = vrot.lane.b32.xlu0 %v6591, 56
  %v7008 = vpop.permute.xlu0 %7007
  %7009 = vrot.lane.b32.xlu0 %v6592, 56
  %v7010 = vpop.permute.xlu0 %7009
  %7011 = vrot.lane.b32.xlu0 %v6593, 56
  %v7012 = vpop.permute.xlu0 %7011
  %7013 = vrot.lane.b32.xlu0 %v6594, 56
  %v7014 = vpop.permute.xlu0 %7013
  %7015 = vrot.lane.b32.xlu0 %v6595, 56
  %v7016 = vpop.permute.xlu0 %7015
  %7017 = vrot.lane.b32.xlu0 %v6596, 56
  %v7018 = vpop.permute.xlu0 %7017
  %7019 = vrot.lane.b32.xlu0 %v6597, 56
  %v7020 = vpop.permute.xlu0 %7019
  %7021 = vrot.lane.b32.xlu0 %v6598, 56
  %v7022 = vpop.permute.xlu0 %7021
  %7023 = vrot.lane.b32.xlu0 %v6599, 56
  %v7024 = vpop.permute.xlu0 %7023
  %7025 = vrot.lane.b32.xlu0 %v6600, 56
  %v7026 = vpop.permute.xlu0 %7025
  %7027 = vrot.lane.b32.xlu0 %v6601, 56
  %v7028 = vpop.permute.xlu0 %7027
  %7029 = vrot.lane.b32.xlu0 %v6602, 56
  %v7030 = vpop.permute.xlu0 %7029
  %7031 = vrot.lane.b32.xlu0 %v6603, 56
  %v7032 = vpop.permute.xlu0 %7031
  %7033 = vrot.lane.b32.xlu0 %v6604, 56
  %v7034 = vpop.permute.xlu0 %7033
  %7035 = vrot.lane.b32.xlu0 %v6605, 56
  %v7036 = vpop.permute.xlu0 %7035
  %7037 = vrot.lane.b32.xlu0 %v6606, 56
  %v7038 = vpop.permute.xlu0 %7037
  %vm7055 = vcmask 64512
  %v7056 = vsel %vm7055, %v925, %v6624
  %v7057 = vsel %vm7055, %v926, %v6626
  %v7058 = vsel %vm7055, %v927, %v6628
  %v7059 = vsel %vm7055, %v928, %v6630
  %v7060 = vsel %vm7055, %v929, %v6632
  %v7061 = vsel %vm7055, %v930, %v6634
  %v7062 = vsel %vm7055, %v931, %v6636
  %v7063 = vsel %vm7055, %v932, %v6638
  %v7064 = vsel %vm7055, %v933, %v6640
  %v7065 = vsel %vm7055, %v934, %v6642
  %v7066 = vsel %vm7055, %v935, %v6644
  %v7067 = vsel %vm7055, %v936, %v6646
  %v7068 = vsel %vm7055, %v937, %v6648
  %v7069 = vsel %vm7055, %v938, %v6650
  %v7070 = vsel %vm7055, %v939, %v6652
  %v7071 = vsel %vm7055, %v940, %v6654
  %vm7072 = vcmask 130048
  %v7073 = vsel %vm7072, %v7056, %v6688
  %v7074 = vsel %vm7072, %v7057, %v6690
  %v7075 = vsel %vm7072, %v7058, %v6692
  %v7076 = vsel %vm7072, %v7059, %v6694
  %v7077 = vsel %vm7072, %v7060, %v6696
  %v7078 = vsel %vm7072, %v7061, %v6698
  %v7079 = vsel %vm7072, %v7062, %v6700
  %v7080 = vsel %vm7072, %v7063, %v6702
  %v7081 = vsel %vm7072, %v7064, %v6704
  %v7082 = vsel %vm7072, %v7065, %v6706
  %v7083 = vsel %vm7072, %v7066, %v6708
  %v7084 = vsel %vm7072, %v7067, %v6710
  %v7085 = vsel %vm7072, %v7068, %v6712
  %v7086 = vsel %vm7072, %v7069, %v6714
  %v7087 = vsel %vm7072, %v7070, %v6716
  %v7088 = vsel %vm7072, %v7071, %v6718
  %vm7089 = vcmask 195584
  %v7090 = vsel %vm7089, %v7073, %v6752
  %v7091 = vsel %vm7089, %v7074, %v6754
  %v7092 = vsel %vm7089, %v7075, %v6756
  %v7093 = vsel %vm7089, %v7076, %v6758
  %v7094 = vsel %vm7089, %v7077, %v6760
  %v7095 = vsel %vm7089, %v7078, %v6762
  %v7096 = vsel %vm7089, %v7079, %v6764
  %v7097 = vsel %vm7089, %v7080, %v6766
  %v7098 = vsel %vm7089, %v7081, %v6768
  %v7099 = vsel %vm7089, %v7082, %v6770
  %v7100 = vsel %vm7089, %v7083, %v6772
  %v7101 = vsel %vm7089, %v7084, %v6774
  %v7102 = vsel %vm7089, %v7085, %v6776
  %v7103 = vsel %vm7089, %v7086, %v6778
  %v7104 = vsel %vm7089, %v7087, %v6780
  %v7105 = vsel %vm7089, %v7088, %v6782
  %vm7106 = vcmask 261120
  %v7107 = vsel %vm7106, %v7090, %v6816
  %v7108 = vsel %vm7106, %v7091, %v6818
  %v7109 = vsel %vm7106, %v7092, %v6820
  %v7110 = vsel %vm7106, %v7093, %v6822
  %v7111 = vsel %vm7106, %v7094, %v6824
  %v7112 = vsel %vm7106, %v7095, %v6826
  %v7113 = vsel %vm7106, %v7096, %v6828
  %v7114 = vsel %vm7106, %v7097, %v6830
  %v7115 = vsel %vm7106, %v7098, %v6832
  %v7116 = vsel %vm7106, %v7099, %v6834
  %v7117 = vsel %vm7106, %v7100, %v6836
  %v7118 = vsel %vm7106, %v7101, %v6838
  %v7119 = vsel %vm7106, %v7102, %v6840
  %v7120 = vsel %vm7106, %v7103, %v6842
  %v7121 = vsel %vm7106, %v7104, %v6844
  %v7122 = vsel %vm7106, %v7105, %v6846
  %vm7123 = vcmask 326656
  %v7124 = vsel %vm7123, %v7107, %v6880
  %v7125 = vsel %vm7123, %v7108, %v6882
  %v7126 = vsel %vm7123, %v7109, %v6884
  %v7127 = vsel %vm7123, %v7110, %v6886
  %v7128 = vsel %vm7123, %v7111, %v6888
  %v7129 = vsel %vm7123, %v7112, %v6890
  %v7130 = vsel %vm7123, %v7113, %v6892
  %v7131 = vsel %vm7123, %v7114, %v6894
  %v7132 = vsel %vm7123, %v7115, %v6896
  %v7133 = vsel %vm7123, %v7116, %v6898
  %v7134 = vsel %vm7123, %v7117, %v6900
  %v7135 = vsel %vm7123, %v7118, %v6902
  %v7136 = vsel %vm7123, %v7119, %v6904
  %v7137 = vsel %vm7123, %v7120, %v6906
  %v7138 = vsel %vm7123, %v7121, %v6908
  %v7139 = vsel %vm7123, %v7122, %v6910
  %vm7140 = vcmask 392192
  %v7141 = vsel %vm7140, %v7124, %v6944
  %v7142 = vsel %vm7140, %v7125, %v6946
  %v7143 = vsel %vm7140, %v7126, %v6948
  %v7144 = vsel %vm7140, %v7127, %v6950
  %v7145 = vsel %vm7140, %v7128, %v6952
  %v7146 = vsel %vm7140, %v7129, %v6954
  %v7147 = vsel %vm7140, %v7130, %v6956
  %v7148 = vsel %vm7140, %v7131, %v6958
  %v7149 = vsel %vm7140, %v7132, %v6960
  %v7150 = vsel %vm7140, %v7133, %v6962
  %v7151 = vsel %vm7140, %v7134, %v6964
  %v7152 = vsel %vm7140, %v7135, %v6966
  %v7153 = vsel %vm7140, %v7136, %v6968
  %v7154 = vsel %vm7140, %v7137, %v6970
  %v7155 = vsel %vm7140, %v7138, %v6972
  %v7156 = vsel %vm7140, %v7139, %v6974
  %vm7157 = vcmask 457728
  %v7158 = vsel %vm7157, %v7141, %v7008
  %v7159 = vsel %vm7157, %v7142, %v7010
  %v7160 = vsel %vm7157, %v7143, %v7012
  %v7161 = vsel %vm7157, %v7144, %v7014
  %v7162 = vsel %vm7157, %v7145, %v7016
  %v7163 = vsel %vm7157, %v7146, %v7018
  %v7164 = vsel %vm7157, %v7147, %v7020
  %v7165 = vsel %vm7157, %v7148, %v7022
  %v7166 = vsel %vm7157, %v7149, %v7024
  %v7167 = vsel %vm7157, %v7150, %v7026
  %v7168 = vsel %vm7157, %v7151, %v7028
  %v7169 = vsel %vm7157, %v7152, %v7030
  %v7170 = vsel %vm7157, %v7153, %v7032
  %v7171 = vsel %vm7157, %v7154, %v7034
  %v7172 = vsel %vm7157, %v7155, %v7036
  %v7173 = vsel %vm7157, %v7156, %v7038
  %vm7174 = vcmask 523264
  %v7175 = vsel %vm7174, %v7158, 0.0
  %v7176 = vsel %vm7174, %v7159, 0.0
  %v7177 = vsel %vm7174, %v7160, 0.0
  %v7178 = vsel %vm7174, %v7161, 0.0
  %v7179 = vsel %vm7174, %v7162, 0.0
  %v7180 = vsel %vm7174, %v7163, 0.0
  %v7181 = vsel %vm7174, %v7164, 0.0
  %v7182 = vsel %vm7174, %v7165, 0.0
  %v7183 = vsel %vm7174, %v7166, 0.0
  %v7184 = vsel %vm7174, %v7167, 0.0
  %v7185 = vsel %vm7174, %v7168, 0.0
  %v7186 = vsel %vm7174, %v7169, 0.0
  %v7187 = vsel %vm7174, %v7170, 0.0
  %v7188 = vsel %vm7174, %v7171, 0.0
  %v7189 = vsel %vm7174, %v7172, 0.0
  %v7190 = vsel %vm7174, %v7173, 0.0
  %v7192 = vlaneseq
  %v7193 = vshrl.u32 %v7192, 7
  %v7194 = vsub.s32 0, %v7193
  %v7195 = vrot.slane %v72, %v7194
  %v7197 = vadd.f32 %v7175, %v7195
  %v7198 = vadd.f32 %v7176, %v7195
  %v7199 = vadd.f32 %v7177, %v7195
  %v7200 = vadd.f32 %v7178, %v7195
  %v7201 = vadd.f32 %v7179, %v7195
  %v7202 = vadd.f32 %v7180, %v7195
  %v7203 = vadd.f32 %v7181, %v7195
  %v7204 = vadd.f32 %v7182, %v7195
  %v7205 = vadd.f32 %v7183, %v7195
  %v7206 = vadd.f32 %v7184, %v7195
  %v7207 = vadd.f32 %v7185, %v7195
  %v7208 = vadd.f32 %v7186, %v7195
  %v7209 = vadd.f32 %v7187, %v7195
  %v7210 = vadd.f32 %v7188, %v7195
  %v7211 = vadd.f32 %v7189, %v7195
  %v7212 = vadd.f32 %v7190, %v7195
  %vm7213 = vcmp.gt.f32.partialorder %v7197, 0.0
  %vm7214 = vcmp.gt.f32.partialorder %v7198, 0.0
  %vm7215 = vcmp.gt.f32.partialorder %v7199, 0.0
  %vm7216 = vcmp.gt.f32.partialorder %v7200, 0.0
  %vm7217 = vcmp.gt.f32.partialorder %v7201, 0.0
  %vm7218 = vcmp.gt.f32.partialorder %v7202, 0.0
  %vm7219 = vcmp.gt.f32.partialorder %v7203, 0.0
  %vm7220 = vcmp.gt.f32.partialorder %v7204, 0.0
  %vm7221 = vcmp.gt.f32.partialorder %v7205, 0.0
  %vm7222 = vcmp.gt.f32.partialorder %v7206, 0.0
  %vm7223 = vcmp.gt.f32.partialorder %v7207, 0.0
  %vm7224 = vcmp.gt.f32.partialorder %v7208, 0.0
  %vm7225 = vcmp.gt.f32.partialorder %v7209, 0.0
  %vm7226 = vcmp.gt.f32.partialorder %v7210, 0.0
  %vm7227 = vcmp.gt.f32.partialorder %v7211, 0.0
  %vm7228 = vcmp.gt.f32.partialorder %v7212, 0.0
  %v7229 = vmul.f32 %v7197, 1.442695
  %v7230 = vpow.pop %v7229
  %v7231 = vmul.f32 %v7198, 1.442695
  %v7232 = vpow.pop %v7231
  %v7233 = vmul.f32 %v7199, 1.442695
  %v7234 = vpow.pop %v7233
  %v7235 = vmul.f32 %v7200, 1.442695
  %v7236 = vpow.pop %v7235
  %v7237 = vmul.f32 %v7201, 1.442695
  %v7238 = vpow.pop %v7237
  %v7239 = vmul.f32 %v7202, 1.442695
  %v7240 = vpow.pop %v7239
  %v7241 = vmul.f32 %v7203, 1.442695
  %v7242 = vpow.pop %v7241
  %v7243 = vmul.f32 %v7204, 1.442695
  %v7244 = vpow.pop %v7243
  %v7245 = vmul.f32 %v7205, 1.442695
  %v7246 = vpow.pop %v7245
  %v7247 = vmul.f32 %v7206, 1.442695
  %v7248 = vpow.pop %v7247
  %v7249 = vmul.f32 %v7207, 1.442695
  %v7250 = vpow.pop %v7249
  %v7251 = vmul.f32 %v7208, 1.442695
  %v7252 = vpow.pop %v7251
  %v7253 = vmul.f32 %v7209, 1.442695
  %v7254 = vpow.pop %v7253
  %v7255 = vmul.f32 %v7210, 1.442695
  %v7256 = vpow.pop %v7255
  %v7257 = vmul.f32 %v7211, 1.442695
  %v7258 = vpow.pop %v7257
  %v7259 = vmul.f32 %v7212, 1.442695
  %v7260 = vpow.pop %v7259
  %v7261 = vsub.f32 %v7230, 1.0
  %v7262 = vsub.f32 %v7232, 1.0
  %v7263 = vsub.f32 %v7234, 1.0
  %v7264 = vsub.f32 %v7236, 1.0
  %v7265 = vsub.f32 %v7238, 1.0
  %v7266 = vsub.f32 %v7240, 1.0
  %v7267 = vsub.f32 %v7242, 1.0
  %v7268 = vsub.f32 %v7244, 1.0
  %v7269 = vsub.f32 %v7246, 1.0
  %v7270 = vsub.f32 %v7248, 1.0
  %v7271 = vsub.f32 %v7250, 1.0
  %v7272 = vsub.f32 %v7252, 1.0
  %v7273 = vsub.f32 %v7254, 1.0
  %v7274 = vsub.f32 %v7256, 1.0
  %v7275 = vsub.f32 %v7258, 1.0
  %v7276 = vsub.f32 %v7260, 1.0
  %v7277 = vsel %vm7213, %v7197, %v7261
  %v7278 = vsel %vm7214, %v7198, %v7262
  %v7279 = vsel %vm7215, %v7199, %v7263
  %v7280 = vsel %vm7216, %v7200, %v7264
  %v7281 = vsel %vm7217, %v7201, %v7265
  %v7282 = vsel %vm7218, %v7202, %v7266
  %v7283 = vsel %vm7219, %v7203, %v7267
  %v7284 = vsel %vm7220, %v7204, %v7268
  %v7285 = vsel %vm7221, %v7205, %v7269
  %v7286 = vsel %vm7222, %v7206, %v7270
  %v7287 = vsel %vm7223, %v7207, %v7271
  %v7288 = vsel %vm7224, %v7208, %v7272
  %v7289 = vsel %vm7225, %v7209, %v7273
  %v7290 = vsel %vm7226, %v7210, %v7274
  %v7291 = vsel %vm7227, %v7211, %v7275
  %v7292 = vsel %vm7228, %v7212, %v7276
  %7293 = vst [vmem:[%s5] sm:$0xff] %v7277
  %7294 = vst [vmem:[%s5 + $0x8] sm:$0xff] %v7278
  %7295 = vst [vmem:[%s5 + $0x10] sm:$0xff] %v7279
  %7296 = vst [vmem:[%s5 + $0x18] sm:$0xff] %v7280
  %7297 = vst [vmem:[%s5 + $0x20] sm:$0xff] %v7281
  %7298 = vst [vmem:[%s5 + $0x28] sm:$0xff] %v7282
  %7299 = vst [vmem:[%s5 + $0x30] sm:$0xff] %v7283
  %7300 = vst [vmem:[%s5 + $0x38] sm:$0xff] %v7284
  %7301 = vst [vmem:[%s5 + $0x40] sm:$0xff] %v7285
  %7302 = vst [vmem:[%s5 + $0x48] sm:$0xff] %v7286
  %7303 = vst [vmem:[%s5 + $0x50] sm:$0xff] %v7287
  %7304 = vst [vmem:[%s5 + $0x58] sm:$0xff] %v7288
  %7305 = vst [vmem:[%s5 + $0x60] sm:$0xff] %v7289
  %7306 = vst [vmem:[%s5 + $0x68] sm:$0xff] %v7290
  %7307 = vst [vmem:[%s5 + $0x70] sm:$0xff] %v7291
  %7308 = vst [vmem:[%s5 + $0x78] sm:$0xff] %v7292
  // Predicated region
  $region22: #{gat_forward.5} parent=0 // pred_check
    _
  $region23: #{gat_forward.5} parent=0 // pred_check_branch
    %7310 = sbr.rel (0) target = $region25
  $region24: #{gat_forward.5} parent=0 // pred_region
    _
  $region25: #{gat_forward.5} parent=0 // pred_fallthru
    _
  // Predicated region
  $region26: #{gat_forward.5} parent=0 // pred_check
    _
  $region27: #{gat_forward.5} parent=0 // pred_check_branch
    %7312 = sbr.rel (0) target = $region29
  $region28: #{gat_forward.5} parent=0 // pred_region
    _
  $region29: #{gat_forward.5} parent=0 // pred_fallthru
    _

</llo_original>
